<compile_context>
chip_gen: v7x
topology: tpu7x:2x2x1
jax: 0.10.0
libtpu: 0.0.40
codegen_flags: <defaults>
</compile_context>

<pallas_src>
import functools
import numpy as np
import jax
import jax.numpy as jnp
from jax.experimental import pallas as pl
from jax.experimental.pallas import tpu as pltpu


TN = 512      # output-point (No) tile  -- grid axis 0, "parallel"
TK = 4096     # input-point  (Ni) tile  -- grid axis 1, "arbitrary" (reduction)
OUT_W = 128   # lane width of the (padded) output slab


# ----------------------------- Pallas kernel --------------------------------
def _statsconv_kernel(m_ref, r_ref, aux_ref, o_ref, acc_ref, *, cc, d):
    """One (TN, TK) incidence tile x (TK, slab) fused RHS slab per grid step.

    slab lanes: [ P (cc) | ones (1) | local^2 (d) | local (d) ]
    acc lanes : [ conv_sum | counts | sum local^2 | sum local ]
    out lanes : [ conv     | density| variance    | norm_center | 0-pad ]
    """
    k = pl.program_id(1)

    @pl.when(k == 0)
    def _init():
        acc_ref[...] = jnp.zeros_like(acc_ref)

    # int8 0/1 incidence -> bf16 (VPU, hidden under the DMA wait of the next
    # tile), then ONE MXU matmul per (No-tile, Ni-tile).
    m = m_ref[...].astype(jnp.bfloat16)
    acc_ref[...] += jnp.dot(m, r_ref[...], preferred_element_type=jnp.float32)

    @pl.when(k == pl.num_programs(1) - 1)
    def _finalize():
        slab = cc + 1 + 2 * d
        counts = acc_ref[:, cc:cc + 1]                    # neighbors per output
        inv_cnt = 1.0 / jnp.maximum(counts, 1.0)
        sum_l2 = acc_ref[:, cc + 1:cc + 1 + d]            # sum of local^2
        sum_l = acc_ref[:, cc + 1 + d:slab]               # sum of local
        mean_l = sum_l * inv_cnt                          # == norm_center
        # variance = E[local^2] - mean(local)^2; local in [0, stride) so this
        # is exact in bf16/f32 for any coordinate extent.
        var = jnp.maximum(sum_l2 * inv_cnt - mean_l * mean_l, 0.0)

        # Direct sliced stores (no concatenate of a full (TN,128) temporary).
        # Bias is added host-side after slicing the real rows/columns.
        o_ref[:, :cc] = acc_ref[:, :cc]                           # conv sums
        o_ref[:, cc:cc + 1] = counts * aux_ref[:, 0:1]            # density
        o_ref[:, cc + 1:cc + 1 + d] = var                         # variance
        o_ref[:, cc + 1 + d:slab] = mean_l                        # norm_center
        o_ref[:, slab:] = jnp.zeros(
            (o_ref.shape[0], o_ref.shape[1] - slab), jnp.float32)


def statsconv_pallas(M_i8, R, AUX, *, cc, d):
    """M_i8: (No_pad, Ni_pad) int8 incidence; R: (Ni_pad, slab) bf16 fused slab;
    AUX: (No_pad, 8) f32 with lane 0 = 1/points_in_batch.  Returns a lane-dense
    (No_pad, 128) f32 slab; caller slices [:N_out, :outplanes] and adds bias."""
    no_pad, ni_pad = M_i8.shape
    slab = R.shape[1]
    assert no_pad % TN == 0 and ni_pad % TK == 0
    assert slab <= OUT_W
    grid = (no_pad // TN, ni_pad // TK)
    kernel = functools.partial(_statsconv_kernel, cc=cc, d=d)
    return pl.pallas_call(
        kernel,
        out_shape=jax.ShapeDtypeStruct((no_pad, OUT_W), jnp.float32),
        grid_spec=pltpu.PrefetchScalarGridSpec(
            num_scalar_prefetch=0,
            grid=grid,
            in_specs=[
                pl.BlockSpec((TN, TK), lambda i, k: (i, k)),            # M tile (int8)
                pl.BlockSpec((TK, slab), lambda i, k: (k, 0)),          # fused RHS slab (bf16)
                pl.BlockSpec((TN, AUX.shape[1]), lambda i, k: (i, 0)),  # per-output aux (f32)
            ],
            out_specs=pl.BlockSpec((TN, OUT_W), lambda i, k: (i, 0)),   # resident across k
            scratch_shapes=[pltpu.VMEM((TN, slab), jnp.float32)],       # f32 accumulator
        ),
        compiler_params=pltpu.CompilerParams(
            dimension_semantics=("parallel", "arbitrary"),
            # ~10 MiB actually used; explicit limit so the same config also
            # clears v5e's 16 MiB scoped default and stays under v7x's 64 MiB.
            vmem_limit_bytes=48 * 1024 * 1024,
        ),
    )(M_i8, R, AUX)


# ------------------------- host-side glue (NumPy) ---------------------------
def build_coord_map(batch_idx, coords, stride):
    """CoordinateManager equivalent: output cells, per-point output index,
    kernel-offset index and stride-local coordinates."""
    out_coords = (coords // stride) * stride
    full = np.concatenate([batch_idx[:, None], out_coords], axis=1)
    uniq, out_idx = np.unique(full, axis=0, return_inverse=True)
    out_idx = out_idx.reshape(-1)
    local = coords % stride                      # stride-local offsets 0..stride-1
    k_idx = np.zeros(coords.shape[0], np.int64)
    for dd in range(coords.shape[1]):
        k_idx = k_idx * stride + local[:, dd]
    return uniq, out_idx, k_idx, local


def build_device_inputs(batch_idx, coords, Xq, W, stride, B):
    """Build int8 incidence M, fused bf16 RHS slab R, per-output AUX."""
    N, D = coords.shape
    K, C_in, Cc = W.shape
    uniq, out_idx, k_idx, local = build_coord_map(batch_idx, coords, stride)
    N_out = uniq.shape[0]

    No_pad = -(-N_out // TN) * TN
    Ni_pad = -(-N // TK) * TK

    # 0/1 incidence, stored int8 (halves the dominant HBM stream).
    M = np.zeros((No_pad, Ni_pad), np.int8)
    M[out_idx, np.arange(N)] = 1

    # Per-point conv contribution P[p] = W[k(p)]^T x[p], hoisted out of the
    # kernel (in production this is one small XLA einsum).  Quantize to bf16 so
    # the reference and the kernel see identical values.
    P = np.einsum('nc,ncd->nd', Xq, W[k_idx]).astype(np.float32)
    Pq = np.asarray(jnp.asarray(P).astype(jnp.bfloat16).astype(jnp.float32))

    # Fused RHS slab: [ P | ones | local^2 | local ]  (slab = Cc + 1 + 2D lanes).
    # Stride-local coords keep coords^2 exact in bf16 and make
    # norm_center = mean(local) directly (no out_coords needed in AUX).
    slab = Cc + 1 + 2 * D
    assert slab <= OUT_W
    R = np.zeros((Ni_pad, slab), np.float32)
    R[:N, :Cc] = Pq
    R[:N, Cc] = 1.0
    R[:N, Cc + 1:Cc + 1 + D] = local.astype(np.float32) ** 2
    R[:N, Cc + 1 + D:slab] = local.astype(np.float32)

    # Per-output aux: lane 0 = 1 / points_in_batch (0 on padded rows).
    pts_per_batch = np.bincount(batch_idx, minlength=B).astype(np.float64)
    AUX = np.zeros((No_pad, 8), np.float32)
    AUX[:N_out, 0] = (1.0 / pts_per_batch[uniq[:, 0]]).astype(np.float32)

    return M, R, AUX, Pq, N_out, uniq, out_idx


def reference_numpy(Pq, coords, batch_idx, uniq, out_idx, bias, B):
    """Module-faithful reference (sum/avg pool, unpool, broadcast) in float64."""
    N, D = coords.shape
    N_out = uniq.shape[0]
    M = np.zeros((N_out, N), np.float64)
    M[out_idx, np.arange(N)] = 1.0
    counts = M.sum(1, keepdims=True)
    pts_per_batch = np.bincount(batch_idx, minlength=B).astype(np.float64)
    density = counts / pts_per_batch[uniq[:, 0]][:, None]
    cf = coords.astype(np.float64)
    center = (M @ cf) / counts
    md = cf - M.T @ center                       # unpool(center) back to inputs
    var = (M @ (md * md)) / counts
    nc = center - uniq[:, 1:].astype(np.float64)
    conv = M @ Pq.astype(np.float64) + bias.astype(np.float64)
    return np.concatenate([conv, density, var, nc], axis=1)


# --------------------------------- main --------------------------------------
if __name__ == "__main__":
    # StatsConv(inplanes=4, outplanes=16, kernel_size=2, stride=2, dilation=1, dimension=3)
    B, D, S = 2, 3, 16
    N = 256
    C_in = 4
    outplanes = 16
    stride = kernel_size = 2
    num_feat = 2 * D + 1                 # density(1) + variance(D) + norm_center(D) = 7
    Cc = outplanes - num_feat            # conv output channels = 9
    K = kernel_size ** D                 # 8 kernel offsets

    key = jax.random.PRNGKey(0)
    k_coord, k_x, k_w, k_b = jax.random.split(key, 4)

    # unique (batch, coord) cells -> deterministic sparse point cloud
    perm = np.array(jax.random.permutation(k_coord, B * S ** D))[:N]
    batch_idx = (perm // (S ** D)).astype(np.int64)
    rem = perm % (S ** D)
    coords = np.stack([rem // (S * S), (rem // S) % S, rem % S], axis=1).astype(np.int64)

    X = np.array(jax.random.normal(k_x, (N, C_in), dtype=jnp.float32))
    W = np.array(jax.random.normal(k_w, (K, C_in, Cc), dtype=jnp.float32)) * 0.1
    bias = np.array(jax.random.normal(k_b, (1, Cc), dtype=jnp.float32)) * 0.1

    # Features quantized to bf16 for the MXU path; the reference uses the same
    # quantized values so the test checks kernel math, not quantization error.
    Xq = np.asarray(jnp.asarray(X).astype(jnp.bfloat16).astype(jnp.float32))

    M, R, AUX, Pq, N_out, uniq, out_idx = build_device_inputs(
        batch_idx, coords, Xq, W, stride, B)

    out_padded = statsconv_pallas(
        jnp.asarray(M),                    # int8 incidence
        jnp.asarray(R, jnp.bfloat16),      # fused RHS slab
        jnp.asarray(AUX),                  # per-output aux
        cc=Cc, d=D)
    out_padded = jax.block_until_ready(out_padded)

    # Slice real rows / lanes, then add bias (padded rows never see it).
    out = np.array(out_padded)[:N_out, :outplanes]
    out[:, :Cc] = out[:, :Cc] + bias

    ref = reference_numpy(Pq, coords, batch_idx, uniq, out_idx, bias, B)
    np.testing.assert_allclose(out, ref, rtol=1e-2, atol=1e-2)
    assert out.shape == (N_out, outplanes)

    print("KERNEL_OK")
</pallas_src>

<mosaic_0001>
module attributes {stable_mosaic.version = 11 : i64} {
  func.func @_statsconv_kernel(%arg0: i32, %arg1: i32, %arg2: memref<512x4096xi8, #tpu.memory_space<vmem>>, %arg3: memref<4096x16xbf16, #tpu.memory_space<vmem>>, %arg4: memref<512x8xf32, #tpu.memory_space<vmem>>, %arg5: memref<512x128xf32, #tpu.memory_space<vmem>>, %arg6: memref<512x16xf32, #tpu.memory_space<vmem>>) attributes {dimension_semantics = [#tpu.dimension_semantics<parallel>, #tpu.dimension_semantics<arbitrary>], iteration_bounds = array<i64: 1, 1>, scalar_prefetch = 0 : i64, scratch_operands = 1 : i64, tpu.core_type = #tpu.core_type<tc>, window_params = [{transform_indices = @transform_0, window_bounds = array<i64: 512, 4096>}, {transform_indices = @transform_1, window_bounds = array<i64: 4096, 16>}, {transform_indices = @transform_2, window_bounds = array<i64: 512, 8>}, {transform_indices = @transform_3, window_bounds = array<i64: 512, 128>}]} {
    %c0_i32 = arith.constant 0 : i32
    %0 = arith.cmpi eq, %arg1, %c0_i32 : i32
    %1 = arith.extui %0 : i1 to i32
    %c0_i32_0 = arith.constant 0 : i32
    %2 = arith.cmpi ne, %1, %c0_i32_0 : i32
    scf.if %2 {
      %cst_10 = arith.constant 0.000000e+00 : f32
      %13 = vector.broadcast %cst_10 : f32 to vector<512x16xf32>
      %c0_11 = arith.constant 0 : index
      %c0_12 = arith.constant 0 : index
      %14 = vector.load %arg6[%c0_11, %c0_12] : memref<512x16xf32, #tpu.memory_space<vmem>>, vector<512x16xf32>
      tpu.vector_store %arg6[%c0_11, %c0_12], %13 {strides = array<i32>} : memref<512x16xf32, #tpu.memory_space<vmem>>, vector<512x16xf32>,
    } else {
    }
    %c0 = arith.constant 0 : index
    %c0_1 = arith.constant 0 : index
    %3 = vector.load %arg2[%c0, %c0_1] : memref<512x4096xi8, #tpu.memory_space<vmem>>, vector<512x4096xi8>
    %4 = arith.sitofp %3 : vector<512x4096xi8> to vector<512x4096xbf16>
    %c0_2 = arith.constant 0 : index
    %c0_3 = arith.constant 0 : index
    %5 = vector.load %arg6[%c0_2, %c0_3] : memref<512x16xf32, #tpu.memory_space<vmem>>, vector<512x16xf32>
    %c0_4 = arith.constant 0 : index
    %c0_5 = arith.constant 0 : index
    %6 = vector.load %arg3[%c0_4, %c0_5] : memref<4096x16xbf16, #tpu.memory_space<vmem>>, vector<4096x16xbf16>
    %cst = arith.constant dense<0.000000e+00> : vector<512x16xf32>
    %7 = tpu.matmul %4, %6, %cst {dimension_numbers = #tpu.dot_dimension_numbers<[1], [0], [0], [1], [0, 0, 1, 1], [], []>} : vector<512x4096xbf16>, vector<4096x16xbf16>, vector<512x16xf32> -> vector<512x16xf32>
    %8 = arith.addf %5, %7 : vector<512x16xf32>
    %c0_6 = arith.constant 0 : index
    %c0_7 = arith.constant 0 : index
    %9 = vector.load %arg6[%c0_6, %c0_7] : memref<512x16xf32, #tpu.memory_space<vmem>>, vector<512x16xf32>
    tpu.vector_store %arg6[%c0_6, %c0_7], %8 {strides = array<i32>} : memref<512x16xf32, #tpu.memory_space<vmem>>, vector<512x16xf32>,
    %c0_i32_8 = arith.constant 0 : i32
    %10 = arith.cmpi eq, %arg1, %c0_i32_8 : i32
    %11 = arith.extui %10 : i1 to i32
    %c0_i32_9 = arith.constant 0 : i32
    %12 = arith.cmpi ne, %11, %c0_i32_9 : i32
    scf.if %12 {
      %c0_10 = arith.constant 0 : index
      %c9 = arith.constant 9 : index
      %13 = vector.load %arg6[%c0_10, %c9] : memref<512x16xf32, #tpu.memory_space<vmem>>, vector<512x1xf32>
      %cst_11 = arith.constant 1.000000e+00 : f32
      %14 = vector.broadcast %cst_11 : f32 to vector<512x1xf32>
      %15 = arith.maximumf %13, %14 : vector<512x1xf32>
      %cst_12 = arith.constant 1.000000e+00 : f32
      %16 = vector.broadcast %cst_12 : f32 to vector<512x1xf32>
      %17 = arith.divf %16, %15 : vector<512x1xf32>
      %c0_13 = arith.constant 0 : index
      %c10 = arith.constant 10 : index
      %18 = vector.load %arg6[%c0_13, %c10] : memref<512x16xf32, #tpu.memory_space<vmem>>, vector<512x3xf32>
      %c0_14 = arith.constant 0 : index
      %c13 = arith.constant 13 : index
      %19 = vector.load %arg6[%c0_14, %c13] : memref<512x16xf32, #tpu.memory_space<vmem>>, vector<512x3xf32>
      %20 = vector.broadcast %17 : vector<512x1xf32> to vector<512x3xf32>
      %21 = arith.mulf %19, %20 : vector<512x3xf32>
      %22 = vector.broadcast %17 : vector<512x1xf32> to vector<512x3xf32>
      %23 = arith.mulf %18, %22 : vector<512x3xf32>
      %24 = arith.mulf %21, %21 : vector<512x3xf32>
      %25 = arith.subf %23, %24 : vector<512x3xf32>
      %cst_15 = arith.constant 0.000000e+00 : f32
      %26 = vector.broadcast %cst_15 : f32 to vector<512x3xf32>
      %27 = arith.maximumf %25, %26 : vector<512x3xf32>
      %c0_16 = arith.constant 0 : index
      %c0_17 = arith.constant 0 : index
      %28 = vector.load %arg6[%c0_16, %c0_17] : memref<512x16xf32, #tpu.memory_space<vmem>>, vector<512x9xf32>
      %c0_18 = arith.constant 0 : index
      %c0_19 = arith.constant 0 : index
      %29 = vector.load %arg5[%c0_18, %c0_19] : memref<512x128xf32, #tpu.memory_space<vmem>>, vector<512x9xf32>
      tpu.vector_store %arg5[%c0_18, %c0_19], %28 {strides = array<i32>} : memref<512x128xf32, #tpu.memory_space<vmem>>, vector<512x9xf32>,
      %c0_20 = arith.constant 0 : index
      %c0_21 = arith.constant 0 : index
      %30 = vector.load %arg4[%c0_20, %c0_21] : memref<512x8xf32, #tpu.memory_space<vmem>>, vector<512x1xf32>
      %31 = arith.mulf %13, %30 : vector<512x1xf32>
      %c0_22 = arith.constant 0 : index
      %c9_23 = arith.constant 9 : index
      %32 = vector.load %arg5[%c0_22, %c9_23] : memref<512x128xf32, #tpu.memory_space<vmem>>, vector<512x1xf32>
      tpu.vector_store %arg5[%c0_22, %c9_23], %31 {strides = array<i32>} : memref<512x128xf32, #tpu.memory_space<vmem>>, vector<512x1xf32>,
      %c0_24 = arith.constant 0 : index
      %c10_25 = arith.constant 10 : index
      %33 = vector.load %arg5[%c0_24, %c10_25] : memref<512x128xf32, #tpu.memory_space<vmem>>, vector<512x3xf32>
      tpu.vector_store %arg5[%c0_24, %c10_25], %27 {strides = array<i32>} : memref<512x128xf32, #tpu.memory_space<vmem>>, vector<512x3xf32>,
      %c0_26 = arith.constant 0 : index
      %c13_27 = arith.constant 13 : index
      %34 = vector.load %arg5[%c0_26, %c13_27] : memref<512x128xf32, #tpu.memory_space<vmem>>, vector<512x3xf32>
      tpu.vector_store %arg5[%c0_26, %c13_27], %21 {strides = array<i32>} : memref<512x128xf32, #tpu.memory_space<vmem>>, vector<512x3xf32>,
      %cst_28 = arith.constant 0.000000e+00 : f32
      %35 = vector.broadcast %cst_28 : f32 to vector<512x112xf32>
      %c0_29 = arith.constant 0 : index
      %c16 = arith.constant 16 : index
      %36 = vector.load %arg5[%c0_29, %c16] : memref<512x128xf32, #tpu.memory_space<vmem>>, vector<512x112xf32>
      tpu.vector_store %arg5[%c0_29, %c16], %35 {strides = array<i32>} : memref<512x128xf32, #tpu.memory_space<vmem>>, vector<512x112xf32>,
    } else {
    }
    return
  }
  func.func @transform_0(%arg0: i32, %arg1: i32) -> (i32, i32) {
    %c0_i32 = arith.constant 0 : i32
    return %arg0, %arg1 : i32, i32
  }
  func.func @transform_1(%arg0: i32, %arg1: i32) -> (i32, i32) {
    %c0_i32 = arith.constant 0 : i32
    %c0_i32_0 = arith.constant 0 : i32
    return %arg1, %c0_i32 : i32, i32
  }
  func.func @transform_2(%arg0: i32, %arg1: i32) -> (i32, i32) {
    %c0_i32 = arith.constant 0 : i32
    %c0_i32_0 = arith.constant 0 : i32
    return %arg0, %c0_i32 : i32, i32
  }
  func.func @transform_3(%arg0: i32, %arg1: i32) -> (i32, i32) {
    %c0_i32 = arith.constant 0 : i32
    %c0_i32_0 = arith.constant 0 : i32
    return %arg0, %c0_i32 : i32, i32
  }
}

</mosaic_0001>

<llo_original>
// kernel: tpu_custom_call.1
$region0: #{tpu_custom_call.1}
  #allocation0 [shape = 'u32[]', space=smem, size = 0x4, offset = 0x4, fixed_abs, tag = 'smem constant byte address 0x4 - core index']
  #allocation1 [shape = 'u32[144,128]{1,0:T(1,128)}', space=vmem, size = 0x12000, scoped, tag = 'internal scratch']
  #allocation2 [shape = 'f32[512,16]{1,0:T(8,128)}', space=vmem, size = 0x40000, scoped, tag = 'scratch operand']
  %s0 = inlined_call_operand.hbm [shape: s8[512,4096], index: 0, kind: input, shape index: {}]
  %s1 = inlined_call_operand.vmem [shape: bf16[4096,16], index: 1, kind: input, shape index: {}]
  %s2 = inlined_call_operand.vmem [shape: f32[512,8], index: 2, kind: input, shape index: {}]
  %s3 = inlined_call_operand.hbm [shape: f32[512,128], index: 3, kind: output, shape index: {}]
  %s4 = sld [smem:[#allocation0]]
  $region34: #{tpu_custom_call.1} parent=0
    _
  %s6 = ssub.s32 1, %s4
  %s7 = scalar_select 0, %s6, %s4
  $region1: #{tpu_custom_call.1} parent=0
    #allocation3 [shape = 'u8[2097152]{0}', space=vmem, size = 0x200000, scoped, tag = 'input window, operand 0, single buffered']
    #allocation4 [shape = 's32[1]{0}', space=sflag, size = 0x4, scoped, tag = 'scoped memory for tpu_custom_call.1']
    #allocation5 [shape = 's32[1]{0}', space=sflag, size = 0x4, scoped, tag = 'scoped memory for tpu_custom_call.1']
    #allocation6 [shape = 'u8[262144]{0}', space=vmem, size = 0x40000, scoped, tag = 'output window, operand 0, single buffered']
    %8 = vsyncpa [#allocation4], 0
    %9 = vsyncpa [#allocation5], 0
    // Predicated region
    $region2: #{tpu_custom_call.1} parent=1 // pred_check
      _
    $region3: #{tpu_custom_call.1} parent=1 // pred_check_branch
      %11 = sbr.rel (0) target = $region5
    $region4: #{tpu_custom_call.1} parent=1 // pred_region
      %s13 = ssub.s32 65536, 65536
      %14 = vsyncadd [#allocation4], %s13
      %s15 = sshll.u32 [#allocation3], 4
      %s16 = int_to_ptr.vmem [resolvable:$true] %s15
      %21 = dma.hbm_to_vmem [thread:$0]  %s0, 65536, %s16, [#allocation4], 4096, 4096, 256
    $region5: #{tpu_custom_call.1} parent=1 // pred_fallthru
      _
    // Predicated region
    $region6: #{tpu_custom_call.1} parent=1 // pred_check
      _
    $region7: #{tpu_custom_call.1} parent=1 // pred_check_branch
      %23 = sbr.rel (0) target = $region9
    $region8: #{tpu_custom_call.1} parent=1 // pred_region
      _
    $region9: #{tpu_custom_call.1} parent=1 // pred_fallthru
      _
    // Predicated region
    $region10: #{tpu_custom_call.1} parent=1 // pred_check
      _
    $region11: #{tpu_custom_call.1} parent=1 // pred_check_branch
      %25 = sbr.rel (0) target = $region13
    $region12: #{tpu_custom_call.1} parent=1 // pred_region
      _
    $region13: #{tpu_custom_call.1} parent=1 // pred_fallthru
      _
    // Predicated region
    $region14: #{tpu_custom_call.1} parent=1 // pred_check
      _
    $region15: #{tpu_custom_call.1} parent=1 // pred_check_branch
      %27 = sbr.rel (0) target = $region17
    $region16: #{tpu_custom_call.1} parent=1 // pred_region
      %28 = dma.done [#allocation4], 65536
    $region17: #{tpu_custom_call.1} parent=1 // pred_fallthru
      _
    %p30 = scmp.eq.s32.totalorder 0, 0
    // Predicated region
    $region18: #{tpu_custom_call.1} parent=1 // pred_check
      %p31 = pneg %p30
    $region19: #{tpu_custom_call.1} parent=1 // pred_check_branch
      %33 = sbr.rel (%p31) target = $region21
    $region20: #{tpu_custom_call.1} parent=1 // pred_region
      %vm34 = vcmask 130048
      %35 = vst.msk [vmem:[#allocation2] sm:$0xff] %vm34, 0.0
      %36 = vst.msk [vmem:[#allocation2 + $0x8] sm:$0xff] %vm34, 0.0
      %37 = vst.msk [vmem:[#allocation2 + $0x10] sm:$0xff] %vm34, 0.0
      %38 = vst.msk [vmem:[#allocation2 + $0x18] sm:$0xff] %vm34, 0.0
      %39 = vst.msk [vmem:[#allocation2 + $0x20] sm:$0xff] %vm34, 0.0
      %40 = vst.msk [vmem:[#allocation2 + $0x28] sm:$0xff] %vm34, 0.0
      %41 = vst.msk [vmem:[#allocation2 + $0x30] sm:$0xff] %vm34, 0.0
      %42 = vst.msk [vmem:[#allocation2 + $0x38] sm:$0xff] %vm34, 0.0
      %43 = vst.msk [vmem:[#allocation2 + $0x40] sm:$0xff] %vm34, 0.0
      %44 = vst.msk [vmem:[#allocation2 + $0x48] sm:$0xff] %vm34, 0.0
      %45 = vst.msk [vmem:[#allocation2 + $0x50] sm:$0xff] %vm34, 0.0
      %46 = vst.msk [vmem:[#allocation2 + $0x58] sm:$0xff] %vm34, 0.0
      %47 = vst.msk [vmem:[#allocation2 + $0x60] sm:$0xff] %vm34, 0.0
      %48 = vst.msk [vmem:[#allocation2 + $0x68] sm:$0xff] %vm34, 0.0
      %49 = vst.msk [vmem:[#allocation2 + $0x70] sm:$0xff] %vm34, 0.0
      %50 = vst.msk [vmem:[#allocation2 + $0x78] sm:$0xff] %vm34, 0.0
      %51 = vst.msk [vmem:[#allocation2 + $0x80] sm:$0xff] %vm34, 0.0
      %52 = vst.msk [vmem:[#allocation2 + $0x88] sm:$0xff] %vm34, 0.0
      %53 = vst.msk [vmem:[#allocation2 + $0x90] sm:$0xff] %vm34, 0.0
      %54 = vst.msk [vmem:[#allocation2 + $0x98] sm:$0xff] %vm34, 0.0
      %55 = vst.msk [vmem:[#allocation2 + $0xa0] sm:$0xff] %vm34, 0.0
      %56 = vst.msk [vmem:[#allocation2 + $0xa8] sm:$0xff] %vm34, 0.0
      %57 = vst.msk [vmem:[#allocation2 + $0xb0] sm:$0xff] %vm34, 0.0
      %58 = vst.msk [vmem:[#allocation2 + $0xb8] sm:$0xff] %vm34, 0.0
      %59 = vst.msk [vmem:[#allocation2 + $0xc0] sm:$0xff] %vm34, 0.0
      %60 = vst.msk [vmem:[#allocation2 + $0xc8] sm:$0xff] %vm34, 0.0
      %61 = vst.msk [vmem:[#allocation2 + $0xd0] sm:$0xff] %vm34, 0.0
      %62 = vst.msk [vmem:[#allocation2 + $0xd8] sm:$0xff] %vm34, 0.0
      %63 = vst.msk [vmem:[#allocation2 + $0xe0] sm:$0xff] %vm34, 0.0
      %64 = vst.msk [vmem:[#allocation2 + $0xe8] sm:$0xff] %vm34, 0.0
      %65 = vst.msk [vmem:[#allocation2 + $0xf0] sm:$0xff] %vm34, 0.0
      %66 = vst.msk [vmem:[#allocation2 + $0xf8] sm:$0xff] %vm34, 0.0
      %67 = vst.msk [vmem:[#allocation2 + $0x100] sm:$0xff] %vm34, 0.0
      %68 = vst.msk [vmem:[#allocation2 + $0x108] sm:$0xff] %vm34, 0.0
      %69 = vst.msk [vmem:[#allocation2 + $0x110] sm:$0xff] %vm34, 0.0
      %70 = vst.msk [vmem:[#allocation2 + $0x118] sm:$0xff] %vm34, 0.0
      %71 = vst.msk [vmem:[#allocation2 + $0x120] sm:$0xff] %vm34, 0.0
      %72 = vst.msk [vmem:[#allocation2 + $0x128] sm:$0xff] %vm34, 0.0
      %73 = vst.msk [vmem:[#allocation2 + $0x130] sm:$0xff] %vm34, 0.0
      %74 = vst.msk [vmem:[#allocation2 + $0x138] sm:$0xff] %vm34, 0.0
      %75 = vst.msk [vmem:[#allocation2 + $0x140] sm:$0xff] %vm34, 0.0
      %76 = vst.msk [vmem:[#allocation2 + $0x148] sm:$0xff] %vm34, 0.0
      %77 = vst.msk [vmem:[#allocation2 + $0x150] sm:$0xff] %vm34, 0.0
      %78 = vst.msk [vmem:[#allocation2 + $0x158] sm:$0xff] %vm34, 0.0
      %79 = vst.msk [vmem:[#allocation2 + $0x160] sm:$0xff] %vm34, 0.0
      %80 = vst.msk [vmem:[#allocation2 + $0x168] sm:$0xff] %vm34, 0.0
      %81 = vst.msk [vmem:[#allocation2 + $0x170] sm:$0xff] %vm34, 0.0
      %82 = vst.msk [vmem:[#allocation2 + $0x178] sm:$0xff] %vm34, 0.0
      %83 = vst.msk [vmem:[#allocation2 + $0x180] sm:$0xff] %vm34, 0.0
      %84 = vst.msk [vmem:[#allocation2 + $0x188] sm:$0xff] %vm34, 0.0
      %85 = vst.msk [vmem:[#allocation2 + $0x190] sm:$0xff] %vm34, 0.0
      %86 = vst.msk [vmem:[#allocation2 + $0x198] sm:$0xff] %vm34, 0.0
      %87 = vst.msk [vmem:[#allocation2 + $0x1a0] sm:$0xff] %vm34, 0.0
      %88 = vst.msk [vmem:[#allocation2 + $0x1a8] sm:$0xff] %vm34, 0.0
      %89 = vst.msk [vmem:[#allocation2 + $0x1b0] sm:$0xff] %vm34, 0.0
      %90 = vst.msk [vmem:[#allocation2 + $0x1b8] sm:$0xff] %vm34, 0.0
      %91 = vst.msk [vmem:[#allocation2 + $0x1c0] sm:$0xff] %vm34, 0.0
      %92 = vst.msk [vmem:[#allocation2 + $0x1c8] sm:$0xff] %vm34, 0.0
      %93 = vst.msk [vmem:[#allocation2 + $0x1d0] sm:$0xff] %vm34, 0.0
      %94 = vst.msk [vmem:[#allocation2 + $0x1d8] sm:$0xff] %vm34, 0.0
      %95 = vst.msk [vmem:[#allocation2 + $0x1e0] sm:$0xff] %vm34, 0.0
      %96 = vst.msk [vmem:[#allocation2 + $0x1e8] sm:$0xff] %vm34, 0.0
      %97 = vst.msk [vmem:[#allocation2 + $0x1f0] sm:$0xff] %vm34, 0.0
      %98 = vst.msk [vmem:[#allocation2 + $0x1f8] sm:$0xff] %vm34, 0.0
    $region21: #{tpu_custom_call.1} parent=1 // pred_fallthru
      _
    %v99 = vld [vmem:[#allocation3] sm:$0xff]
    %v100 = vld [vmem:[#allocation3 + $0x8] sm:$0xff]
    %v101 = vld [vmem:[#allocation3 + $0x10] sm:$0xff]
    %v102 = vld [vmem:[#allocation3 + $0x18] sm:$0xff]
    %v103 = vld [vmem:[#allocation3 + $0x20] sm:$0xff]
    %v104 = vld [vmem:[#allocation3 + $0x28] sm:$0xff]
    %v105 = vld [vmem:[#allocation3 + $0x30] sm:$0xff]
    %v106 = vld [vmem:[#allocation3 + $0x38] sm:$0xff]
    %v107 = vld [vmem:[#allocation3 + $0x40] sm:$0xff]
    %v108 = vld [vmem:[#allocation3 + $0x48] sm:$0xff]
    %v109 = vld [vmem:[#allocation3 + $0x50] sm:$0xff]
    %v110 = vld [vmem:[#allocation3 + $0x58] sm:$0xff]
    %v111 = vld [vmem:[#allocation3 + $0x60] sm:$0xff]
    %v112 = vld [vmem:[#allocation3 + $0x68] sm:$0xff]
    %v113 = vld [vmem:[#allocation3 + $0x70] sm:$0xff]
    %v114 = vld [vmem:[#allocation3 + $0x78] sm:$0xff]
    %v115 = vld [vmem:[#allocation3 + $0x80] sm:$0xff]
    %v116 = vld [vmem:[#allocation3 + $0x88] sm:$0xff]
    %v117 = vld [vmem:[#allocation3 + $0x90] sm:$0xff]
    %v118 = vld [vmem:[#allocation3 + $0x98] sm:$0xff]
    %v119 = vld [vmem:[#allocation3 + $0xa0] sm:$0xff]
    %v120 = vld [vmem:[#allocation3 + $0xa8] sm:$0xff]
    %v121 = vld [vmem:[#allocation3 + $0xb0] sm:$0xff]
    %v122 = vld [vmem:[#allocation3 + $0xb8] sm:$0xff]
    %v123 = vld [vmem:[#allocation3 + $0xc0] sm:$0xff]
    %v124 = vld [vmem:[#allocation3 + $0xc8] sm:$0xff]
    %v125 = vld [vmem:[#allocation3 + $0xd0] sm:$0xff]
    %v126 = vld [vmem:[#allocation3 + $0xd8] sm:$0xff]
    %v127 = vld [vmem:[#allocation3 + $0xe0] sm:$0xff]
    %v128 = vld [vmem:[#allocation3 + $0xe8] sm:$0xff]
    %v129 = vld [vmem:[#allocation3 + $0xf0] sm:$0xff]
    %v130 = vld [vmem:[#allocation3 + $0xf8] sm:$0xff]
    %v131 = vld [vmem:[#allocation3 + $0x100] sm:$0xff]
    %v132 = vld [vmem:[#allocation3 + $0x108] sm:$0xff]
    %v133 = vld [vmem:[#allocation3 + $0x110] sm:$0xff]
    %v134 = vld [vmem:[#allocation3 + $0x118] sm:$0xff]
    %v135 = vld [vmem:[#allocation3 + $0x120] sm:$0xff]
    %v136 = vld [vmem:[#allocation3 + $0x128] sm:$0xff]
    %v137 = vld [vmem:[#allocation3 + $0x130] sm:$0xff]
    %v138 = vld [vmem:[#allocation3 + $0x138] sm:$0xff]
    %v139 = vld [vmem:[#allocation3 + $0x140] sm:$0xff]
    %v140 = vld [vmem:[#allocation3 + $0x148] sm:$0xff]
    %v141 = vld [vmem:[#allocation3 + $0x150] sm:$0xff]
    %v142 = vld [vmem:[#allocation3 + $0x158] sm:$0xff]
    %v143 = vld [vmem:[#allocation3 + $0x160] sm:$0xff]
    %v144 = vld [vmem:[#allocation3 + $0x168] sm:$0xff]
    %v145 = vld [vmem:[#allocation3 + $0x170] sm:$0xff]
    %v146 = vld [vmem:[#allocation3 + $0x178] sm:$0xff]
    %v147 = vld [vmem:[#allocation3 + $0x180] sm:$0xff]
    %v148 = vld [vmem:[#allocation3 + $0x188] sm:$0xff]
    %v149 = vld [vmem:[#allocation3 + $0x190] sm:$0xff]
    %v150 = vld [vmem:[#allocation3 + $0x198] sm:$0xff]
    %v151 = vld [vmem:[#allocation3 + $0x1a0] sm:$0xff]
    %v152 = vld [vmem:[#allocation3 + $0x1a8] sm:$0xff]
    %v153 = vld [vmem:[#allocation3 + $0x1b0] sm:$0xff]
    %v154 = vld [vmem:[#allocation3 + $0x1b8] sm:$0xff]
    %v155 = vld [vmem:[#allocation3 + $0x1c0] sm:$0xff]
    %v156 = vld [vmem:[#allocation3 + $0x1c8] sm:$0xff]
    %v157 = vld [vmem:[#allocation3 + $0x1d0] sm:$0xff]
    %v158 = vld [vmem:[#allocation3 + $0x1d8] sm:$0xff]
    %v159 = vld [vmem:[#allocation3 + $0x1e0] sm:$0xff]
    %v160 = vld [vmem:[#allocation3 + $0x1e8] sm:$0xff]
    %v161 = vld [vmem:[#allocation3 + $0x1f0] sm:$0xff]
    %v162 = vld [vmem:[#allocation3 + $0x1f8] sm:$0xff]
    %v163 = vld [vmem:[#allocation3 + $0x200] sm:$0xff]
    %v164 = vld [vmem:[#allocation3 + $0x208] sm:$0xff]
    %v165 = vld [vmem:[#allocation3 + $0x210] sm:$0xff]
    %v166 = vld [vmem:[#allocation3 + $0x218] sm:$0xff]
    %v167 = vld [vmem:[#allocation3 + $0x220] sm:$0xff]
    %v168 = vld [vmem:[#allocation3 + $0x228] sm:$0xff]
    %v169 = vld [vmem:[#allocation3 + $0x230] sm:$0xff]
    %v170 = vld [vmem:[#allocation3 + $0x238] sm:$0xff]
    %v171 = vld [vmem:[#allocation3 + $0x240] sm:$0xff]
    %v172 = vld [vmem:[#allocation3 + $0x248] sm:$0xff]
    %v173 = vld [vmem:[#allocation3 + $0x250] sm:$0xff]
    %v174 = vld [vmem:[#allocation3 + $0x258] sm:$0xff]
    %v175 = vld [vmem:[#allocation3 + $0x260] sm:$0xff]
    %v176 = vld [vmem:[#allocation3 + $0x268] sm:$0xff]
    %v177 = vld [vmem:[#allocation3 + $0x270] sm:$0xff]
    %v178 = vld [vmem:[#allocation3 + $0x278] sm:$0xff]
    %v179 = vld [vmem:[#allocation3 + $0x280] sm:$0xff]
    %v180 = vld [vmem:[#allocation3 + $0x288] sm:$0xff]
    %v181 = vld [vmem:[#allocation3 + $0x290] sm:$0xff]
    %v182 = vld [vmem:[#allocation3 + $0x298] sm:$0xff]
    %v183 = vld [vmem:[#allocation3 + $0x2a0] sm:$0xff]
    %v184 = vld [vmem:[#allocation3 + $0x2a8] sm:$0xff]
    %v185 = vld [vmem:[#allocation3 + $0x2b0] sm:$0xff]
    %v186 = vld [vmem:[#allocation3 + $0x2b8] sm:$0xff]
    %v187 = vld [vmem:[#allocation3 + $0x2c0] sm:$0xff]
    %v188 = vld [vmem:[#allocation3 + $0x2c8] sm:$0xff]
    %v189 = vld [vmem:[#allocation3 + $0x2d0] sm:$0xff]
    %v190 = vld [vmem:[#allocation3 + $0x2d8] sm:$0xff]
    %v191 = vld [vmem:[#allocation3 + $0x2e0] sm:$0xff]
    %v192 = vld [vmem:[#allocation3 + $0x2e8] sm:$0xff]
    %v193 = vld [vmem:[#allocation3 + $0x2f0] sm:$0xff]
    %v194 = vld [vmem:[#allocation3 + $0x2f8] sm:$0xff]
    %v195 = vld [vmem:[#allocation3 + $0x300] sm:$0xff]
    %v196 = vld [vmem:[#allocation3 + $0x308] sm:$0xff]
    %v197 = vld [vmem:[#allocation3 + $0x310] sm:$0xff]
    %v198 = vld [vmem:[#allocation3 + $0x318] sm:$0xff]
    %v199 = vld [vmem:[#allocation3 + $0x320] sm:$0xff]
    %v200 = vld [vmem:[#allocation3 + $0x328] sm:$0xff]
    %v201 = vld [vmem:[#allocation3 + $0x330] sm:$0xff]
    %v202 = vld [vmem:[#allocation3 + $0x338] sm:$0xff]
    %v203 = vld [vmem:[#allocation3 + $0x340] sm:$0xff]
    %v204 = vld [vmem:[#allocation3 + $0x348] sm:$0xff]
    %v205 = vld [vmem:[#allocation3 + $0x350] sm:$0xff]
    %v206 = vld [vmem:[#allocation3 + $0x358] sm:$0xff]
    %v207 = vld [vmem:[#allocation3 + $0x360] sm:$0xff]
    %v208 = vld [vmem:[#allocation3 + $0x368] sm:$0xff]
    %v209 = vld [vmem:[#allocation3 + $0x370] sm:$0xff]
    %v210 = vld [vmem:[#allocation3 + $0x378] sm:$0xff]
    %v211 = vld [vmem:[#allocation3 + $0x380] sm:$0xff]
    %v212 = vld [vmem:[#allocation3 + $0x388] sm:$0xff]
    %v213 = vld [vmem:[#allocation3 + $0x390] sm:$0xff]
    %v214 = vld [vmem:[#allocation3 + $0x398] sm:$0xff]
    %v215 = vld [vmem:[#allocation3 + $0x3a0] sm:$0xff]
    %v216 = vld [vmem:[#allocation3 + $0x3a8] sm:$0xff]
    %v217 = vld [vmem:[#allocation3 + $0x3b0] sm:$0xff]
    %v218 = vld [vmem:[#allocation3 + $0x3b8] sm:$0xff]
    %v219 = vld [vmem:[#allocation3 + $0x3c0] sm:$0xff]
    %v220 = vld [vmem:[#allocation3 + $0x3c8] sm:$0xff]
    %v221 = vld [vmem:[#allocation3 + $0x3d0] sm:$0xff]
    %v222 = vld [vmem:[#allocation3 + $0x3d8] sm:$0xff]
    %v223 = vld [vmem:[#allocation3 + $0x3e0] sm:$0xff]
    %v224 = vld [vmem:[#allocation3 + $0x3e8] sm:$0xff]
    %v225 = vld [vmem:[#allocation3 + $0x3f0] sm:$0xff]
    %v226 = vld [vmem:[#allocation3 + $0x3f8] sm:$0xff]
    %v227 = vld [vmem:[#allocation3 + $0x400] sm:$0xff]
    %v228 = vld [vmem:[#allocation3 + $0x408] sm:$0xff]
    %v229 = vld [vmem:[#allocation3 + $0x410] sm:$0xff]
    %v230 = vld [vmem:[#allocation3 + $0x418] sm:$0xff]
    %v231 = vld [vmem:[#allocation3 + $0x420] sm:$0xff]
    %v232 = vld [vmem:[#allocation3 + $0x428] sm:$0xff]
    %v233 = vld [vmem:[#allocation3 + $0x430] sm:$0xff]
    %v234 = vld [vmem:[#allocation3 + $0x438] sm:$0xff]
    %v235 = vld [vmem:[#allocation3 + $0x440] sm:$0xff]
    %v236 = vld [vmem:[#allocation3 + $0x448] sm:$0xff]
    %v237 = vld [vmem:[#allocation3 + $0x450] sm:$0xff]
    %v238 = vld [vmem:[#allocation3 + $0x458] sm:$0xff]
    %v239 = vld [vmem:[#allocation3 + $0x460] sm:$0xff]
    %v240 = vld [vmem:[#allocation3 + $0x468] sm:$0xff]
    %v241 = vld [vmem:[#allocation3 + $0x470] sm:$0xff]
    %v242 = vld [vmem:[#allocation3 + $0x478] sm:$0xff]
    %v243 = vld [vmem:[#allocation3 + $0x480] sm:$0xff]
    %v244 = vld [vmem:[#allocation3 + $0x488] sm:$0xff]
    %v245 = vld [vmem:[#allocation3 + $0x490] sm:$0xff]
    %v246 = vld [vmem:[#allocation3 + $0x498] sm:$0xff]
    %v247 = vld [vmem:[#allocation3 + $0x4a0] sm:$0xff]
    %v248 = vld [vmem:[#allocation3 + $0x4a8] sm:$0xff]
    %v249 = vld [vmem:[#allocation3 + $0x4b0] sm:$0xff]
    %v250 = vld [vmem:[#allocation3 + $0x4b8] sm:$0xff]
    %v251 = vld [vmem:[#allocation3 + $0x4c0] sm:$0xff]
    %v252 = vld [vmem:[#allocation3 + $0x4c8] sm:$0xff]
    %v253 = vld [vmem:[#allocation3 + $0x4d0] sm:$0xff]
    %v254 = vld [vmem:[#allocation3 + $0x4d8] sm:$0xff]
    %v255 = vld [vmem:[#allocation3 + $0x4e0] sm:$0xff]
    %v256 = vld [vmem:[#allocation3 + $0x4e8] sm:$0xff]
    %v257 = vld [vmem:[#allocation3 + $0x4f0] sm:$0xff]
    %v258 = vld [vmem:[#allocation3 + $0x4f8] sm:$0xff]
    %v259 = vld [vmem:[#allocation3 + $0x500] sm:$0xff]
    %v260 = vld [vmem:[#allocation3 + $0x508] sm:$0xff]
    %v261 = vld [vmem:[#allocation3 + $0x510] sm:$0xff]
    %v262 = vld [vmem:[#allocation3 + $0x518] sm:$0xff]
    %v263 = vld [vmem:[#allocation3 + $0x520] sm:$0xff]
    %v264 = vld [vmem:[#allocation3 + $0x528] sm:$0xff]
    %v265 = vld [vmem:[#allocation3 + $0x530] sm:$0xff]
    %v266 = vld [vmem:[#allocation3 + $0x538] sm:$0xff]
    %v267 = vld [vmem:[#allocation3 + $0x540] sm:$0xff]
    %v268 = vld [vmem:[#allocation3 + $0x548] sm:$0xff]
    %v269 = vld [vmem:[#allocation3 + $0x550] sm:$0xff]
    %v270 = vld [vmem:[#allocation3 + $0x558] sm:$0xff]
    %v271 = vld [vmem:[#allocation3 + $0x560] sm:$0xff]
    %v272 = vld [vmem:[#allocation3 + $0x568] sm:$0xff]
    %v273 = vld [vmem:[#allocation3 + $0x570] sm:$0xff]
    %v274 = vld [vmem:[#allocation3 + $0x578] sm:$0xff]
    %v275 = vld [vmem:[#allocation3 + $0x580] sm:$0xff]
    %v276 = vld [vmem:[#allocation3 + $0x588] sm:$0xff]
    %v277 = vld [vmem:[#allocation3 + $0x590] sm:$0xff]
    %v278 = vld [vmem:[#allocation3 + $0x598] sm:$0xff]
    %v279 = vld [vmem:[#allocation3 + $0x5a0] sm:$0xff]
    %v280 = vld [vmem:[#allocation3 + $0x5a8] sm:$0xff]
    %v281 = vld [vmem:[#allocation3 + $0x5b0] sm:$0xff]
    %v282 = vld [vmem:[#allocation3 + $0x5b8] sm:$0xff]
    %v283 = vld [vmem:[#allocation3 + $0x5c0] sm:$0xff]
    %v284 = vld [vmem:[#allocation3 + $0x5c8] sm:$0xff]
    %v285 = vld [vmem:[#allocation3 + $0x5d0] sm:$0xff]
    %v286 = vld [vmem:[#allocation3 + $0x5d8] sm:$0xff]
    %v287 = vld [vmem:[#allocation3 + $0x5e0] sm:$0xff]
    %v288 = vld [vmem:[#allocation3 + $0x5e8] sm:$0xff]
    %v289 = vld [vmem:[#allocation3 + $0x5f0] sm:$0xff]
    %v290 = vld [vmem:[#allocation3 + $0x5f8] sm:$0xff]
    %v291 = vld [vmem:[#allocation3 + $0x600] sm:$0xff]
    %v292 = vld [vmem:[#allocation3 + $0x608] sm:$0xff]
    %v293 = vld [vmem:[#allocation3 + $0x610] sm:$0xff]
    %v294 = vld [vmem:[#allocation3 + $0x618] sm:$0xff]
    %v295 = vld [vmem:[#allocation3 + $0x620] sm:$0xff]
    %v296 = vld [vmem:[#allocation3 + $0x628] sm:$0xff]
    %v297 = vld [vmem:[#allocation3 + $0x630] sm:$0xff]
    %v298 = vld [vmem:[#allocation3 + $0x638] sm:$0xff]
    %v299 = vld [vmem:[#allocation3 + $0x640] sm:$0xff]
    %v300 = vld [vmem:[#allocation3 + $0x648] sm:$0xff]
    %v301 = vld [vmem:[#allocation3 + $0x650] sm:$0xff]
    %v302 = vld [vmem:[#allocation3 + $0x658] sm:$0xff]
    %v303 = vld [vmem:[#allocation3 + $0x660] sm:$0xff]
    %v304 = vld [vmem:[#allocation3 + $0x668] sm:$0xff]
    %v305 = vld [vmem:[#allocation3 + $0x670] sm:$0xff]
    %v306 = vld [vmem:[#allocation3 + $0x678] sm:$0xff]
    %v307 = vld [vmem:[#allocation3 + $0x680] sm:$0xff]
    %v308 = vld [vmem:[#allocation3 + $0x688] sm:$0xff]
    %v309 = vld [vmem:[#allocation3 + $0x690] sm:$0xff]
    %v310 = vld [vmem:[#allocation3 + $0x698] sm:$0xff]
    %v311 = vld [vmem:[#allocation3 + $0x6a0] sm:$0xff]
    %v312 = vld [vmem:[#allocation3 + $0x6a8] sm:$0xff]
    %v313 = vld [vmem:[#allocation3 + $0x6b0] sm:$0xff]
    %v314 = vld [vmem:[#allocation3 + $0x6b8] sm:$0xff]
    %v315 = vld [vmem:[#allocation3 + $0x6c0] sm:$0xff]
    %v316 = vld [vmem:[#allocation3 + $0x6c8] sm:$0xff]
    %v317 = vld [vmem:[#allocation3 + $0x6d0] sm:$0xff]
    %v318 = vld [vmem:[#allocation3 + $0x6d8] sm:$0xff]
    %v319 = vld [vmem:[#allocation3 + $0x6e0] sm:$0xff]
    %v320 = vld [vmem:[#allocation3 + $0x6e8] sm:$0xff]
    %v321 = vld [vmem:[#allocation3 + $0x6f0] sm:$0xff]
    %v322 = vld [vmem:[#allocation3 + $0x6f8] sm:$0xff]
    %v323 = vld [vmem:[#allocation3 + $0x700] sm:$0xff]
    %v324 = vld [vmem:[#allocation3 + $0x708] sm:$0xff]
    %v325 = vld [vmem:[#allocation3 + $0x710] sm:$0xff]
    %v326 = vld [vmem:[#allocation3 + $0x718] sm:$0xff]
    %v327 = vld [vmem:[#allocation3 + $0x720] sm:$0xff]
    %v328 = vld [vmem:[#allocation3 + $0x728] sm:$0xff]
    %v329 = vld [vmem:[#allocation3 + $0x730] sm:$0xff]
    %v330 = vld [vmem:[#allocation3 + $0x738] sm:$0xff]
    %v331 = vld [vmem:[#allocation3 + $0x740] sm:$0xff]
    %v332 = vld [vmem:[#allocation3 + $0x748] sm:$0xff]
    %v333 = vld [vmem:[#allocation3 + $0x750] sm:$0xff]
    %v334 = vld [vmem:[#allocation3 + $0x758] sm:$0xff]
    %v335 = vld [vmem:[#allocation3 + $0x760] sm:$0xff]
    %v336 = vld [vmem:[#allocation3 + $0x768] sm:$0xff]
    %v337 = vld [vmem:[#allocation3 + $0x770] sm:$0xff]
    %v338 = vld [vmem:[#allocation3 + $0x778] sm:$0xff]
    %v339 = vld [vmem:[#allocation3 + $0x780] sm:$0xff]
    %v340 = vld [vmem:[#allocation3 + $0x788] sm:$0xff]
    %v341 = vld [vmem:[#allocation3 + $0x790] sm:$0xff]
    %v342 = vld [vmem:[#allocation3 + $0x798] sm:$0xff]
    %v343 = vld [vmem:[#allocation3 + $0x7a0] sm:$0xff]
    %v344 = vld [vmem:[#allocation3 + $0x7a8] sm:$0xff]
    %v345 = vld [vmem:[#allocation3 + $0x7b0] sm:$0xff]
    %v346 = vld [vmem:[#allocation3 + $0x7b8] sm:$0xff]
    %v347 = vld [vmem:[#allocation3 + $0x7c0] sm:$0xff]
    %v348 = vld [vmem:[#allocation3 + $0x7c8] sm:$0xff]
    %v349 = vld [vmem:[#allocation3 + $0x7d0] sm:$0xff]
    %v350 = vld [vmem:[#allocation3 + $0x7d8] sm:$0xff]
    %v351 = vld [vmem:[#allocation3 + $0x7e0] sm:$0xff]
    %v352 = vld [vmem:[#allocation3 + $0x7e8] sm:$0xff]
    %v353 = vld [vmem:[#allocation3 + $0x7f0] sm:$0xff]
    %v354 = vld [vmem:[#allocation3 + $0x7f8] sm:$0xff]
    %v355 = vld [vmem:[#allocation3 + $0x800] sm:$0xff]
    %v356 = vld [vmem:[#allocation3 + $0x808] sm:$0xff]
    %v357 = vld [vmem:[#allocation3 + $0x810] sm:$0xff]
    %v358 = vld [vmem:[#allocation3 + $0x818] sm:$0xff]
    %v359 = vld [vmem:[#allocation3 + $0x820] sm:$0xff]
    %v360 = vld [vmem:[#allocation3 + $0x828] sm:$0xff]
    %v361 = vld [vmem:[#allocation3 + $0x830] sm:$0xff]
    %v362 = vld [vmem:[#allocation3 + $0x838] sm:$0xff]
    %v363 = vld [vmem:[#allocation3 + $0x840] sm:$0xff]
    %v364 = vld [vmem:[#allocation3 + $0x848] sm:$0xff]
    %v365 = vld [vmem:[#allocation3 + $0x850] sm:$0xff]
    %v366 = vld [vmem:[#allocation3 + $0x858] sm:$0xff]
    %v367 = vld [vmem:[#allocation3 + $0x860] sm:$0xff]
    %v368 = vld [vmem:[#allocation3 + $0x868] sm:$0xff]
    %v369 = vld [vmem:[#allocation3 + $0x870] sm:$0xff]
    %v370 = vld [vmem:[#allocation3 + $0x878] sm:$0xff]
    %v371 = vld [vmem:[#allocation3 + $0x880] sm:$0xff]
    %v372 = vld [vmem:[#allocation3 + $0x888] sm:$0xff]
    %v373 = vld [vmem:[#allocation3 + $0x890] sm:$0xff]
    %v374 = vld [vmem:[#allocation3 + $0x898] sm:$0xff]
    %v375 = vld [vmem:[#allocation3 + $0x8a0] sm:$0xff]
    %v376 = vld [vmem:[#allocation3 + $0x8a8] sm:$0xff]
    %v377 = vld [vmem:[#allocation3 + $0x8b0] sm:$0xff]
    %v378 = vld [vmem:[#allocation3 + $0x8b8] sm:$0xff]
    %v379 = vld [vmem:[#allocation3 + $0x8c0] sm:$0xff]
    %v380 = vld [vmem:[#allocation3 + $0x8c8] sm:$0xff]
    %v381 = vld [vmem:[#allocation3 + $0x8d0] sm:$0xff]
    %v382 = vld [vmem:[#allocation3 + $0x8d8] sm:$0xff]
    %v383 = vld [vmem:[#allocation3 + $0x8e0] sm:$0xff]
    %v384 = vld [vmem:[#allocation3 + $0x8e8] sm:$0xff]
    %v385 = vld [vmem:[#allocation3 + $0x8f0] sm:$0xff]
    %v386 = vld [vmem:[#allocation3 + $0x8f8] sm:$0xff]
    %v387 = vld [vmem:[#allocation3 + $0x900] sm:$0xff]
    %v388 = vld [vmem:[#allocation3 + $0x908] sm:$0xff]
    %v389 = vld [vmem:[#allocation3 + $0x910] sm:$0xff]
    %v390 = vld [vmem:[#allocation3 + $0x918] sm:$0xff]
    %v391 = vld [vmem:[#allocation3 + $0x920] sm:$0xff]
    %v392 = vld [vmem:[#allocation3 + $0x928] sm:$0xff]
    %v393 = vld [vmem:[#allocation3 + $0x930] sm:$0xff]
    %v394 = vld [vmem:[#allocation3 + $0x938] sm:$0xff]
    %v395 = vld [vmem:[#allocation3 + $0x940] sm:$0xff]
    %v396 = vld [vmem:[#allocation3 + $0x948] sm:$0xff]
    %v397 = vld [vmem:[#allocation3 + $0x950] sm:$0xff]
    %v398 = vld [vmem:[#allocation3 + $0x958] sm:$0xff]
    %v399 = vld [vmem:[#allocation3 + $0x960] sm:$0xff]
    %v400 = vld [vmem:[#allocation3 + $0x968] sm:$0xff]
    %v401 = vld [vmem:[#allocation3 + $0x970] sm:$0xff]
    %v402 = vld [vmem:[#allocation3 + $0x978] sm:$0xff]
    %v403 = vld [vmem:[#allocation3 + $0x980] sm:$0xff]
    %v404 = vld [vmem:[#allocation3 + $0x988] sm:$0xff]
    %v405 = vld [vmem:[#allocation3 + $0x990] sm:$0xff]
    %v406 = vld [vmem:[#allocation3 + $0x998] sm:$0xff]
    %v407 = vld [vmem:[#allocation3 + $0x9a0] sm:$0xff]
    %v408 = vld [vmem:[#allocation3 + $0x9a8] sm:$0xff]
    %v409 = vld [vmem:[#allocation3 + $0x9b0] sm:$0xff]
    %v410 = vld [vmem:[#allocation3 + $0x9b8] sm:$0xff]
    %v411 = vld [vmem:[#allocation3 + $0x9c0] sm:$0xff]
    %v412 = vld [vmem:[#allocation3 + $0x9c8] sm:$0xff]
    %v413 = vld [vmem:[#allocation3 + $0x9d0] sm:$0xff]
    %v414 = vld [vmem:[#allocation3 + $0x9d8] sm:$0xff]
    %v415 = vld [vmem:[#allocation3 + $0x9e0] sm:$0xff]
    %v416 = vld [vmem:[#allocation3 + $0x9e8] sm:$0xff]
    %v417 = vld [vmem:[#allocation3 + $0x9f0] sm:$0xff]
    %v418 = vld [vmem:[#allocation3 + $0x9f8] sm:$0xff]
    %v419 = vld [vmem:[#allocation3 + $0xa00] sm:$0xff]
    %v420 = vld [vmem:[#allocation3 + $0xa08] sm:$0xff]
    %v421 = vld [vmem:[#allocation3 + $0xa10] sm:$0xff]
    %v422 = vld [vmem:[#allocation3 + $0xa18] sm:$0xff]
    %v423 = vld [vmem:[#allocation3 + $0xa20] sm:$0xff]
    %v424 = vld [vmem:[#allocation3 + $0xa28] sm:$0xff]
    %v425 = vld [vmem:[#allocation3 + $0xa30] sm:$0xff]
    %v426 = vld [vmem:[#allocation3 + $0xa38] sm:$0xff]
    %v427 = vld [vmem:[#allocation3 + $0xa40] sm:$0xff]
    %v428 = vld [vmem:[#allocation3 + $0xa48] sm:$0xff]
    %v429 = vld [vmem:[#allocation3 + $0xa50] sm:$0xff]
    %v430 = vld [vmem:[#allocation3 + $0xa58] sm:$0xff]
    %v431 = vld [vmem:[#allocation3 + $0xa60] sm:$0xff]
    %v432 = vld [vmem:[#allocation3 + $0xa68] sm:$0xff]
    %v433 = vld [vmem:[#allocation3 + $0xa70] sm:$0xff]
    %v434 = vld [vmem:[#allocation3 + $0xa78] sm:$0xff]
    %v435 = vld [vmem:[#allocation3 + $0xa80] sm:$0xff]
    %v436 = vld [vmem:[#allocation3 + $0xa88] sm:$0xff]
    %v437 = vld [vmem:[#allocation3 + $0xa90] sm:$0xff]
    %v438 = vld [vmem:[#allocation3 + $0xa98] sm:$0xff]
    %v439 = vld [vmem:[#allocation3 + $0xaa0] sm:$0xff]
    %v440 = vld [vmem:[#allocation3 + $0xaa8] sm:$0xff]
    %v441 = vld [vmem:[#allocation3 + $0xab0] sm:$0xff]
    %v442 = vld [vmem:[#allocation3 + $0xab8] sm:$0xff]
    %v443 = vld [vmem:[#allocation3 + $0xac0] sm:$0xff]
    %v444 = vld [vmem:[#allocation3 + $0xac8] sm:$0xff]
    %v445 = vld [vmem:[#allocation3 + $0xad0] sm:$0xff]
    %v446 = vld [vmem:[#allocation3 + $0xad8] sm:$0xff]
    %v447 = vld [vmem:[#allocation3 + $0xae0] sm:$0xff]
    %v448 = vld [vmem:[#allocation3 + $0xae8] sm:$0xff]
    %v449 = vld [vmem:[#allocation3 + $0xaf0] sm:$0xff]
    %v450 = vld [vmem:[#allocation3 + $0xaf8] sm:$0xff]
    %v451 = vld [vmem:[#allocation3 + $0xb00] sm:$0xff]
    %v452 = vld [vmem:[#allocation3 + $0xb08] sm:$0xff]
    %v453 = vld [vmem:[#allocation3 + $0xb10] sm:$0xff]
    %v454 = vld [vmem:[#allocation3 + $0xb18] sm:$0xff]
    %v455 = vld [vmem:[#allocation3 + $0xb20] sm:$0xff]
    %v456 = vld [vmem:[#allocation3 + $0xb28] sm:$0xff]
    %v457 = vld [vmem:[#allocation3 + $0xb30] sm:$0xff]
    %v458 = vld [vmem:[#allocation3 + $0xb38] sm:$0xff]
    %v459 = vld [vmem:[#allocation3 + $0xb40] sm:$0xff]
    %v460 = vld [vmem:[#allocation3 + $0xb48] sm:$0xff]
    %v461 = vld [vmem:[#allocation3 + $0xb50] sm:$0xff]
    %v462 = vld [vmem:[#allocation3 + $0xb58] sm:$0xff]
    %v463 = vld [vmem:[#allocation3 + $0xb60] sm:$0xff]
    %v464 = vld [vmem:[#allocation3 + $0xb68] sm:$0xff]
    %v465 = vld [vmem:[#allocation3 + $0xb70] sm:$0xff]
    %v466 = vld [vmem:[#allocation3 + $0xb78] sm:$0xff]
    %v467 = vld [vmem:[#allocation3 + $0xb80] sm:$0xff]
    %v468 = vld [vmem:[#allocation3 + $0xb88] sm:$0xff]
    %v469 = vld [vmem:[#allocation3 + $0xb90] sm:$0xff]
    %v470 = vld [vmem:[#allocation3 + $0xb98] sm:$0xff]
    %v471 = vld [vmem:[#allocation3 + $0xba0] sm:$0xff]
    %v472 = vld [vmem:[#allocation3 + $0xba8] sm:$0xff]
    %v473 = vld [vmem:[#allocation3 + $0xbb0] sm:$0xff]
    %v474 = vld [vmem:[#allocation3 + $0xbb8] sm:$0xff]
    %v475 = vld [vmem:[#allocation3 + $0xbc0] sm:$0xff]
    %v476 = vld [vmem:[#allocation3 + $0xbc8] sm:$0xff]
    %v477 = vld [vmem:[#allocation3 + $0xbd0] sm:$0xff]
    %v478 = vld [vmem:[#allocation3 + $0xbd8] sm:$0xff]
    %v479 = vld [vmem:[#allocation3 + $0xbe0] sm:$0xff]
    %v480 = vld [vmem:[#allocation3 + $0xbe8] sm:$0xff]
    %v481 = vld [vmem:[#allocation3 + $0xbf0] sm:$0xff]
    %v482 = vld [vmem:[#allocation3 + $0xbf8] sm:$0xff]
    %v483 = vld [vmem:[#allocation3 + $0xc00] sm:$0xff]
    %v484 = vld [vmem:[#allocation3 + $0xc08] sm:$0xff]
    %v485 = vld [vmem:[#allocation3 + $0xc10] sm:$0xff]
    %v486 = vld [vmem:[#allocation3 + $0xc18] sm:$0xff]
    %v487 = vld [vmem:[#allocation3 + $0xc20] sm:$0xff]
    %v488 = vld [vmem:[#allocation3 + $0xc28] sm:$0xff]
    %v489 = vld [vmem:[#allocation3 + $0xc30] sm:$0xff]
    %v490 = vld [vmem:[#allocation3 + $0xc38] sm:$0xff]
    %v491 = vld [vmem:[#allocation3 + $0xc40] sm:$0xff]
    %v492 = vld [vmem:[#allocation3 + $0xc48] sm:$0xff]
    %v493 = vld [vmem:[#allocation3 + $0xc50] sm:$0xff]
    %v494 = vld [vmem:[#allocation3 + $0xc58] sm:$0xff]
    %v495 = vld [vmem:[#allocation3 + $0xc60] sm:$0xff]
    %v496 = vld [vmem:[#allocation3 + $0xc68] sm:$0xff]
    %v497 = vld [vmem:[#allocation3 + $0xc70] sm:$0xff]
    %v498 = vld [vmem:[#allocation3 + $0xc78] sm:$0xff]
    %v499 = vld [vmem:[#allocation3 + $0xc80] sm:$0xff]
    %v500 = vld [vmem:[#allocation3 + $0xc88] sm:$0xff]
    %v501 = vld [vmem:[#allocation3 + $0xc90] sm:$0xff]
    %v502 = vld [vmem:[#allocation3 + $0xc98] sm:$0xff]
    %v503 = vld [vmem:[#allocation3 + $0xca0] sm:$0xff]
    %v504 = vld [vmem:[#allocation3 + $0xca8] sm:$0xff]
    %v505 = vld [vmem:[#allocation3 + $0xcb0] sm:$0xff]
    %v506 = vld [vmem:[#allocation3 + $0xcb8] sm:$0xff]
    %v507 = vld [vmem:[#allocation3 + $0xcc0] sm:$0xff]
    %v508 = vld [vmem:[#allocation3 + $0xcc8] sm:$0xff]
    %v509 = vld [vmem:[#allocation3 + $0xcd0] sm:$0xff]
    %v510 = vld [vmem:[#allocation3 + $0xcd8] sm:$0xff]
    %v511 = vld [vmem:[#allocation3 + $0xce0] sm:$0xff]
    %v512 = vld [vmem:[#allocation3 + $0xce8] sm:$0xff]
    %v513 = vld [vmem:[#allocation3 + $0xcf0] sm:$0xff]
    %v514 = vld [vmem:[#allocation3 + $0xcf8] sm:$0xff]
    %v515 = vld [vmem:[#allocation3 + $0xd00] sm:$0xff]
    %v516 = vld [vmem:[#allocation3 + $0xd08] sm:$0xff]
    %v517 = vld [vmem:[#allocation3 + $0xd10] sm:$0xff]
    %v518 = vld [vmem:[#allocation3 + $0xd18] sm:$0xff]
    %v519 = vld [vmem:[#allocation3 + $0xd20] sm:$0xff]
    %v520 = vld [vmem:[#allocation3 + $0xd28] sm:$0xff]
    %v521 = vld [vmem:[#allocation3 + $0xd30] sm:$0xff]
    %v522 = vld [vmem:[#allocation3 + $0xd38] sm:$0xff]
    %v523 = vld [vmem:[#allocation3 + $0xd40] sm:$0xff]
    %v524 = vld [vmem:[#allocation3 + $0xd48] sm:$0xff]
    %v525 = vld [vmem:[#allocation3 + $0xd50] sm:$0xff]
    %v526 = vld [vmem:[#allocation3 + $0xd58] sm:$0xff]
    %v527 = vld [vmem:[#allocation3 + $0xd60] sm:$0xff]
    %v528 = vld [vmem:[#allocation3 + $0xd68] sm:$0xff]
    %v529 = vld [vmem:[#allocation3 + $0xd70] sm:$0xff]
    %v530 = vld [vmem:[#allocation3 + $0xd78] sm:$0xff]
    %v531 = vld [vmem:[#allocation3 + $0xd80] sm:$0xff]
    %v532 = vld [vmem:[#allocation3 + $0xd88] sm:$0xff]
    %v533 = vld [vmem:[#allocation3 + $0xd90] sm:$0xff]
    %v534 = vld [vmem:[#allocation3 + $0xd98] sm:$0xff]
    %v535 = vld [vmem:[#allocation3 + $0xda0] sm:$0xff]
    %v536 = vld [vmem:[#allocation3 + $0xda8] sm:$0xff]
    %v537 = vld [vmem:[#allocation3 + $0xdb0] sm:$0xff]
    %v538 = vld [vmem:[#allocation3 + $0xdb8] sm:$0xff]
    %v539 = vld [vmem:[#allocation3 + $0xdc0] sm:$0xff]
    %v540 = vld [vmem:[#allocation3 + $0xdc8] sm:$0xff]
    %v541 = vld [vmem:[#allocation3 + $0xdd0] sm:$0xff]
    %v542 = vld [vmem:[#allocation3 + $0xdd8] sm:$0xff]
    %v543 = vld [vmem:[#allocation3 + $0xde0] sm:$0xff]
    %v544 = vld [vmem:[#allocation3 + $0xde8] sm:$0xff]
    %v545 = vld [vmem:[#allocation3 + $0xdf0] sm:$0xff]
    %v546 = vld [vmem:[#allocation3 + $0xdf8] sm:$0xff]
    %v547 = vld [vmem:[#allocation3 + $0xe00] sm:$0xff]
    %v548 = vld [vmem:[#allocation3 + $0xe08] sm:$0xff]
    %v549 = vld [vmem:[#allocation3 + $0xe10] sm:$0xff]
    %v550 = vld [vmem:[#allocation3 + $0xe18] sm:$0xff]
    %v551 = vld [vmem:[#allocation3 + $0xe20] sm:$0xff]
    %v552 = vld [vmem:[#allocation3 + $0xe28] sm:$0xff]
    %v553 = vld [vmem:[#allocation3 + $0xe30] sm:$0xff]
    %v554 = vld [vmem:[#allocation3 + $0xe38] sm:$0xff]
    %v555 = vld [vmem:[#allocation3 + $0xe40] sm:$0xff]
    %v556 = vld [vmem:[#allocation3 + $0xe48] sm:$0xff]
    %v557 = vld [vmem:[#allocation3 + $0xe50] sm:$0xff]
    %v558 = vld [vmem:[#allocation3 + $0xe58] sm:$0xff]
    %v559 = vld [vmem:[#allocation3 + $0xe60] sm:$0xff]
    %v560 = vld [vmem:[#allocation3 + $0xe68] sm:$0xff]
    %v561 = vld [vmem:[#allocation3 + $0xe70] sm:$0xff]
    %v562 = vld [vmem:[#allocation3 + $0xe78] sm:$0xff]
    %v563 = vld [vmem:[#allocation3 + $0xe80] sm:$0xff]
    %v564 = vld [vmem:[#allocation3 + $0xe88] sm:$0xff]
    %v565 = vld [vmem:[#allocation3 + $0xe90] sm:$0xff]
    %v566 = vld [vmem:[#allocation3 + $0xe98] sm:$0xff]
    %v567 = vld [vmem:[#allocation3 + $0xea0] sm:$0xff]
    %v568 = vld [vmem:[#allocation3 + $0xea8] sm:$0xff]
    %v569 = vld [vmem:[#allocation3 + $0xeb0] sm:$0xff]
    %v570 = vld [vmem:[#allocation3 + $0xeb8] sm:$0xff]
    %v571 = vld [vmem:[#allocation3 + $0xec0] sm:$0xff]
    %v572 = vld [vmem:[#allocation3 + $0xec8] sm:$0xff]
    %v573 = vld [vmem:[#allocation3 + $0xed0] sm:$0xff]
    %v574 = vld [vmem:[#allocation3 + $0xed8] sm:$0xff]
    %v575 = vld [vmem:[#allocation3 + $0xee0] sm:$0xff]
    %v576 = vld [vmem:[#allocation3 + $0xee8] sm:$0xff]
    %v577 = vld [vmem:[#allocation3 + $0xef0] sm:$0xff]
    %v578 = vld [vmem:[#allocation3 + $0xef8] sm:$0xff]
    %v579 = vld [vmem:[#allocation3 + $0xf00] sm:$0xff]
    %v580 = vld [vmem:[#allocation3 + $0xf08] sm:$0xff]
    %v581 = vld [vmem:[#allocation3 + $0xf10] sm:$0xff]
    %v582 = vld [vmem:[#allocation3 + $0xf18] sm:$0xff]
    %v583 = vld [vmem:[#allocation3 + $0xf20] sm:$0xff]
    %v584 = vld [vmem:[#allocation3 + $0xf28] sm:$0xff]
    %v585 = vld [vmem:[#allocation3 + $0xf30] sm:$0xff]
    %v586 = vld [vmem:[#allocation3 + $0xf38] sm:$0xff]
    %v587 = vld [vmem:[#allocation3 + $0xf40] sm:$0xff]
    %v588 = vld [vmem:[#allocation3 + $0xf48] sm:$0xff]
    %v589 = vld [vmem:[#allocation3 + $0xf50] sm:$0xff]
    %v590 = vld [vmem:[#allocation3 + $0xf58] sm:$0xff]
    %v591 = vld [vmem:[#allocation3 + $0xf60] sm:$0xff]
    %v592 = vld [vmem:[#allocation3 + $0xf68] sm:$0xff]
    %v593 = vld [vmem:[#allocation3 + $0xf70] sm:$0xff]
    %v594 = vld [vmem:[#allocation3 + $0xf78] sm:$0xff]
    %v595 = vld [vmem:[#allocation3 + $0xf80] sm:$0xff]
    %v596 = vld [vmem:[#allocation3 + $0xf88] sm:$0xff]
    %v597 = vld [vmem:[#allocation3 + $0xf90] sm:$0xff]
    %v598 = vld [vmem:[#allocation3 + $0xf98] sm:$0xff]
    %v599 = vld [vmem:[#allocation3 + $0xfa0] sm:$0xff]
    %v600 = vld [vmem:[#allocation3 + $0xfa8] sm:$0xff]
    %v601 = vld [vmem:[#allocation3 + $0xfb0] sm:$0xff]
    %v602 = vld [vmem:[#allocation3 + $0xfb8] sm:$0xff]
    %v603 = vld [vmem:[#allocation3 + $0xfc0] sm:$0xff]
    %v604 = vld [vmem:[#allocation3 + $0xfc8] sm:$0xff]
    %v605 = vld [vmem:[#allocation3 + $0xfd0] sm:$0xff]
    %v606 = vld [vmem:[#allocation3 + $0xfd8] sm:$0xff]
    %v607 = vld [vmem:[#allocation3 + $0xfe0] sm:$0xff]
    %v608 = vld [vmem:[#allocation3 + $0xfe8] sm:$0xff]
    %v609 = vld [vmem:[#allocation3 + $0xff0] sm:$0xff]
    %v610 = vld [vmem:[#allocation3 + $0xff8] sm:$0xff]
    %v611 = vunpack.c.l.s8.bf16 %v99
    %v612 = vunpack.c.l.s8.bf16 %v100
    %v613 = vunpack.c.l.s8.bf16 %v101
    %v614 = vunpack.c.l.s8.bf16 %v102
    %v615 = vunpack.c.l.s8.bf16 %v103
    %v616 = vunpack.c.l.s8.bf16 %v104
    %v617 = vunpack.c.l.s8.bf16 %v105
    %v618 = vunpack.c.l.s8.bf16 %v106
    %v619 = vunpack.c.l.s8.bf16 %v107
    %v620 = vunpack.c.l.s8.bf16 %v108
    %v621 = vunpack.c.l.s8.bf16 %v109
    %v622 = vunpack.c.l.s8.bf16 %v110
    %v623 = vunpack.c.l.s8.bf16 %v111
    %v624 = vunpack.c.l.s8.bf16 %v112
    %v625 = vunpack.c.l.s8.bf16 %v113
    %v626 = vunpack.c.l.s8.bf16 %v114
    %v627 = vunpack.c.l.s8.bf16 %v115
    %v628 = vunpack.c.l.s8.bf16 %v116
    %v629 = vunpack.c.l.s8.bf16 %v117
    %v630 = vunpack.c.l.s8.bf16 %v118
    %v631 = vunpack.c.l.s8.bf16 %v119
    %v632 = vunpack.c.l.s8.bf16 %v120
    %v633 = vunpack.c.l.s8.bf16 %v121
    %v634 = vunpack.c.l.s8.bf16 %v122
    %v635 = vunpack.c.l.s8.bf16 %v123
    %v636 = vunpack.c.l.s8.bf16 %v124
    %v637 = vunpack.c.l.s8.bf16 %v125
    %v638 = vunpack.c.l.s8.bf16 %v126
    %v639 = vunpack.c.l.s8.bf16 %v127
    %v640 = vunpack.c.l.s8.bf16 %v128
    %v641 = vunpack.c.l.s8.bf16 %v129
    %v642 = vunpack.c.l.s8.bf16 %v130
    %v643 = vunpack.c.h.s8.bf16 %v99
    %v644 = vunpack.c.h.s8.bf16 %v100
    %v645 = vunpack.c.h.s8.bf16 %v101
    %v646 = vunpack.c.h.s8.bf16 %v102
    %v647 = vunpack.c.h.s8.bf16 %v103
    %v648 = vunpack.c.h.s8.bf16 %v104
    %v649 = vunpack.c.h.s8.bf16 %v105
    %v650 = vunpack.c.h.s8.bf16 %v106
    %v651 = vunpack.c.h.s8.bf16 %v107
    %v652 = vunpack.c.h.s8.bf16 %v108
    %v653 = vunpack.c.h.s8.bf16 %v109
    %v654 = vunpack.c.h.s8.bf16 %v110
    %v655 = vunpack.c.h.s8.bf16 %v111
    %v656 = vunpack.c.h.s8.bf16 %v112
    %v657 = vunpack.c.h.s8.bf16 %v113
    %v658 = vunpack.c.h.s8.bf16 %v114
    %v659 = vunpack.c.h.s8.bf16 %v115
    %v660 = vunpack.c.h.s8.bf16 %v116
    %v661 = vunpack.c.h.s8.bf16 %v117
    %v662 = vunpack.c.h.s8.bf16 %v118
    %v663 = vunpack.c.h.s8.bf16 %v119
    %v664 = vunpack.c.h.s8.bf16 %v120
    %v665 = vunpack.c.h.s8.bf16 %v121
    %v666 = vunpack.c.h.s8.bf16 %v122
    %v667 = vunpack.c.h.s8.bf16 %v123
    %v668 = vunpack.c.h.s8.bf16 %v124
    %v669 = vunpack.c.h.s8.bf16 %v125
    %v670 = vunpack.c.h.s8.bf16 %v126
    %v671 = vunpack.c.h.s8.bf16 %v127
    %v672 = vunpack.c.h.s8.bf16 %v128
    %v673 = vunpack.c.h.s8.bf16 %v129
    %v674 = vunpack.c.h.s8.bf16 %v130
    %v675 = vunpack.c.l.s8.bf16 %v131
    %v676 = vunpack.c.l.s8.bf16 %v132
    %v677 = vunpack.c.l.s8.bf16 %v133
    %v678 = vunpack.c.l.s8.bf16 %v134
    %v679 = vunpack.c.l.s8.bf16 %v135
    %v680 = vunpack.c.l.s8.bf16 %v136
    %v681 = vunpack.c.l.s8.bf16 %v137
    %v682 = vunpack.c.l.s8.bf16 %v138
    %v683 = vunpack.c.l.s8.bf16 %v139
    %v684 = vunpack.c.l.s8.bf16 %v140
    %v685 = vunpack.c.l.s8.bf16 %v141
    %v686 = vunpack.c.l.s8.bf16 %v142
    %v687 = vunpack.c.l.s8.bf16 %v143
    %v688 = vunpack.c.l.s8.bf16 %v144
    %v689 = vunpack.c.l.s8.bf16 %v145
    %v690 = vunpack.c.l.s8.bf16 %v146
    %v691 = vunpack.c.l.s8.bf16 %v147
    %v692 = vunpack.c.l.s8.bf16 %v148
    %v693 = vunpack.c.l.s8.bf16 %v149
    %v694 = vunpack.c.l.s8.bf16 %v150
    %v695 = vunpack.c.l.s8.bf16 %v151
    %v696 = vunpack.c.l.s8.bf16 %v152
    %v697 = vunpack.c.l.s8.bf16 %v153
    %v698 = vunpack.c.l.s8.bf16 %v154
    %v699 = vunpack.c.l.s8.bf16 %v155
    %v700 = vunpack.c.l.s8.bf16 %v156
    %v701 = vunpack.c.l.s8.bf16 %v157
    %v702 = vunpack.c.l.s8.bf16 %v158
    %v703 = vunpack.c.l.s8.bf16 %v159
    %v704 = vunpack.c.l.s8.bf16 %v160
    %v705 = vunpack.c.l.s8.bf16 %v161
    %v706 = vunpack.c.l.s8.bf16 %v162
    %v707 = vunpack.c.h.s8.bf16 %v131
    %v708 = vunpack.c.h.s8.bf16 %v132
    %v709 = vunpack.c.h.s8.bf16 %v133
    %v710 = vunpack.c.h.s8.bf16 %v134
    %v711 = vunpack.c.h.s8.bf16 %v135
    %v712 = vunpack.c.h.s8.bf16 %v136
    %v713 = vunpack.c.h.s8.bf16 %v137
    %v714 = vunpack.c.h.s8.bf16 %v138
    %v715 = vunpack.c.h.s8.bf16 %v139
    %v716 = vunpack.c.h.s8.bf16 %v140
    %v717 = vunpack.c.h.s8.bf16 %v141
    %v718 = vunpack.c.h.s8.bf16 %v142
    %v719 = vunpack.c.h.s8.bf16 %v143
    %v720 = vunpack.c.h.s8.bf16 %v144
    %v721 = vunpack.c.h.s8.bf16 %v145
    %v722 = vunpack.c.h.s8.bf16 %v146
    %v723 = vunpack.c.h.s8.bf16 %v147
    %v724 = vunpack.c.h.s8.bf16 %v148
    %v725 = vunpack.c.h.s8.bf16 %v149
    %v726 = vunpack.c.h.s8.bf16 %v150
    %v727 = vunpack.c.h.s8.bf16 %v151
    %v728 = vunpack.c.h.s8.bf16 %v152
    %v729 = vunpack.c.h.s8.bf16 %v153
    %v730 = vunpack.c.h.s8.bf16 %v154
    %v731 = vunpack.c.h.s8.bf16 %v155
    %v732 = vunpack.c.h.s8.bf16 %v156
    %v733 = vunpack.c.h.s8.bf16 %v157
    %v734 = vunpack.c.h.s8.bf16 %v158
    %v735 = vunpack.c.h.s8.bf16 %v159
    %v736 = vunpack.c.h.s8.bf16 %v160
    %v737 = vunpack.c.h.s8.bf16 %v161
    %v738 = vunpack.c.h.s8.bf16 %v162
    %v739 = vunpack.c.l.s8.bf16 %v163
    %v740 = vunpack.c.l.s8.bf16 %v164
    %v741 = vunpack.c.l.s8.bf16 %v165
    %v742 = vunpack.c.l.s8.bf16 %v166
    %v743 = vunpack.c.l.s8.bf16 %v167
    %v744 = vunpack.c.l.s8.bf16 %v168
    %v745 = vunpack.c.l.s8.bf16 %v169
    %v746 = vunpack.c.l.s8.bf16 %v170
    %v747 = vunpack.c.l.s8.bf16 %v171
    %v748 = vunpack.c.l.s8.bf16 %v172
    %v749 = vunpack.c.l.s8.bf16 %v173
    %v750 = vunpack.c.l.s8.bf16 %v174
    %v751 = vunpack.c.l.s8.bf16 %v175
    %v752 = vunpack.c.l.s8.bf16 %v176
    %v753 = vunpack.c.l.s8.bf16 %v177
    %v754 = vunpack.c.l.s8.bf16 %v178
    %v755 = vunpack.c.l.s8.bf16 %v179
    %v756 = vunpack.c.l.s8.bf16 %v180
    %v757 = vunpack.c.l.s8.bf16 %v181
    %v758 = vunpack.c.l.s8.bf16 %v182
    %v759 = vunpack.c.l.s8.bf16 %v183
    %v760 = vunpack.c.l.s8.bf16 %v184
    %v761 = vunpack.c.l.s8.bf16 %v185
    %v762 = vunpack.c.l.s8.bf16 %v186
    %v763 = vunpack.c.l.s8.bf16 %v187
    %v764 = vunpack.c.l.s8.bf16 %v188
    %v765 = vunpack.c.l.s8.bf16 %v189
    %v766 = vunpack.c.l.s8.bf16 %v190
    %v767 = vunpack.c.l.s8.bf16 %v191
    %v768 = vunpack.c.l.s8.bf16 %v192
    %v769 = vunpack.c.l.s8.bf16 %v193
    %v770 = vunpack.c.l.s8.bf16 %v194
    %v771 = vunpack.c.h.s8.bf16 %v163
    %v772 = vunpack.c.h.s8.bf16 %v164
    %v773 = vunpack.c.h.s8.bf16 %v165
    %v774 = vunpack.c.h.s8.bf16 %v166
    %v775 = vunpack.c.h.s8.bf16 %v167
    %v776 = vunpack.c.h.s8.bf16 %v168
    %v777 = vunpack.c.h.s8.bf16 %v169
    %v778 = vunpack.c.h.s8.bf16 %v170
    %v779 = vunpack.c.h.s8.bf16 %v171
    %v780 = vunpack.c.h.s8.bf16 %v172
    %v781 = vunpack.c.h.s8.bf16 %v173
    %v782 = vunpack.c.h.s8.bf16 %v174
    %v783 = vunpack.c.h.s8.bf16 %v175
    %v784 = vunpack.c.h.s8.bf16 %v176
    %v785 = vunpack.c.h.s8.bf16 %v177
    %v786 = vunpack.c.h.s8.bf16 %v178
    %v787 = vunpack.c.h.s8.bf16 %v179
    %v788 = vunpack.c.h.s8.bf16 %v180
    %v789 = vunpack.c.h.s8.bf16 %v181
    %v790 = vunpack.c.h.s8.bf16 %v182
    %v791 = vunpack.c.h.s8.bf16 %v183
    %v792 = vunpack.c.h.s8.bf16 %v184
    %v793 = vunpack.c.h.s8.bf16 %v185
    %v794 = vunpack.c.h.s8.bf16 %v186
    %v795 = vunpack.c.h.s8.bf16 %v187
    %v796 = vunpack.c.h.s8.bf16 %v188
    %v797 = vunpack.c.h.s8.bf16 %v189
    %v798 = vunpack.c.h.s8.bf16 %v190
    %v799 = vunpack.c.h.s8.bf16 %v191
    %v800 = vunpack.c.h.s8.bf16 %v192
    %v801 = vunpack.c.h.s8.bf16 %v193
    %v802 = vunpack.c.h.s8.bf16 %v194
    %v803 = vunpack.c.l.s8.bf16 %v195
    %v804 = vunpack.c.l.s8.bf16 %v196
    %v805 = vunpack.c.l.s8.bf16 %v197
    %v806 = vunpack.c.l.s8.bf16 %v198
    %v807 = vunpack.c.l.s8.bf16 %v199
    %v808 = vunpack.c.l.s8.bf16 %v200
    %v809 = vunpack.c.l.s8.bf16 %v201
    %v810 = vunpack.c.l.s8.bf16 %v202
    %v811 = vunpack.c.l.s8.bf16 %v203
    %v812 = vunpack.c.l.s8.bf16 %v204
    %v813 = vunpack.c.l.s8.bf16 %v205
    %v814 = vunpack.c.l.s8.bf16 %v206
    %v815 = vunpack.c.l.s8.bf16 %v207
    %v816 = vunpack.c.l.s8.bf16 %v208
    %v817 = vunpack.c.l.s8.bf16 %v209
    %v818 = vunpack.c.l.s8.bf16 %v210
    %v819 = vunpack.c.l.s8.bf16 %v211
    %v820 = vunpack.c.l.s8.bf16 %v212
    %v821 = vunpack.c.l.s8.bf16 %v213
    %v822 = vunpack.c.l.s8.bf16 %v214
    %v823 = vunpack.c.l.s8.bf16 %v215
    %v824 = vunpack.c.l.s8.bf16 %v216
    %v825 = vunpack.c.l.s8.bf16 %v217
    %v826 = vunpack.c.l.s8.bf16 %v218
    %v827 = vunpack.c.l.s8.bf16 %v219
    %v828 = vunpack.c.l.s8.bf16 %v220
    %v829 = vunpack.c.l.s8.bf16 %v221
    %v830 = vunpack.c.l.s8.bf16 %v222
    %v831 = vunpack.c.l.s8.bf16 %v223
    %v832 = vunpack.c.l.s8.bf16 %v224
    %v833 = vunpack.c.l.s8.bf16 %v225
    %v834 = vunpack.c.l.s8.bf16 %v226
    %v835 = vunpack.c.h.s8.bf16 %v195
    %v836 = vunpack.c.h.s8.bf16 %v196
    %v837 = vunpack.c.h.s8.bf16 %v197
    %v838 = vunpack.c.h.s8.bf16 %v198
    %v839 = vunpack.c.h.s8.bf16 %v199
    %v840 = vunpack.c.h.s8.bf16 %v200
    %v841 = vunpack.c.h.s8.bf16 %v201
    %v842 = vunpack.c.h.s8.bf16 %v202
    %v843 = vunpack.c.h.s8.bf16 %v203
    %v844 = vunpack.c.h.s8.bf16 %v204
    %v845 = vunpack.c.h.s8.bf16 %v205
    %v846 = vunpack.c.h.s8.bf16 %v206
    %v847 = vunpack.c.h.s8.bf16 %v207
    %v848 = vunpack.c.h.s8.bf16 %v208
    %v849 = vunpack.c.h.s8.bf16 %v209
    %v850 = vunpack.c.h.s8.bf16 %v210
    %v851 = vunpack.c.h.s8.bf16 %v211
    %v852 = vunpack.c.h.s8.bf16 %v212
    %v853 = vunpack.c.h.s8.bf16 %v213
    %v854 = vunpack.c.h.s8.bf16 %v214
    %v855 = vunpack.c.h.s8.bf16 %v215
    %v856 = vunpack.c.h.s8.bf16 %v216
    %v857 = vunpack.c.h.s8.bf16 %v217
    %v858 = vunpack.c.h.s8.bf16 %v218
    %v859 = vunpack.c.h.s8.bf16 %v219
    %v860 = vunpack.c.h.s8.bf16 %v220
    %v861 = vunpack.c.h.s8.bf16 %v221
    %v862 = vunpack.c.h.s8.bf16 %v222
    %v863 = vunpack.c.h.s8.bf16 %v223
    %v864 = vunpack.c.h.s8.bf16 %v224
    %v865 = vunpack.c.h.s8.bf16 %v225
    %v866 = vunpack.c.h.s8.bf16 %v226
    %v867 = vunpack.c.l.s8.bf16 %v227
    %v868 = vunpack.c.l.s8.bf16 %v228
    %v869 = vunpack.c.l.s8.bf16 %v229
    %v870 = vunpack.c.l.s8.bf16 %v230
    %v871 = vunpack.c.l.s8.bf16 %v231
    %v872 = vunpack.c.l.s8.bf16 %v232
    %v873 = vunpack.c.l.s8.bf16 %v233
    %v874 = vunpack.c.l.s8.bf16 %v234
    %v875 = vunpack.c.l.s8.bf16 %v235
    %v876 = vunpack.c.l.s8.bf16 %v236
    %v877 = vunpack.c.l.s8.bf16 %v237
    %v878 = vunpack.c.l.s8.bf16 %v238
    %v879 = vunpack.c.l.s8.bf16 %v239
    %v880 = vunpack.c.l.s8.bf16 %v240
    %v881 = vunpack.c.l.s8.bf16 %v241
    %v882 = vunpack.c.l.s8.bf16 %v242
    %v883 = vunpack.c.l.s8.bf16 %v243
    %v884 = vunpack.c.l.s8.bf16 %v244
    %v885 = vunpack.c.l.s8.bf16 %v245
    %v886 = vunpack.c.l.s8.bf16 %v246
    %v887 = vunpack.c.l.s8.bf16 %v247
    %v888 = vunpack.c.l.s8.bf16 %v248
    %v889 = vunpack.c.l.s8.bf16 %v249
    %v890 = vunpack.c.l.s8.bf16 %v250
    %v891 = vunpack.c.l.s8.bf16 %v251
    %v892 = vunpack.c.l.s8.bf16 %v252
    %v893 = vunpack.c.l.s8.bf16 %v253
    %v894 = vunpack.c.l.s8.bf16 %v254
    %v895 = vunpack.c.l.s8.bf16 %v255
    %v896 = vunpack.c.l.s8.bf16 %v256
    %v897 = vunpack.c.l.s8.bf16 %v257
    %v898 = vunpack.c.l.s8.bf16 %v258
    %v899 = vunpack.c.h.s8.bf16 %v227
    %v900 = vunpack.c.h.s8.bf16 %v228
    %v901 = vunpack.c.h.s8.bf16 %v229
    %v902 = vunpack.c.h.s8.bf16 %v230
    %v903 = vunpack.c.h.s8.bf16 %v231
    %v904 = vunpack.c.h.s8.bf16 %v232
    %v905 = vunpack.c.h.s8.bf16 %v233
    %v906 = vunpack.c.h.s8.bf16 %v234
    %v907 = vunpack.c.h.s8.bf16 %v235
    %v908 = vunpack.c.h.s8.bf16 %v236
    %v909 = vunpack.c.h.s8.bf16 %v237
    %v910 = vunpack.c.h.s8.bf16 %v238
    %v911 = vunpack.c.h.s8.bf16 %v239
    %v912 = vunpack.c.h.s8.bf16 %v240
    %v913 = vunpack.c.h.s8.bf16 %v241
    %v914 = vunpack.c.h.s8.bf16 %v242
    %v915 = vunpack.c.h.s8.bf16 %v243
    %v916 = vunpack.c.h.s8.bf16 %v244
    %v917 = vunpack.c.h.s8.bf16 %v245
    %v918 = vunpack.c.h.s8.bf16 %v246
    %v919 = vunpack.c.h.s8.bf16 %v247
    %v920 = vunpack.c.h.s8.bf16 %v248
    %v921 = vunpack.c.h.s8.bf16 %v249
    %v922 = vunpack.c.h.s8.bf16 %v250
    %v923 = vunpack.c.h.s8.bf16 %v251
    %v924 = vunpack.c.h.s8.bf16 %v252
    %v925 = vunpack.c.h.s8.bf16 %v253
    %v926 = vunpack.c.h.s8.bf16 %v254
    %v927 = vunpack.c.h.s8.bf16 %v255
    %v928 = vunpack.c.h.s8.bf16 %v256
    %v929 = vunpack.c.h.s8.bf16 %v257
    %v930 = vunpack.c.h.s8.bf16 %v258
    %v931 = vunpack.c.l.s8.bf16 %v259
    %v932 = vunpack.c.l.s8.bf16 %v260
    %v933 = vunpack.c.l.s8.bf16 %v261
    %v934 = vunpack.c.l.s8.bf16 %v262
    %v935 = vunpack.c.l.s8.bf16 %v263
    %v936 = vunpack.c.l.s8.bf16 %v264
    %v937 = vunpack.c.l.s8.bf16 %v265
    %v938 = vunpack.c.l.s8.bf16 %v266
    %v939 = vunpack.c.l.s8.bf16 %v267
    %v940 = vunpack.c.l.s8.bf16 %v268
    %v941 = vunpack.c.l.s8.bf16 %v269
    %v942 = vunpack.c.l.s8.bf16 %v270
    %v943 = vunpack.c.l.s8.bf16 %v271
    %v944 = vunpack.c.l.s8.bf16 %v272
    %v945 = vunpack.c.l.s8.bf16 %v273
    %v946 = vunpack.c.l.s8.bf16 %v274
    %v947 = vunpack.c.l.s8.bf16 %v275
    %v948 = vunpack.c.l.s8.bf16 %v276
    %v949 = vunpack.c.l.s8.bf16 %v277
    %v950 = vunpack.c.l.s8.bf16 %v278
    %v951 = vunpack.c.l.s8.bf16 %v279
    %v952 = vunpack.c.l.s8.bf16 %v280
    %v953 = vunpack.c.l.s8.bf16 %v281
    %v954 = vunpack.c.l.s8.bf16 %v282
    %v955 = vunpack.c.l.s8.bf16 %v283
    %v956 = vunpack.c.l.s8.bf16 %v284
    %v957 = vunpack.c.l.s8.bf16 %v285
    %v958 = vunpack.c.l.s8.bf16 %v286
    %v959 = vunpack.c.l.s8.bf16 %v287
    %v960 = vunpack.c.l.s8.bf16 %v288
    %v961 = vunpack.c.l.s8.bf16 %v289
    %v962 = vunpack.c.l.s8.bf16 %v290
    %v963 = vunpack.c.h.s8.bf16 %v259
    %v964 = vunpack.c.h.s8.bf16 %v260
    %v965 = vunpack.c.h.s8.bf16 %v261
    %v966 = vunpack.c.h.s8.bf16 %v262
    %v967 = vunpack.c.h.s8.bf16 %v263
    %v968 = vunpack.c.h.s8.bf16 %v264
    %v969 = vunpack.c.h.s8.bf16 %v265
    %v970 = vunpack.c.h.s8.bf16 %v266
    %v971 = vunpack.c.h.s8.bf16 %v267
    %v972 = vunpack.c.h.s8.bf16 %v268
    %v973 = vunpack.c.h.s8.bf16 %v269
    %v974 = vunpack.c.h.s8.bf16 %v270
    %v975 = vunpack.c.h.s8.bf16 %v271
    %v976 = vunpack.c.h.s8.bf16 %v272
    %v977 = vunpack.c.h.s8.bf16 %v273
    %v978 = vunpack.c.h.s8.bf16 %v274
    %v979 = vunpack.c.h.s8.bf16 %v275
    %v980 = vunpack.c.h.s8.bf16 %v276
    %v981 = vunpack.c.h.s8.bf16 %v277
    %v982 = vunpack.c.h.s8.bf16 %v278
    %v983 = vunpack.c.h.s8.bf16 %v279
    %v984 = vunpack.c.h.s8.bf16 %v280
    %v985 = vunpack.c.h.s8.bf16 %v281
    %v986 = vunpack.c.h.s8.bf16 %v282
    %v987 = vunpack.c.h.s8.bf16 %v283
    %v988 = vunpack.c.h.s8.bf16 %v284
    %v989 = vunpack.c.h.s8.bf16 %v285
    %v990 = vunpack.c.h.s8.bf16 %v286
    %v991 = vunpack.c.h.s8.bf16 %v287
    %v992 = vunpack.c.h.s8.bf16 %v288
    %v993 = vunpack.c.h.s8.bf16 %v289
    %v994 = vunpack.c.h.s8.bf16 %v290
    %v995 = vunpack.c.l.s8.bf16 %v291
    %v996 = vunpack.c.l.s8.bf16 %v292
    %v997 = vunpack.c.l.s8.bf16 %v293
    %v998 = vunpack.c.l.s8.bf16 %v294
    %v999 = vunpack.c.l.s8.bf16 %v295
    %v1000 = vunpack.c.l.s8.bf16 %v296
    %v1001 = vunpack.c.l.s8.bf16 %v297
    %v1002 = vunpack.c.l.s8.bf16 %v298
    %v1003 = vunpack.c.l.s8.bf16 %v299
    %v1004 = vunpack.c.l.s8.bf16 %v300
    %v1005 = vunpack.c.l.s8.bf16 %v301
    %v1006 = vunpack.c.l.s8.bf16 %v302
    %v1007 = vunpack.c.l.s8.bf16 %v303
    %v1008 = vunpack.c.l.s8.bf16 %v304
    %v1009 = vunpack.c.l.s8.bf16 %v305
    %v1010 = vunpack.c.l.s8.bf16 %v306
    %v1011 = vunpack.c.l.s8.bf16 %v307
    %v1012 = vunpack.c.l.s8.bf16 %v308
    %v1013 = vunpack.c.l.s8.bf16 %v309
    %v1014 = vunpack.c.l.s8.bf16 %v310
    %v1015 = vunpack.c.l.s8.bf16 %v311
    %v1016 = vunpack.c.l.s8.bf16 %v312
    %v1017 = vunpack.c.l.s8.bf16 %v313
    %v1018 = vunpack.c.l.s8.bf16 %v314
    %v1019 = vunpack.c.l.s8.bf16 %v315
    %v1020 = vunpack.c.l.s8.bf16 %v316
    %v1021 = vunpack.c.l.s8.bf16 %v317
    %v1022 = vunpack.c.l.s8.bf16 %v318
    %v1023 = vunpack.c.l.s8.bf16 %v319
    %v1024 = vunpack.c.l.s8.bf16 %v320
    %v1025 = vunpack.c.l.s8.bf16 %v321
    %v1026 = vunpack.c.l.s8.bf16 %v322
    %v1027 = vunpack.c.h.s8.bf16 %v291
    %v1028 = vunpack.c.h.s8.bf16 %v292
    %v1029 = vunpack.c.h.s8.bf16 %v293
    %v1030 = vunpack.c.h.s8.bf16 %v294
    %v1031 = vunpack.c.h.s8.bf16 %v295
    %v1032 = vunpack.c.h.s8.bf16 %v296
    %v1033 = vunpack.c.h.s8.bf16 %v297
    %v1034 = vunpack.c.h.s8.bf16 %v298
    %v1035 = vunpack.c.h.s8.bf16 %v299
    %v1036 = vunpack.c.h.s8.bf16 %v300
    %v1037 = vunpack.c.h.s8.bf16 %v301
    %v1038 = vunpack.c.h.s8.bf16 %v302
    %v1039 = vunpack.c.h.s8.bf16 %v303
    %v1040 = vunpack.c.h.s8.bf16 %v304
    %v1041 = vunpack.c.h.s8.bf16 %v305
    %v1042 = vunpack.c.h.s8.bf16 %v306
    %v1043 = vunpack.c.h.s8.bf16 %v307
    %v1044 = vunpack.c.h.s8.bf16 %v308
    %v1045 = vunpack.c.h.s8.bf16 %v309
    %v1046 = vunpack.c.h.s8.bf16 %v310
    %v1047 = vunpack.c.h.s8.bf16 %v311
    %v1048 = vunpack.c.h.s8.bf16 %v312
    %v1049 = vunpack.c.h.s8.bf16 %v313
    %v1050 = vunpack.c.h.s8.bf16 %v314
    %v1051 = vunpack.c.h.s8.bf16 %v315
    %v1052 = vunpack.c.h.s8.bf16 %v316
    %v1053 = vunpack.c.h.s8.bf16 %v317
    %v1054 = vunpack.c.h.s8.bf16 %v318
    %v1055 = vunpack.c.h.s8.bf16 %v319
    %v1056 = vunpack.c.h.s8.bf16 %v320
    %v1057 = vunpack.c.h.s8.bf16 %v321
    %v1058 = vunpack.c.h.s8.bf16 %v322
    %v1059 = vunpack.c.l.s8.bf16 %v323
    %v1060 = vunpack.c.l.s8.bf16 %v324
    %v1061 = vunpack.c.l.s8.bf16 %v325
    %v1062 = vunpack.c.l.s8.bf16 %v326
    %v1063 = vunpack.c.l.s8.bf16 %v327
    %v1064 = vunpack.c.l.s8.bf16 %v328
    %v1065 = vunpack.c.l.s8.bf16 %v329
    %v1066 = vunpack.c.l.s8.bf16 %v330
    %v1067 = vunpack.c.l.s8.bf16 %v331
    %v1068 = vunpack.c.l.s8.bf16 %v332
    %v1069 = vunpack.c.l.s8.bf16 %v333
    %v1070 = vunpack.c.l.s8.bf16 %v334
    %v1071 = vunpack.c.l.s8.bf16 %v335
    %v1072 = vunpack.c.l.s8.bf16 %v336
    %v1073 = vunpack.c.l.s8.bf16 %v337
    %v1074 = vunpack.c.l.s8.bf16 %v338
    %v1075 = vunpack.c.l.s8.bf16 %v339
    %v1076 = vunpack.c.l.s8.bf16 %v340
    %v1077 = vunpack.c.l.s8.bf16 %v341
    %v1078 = vunpack.c.l.s8.bf16 %v342
    %v1079 = vunpack.c.l.s8.bf16 %v343
    %v1080 = vunpack.c.l.s8.bf16 %v344
    %v1081 = vunpack.c.l.s8.bf16 %v345
    %v1082 = vunpack.c.l.s8.bf16 %v346
    %v1083 = vunpack.c.l.s8.bf16 %v347
    %v1084 = vunpack.c.l.s8.bf16 %v348
    %v1085 = vunpack.c.l.s8.bf16 %v349
    %v1086 = vunpack.c.l.s8.bf16 %v350
    %v1087 = vunpack.c.l.s8.bf16 %v351
    %v1088 = vunpack.c.l.s8.bf16 %v352
    %v1089 = vunpack.c.l.s8.bf16 %v353
    %v1090 = vunpack.c.l.s8.bf16 %v354
    %v1091 = vunpack.c.h.s8.bf16 %v323
    %v1092 = vunpack.c.h.s8.bf16 %v324
    %v1093 = vunpack.c.h.s8.bf16 %v325
    %v1094 = vunpack.c.h.s8.bf16 %v326
    %v1095 = vunpack.c.h.s8.bf16 %v327
    %v1096 = vunpack.c.h.s8.bf16 %v328
    %v1097 = vunpack.c.h.s8.bf16 %v329
    %v1098 = vunpack.c.h.s8.bf16 %v330
    %v1099 = vunpack.c.h.s8.bf16 %v331
    %v1100 = vunpack.c.h.s8.bf16 %v332
    %v1101 = vunpack.c.h.s8.bf16 %v333
    %v1102 = vunpack.c.h.s8.bf16 %v334
    %v1103 = vunpack.c.h.s8.bf16 %v335
    %v1104 = vunpack.c.h.s8.bf16 %v336
    %v1105 = vunpack.c.h.s8.bf16 %v337
    %v1106 = vunpack.c.h.s8.bf16 %v338
    %v1107 = vunpack.c.h.s8.bf16 %v339
    %v1108 = vunpack.c.h.s8.bf16 %v340
    %v1109 = vunpack.c.h.s8.bf16 %v341
    %v1110 = vunpack.c.h.s8.bf16 %v342
    %v1111 = vunpack.c.h.s8.bf16 %v343
    %v1112 = vunpack.c.h.s8.bf16 %v344
    %v1113 = vunpack.c.h.s8.bf16 %v345
    %v1114 = vunpack.c.h.s8.bf16 %v346
    %v1115 = vunpack.c.h.s8.bf16 %v347
    %v1116 = vunpack.c.h.s8.bf16 %v348
    %v1117 = vunpack.c.h.s8.bf16 %v349
    %v1118 = vunpack.c.h.s8.bf16 %v350
    %v1119 = vunpack.c.h.s8.bf16 %v351
    %v1120 = vunpack.c.h.s8.bf16 %v352
    %v1121 = vunpack.c.h.s8.bf16 %v353
    %v1122 = vunpack.c.h.s8.bf16 %v354
    %v1123 = vunpack.c.l.s8.bf16 %v355
    %v1124 = vunpack.c.l.s8.bf16 %v356
    %v1125 = vunpack.c.l.s8.bf16 %v357
    %v1126 = vunpack.c.l.s8.bf16 %v358
    %v1127 = vunpack.c.l.s8.bf16 %v359
    %v1128 = vunpack.c.l.s8.bf16 %v360
    %v1129 = vunpack.c.l.s8.bf16 %v361
    %v1130 = vunpack.c.l.s8.bf16 %v362
    %v1131 = vunpack.c.l.s8.bf16 %v363
    %v1132 = vunpack.c.l.s8.bf16 %v364
    %v1133 = vunpack.c.l.s8.bf16 %v365
    %v1134 = vunpack.c.l.s8.bf16 %v366
    %v1135 = vunpack.c.l.s8.bf16 %v367
    %v1136 = vunpack.c.l.s8.bf16 %v368
    %v1137 = vunpack.c.l.s8.bf16 %v369
    %v1138 = vunpack.c.l.s8.bf16 %v370
    %v1139 = vunpack.c.l.s8.bf16 %v371
    %v1140 = vunpack.c.l.s8.bf16 %v372
    %v1141 = vunpack.c.l.s8.bf16 %v373
    %v1142 = vunpack.c.l.s8.bf16 %v374
    %v1143 = vunpack.c.l.s8.bf16 %v375
    %v1144 = vunpack.c.l.s8.bf16 %v376
    %v1145 = vunpack.c.l.s8.bf16 %v377
    %v1146 = vunpack.c.l.s8.bf16 %v378
    %v1147 = vunpack.c.l.s8.bf16 %v379
    %v1148 = vunpack.c.l.s8.bf16 %v380
    %v1149 = vunpack.c.l.s8.bf16 %v381
    %v1150 = vunpack.c.l.s8.bf16 %v382
    %v1151 = vunpack.c.l.s8.bf16 %v383
    %v1152 = vunpack.c.l.s8.bf16 %v384
    %v1153 = vunpack.c.l.s8.bf16 %v385
    %v1154 = vunpack.c.l.s8.bf16 %v386
    %v1155 = vunpack.c.h.s8.bf16 %v355
    %v1156 = vunpack.c.h.s8.bf16 %v356
    %v1157 = vunpack.c.h.s8.bf16 %v357
    %v1158 = vunpack.c.h.s8.bf16 %v358
    %v1159 = vunpack.c.h.s8.bf16 %v359
    %v1160 = vunpack.c.h.s8.bf16 %v360
    %v1161 = vunpack.c.h.s8.bf16 %v361
    %v1162 = vunpack.c.h.s8.bf16 %v362
    %v1163 = vunpack.c.h.s8.bf16 %v363
    %v1164 = vunpack.c.h.s8.bf16 %v364
    %v1165 = vunpack.c.h.s8.bf16 %v365
    %v1166 = vunpack.c.h.s8.bf16 %v366
    %v1167 = vunpack.c.h.s8.bf16 %v367
    %v1168 = vunpack.c.h.s8.bf16 %v368
    %v1169 = vunpack.c.h.s8.bf16 %v369
    %v1170 = vunpack.c.h.s8.bf16 %v370
    %v1171 = vunpack.c.h.s8.bf16 %v371
    %v1172 = vunpack.c.h.s8.bf16 %v372
    %v1173 = vunpack.c.h.s8.bf16 %v373
    %v1174 = vunpack.c.h.s8.bf16 %v374
    %v1175 = vunpack.c.h.s8.bf16 %v375
    %v1176 = vunpack.c.h.s8.bf16 %v376
    %v1177 = vunpack.c.h.s8.bf16 %v377
    %v1178 = vunpack.c.h.s8.bf16 %v378
    %v1179 = vunpack.c.h.s8.bf16 %v379
    %v1180 = vunpack.c.h.s8.bf16 %v380
    %v1181 = vunpack.c.h.s8.bf16 %v381
    %v1182 = vunpack.c.h.s8.bf16 %v382
    %v1183 = vunpack.c.h.s8.bf16 %v383
    %v1184 = vunpack.c.h.s8.bf16 %v384
    %v1185 = vunpack.c.h.s8.bf16 %v385
    %v1186 = vunpack.c.h.s8.bf16 %v386
    %v1187 = vunpack.c.l.s8.bf16 %v387
    %v1188 = vunpack.c.l.s8.bf16 %v388
    %v1189 = vunpack.c.l.s8.bf16 %v389
    %v1190 = vunpack.c.l.s8.bf16 %v390
    %v1191 = vunpack.c.l.s8.bf16 %v391
    %v1192 = vunpack.c.l.s8.bf16 %v392
    %v1193 = vunpack.c.l.s8.bf16 %v393
    %v1194 = vunpack.c.l.s8.bf16 %v394
    %v1195 = vunpack.c.l.s8.bf16 %v395
    %v1196 = vunpack.c.l.s8.bf16 %v396
    %v1197 = vunpack.c.l.s8.bf16 %v397
    %v1198 = vunpack.c.l.s8.bf16 %v398
    %v1199 = vunpack.c.l.s8.bf16 %v399
    %v1200 = vunpack.c.l.s8.bf16 %v400
    %v1201 = vunpack.c.l.s8.bf16 %v401
    %v1202 = vunpack.c.l.s8.bf16 %v402
    %v1203 = vunpack.c.l.s8.bf16 %v403
    %v1204 = vunpack.c.l.s8.bf16 %v404
    %v1205 = vunpack.c.l.s8.bf16 %v405
    %v1206 = vunpack.c.l.s8.bf16 %v406
    %v1207 = vunpack.c.l.s8.bf16 %v407
    %v1208 = vunpack.c.l.s8.bf16 %v408
    %v1209 = vunpack.c.l.s8.bf16 %v409
    %v1210 = vunpack.c.l.s8.bf16 %v410
    %v1211 = vunpack.c.l.s8.bf16 %v411
    %v1212 = vunpack.c.l.s8.bf16 %v412
    %v1213 = vunpack.c.l.s8.bf16 %v413
    %v1214 = vunpack.c.l.s8.bf16 %v414
    %v1215 = vunpack.c.l.s8.bf16 %v415
    %v1216 = vunpack.c.l.s8.bf16 %v416
    %v1217 = vunpack.c.l.s8.bf16 %v417
    %v1218 = vunpack.c.l.s8.bf16 %v418
    %v1219 = vunpack.c.h.s8.bf16 %v387
    %v1220 = vunpack.c.h.s8.bf16 %v388
    %v1221 = vunpack.c.h.s8.bf16 %v389
    %v1222 = vunpack.c.h.s8.bf16 %v390
    %v1223 = vunpack.c.h.s8.bf16 %v391
    %v1224 = vunpack.c.h.s8.bf16 %v392
    %v1225 = vunpack.c.h.s8.bf16 %v393
    %v1226 = vunpack.c.h.s8.bf16 %v394
    %v1227 = vunpack.c.h.s8.bf16 %v395
    %v1228 = vunpack.c.h.s8.bf16 %v396
    %v1229 = vunpack.c.h.s8.bf16 %v397
    %v1230 = vunpack.c.h.s8.bf16 %v398
    %v1231 = vunpack.c.h.s8.bf16 %v399
    %v1232 = vunpack.c.h.s8.bf16 %v400
    %v1233 = vunpack.c.h.s8.bf16 %v401
    %v1234 = vunpack.c.h.s8.bf16 %v402
    %v1235 = vunpack.c.h.s8.bf16 %v403
    %v1236 = vunpack.c.h.s8.bf16 %v404
    %v1237 = vunpack.c.h.s8.bf16 %v405
    %v1238 = vunpack.c.h.s8.bf16 %v406
    %v1239 = vunpack.c.h.s8.bf16 %v407
    %v1240 = vunpack.c.h.s8.bf16 %v408
    %v1241 = vunpack.c.h.s8.bf16 %v409
    %v1242 = vunpack.c.h.s8.bf16 %v410
    %v1243 = vunpack.c.h.s8.bf16 %v411
    %v1244 = vunpack.c.h.s8.bf16 %v412
    %v1245 = vunpack.c.h.s8.bf16 %v413
    %v1246 = vunpack.c.h.s8.bf16 %v414
    %v1247 = vunpack.c.h.s8.bf16 %v415
    %v1248 = vunpack.c.h.s8.bf16 %v416
    %v1249 = vunpack.c.h.s8.bf16 %v417
    %v1250 = vunpack.c.h.s8.bf16 %v418
    %v1251 = vunpack.c.l.s8.bf16 %v419
    %v1252 = vunpack.c.l.s8.bf16 %v420
    %v1253 = vunpack.c.l.s8.bf16 %v421
    %v1254 = vunpack.c.l.s8.bf16 %v422
    %v1255 = vunpack.c.l.s8.bf16 %v423
    %v1256 = vunpack.c.l.s8.bf16 %v424
    %v1257 = vunpack.c.l.s8.bf16 %v425
    %v1258 = vunpack.c.l.s8.bf16 %v426
    %v1259 = vunpack.c.l.s8.bf16 %v427
    %v1260 = vunpack.c.l.s8.bf16 %v428
    %v1261 = vunpack.c.l.s8.bf16 %v429
    %v1262 = vunpack.c.l.s8.bf16 %v430
    %v1263 = vunpack.c.l.s8.bf16 %v431
    %v1264 = vunpack.c.l.s8.bf16 %v432
    %v1265 = vunpack.c.l.s8.bf16 %v433
    %v1266 = vunpack.c.l.s8.bf16 %v434
    %v1267 = vunpack.c.l.s8.bf16 %v435
    %v1268 = vunpack.c.l.s8.bf16 %v436
    %v1269 = vunpack.c.l.s8.bf16 %v437
    %v1270 = vunpack.c.l.s8.bf16 %v438
    %v1271 = vunpack.c.l.s8.bf16 %v439
    %v1272 = vunpack.c.l.s8.bf16 %v440
    %v1273 = vunpack.c.l.s8.bf16 %v441
    %v1274 = vunpack.c.l.s8.bf16 %v442
    %v1275 = vunpack.c.l.s8.bf16 %v443
    %v1276 = vunpack.c.l.s8.bf16 %v444
    %v1277 = vunpack.c.l.s8.bf16 %v445
    %v1278 = vunpack.c.l.s8.bf16 %v446
    %v1279 = vunpack.c.l.s8.bf16 %v447
    %v1280 = vunpack.c.l.s8.bf16 %v448
    %v1281 = vunpack.c.l.s8.bf16 %v449
    %v1282 = vunpack.c.l.s8.bf16 %v450
    %v1283 = vunpack.c.h.s8.bf16 %v419
    %v1284 = vunpack.c.h.s8.bf16 %v420
    %v1285 = vunpack.c.h.s8.bf16 %v421
    %v1286 = vunpack.c.h.s8.bf16 %v422
    %v1287 = vunpack.c.h.s8.bf16 %v423
    %v1288 = vunpack.c.h.s8.bf16 %v424
    %v1289 = vunpack.c.h.s8.bf16 %v425
    %v1290 = vunpack.c.h.s8.bf16 %v426
    %v1291 = vunpack.c.h.s8.bf16 %v427
    %v1292 = vunpack.c.h.s8.bf16 %v428
    %v1293 = vunpack.c.h.s8.bf16 %v429
    %v1294 = vunpack.c.h.s8.bf16 %v430
    %v1295 = vunpack.c.h.s8.bf16 %v431
    %v1296 = vunpack.c.h.s8.bf16 %v432
    %v1297 = vunpack.c.h.s8.bf16 %v433
    %v1298 = vunpack.c.h.s8.bf16 %v434
    %v1299 = vunpack.c.h.s8.bf16 %v435
    %v1300 = vunpack.c.h.s8.bf16 %v436
    %v1301 = vunpack.c.h.s8.bf16 %v437
    %v1302 = vunpack.c.h.s8.bf16 %v438
    %v1303 = vunpack.c.h.s8.bf16 %v439
    %v1304 = vunpack.c.h.s8.bf16 %v440
    %v1305 = vunpack.c.h.s8.bf16 %v441
    %v1306 = vunpack.c.h.s8.bf16 %v442
    %v1307 = vunpack.c.h.s8.bf16 %v443
    %v1308 = vunpack.c.h.s8.bf16 %v444
    %v1309 = vunpack.c.h.s8.bf16 %v445
    %v1310 = vunpack.c.h.s8.bf16 %v446
    %v1311 = vunpack.c.h.s8.bf16 %v447
    %v1312 = vunpack.c.h.s8.bf16 %v448
    %v1313 = vunpack.c.h.s8.bf16 %v449
    %v1314 = vunpack.c.h.s8.bf16 %v450
    %v1315 = vunpack.c.l.s8.bf16 %v451
    %v1316 = vunpack.c.l.s8.bf16 %v452
    %v1317 = vunpack.c.l.s8.bf16 %v453
    %v1318 = vunpack.c.l.s8.bf16 %v454
    %v1319 = vunpack.c.l.s8.bf16 %v455
    %v1320 = vunpack.c.l.s8.bf16 %v456
    %v1321 = vunpack.c.l.s8.bf16 %v457
    %v1322 = vunpack.c.l.s8.bf16 %v458
    %v1323 = vunpack.c.l.s8.bf16 %v459
    %v1324 = vunpack.c.l.s8.bf16 %v460
    %v1325 = vunpack.c.l.s8.bf16 %v461
    %v1326 = vunpack.c.l.s8.bf16 %v462
    %v1327 = vunpack.c.l.s8.bf16 %v463
    %v1328 = vunpack.c.l.s8.bf16 %v464
    %v1329 = vunpack.c.l.s8.bf16 %v465
    %v1330 = vunpack.c.l.s8.bf16 %v466
    %v1331 = vunpack.c.l.s8.bf16 %v467
    %v1332 = vunpack.c.l.s8.bf16 %v468
    %v1333 = vunpack.c.l.s8.bf16 %v469
    %v1334 = vunpack.c.l.s8.bf16 %v470
    %v1335 = vunpack.c.l.s8.bf16 %v471
    %v1336 = vunpack.c.l.s8.bf16 %v472
    %v1337 = vunpack.c.l.s8.bf16 %v473
    %v1338 = vunpack.c.l.s8.bf16 %v474
    %v1339 = vunpack.c.l.s8.bf16 %v475
    %v1340 = vunpack.c.l.s8.bf16 %v476
    %v1341 = vunpack.c.l.s8.bf16 %v477
    %v1342 = vunpack.c.l.s8.bf16 %v478
    %v1343 = vunpack.c.l.s8.bf16 %v479
    %v1344 = vunpack.c.l.s8.bf16 %v480
    %v1345 = vunpack.c.l.s8.bf16 %v481
    %v1346 = vunpack.c.l.s8.bf16 %v482
    %v1347 = vunpack.c.h.s8.bf16 %v451
    %v1348 = vunpack.c.h.s8.bf16 %v452
    %v1349 = vunpack.c.h.s8.bf16 %v453
    %v1350 = vunpack.c.h.s8.bf16 %v454
    %v1351 = vunpack.c.h.s8.bf16 %v455
    %v1352 = vunpack.c.h.s8.bf16 %v456
    %v1353 = vunpack.c.h.s8.bf16 %v457
    %v1354 = vunpack.c.h.s8.bf16 %v458
    %v1355 = vunpack.c.h.s8.bf16 %v459
    %v1356 = vunpack.c.h.s8.bf16 %v460
    %v1357 = vunpack.c.h.s8.bf16 %v461
    %v1358 = vunpack.c.h.s8.bf16 %v462
    %v1359 = vunpack.c.h.s8.bf16 %v463
    %v1360 = vunpack.c.h.s8.bf16 %v464
    %v1361 = vunpack.c.h.s8.bf16 %v465
    %v1362 = vunpack.c.h.s8.bf16 %v466
    %v1363 = vunpack.c.h.s8.bf16 %v467
    %v1364 = vunpack.c.h.s8.bf16 %v468
    %v1365 = vunpack.c.h.s8.bf16 %v469
    %v1366 = vunpack.c.h.s8.bf16 %v470
    %v1367 = vunpack.c.h.s8.bf16 %v471
    %v1368 = vunpack.c.h.s8.bf16 %v472
    %v1369 = vunpack.c.h.s8.bf16 %v473
    %v1370 = vunpack.c.h.s8.bf16 %v474
    %v1371 = vunpack.c.h.s8.bf16 %v475
    %v1372 = vunpack.c.h.s8.bf16 %v476
    %v1373 = vunpack.c.h.s8.bf16 %v477
    %v1374 = vunpack.c.h.s8.bf16 %v478
    %v1375 = vunpack.c.h.s8.bf16 %v479
    %v1376 = vunpack.c.h.s8.bf16 %v480
    %v1377 = vunpack.c.h.s8.bf16 %v481
    %v1378 = vunpack.c.h.s8.bf16 %v482
    %v1379 = vunpack.c.l.s8.bf16 %v483
    %v1380 = vunpack.c.l.s8.bf16 %v484
    %v1381 = vunpack.c.l.s8.bf16 %v485
    %v1382 = vunpack.c.l.s8.bf16 %v486
    %v1383 = vunpack.c.l.s8.bf16 %v487
    %v1384 = vunpack.c.l.s8.bf16 %v488
    %v1385 = vunpack.c.l.s8.bf16 %v489
    %v1386 = vunpack.c.l.s8.bf16 %v490
    %v1387 = vunpack.c.l.s8.bf16 %v491
    %v1388 = vunpack.c.l.s8.bf16 %v492
    %v1389 = vunpack.c.l.s8.bf16 %v493
    %v1390 = vunpack.c.l.s8.bf16 %v494
    %v1391 = vunpack.c.l.s8.bf16 %v495
    %v1392 = vunpack.c.l.s8.bf16 %v496
    %v1393 = vunpack.c.l.s8.bf16 %v497
    %v1394 = vunpack.c.l.s8.bf16 %v498
    %v1395 = vunpack.c.l.s8.bf16 %v499
    %v1396 = vunpack.c.l.s8.bf16 %v500
    %v1397 = vunpack.c.l.s8.bf16 %v501
    %v1398 = vunpack.c.l.s8.bf16 %v502
    %v1399 = vunpack.c.l.s8.bf16 %v503
    %v1400 = vunpack.c.l.s8.bf16 %v504
    %v1401 = vunpack.c.l.s8.bf16 %v505
    %v1402 = vunpack.c.l.s8.bf16 %v506
    %v1403 = vunpack.c.l.s8.bf16 %v507
    %v1404 = vunpack.c.l.s8.bf16 %v508
    %v1405 = vunpack.c.l.s8.bf16 %v509
    %v1406 = vunpack.c.l.s8.bf16 %v510
    %v1407 = vunpack.c.l.s8.bf16 %v511
    %v1408 = vunpack.c.l.s8.bf16 %v512
    %v1409 = vunpack.c.l.s8.bf16 %v513
    %v1410 = vunpack.c.l.s8.bf16 %v514
    %v1411 = vunpack.c.h.s8.bf16 %v483
    %v1412 = vunpack.c.h.s8.bf16 %v484
    %v1413 = vunpack.c.h.s8.bf16 %v485
    %v1414 = vunpack.c.h.s8.bf16 %v486
    %v1415 = vunpack.c.h.s8.bf16 %v487
    %v1416 = vunpack.c.h.s8.bf16 %v488
    %v1417 = vunpack.c.h.s8.bf16 %v489
    %v1418 = vunpack.c.h.s8.bf16 %v490
    %v1419 = vunpack.c.h.s8.bf16 %v491
    %v1420 = vunpack.c.h.s8.bf16 %v492
    %v1421 = vunpack.c.h.s8.bf16 %v493
    %v1422 = vunpack.c.h.s8.bf16 %v494
    %v1423 = vunpack.c.h.s8.bf16 %v495
    %v1424 = vunpack.c.h.s8.bf16 %v496
    %v1425 = vunpack.c.h.s8.bf16 %v497
    %v1426 = vunpack.c.h.s8.bf16 %v498
    %v1427 = vunpack.c.h.s8.bf16 %v499
    %v1428 = vunpack.c.h.s8.bf16 %v500
    %v1429 = vunpack.c.h.s8.bf16 %v501
    %v1430 = vunpack.c.h.s8.bf16 %v502
    %v1431 = vunpack.c.h.s8.bf16 %v503
    %v1432 = vunpack.c.h.s8.bf16 %v504
    %v1433 = vunpack.c.h.s8.bf16 %v505
    %v1434 = vunpack.c.h.s8.bf16 %v506
    %v1435 = vunpack.c.h.s8.bf16 %v507
    %v1436 = vunpack.c.h.s8.bf16 %v508
    %v1437 = vunpack.c.h.s8.bf16 %v509
    %v1438 = vunpack.c.h.s8.bf16 %v510
    %v1439 = vunpack.c.h.s8.bf16 %v511
    %v1440 = vunpack.c.h.s8.bf16 %v512
    %v1441 = vunpack.c.h.s8.bf16 %v513
    %v1442 = vunpack.c.h.s8.bf16 %v514
    %v1443 = vunpack.c.l.s8.bf16 %v515
    %v1444 = vunpack.c.l.s8.bf16 %v516
    %v1445 = vunpack.c.l.s8.bf16 %v517
    %v1446 = vunpack.c.l.s8.bf16 %v518
    %v1447 = vunpack.c.l.s8.bf16 %v519
    %v1448 = vunpack.c.l.s8.bf16 %v520
    %v1449 = vunpack.c.l.s8.bf16 %v521
    %v1450 = vunpack.c.l.s8.bf16 %v522
    %v1451 = vunpack.c.l.s8.bf16 %v523
    %v1452 = vunpack.c.l.s8.bf16 %v524
    %v1453 = vunpack.c.l.s8.bf16 %v525
    %v1454 = vunpack.c.l.s8.bf16 %v526
    %v1455 = vunpack.c.l.s8.bf16 %v527
    %v1456 = vunpack.c.l.s8.bf16 %v528
    %v1457 = vunpack.c.l.s8.bf16 %v529
    %v1458 = vunpack.c.l.s8.bf16 %v530
    %v1459 = vunpack.c.l.s8.bf16 %v531
    %v1460 = vunpack.c.l.s8.bf16 %v532
    %v1461 = vunpack.c.l.s8.bf16 %v533
    %v1462 = vunpack.c.l.s8.bf16 %v534
    %v1463 = vunpack.c.l.s8.bf16 %v535
    %v1464 = vunpack.c.l.s8.bf16 %v536
    %v1465 = vunpack.c.l.s8.bf16 %v537
    %v1466 = vunpack.c.l.s8.bf16 %v538
    %v1467 = vunpack.c.l.s8.bf16 %v539
    %v1468 = vunpack.c.l.s8.bf16 %v540
    %v1469 = vunpack.c.l.s8.bf16 %v541
    %v1470 = vunpack.c.l.s8.bf16 %v542
    %v1471 = vunpack.c.l.s8.bf16 %v543
    %v1472 = vunpack.c.l.s8.bf16 %v544
    %v1473 = vunpack.c.l.s8.bf16 %v545
    %v1474 = vunpack.c.l.s8.bf16 %v546
    %v1475 = vunpack.c.h.s8.bf16 %v515
    %v1476 = vunpack.c.h.s8.bf16 %v516
    %v1477 = vunpack.c.h.s8.bf16 %v517
    %v1478 = vunpack.c.h.s8.bf16 %v518
    %v1479 = vunpack.c.h.s8.bf16 %v519
    %v1480 = vunpack.c.h.s8.bf16 %v520
    %v1481 = vunpack.c.h.s8.bf16 %v521
    %v1482 = vunpack.c.h.s8.bf16 %v522
    %v1483 = vunpack.c.h.s8.bf16 %v523
    %v1484 = vunpack.c.h.s8.bf16 %v524
    %v1485 = vunpack.c.h.s8.bf16 %v525
    %v1486 = vunpack.c.h.s8.bf16 %v526
    %v1487 = vunpack.c.h.s8.bf16 %v527
    %v1488 = vunpack.c.h.s8.bf16 %v528
    %v1489 = vunpack.c.h.s8.bf16 %v529
    %v1490 = vunpack.c.h.s8.bf16 %v530
    %v1491 = vunpack.c.h.s8.bf16 %v531
    %v1492 = vunpack.c.h.s8.bf16 %v532
    %v1493 = vunpack.c.h.s8.bf16 %v533
    %v1494 = vunpack.c.h.s8.bf16 %v534
    %v1495 = vunpack.c.h.s8.bf16 %v535
    %v1496 = vunpack.c.h.s8.bf16 %v536
    %v1497 = vunpack.c.h.s8.bf16 %v537
    %v1498 = vunpack.c.h.s8.bf16 %v538
    %v1499 = vunpack.c.h.s8.bf16 %v539
    %v1500 = vunpack.c.h.s8.bf16 %v540
    %v1501 = vunpack.c.h.s8.bf16 %v541
    %v1502 = vunpack.c.h.s8.bf16 %v542
    %v1503 = vunpack.c.h.s8.bf16 %v543
    %v1504 = vunpack.c.h.s8.bf16 %v544
    %v1505 = vunpack.c.h.s8.bf16 %v545
    %v1506 = vunpack.c.h.s8.bf16 %v546
    %v1507 = vunpack.c.l.s8.bf16 %v547
    %v1508 = vunpack.c.l.s8.bf16 %v548
    %v1509 = vunpack.c.l.s8.bf16 %v549
    %v1510 = vunpack.c.l.s8.bf16 %v550
    %v1511 = vunpack.c.l.s8.bf16 %v551
    %v1512 = vunpack.c.l.s8.bf16 %v552
    %v1513 = vunpack.c.l.s8.bf16 %v553
    %v1514 = vunpack.c.l.s8.bf16 %v554
    %v1515 = vunpack.c.l.s8.bf16 %v555
    %v1516 = vunpack.c.l.s8.bf16 %v556
    %v1517 = vunpack.c.l.s8.bf16 %v557
    %v1518 = vunpack.c.l.s8.bf16 %v558
    %v1519 = vunpack.c.l.s8.bf16 %v559
    %v1520 = vunpack.c.l.s8.bf16 %v560
    %v1521 = vunpack.c.l.s8.bf16 %v561
    %v1522 = vunpack.c.l.s8.bf16 %v562
    %v1523 = vunpack.c.l.s8.bf16 %v563
    %v1524 = vunpack.c.l.s8.bf16 %v564
    %v1525 = vunpack.c.l.s8.bf16 %v565
    %v1526 = vunpack.c.l.s8.bf16 %v566
    %v1527 = vunpack.c.l.s8.bf16 %v567
    %v1528 = vunpack.c.l.s8.bf16 %v568
    %v1529 = vunpack.c.l.s8.bf16 %v569
    %v1530 = vunpack.c.l.s8.bf16 %v570
    %v1531 = vunpack.c.l.s8.bf16 %v571
    %v1532 = vunpack.c.l.s8.bf16 %v572
    %v1533 = vunpack.c.l.s8.bf16 %v573
    %v1534 = vunpack.c.l.s8.bf16 %v574
    %v1535 = vunpack.c.l.s8.bf16 %v575
    %v1536 = vunpack.c.l.s8.bf16 %v576
    %v1537 = vunpack.c.l.s8.bf16 %v577
    %v1538 = vunpack.c.l.s8.bf16 %v578
    %v1539 = vunpack.c.h.s8.bf16 %v547
    %v1540 = vunpack.c.h.s8.bf16 %v548
    %v1541 = vunpack.c.h.s8.bf16 %v549
    %v1542 = vunpack.c.h.s8.bf16 %v550
    %v1543 = vunpack.c.h.s8.bf16 %v551
    %v1544 = vunpack.c.h.s8.bf16 %v552
    %v1545 = vunpack.c.h.s8.bf16 %v553
    %v1546 = vunpack.c.h.s8.bf16 %v554
    %v1547 = vunpack.c.h.s8.bf16 %v555
    %v1548 = vunpack.c.h.s8.bf16 %v556
    %v1549 = vunpack.c.h.s8.bf16 %v557
    %v1550 = vunpack.c.h.s8.bf16 %v558
    %v1551 = vunpack.c.h.s8.bf16 %v559
    %v1552 = vunpack.c.h.s8.bf16 %v560
    %v1553 = vunpack.c.h.s8.bf16 %v561
    %v1554 = vunpack.c.h.s8.bf16 %v562
    %v1555 = vunpack.c.h.s8.bf16 %v563
    %v1556 = vunpack.c.h.s8.bf16 %v564
    %v1557 = vunpack.c.h.s8.bf16 %v565
    %v1558 = vunpack.c.h.s8.bf16 %v566
    %v1559 = vunpack.c.h.s8.bf16 %v567
    %v1560 = vunpack.c.h.s8.bf16 %v568
    %v1561 = vunpack.c.h.s8.bf16 %v569
    %v1562 = vunpack.c.h.s8.bf16 %v570
    %v1563 = vunpack.c.h.s8.bf16 %v571
    %v1564 = vunpack.c.h.s8.bf16 %v572
    %v1565 = vunpack.c.h.s8.bf16 %v573
    %v1566 = vunpack.c.h.s8.bf16 %v574
    %v1567 = vunpack.c.h.s8.bf16 %v575
    %v1568 = vunpack.c.h.s8.bf16 %v576
    %v1569 = vunpack.c.h.s8.bf16 %v577
    %v1570 = vunpack.c.h.s8.bf16 %v578
    %v1571 = vunpack.c.l.s8.bf16 %v579
    %v1572 = vunpack.c.l.s8.bf16 %v580
    %v1573 = vunpack.c.l.s8.bf16 %v581
    %v1574 = vunpack.c.l.s8.bf16 %v582
    %v1575 = vunpack.c.l.s8.bf16 %v583
    %v1576 = vunpack.c.l.s8.bf16 %v584
    %v1577 = vunpack.c.l.s8.bf16 %v585
    %v1578 = vunpack.c.l.s8.bf16 %v586
    %v1579 = vunpack.c.l.s8.bf16 %v587
    %v1580 = vunpack.c.l.s8.bf16 %v588
    %v1581 = vunpack.c.l.s8.bf16 %v589
    %v1582 = vunpack.c.l.s8.bf16 %v590
    %v1583 = vunpack.c.l.s8.bf16 %v591
    %v1584 = vunpack.c.l.s8.bf16 %v592
    %v1585 = vunpack.c.l.s8.bf16 %v593
    %v1586 = vunpack.c.l.s8.bf16 %v594
    %v1587 = vunpack.c.l.s8.bf16 %v595
    %v1588 = vunpack.c.l.s8.bf16 %v596
    %v1589 = vunpack.c.l.s8.bf16 %v597
    %v1590 = vunpack.c.l.s8.bf16 %v598
    %v1591 = vunpack.c.l.s8.bf16 %v599
    %v1592 = vunpack.c.l.s8.bf16 %v600
    %v1593 = vunpack.c.l.s8.bf16 %v601
    %v1594 = vunpack.c.l.s8.bf16 %v602
    %v1595 = vunpack.c.l.s8.bf16 %v603
    %v1596 = vunpack.c.l.s8.bf16 %v604
    %v1597 = vunpack.c.l.s8.bf16 %v605
    %v1598 = vunpack.c.l.s8.bf16 %v606
    %v1599 = vunpack.c.l.s8.bf16 %v607
    %v1600 = vunpack.c.l.s8.bf16 %v608
    %v1601 = vunpack.c.l.s8.bf16 %v609
    %v1602 = vunpack.c.l.s8.bf16 %v610
    %v1603 = vunpack.c.h.s8.bf16 %v579
    %v1604 = vunpack.c.h.s8.bf16 %v580
    %v1605 = vunpack.c.h.s8.bf16 %v581
    %v1606 = vunpack.c.h.s8.bf16 %v582
    %v1607 = vunpack.c.h.s8.bf16 %v583
    %v1608 = vunpack.c.h.s8.bf16 %v584
    %v1609 = vunpack.c.h.s8.bf16 %v585
    %v1610 = vunpack.c.h.s8.bf16 %v586
    %v1611 = vunpack.c.h.s8.bf16 %v587
    %v1612 = vunpack.c.h.s8.bf16 %v588
    %v1613 = vunpack.c.h.s8.bf16 %v589
    %v1614 = vunpack.c.h.s8.bf16 %v590
    %v1615 = vunpack.c.h.s8.bf16 %v591
    %v1616 = vunpack.c.h.s8.bf16 %v592
    %v1617 = vunpack.c.h.s8.bf16 %v593
    %v1618 = vunpack.c.h.s8.bf16 %v594
    %v1619 = vunpack.c.h.s8.bf16 %v595
    %v1620 = vunpack.c.h.s8.bf16 %v596
    %v1621 = vunpack.c.h.s8.bf16 %v597
    %v1622 = vunpack.c.h.s8.bf16 %v598
    %v1623 = vunpack.c.h.s8.bf16 %v599
    %v1624 = vunpack.c.h.s8.bf16 %v600
    %v1625 = vunpack.c.h.s8.bf16 %v601
    %v1626 = vunpack.c.h.s8.bf16 %v602
    %v1627 = vunpack.c.h.s8.bf16 %v603
    %v1628 = vunpack.c.h.s8.bf16 %v604
    %v1629 = vunpack.c.h.s8.bf16 %v605
    %v1630 = vunpack.c.h.s8.bf16 %v606
    %v1631 = vunpack.c.h.s8.bf16 %v607
    %v1632 = vunpack.c.h.s8.bf16 %v608
    %v1633 = vunpack.c.h.s8.bf16 %v609
    %v1634 = vunpack.c.h.s8.bf16 %v610
    %v1635 = vld [vmem:[#allocation2] sm:$0xff]
    %v1636 = vld [vmem:[#allocation2 + $0x8] sm:$0xff]
    %v1637 = vld [vmem:[#allocation2 + $0x10] sm:$0xff]
    %v1638 = vld [vmem:[#allocation2 + $0x18] sm:$0xff]
    %v1639 = vld [vmem:[#allocation2 + $0x20] sm:$0xff]
    %v1640 = vld [vmem:[#allocation2 + $0x28] sm:$0xff]
    %v1641 = vld [vmem:[#allocation2 + $0x30] sm:$0xff]
    %v1642 = vld [vmem:[#allocation2 + $0x38] sm:$0xff]
    %v1643 = vld [vmem:[#allocation2 + $0x40] sm:$0xff]
    %v1644 = vld [vmem:[#allocation2 + $0x48] sm:$0xff]
    %v1645 = vld [vmem:[#allocation2 + $0x50] sm:$0xff]
    %v1646 = vld [vmem:[#allocation2 + $0x58] sm:$0xff]
    %v1647 = vld [vmem:[#allocation2 + $0x60] sm:$0xff]
    %v1648 = vld [vmem:[#allocation2 + $0x68] sm:$0xff]
    %v1649 = vld [vmem:[#allocation2 + $0x70] sm:$0xff]
    %v1650 = vld [vmem:[#allocation2 + $0x78] sm:$0xff]
    %v1651 = vld [vmem:[#allocation2 + $0x80] sm:$0xff]
    %v1652 = vld [vmem:[#allocation2 + $0x88] sm:$0xff]
    %v1653 = vld [vmem:[#allocation2 + $0x90] sm:$0xff]
    %v1654 = vld [vmem:[#allocation2 + $0x98] sm:$0xff]
    %v1655 = vld [vmem:[#allocation2 + $0xa0] sm:$0xff]
    %v1656 = vld [vmem:[#allocation2 + $0xa8] sm:$0xff]
    %v1657 = vld [vmem:[#allocation2 + $0xb0] sm:$0xff]
    %v1658 = vld [vmem:[#allocation2 + $0xb8] sm:$0xff]
    %v1659 = vld [vmem:[#allocation2 + $0xc0] sm:$0xff]
    %v1660 = vld [vmem:[#allocation2 + $0xc8] sm:$0xff]
    %v1661 = vld [vmem:[#allocation2 + $0xd0] sm:$0xff]
    %v1662 = vld [vmem:[#allocation2 + $0xd8] sm:$0xff]
    %v1663 = vld [vmem:[#allocation2 + $0xe0] sm:$0xff]
    %v1664 = vld [vmem:[#allocation2 + $0xe8] sm:$0xff]
    %v1665 = vld [vmem:[#allocation2 + $0xf0] sm:$0xff]
    %v1666 = vld [vmem:[#allocation2 + $0xf8] sm:$0xff]
    %v1667 = vld [vmem:[#allocation2 + $0x100] sm:$0xff]
    %v1668 = vld [vmem:[#allocation2 + $0x108] sm:$0xff]
    %v1669 = vld [vmem:[#allocation2 + $0x110] sm:$0xff]
    %v1670 = vld [vmem:[#allocation2 + $0x118] sm:$0xff]
    %v1671 = vld [vmem:[#allocation2 + $0x120] sm:$0xff]
    %v1672 = vld [vmem:[#allocation2 + $0x128] sm:$0xff]
    %v1673 = vld [vmem:[#allocation2 + $0x130] sm:$0xff]
    %v1674 = vld [vmem:[#allocation2 + $0x138] sm:$0xff]
    %v1675 = vld [vmem:[#allocation2 + $0x140] sm:$0xff]
    %v1676 = vld [vmem:[#allocation2 + $0x148] sm:$0xff]
    %v1677 = vld [vmem:[#allocation2 + $0x150] sm:$0xff]
    %v1678 = vld [vmem:[#allocation2 + $0x158] sm:$0xff]
    %v1679 = vld [vmem:[#allocation2 + $0x160] sm:$0xff]
    %v1680 = vld [vmem:[#allocation2 + $0x168] sm:$0xff]
    %v1681 = vld [vmem:[#allocation2 + $0x170] sm:$0xff]
    %v1682 = vld [vmem:[#allocation2 + $0x178] sm:$0xff]
    %v1683 = vld [vmem:[#allocation2 + $0x180] sm:$0xff]
    %v1684 = vld [vmem:[#allocation2 + $0x188] sm:$0xff]
    %v1685 = vld [vmem:[#allocation2 + $0x190] sm:$0xff]
    %v1686 = vld [vmem:[#allocation2 + $0x198] sm:$0xff]
    %v1687 = vld [vmem:[#allocation2 + $0x1a0] sm:$0xff]
    %v1688 = vld [vmem:[#allocation2 + $0x1a8] sm:$0xff]
    %v1689 = vld [vmem:[#allocation2 + $0x1b0] sm:$0xff]
    %v1690 = vld [vmem:[#allocation2 + $0x1b8] sm:$0xff]
    %v1691 = vld [vmem:[#allocation2 + $0x1c0] sm:$0xff]
    %v1692 = vld [vmem:[#allocation2 + $0x1c8] sm:$0xff]
    %v1693 = vld [vmem:[#allocation2 + $0x1d0] sm:$0xff]
    %v1694 = vld [vmem:[#allocation2 + $0x1d8] sm:$0xff]
    %v1695 = vld [vmem:[#allocation2 + $0x1e0] sm:$0xff]
    %v1696 = vld [vmem:[#allocation2 + $0x1e8] sm:$0xff]
    %v1697 = vld [vmem:[#allocation2 + $0x1f0] sm:$0xff]
    %v1698 = vld [vmem:[#allocation2 + $0x1f8] sm:$0xff]
    %v1699 = vld [vmem:[%s1] sm:$0xf]
    %v1700 = vld [vmem:[%s1 + $0x4] sm:$0xf]
    %v1701 = vld [vmem:[%s1 + $0x8] sm:$0xf]
    %v1702 = vld [vmem:[%s1 + $0xc] sm:$0xf]
    %v1703 = vld [vmem:[%s1 + $0x10] sm:$0xf]
    %v1704 = vld [vmem:[%s1 + $0x14] sm:$0xf]
    %v1705 = vld [vmem:[%s1 + $0x18] sm:$0xf]
    %v1706 = vld [vmem:[%s1 + $0x1c] sm:$0xf]
    %v1707 = vld [vmem:[%s1 + $0x20] sm:$0xf]
    %v1708 = vld [vmem:[%s1 + $0x24] sm:$0xf]
    %v1709 = vld [vmem:[%s1 + $0x28] sm:$0xf]
    %v1710 = vld [vmem:[%s1 + $0x2c] sm:$0xf]
    %v1711 = vld [vmem:[%s1 + $0x30] sm:$0xf]
    %v1712 = vld [vmem:[%s1 + $0x34] sm:$0xf]
    %v1713 = vld [vmem:[%s1 + $0x38] sm:$0xf]
    %v1714 = vld [vmem:[%s1 + $0x3c] sm:$0xf]
    %v1715 = vld [vmem:[%s1 + $0x40] sm:$0xf]
    %v1716 = vld [vmem:[%s1 + $0x44] sm:$0xf]
    %v1717 = vld [vmem:[%s1 + $0x48] sm:$0xf]
    %v1718 = vld [vmem:[%s1 + $0x4c] sm:$0xf]
    %v1719 = vld [vmem:[%s1 + $0x50] sm:$0xf]
    %v1720 = vld [vmem:[%s1 + $0x54] sm:$0xf]
    %v1721 = vld [vmem:[%s1 + $0x58] sm:$0xf]
    %v1722 = vld [vmem:[%s1 + $0x5c] sm:$0xf]
    %v1723 = vld [vmem:[%s1 + $0x60] sm:$0xf]
    %v1724 = vld [vmem:[%s1 + $0x64] sm:$0xf]
    %v1725 = vld [vmem:[%s1 + $0x68] sm:$0xf]
    %v1726 = vld [vmem:[%s1 + $0x6c] sm:$0xf]
    %v1727 = vld [vmem:[%s1 + $0x70] sm:$0xf]
    %v1728 = vld [vmem:[%s1 + $0x74] sm:$0xf]
    %v1729 = vld [vmem:[%s1 + $0x78] sm:$0xf]
    %v1730 = vld [vmem:[%s1 + $0x7c] sm:$0xf]
    %v1731 = vld [vmem:[%s1 + $0x80] sm:$0xf]
    %v1732 = vld [vmem:[%s1 + $0x84] sm:$0xf]
    %v1733 = vld [vmem:[%s1 + $0x88] sm:$0xf]
    %v1734 = vld [vmem:[%s1 + $0x8c] sm:$0xf]
    %v1735 = vld [vmem:[%s1 + $0x90] sm:$0xf]
    %v1736 = vld [vmem:[%s1 + $0x94] sm:$0xf]
    %v1737 = vld [vmem:[%s1 + $0x98] sm:$0xf]
    %v1738 = vld [vmem:[%s1 + $0x9c] sm:$0xf]
    %v1739 = vld [vmem:[%s1 + $0xa0] sm:$0xf]
    %v1740 = vld [vmem:[%s1 + $0xa4] sm:$0xf]
    %v1741 = vld [vmem:[%s1 + $0xa8] sm:$0xf]
    %v1742 = vld [vmem:[%s1 + $0xac] sm:$0xf]
    %v1743 = vld [vmem:[%s1 + $0xb0] sm:$0xf]
    %v1744 = vld [vmem:[%s1 + $0xb4] sm:$0xf]
    %v1745 = vld [vmem:[%s1 + $0xb8] sm:$0xf]
    %v1746 = vld [vmem:[%s1 + $0xbc] sm:$0xf]
    %v1747 = vld [vmem:[%s1 + $0xc0] sm:$0xf]
    %v1748 = vld [vmem:[%s1 + $0xc4] sm:$0xf]
    %v1749 = vld [vmem:[%s1 + $0xc8] sm:$0xf]
    %v1750 = vld [vmem:[%s1 + $0xcc] sm:$0xf]
    %v1751 = vld [vmem:[%s1 + $0xd0] sm:$0xf]
    %v1752 = vld [vmem:[%s1 + $0xd4] sm:$0xf]
    %v1753 = vld [vmem:[%s1 + $0xd8] sm:$0xf]
    %v1754 = vld [vmem:[%s1 + $0xdc] sm:$0xf]
    %v1755 = vld [vmem:[%s1 + $0xe0] sm:$0xf]
    %v1756 = vld [vmem:[%s1 + $0xe4] sm:$0xf]
    %v1757 = vld [vmem:[%s1 + $0xe8] sm:$0xf]
    %v1758 = vld [vmem:[%s1 + $0xec] sm:$0xf]
    %v1759 = vld [vmem:[%s1 + $0xf0] sm:$0xf]
    %v1760 = vld [vmem:[%s1 + $0xf4] sm:$0xf]
    %v1761 = vld [vmem:[%s1 + $0xf8] sm:$0xf]
    %v1762 = vld [vmem:[%s1 + $0xfc] sm:$0xf]
    %v1763 = vld [vmem:[%s1 + $0x100] sm:$0xf]
    %v1764 = vld [vmem:[%s1 + $0x104] sm:$0xf]
    %v1765 = vld [vmem:[%s1 + $0x108] sm:$0xf]
    %v1766 = vld [vmem:[%s1 + $0x10c] sm:$0xf]
    %v1767 = vld [vmem:[%s1 + $0x110] sm:$0xf]
    %v1768 = vld [vmem:[%s1 + $0x114] sm:$0xf]
    %v1769 = vld [vmem:[%s1 + $0x118] sm:$0xf]
    %v1770 = vld [vmem:[%s1 + $0x11c] sm:$0xf]
    %v1771 = vld [vmem:[%s1 + $0x120] sm:$0xf]
    %v1772 = vld [vmem:[%s1 + $0x124] sm:$0xf]
    %v1773 = vld [vmem:[%s1 + $0x128] sm:$0xf]
    %v1774 = vld [vmem:[%s1 + $0x12c] sm:$0xf]
    %v1775 = vld [vmem:[%s1 + $0x130] sm:$0xf]
    %v1776 = vld [vmem:[%s1 + $0x134] sm:$0xf]
    %v1777 = vld [vmem:[%s1 + $0x138] sm:$0xf]
    %v1778 = vld [vmem:[%s1 + $0x13c] sm:$0xf]
    %v1779 = vld [vmem:[%s1 + $0x140] sm:$0xf]
    %v1780 = vld [vmem:[%s1 + $0x144] sm:$0xf]
    %v1781 = vld [vmem:[%s1 + $0x148] sm:$0xf]
    %v1782 = vld [vmem:[%s1 + $0x14c] sm:$0xf]
    %v1783 = vld [vmem:[%s1 + $0x150] sm:$0xf]
    %v1784 = vld [vmem:[%s1 + $0x154] sm:$0xf]
    %v1785 = vld [vmem:[%s1 + $0x158] sm:$0xf]
    %v1786 = vld [vmem:[%s1 + $0x15c] sm:$0xf]
    %v1787 = vld [vmem:[%s1 + $0x160] sm:$0xf]
    %v1788 = vld [vmem:[%s1 + $0x164] sm:$0xf]
    %v1789 = vld [vmem:[%s1 + $0x168] sm:$0xf]
    %v1790 = vld [vmem:[%s1 + $0x16c] sm:$0xf]
    %v1791 = vld [vmem:[%s1 + $0x170] sm:$0xf]
    %v1792 = vld [vmem:[%s1 + $0x174] sm:$0xf]
    %v1793 = vld [vmem:[%s1 + $0x178] sm:$0xf]
    %v1794 = vld [vmem:[%s1 + $0x17c] sm:$0xf]
    %v1795 = vld [vmem:[%s1 + $0x180] sm:$0xf]
    %v1796 = vld [vmem:[%s1 + $0x184] sm:$0xf]
    %v1797 = vld [vmem:[%s1 + $0x188] sm:$0xf]
    %v1798 = vld [vmem:[%s1 + $0x18c] sm:$0xf]
    %v1799 = vld [vmem:[%s1 + $0x190] sm:$0xf]
    %v1800 = vld [vmem:[%s1 + $0x194] sm:$0xf]
    %v1801 = vld [vmem:[%s1 + $0x198] sm:$0xf]
    %v1802 = vld [vmem:[%s1 + $0x19c] sm:$0xf]
    %v1803 = vld [vmem:[%s1 + $0x1a0] sm:$0xf]
    %v1804 = vld [vmem:[%s1 + $0x1a4] sm:$0xf]
    %v1805 = vld [vmem:[%s1 + $0x1a8] sm:$0xf]
    %v1806 = vld [vmem:[%s1 + $0x1ac] sm:$0xf]
    %v1807 = vld [vmem:[%s1 + $0x1b0] sm:$0xf]
    %v1808 = vld [vmem:[%s1 + $0x1b4] sm:$0xf]
    %v1809 = vld [vmem:[%s1 + $0x1b8] sm:$0xf]
    %v1810 = vld [vmem:[%s1 + $0x1bc] sm:$0xf]
    %v1811 = vld [vmem:[%s1 + $0x1c0] sm:$0xf]
    %v1812 = vld [vmem:[%s1 + $0x1c4] sm:$0xf]
    %v1813 = vld [vmem:[%s1 + $0x1c8] sm:$0xf]
    %v1814 = vld [vmem:[%s1 + $0x1cc] sm:$0xf]
    %v1815 = vld [vmem:[%s1 + $0x1d0] sm:$0xf]
    %v1816 = vld [vmem:[%s1 + $0x1d4] sm:$0xf]
    %v1817 = vld [vmem:[%s1 + $0x1d8] sm:$0xf]
    %v1818 = vld [vmem:[%s1 + $0x1dc] sm:$0xf]
    %v1819 = vld [vmem:[%s1 + $0x1e0] sm:$0xf]
    %v1820 = vld [vmem:[%s1 + $0x1e4] sm:$0xf]
    %v1821 = vld [vmem:[%s1 + $0x1e8] sm:$0xf]
    %v1822 = vld [vmem:[%s1 + $0x1ec] sm:$0xf]
    %v1823 = vld [vmem:[%s1 + $0x1f0] sm:$0xf]
    %v1824 = vld [vmem:[%s1 + $0x1f4] sm:$0xf]
    %v1825 = vld [vmem:[%s1 + $0x1f8] sm:$0xf]
    %v1826 = vld [vmem:[%s1 + $0x1fc] sm:$0xf]
    %v1827 = vld [vmem:[%s1 + $0x200] sm:$0xf]
    %v1828 = vld [vmem:[%s1 + $0x204] sm:$0xf]
    %v1829 = vld [vmem:[%s1 + $0x208] sm:$0xf]
    %v1830 = vld [vmem:[%s1 + $0x20c] sm:$0xf]
    %v1831 = vld [vmem:[%s1 + $0x210] sm:$0xf]
    %v1832 = vld [vmem:[%s1 + $0x214] sm:$0xf]
    %v1833 = vld [vmem:[%s1 + $0x218] sm:$0xf]
    %v1834 = vld [vmem:[%s1 + $0x21c] sm:$0xf]
    %v1835 = vld [vmem:[%s1 + $0x220] sm:$0xf]
    %v1836 = vld [vmem:[%s1 + $0x224] sm:$0xf]
    %v1837 = vld [vmem:[%s1 + $0x228] sm:$0xf]
    %v1838 = vld [vmem:[%s1 + $0x22c] sm:$0xf]
    %v1839 = vld [vmem:[%s1 + $0x230] sm:$0xf]
    %v1840 = vld [vmem:[%s1 + $0x234] sm:$0xf]
    %v1841 = vld [vmem:[%s1 + $0x238] sm:$0xf]
    %v1842 = vld [vmem:[%s1 + $0x23c] sm:$0xf]
    %v1843 = vld [vmem:[%s1 + $0x240] sm:$0xf]
    %v1844 = vld [vmem:[%s1 + $0x244] sm:$0xf]
    %v1845 = vld [vmem:[%s1 + $0x248] sm:$0xf]
    %v1846 = vld [vmem:[%s1 + $0x24c] sm:$0xf]
    %v1847 = vld [vmem:[%s1 + $0x250] sm:$0xf]
    %v1848 = vld [vmem:[%s1 + $0x254] sm:$0xf]
    %v1849 = vld [vmem:[%s1 + $0x258] sm:$0xf]
    %v1850 = vld [vmem:[%s1 + $0x25c] sm:$0xf]
    %v1851 = vld [vmem:[%s1 + $0x260] sm:$0xf]
    %v1852 = vld [vmem:[%s1 + $0x264] sm:$0xf]
    %v1853 = vld [vmem:[%s1 + $0x268] sm:$0xf]
    %v1854 = vld [vmem:[%s1 + $0x26c] sm:$0xf]
    %v1855 = vld [vmem:[%s1 + $0x270] sm:$0xf]
    %v1856 = vld [vmem:[%s1 + $0x274] sm:$0xf]
    %v1857 = vld [vmem:[%s1 + $0x278] sm:$0xf]
    %v1858 = vld [vmem:[%s1 + $0x27c] sm:$0xf]
    %v1859 = vld [vmem:[%s1 + $0x280] sm:$0xf]
    %v1860 = vld [vmem:[%s1 + $0x284] sm:$0xf]
    %v1861 = vld [vmem:[%s1 + $0x288] sm:$0xf]
    %v1862 = vld [vmem:[%s1 + $0x28c] sm:$0xf]
    %v1863 = vld [vmem:[%s1 + $0x290] sm:$0xf]
    %v1864 = vld [vmem:[%s1 + $0x294] sm:$0xf]
    %v1865 = vld [vmem:[%s1 + $0x298] sm:$0xf]
    %v1866 = vld [vmem:[%s1 + $0x29c] sm:$0xf]
    %v1867 = vld [vmem:[%s1 + $0x2a0] sm:$0xf]
    %v1868 = vld [vmem:[%s1 + $0x2a4] sm:$0xf]
    %v1869 = vld [vmem:[%s1 + $0x2a8] sm:$0xf]
    %v1870 = vld [vmem:[%s1 + $0x2ac] sm:$0xf]
    %v1871 = vld [vmem:[%s1 + $0x2b0] sm:$0xf]
    %v1872 = vld [vmem:[%s1 + $0x2b4] sm:$0xf]
    %v1873 = vld [vmem:[%s1 + $0x2b8] sm:$0xf]
    %v1874 = vld [vmem:[%s1 + $0x2bc] sm:$0xf]
    %v1875 = vld [vmem:[%s1 + $0x2c0] sm:$0xf]
    %v1876 = vld [vmem:[%s1 + $0x2c4] sm:$0xf]
    %v1877 = vld [vmem:[%s1 + $0x2c8] sm:$0xf]
    %v1878 = vld [vmem:[%s1 + $0x2cc] sm:$0xf]
    %v1879 = vld [vmem:[%s1 + $0x2d0] sm:$0xf]
    %v1880 = vld [vmem:[%s1 + $0x2d4] sm:$0xf]
    %v1881 = vld [vmem:[%s1 + $0x2d8] sm:$0xf]
    %v1882 = vld [vmem:[%s1 + $0x2dc] sm:$0xf]
    %v1883 = vld [vmem:[%s1 + $0x2e0] sm:$0xf]
    %v1884 = vld [vmem:[%s1 + $0x2e4] sm:$0xf]
    %v1885 = vld [vmem:[%s1 + $0x2e8] sm:$0xf]
    %v1886 = vld [vmem:[%s1 + $0x2ec] sm:$0xf]
    %v1887 = vld [vmem:[%s1 + $0x2f0] sm:$0xf]
    %v1888 = vld [vmem:[%s1 + $0x2f4] sm:$0xf]
    %v1889 = vld [vmem:[%s1 + $0x2f8] sm:$0xf]
    %v1890 = vld [vmem:[%s1 + $0x2fc] sm:$0xf]
    %v1891 = vld [vmem:[%s1 + $0x300] sm:$0xf]
    %v1892 = vld [vmem:[%s1 + $0x304] sm:$0xf]
    %v1893 = vld [vmem:[%s1 + $0x308] sm:$0xf]
    %v1894 = vld [vmem:[%s1 + $0x30c] sm:$0xf]
    %v1895 = vld [vmem:[%s1 + $0x310] sm:$0xf]
    %v1896 = vld [vmem:[%s1 + $0x314] sm:$0xf]
    %v1897 = vld [vmem:[%s1 + $0x318] sm:$0xf]
    %v1898 = vld [vmem:[%s1 + $0x31c] sm:$0xf]
    %v1899 = vld [vmem:[%s1 + $0x320] sm:$0xf]
    %v1900 = vld [vmem:[%s1 + $0x324] sm:$0xf]
    %v1901 = vld [vmem:[%s1 + $0x328] sm:$0xf]
    %v1902 = vld [vmem:[%s1 + $0x32c] sm:$0xf]
    %v1903 = vld [vmem:[%s1 + $0x330] sm:$0xf]
    %v1904 = vld [vmem:[%s1 + $0x334] sm:$0xf]
    %v1905 = vld [vmem:[%s1 + $0x338] sm:$0xf]
    %v1906 = vld [vmem:[%s1 + $0x33c] sm:$0xf]
    %v1907 = vld [vmem:[%s1 + $0x340] sm:$0xf]
    %v1908 = vld [vmem:[%s1 + $0x344] sm:$0xf]
    %v1909 = vld [vmem:[%s1 + $0x348] sm:$0xf]
    %v1910 = vld [vmem:[%s1 + $0x34c] sm:$0xf]
    %v1911 = vld [vmem:[%s1 + $0x350] sm:$0xf]
    %v1912 = vld [vmem:[%s1 + $0x354] sm:$0xf]
    %v1913 = vld [vmem:[%s1 + $0x358] sm:$0xf]
    %v1914 = vld [vmem:[%s1 + $0x35c] sm:$0xf]
    %v1915 = vld [vmem:[%s1 + $0x360] sm:$0xf]
    %v1916 = vld [vmem:[%s1 + $0x364] sm:$0xf]
    %v1917 = vld [vmem:[%s1 + $0x368] sm:$0xf]
    %v1918 = vld [vmem:[%s1 + $0x36c] sm:$0xf]
    %v1919 = vld [vmem:[%s1 + $0x370] sm:$0xf]
    %v1920 = vld [vmem:[%s1 + $0x374] sm:$0xf]
    %v1921 = vld [vmem:[%s1 + $0x378] sm:$0xf]
    %v1922 = vld [vmem:[%s1 + $0x37c] sm:$0xf]
    %v1923 = vld [vmem:[%s1 + $0x380] sm:$0xf]
    %v1924 = vld [vmem:[%s1 + $0x384] sm:$0xf]
    %v1925 = vld [vmem:[%s1 + $0x388] sm:$0xf]
    %v1926 = vld [vmem:[%s1 + $0x38c] sm:$0xf]
    %v1927 = vld [vmem:[%s1 + $0x390] sm:$0xf]
    %v1928 = vld [vmem:[%s1 + $0x394] sm:$0xf]
    %v1929 = vld [vmem:[%s1 + $0x398] sm:$0xf]
    %v1930 = vld [vmem:[%s1 + $0x39c] sm:$0xf]
    %v1931 = vld [vmem:[%s1 + $0x3a0] sm:$0xf]
    %v1932 = vld [vmem:[%s1 + $0x3a4] sm:$0xf]
    %v1933 = vld [vmem:[%s1 + $0x3a8] sm:$0xf]
    %v1934 = vld [vmem:[%s1 + $0x3ac] sm:$0xf]
    %v1935 = vld [vmem:[%s1 + $0x3b0] sm:$0xf]
    %v1936 = vld [vmem:[%s1 + $0x3b4] sm:$0xf]
    %v1937 = vld [vmem:[%s1 + $0x3b8] sm:$0xf]
    %v1938 = vld [vmem:[%s1 + $0x3bc] sm:$0xf]
    %v1939 = vld [vmem:[%s1 + $0x3c0] sm:$0xf]
    %v1940 = vld [vmem:[%s1 + $0x3c4] sm:$0xf]
    %v1941 = vld [vmem:[%s1 + $0x3c8] sm:$0xf]
    %v1942 = vld [vmem:[%s1 + $0x3cc] sm:$0xf]
    %v1943 = vld [vmem:[%s1 + $0x3d0] sm:$0xf]
    %v1944 = vld [vmem:[%s1 + $0x3d4] sm:$0xf]
    %v1945 = vld [vmem:[%s1 + $0x3d8] sm:$0xf]
    %v1946 = vld [vmem:[%s1 + $0x3dc] sm:$0xf]
    %v1947 = vld [vmem:[%s1 + $0x3e0] sm:$0xf]
    %v1948 = vld [vmem:[%s1 + $0x3e4] sm:$0xf]
    %v1949 = vld [vmem:[%s1 + $0x3e8] sm:$0xf]
    %v1950 = vld [vmem:[%s1 + $0x3ec] sm:$0xf]
    %v1951 = vld [vmem:[%s1 + $0x3f0] sm:$0xf]
    %v1952 = vld [vmem:[%s1 + $0x3f4] sm:$0xf]
    %v1953 = vld [vmem:[%s1 + $0x3f8] sm:$0xf]
    %v1954 = vld [vmem:[%s1 + $0x3fc] sm:$0xf]
    %v1955 = vld [vmem:[%s1 + $0x400] sm:$0xf]
    %v1956 = vld [vmem:[%s1 + $0x404] sm:$0xf]
    %v1957 = vld [vmem:[%s1 + $0x408] sm:$0xf]
    %v1958 = vld [vmem:[%s1 + $0x40c] sm:$0xf]
    %v1959 = vld [vmem:[%s1 + $0x410] sm:$0xf]
    %v1960 = vld [vmem:[%s1 + $0x414] sm:$0xf]
    %v1961 = vld [vmem:[%s1 + $0x418] sm:$0xf]
    %v1962 = vld [vmem:[%s1 + $0x41c] sm:$0xf]
    %v1963 = vld [vmem:[%s1 + $0x420] sm:$0xf]
    %v1964 = vld [vmem:[%s1 + $0x424] sm:$0xf]
    %v1965 = vld [vmem:[%s1 + $0x428] sm:$0xf]
    %v1966 = vld [vmem:[%s1 + $0x42c] sm:$0xf]
    %v1967 = vld [vmem:[%s1 + $0x430] sm:$0xf]
    %v1968 = vld [vmem:[%s1 + $0x434] sm:$0xf]
    %v1969 = vld [vmem:[%s1 + $0x438] sm:$0xf]
    %v1970 = vld [vmem:[%s1 + $0x43c] sm:$0xf]
    %v1971 = vld [vmem:[%s1 + $0x440] sm:$0xf]
    %v1972 = vld [vmem:[%s1 + $0x444] sm:$0xf]
    %v1973 = vld [vmem:[%s1 + $0x448] sm:$0xf]
    %v1974 = vld [vmem:[%s1 + $0x44c] sm:$0xf]
    %v1975 = vld [vmem:[%s1 + $0x450] sm:$0xf]
    %v1976 = vld [vmem:[%s1 + $0x454] sm:$0xf]
    %v1977 = vld [vmem:[%s1 + $0x458] sm:$0xf]
    %v1978 = vld [vmem:[%s1 + $0x45c] sm:$0xf]
    %v1979 = vld [vmem:[%s1 + $0x460] sm:$0xf]
    %v1980 = vld [vmem:[%s1 + $0x464] sm:$0xf]
    %v1981 = vld [vmem:[%s1 + $0x468] sm:$0xf]
    %v1982 = vld [vmem:[%s1 + $0x46c] sm:$0xf]
    %v1983 = vld [vmem:[%s1 + $0x470] sm:$0xf]
    %v1984 = vld [vmem:[%s1 + $0x474] sm:$0xf]
    %v1985 = vld [vmem:[%s1 + $0x478] sm:$0xf]
    %v1986 = vld [vmem:[%s1 + $0x47c] sm:$0xf]
    %v1987 = vld [vmem:[%s1 + $0x480] sm:$0xf]
    %v1988 = vld [vmem:[%s1 + $0x484] sm:$0xf]
    %v1989 = vld [vmem:[%s1 + $0x488] sm:$0xf]
    %v1990 = vld [vmem:[%s1 + $0x48c] sm:$0xf]
    %v1991 = vld [vmem:[%s1 + $0x490] sm:$0xf]
    %v1992 = vld [vmem:[%s1 + $0x494] sm:$0xf]
    %v1993 = vld [vmem:[%s1 + $0x498] sm:$0xf]
    %v1994 = vld [vmem:[%s1 + $0x49c] sm:$0xf]
    %v1995 = vld [vmem:[%s1 + $0x4a0] sm:$0xf]
    %v1996 = vld [vmem:[%s1 + $0x4a4] sm:$0xf]
    %v1997 = vld [vmem:[%s1 + $0x4a8] sm:$0xf]
    %v1998 = vld [vmem:[%s1 + $0x4ac] sm:$0xf]
    %v1999 = vld [vmem:[%s1 + $0x4b0] sm:$0xf]
    %v2000 = vld [vmem:[%s1 + $0x4b4] sm:$0xf]
    %v2001 = vld [vmem:[%s1 + $0x4b8] sm:$0xf]
    %v2002 = vld [vmem:[%s1 + $0x4bc] sm:$0xf]
    %v2003 = vld [vmem:[%s1 + $0x4c0] sm:$0xf]
    %v2004 = vld [vmem:[%s1 + $0x4c4] sm:$0xf]
    %v2005 = vld [vmem:[%s1 + $0x4c8] sm:$0xf]
    %v2006 = vld [vmem:[%s1 + $0x4cc] sm:$0xf]
    %v2007 = vld [vmem:[%s1 + $0x4d0] sm:$0xf]
    %v2008 = vld [vmem:[%s1 + $0x4d4] sm:$0xf]
    %v2009 = vld [vmem:[%s1 + $0x4d8] sm:$0xf]
    %v2010 = vld [vmem:[%s1 + $0x4dc] sm:$0xf]
    %v2011 = vld [vmem:[%s1 + $0x4e0] sm:$0xf]
    %v2012 = vld [vmem:[%s1 + $0x4e4] sm:$0xf]
    %v2013 = vld [vmem:[%s1 + $0x4e8] sm:$0xf]
    %v2014 = vld [vmem:[%s1 + $0x4ec] sm:$0xf]
    %v2015 = vld [vmem:[%s1 + $0x4f0] sm:$0xf]
    %v2016 = vld [vmem:[%s1 + $0x4f4] sm:$0xf]
    %v2017 = vld [vmem:[%s1 + $0x4f8] sm:$0xf]
    %v2018 = vld [vmem:[%s1 + $0x4fc] sm:$0xf]
    %v2019 = vld [vmem:[%s1 + $0x500] sm:$0xf]
    %v2020 = vld [vmem:[%s1 + $0x504] sm:$0xf]
    %v2021 = vld [vmem:[%s1 + $0x508] sm:$0xf]
    %v2022 = vld [vmem:[%s1 + $0x50c] sm:$0xf]
    %v2023 = vld [vmem:[%s1 + $0x510] sm:$0xf]
    %v2024 = vld [vmem:[%s1 + $0x514] sm:$0xf]
    %v2025 = vld [vmem:[%s1 + $0x518] sm:$0xf]
    %v2026 = vld [vmem:[%s1 + $0x51c] sm:$0xf]
    %v2027 = vld [vmem:[%s1 + $0x520] sm:$0xf]
    %v2028 = vld [vmem:[%s1 + $0x524] sm:$0xf]
    %v2029 = vld [vmem:[%s1 + $0x528] sm:$0xf]
    %v2030 = vld [vmem:[%s1 + $0x52c] sm:$0xf]
    %v2031 = vld [vmem:[%s1 + $0x530] sm:$0xf]
    %v2032 = vld [vmem:[%s1 + $0x534] sm:$0xf]
    %v2033 = vld [vmem:[%s1 + $0x538] sm:$0xf]
    %v2034 = vld [vmem:[%s1 + $0x53c] sm:$0xf]
    %v2035 = vld [vmem:[%s1 + $0x540] sm:$0xf]
    %v2036 = vld [vmem:[%s1 + $0x544] sm:$0xf]
    %v2037 = vld [vmem:[%s1 + $0x548] sm:$0xf]
    %v2038 = vld [vmem:[%s1 + $0x54c] sm:$0xf]
    %v2039 = vld [vmem:[%s1 + $0x550] sm:$0xf]
    %v2040 = vld [vmem:[%s1 + $0x554] sm:$0xf]
    %v2041 = vld [vmem:[%s1 + $0x558] sm:$0xf]
    %v2042 = vld [vmem:[%s1 + $0x55c] sm:$0xf]
    %v2043 = vld [vmem:[%s1 + $0x560] sm:$0xf]
    %v2044 = vld [vmem:[%s1 + $0x564] sm:$0xf]
    %v2045 = vld [vmem:[%s1 + $0x568] sm:$0xf]
    %v2046 = vld [vmem:[%s1 + $0x56c] sm:$0xf]
    %v2047 = vld [vmem:[%s1 + $0x570] sm:$0xf]
    %v2048 = vld [vmem:[%s1 + $0x574] sm:$0xf]
    %v2049 = vld [vmem:[%s1 + $0x578] sm:$0xf]
    %v2050 = vld [vmem:[%s1 + $0x57c] sm:$0xf]
    %v2051 = vld [vmem:[%s1 + $0x580] sm:$0xf]
    %v2052 = vld [vmem:[%s1 + $0x584] sm:$0xf]
    %v2053 = vld [vmem:[%s1 + $0x588] sm:$0xf]
    %v2054 = vld [vmem:[%s1 + $0x58c] sm:$0xf]
    %v2055 = vld [vmem:[%s1 + $0x590] sm:$0xf]
    %v2056 = vld [vmem:[%s1 + $0x594] sm:$0xf]
    %v2057 = vld [vmem:[%s1 + $0x598] sm:$0xf]
    %v2058 = vld [vmem:[%s1 + $0x59c] sm:$0xf]
    %v2059 = vld [vmem:[%s1 + $0x5a0] sm:$0xf]
    %v2060 = vld [vmem:[%s1 + $0x5a4] sm:$0xf]
    %v2061 = vld [vmem:[%s1 + $0x5a8] sm:$0xf]
    %v2062 = vld [vmem:[%s1 + $0x5ac] sm:$0xf]
    %v2063 = vld [vmem:[%s1 + $0x5b0] sm:$0xf]
    %v2064 = vld [vmem:[%s1 + $0x5b4] sm:$0xf]
    %v2065 = vld [vmem:[%s1 + $0x5b8] sm:$0xf]
    %v2066 = vld [vmem:[%s1 + $0x5bc] sm:$0xf]
    %v2067 = vld [vmem:[%s1 + $0x5c0] sm:$0xf]
    %v2068 = vld [vmem:[%s1 + $0x5c4] sm:$0xf]
    %v2069 = vld [vmem:[%s1 + $0x5c8] sm:$0xf]
    %v2070 = vld [vmem:[%s1 + $0x5cc] sm:$0xf]
    %v2071 = vld [vmem:[%s1 + $0x5d0] sm:$0xf]
    %v2072 = vld [vmem:[%s1 + $0x5d4] sm:$0xf]
    %v2073 = vld [vmem:[%s1 + $0x5d8] sm:$0xf]
    %v2074 = vld [vmem:[%s1 + $0x5dc] sm:$0xf]
    %v2075 = vld [vmem:[%s1 + $0x5e0] sm:$0xf]
    %v2076 = vld [vmem:[%s1 + $0x5e4] sm:$0xf]
    %v2077 = vld [vmem:[%s1 + $0x5e8] sm:$0xf]
    %v2078 = vld [vmem:[%s1 + $0x5ec] sm:$0xf]
    %v2079 = vld [vmem:[%s1 + $0x5f0] sm:$0xf]
    %v2080 = vld [vmem:[%s1 + $0x5f4] sm:$0xf]
    %v2081 = vld [vmem:[%s1 + $0x5f8] sm:$0xf]
    %v2082 = vld [vmem:[%s1 + $0x5fc] sm:$0xf]
    %v2083 = vld [vmem:[%s1 + $0x600] sm:$0xf]
    %v2084 = vld [vmem:[%s1 + $0x604] sm:$0xf]
    %v2085 = vld [vmem:[%s1 + $0x608] sm:$0xf]
    %v2086 = vld [vmem:[%s1 + $0x60c] sm:$0xf]
    %v2087 = vld [vmem:[%s1 + $0x610] sm:$0xf]
    %v2088 = vld [vmem:[%s1 + $0x614] sm:$0xf]
    %v2089 = vld [vmem:[%s1 + $0x618] sm:$0xf]
    %v2090 = vld [vmem:[%s1 + $0x61c] sm:$0xf]
    %v2091 = vld [vmem:[%s1 + $0x620] sm:$0xf]
    %v2092 = vld [vmem:[%s1 + $0x624] sm:$0xf]
    %v2093 = vld [vmem:[%s1 + $0x628] sm:$0xf]
    %v2094 = vld [vmem:[%s1 + $0x62c] sm:$0xf]
    %v2095 = vld [vmem:[%s1 + $0x630] sm:$0xf]
    %v2096 = vld [vmem:[%s1 + $0x634] sm:$0xf]
    %v2097 = vld [vmem:[%s1 + $0x638] sm:$0xf]
    %v2098 = vld [vmem:[%s1 + $0x63c] sm:$0xf]
    %v2099 = vld [vmem:[%s1 + $0x640] sm:$0xf]
    %v2100 = vld [vmem:[%s1 + $0x644] sm:$0xf]
    %v2101 = vld [vmem:[%s1 + $0x648] sm:$0xf]
    %v2102 = vld [vmem:[%s1 + $0x64c] sm:$0xf]
    %v2103 = vld [vmem:[%s1 + $0x650] sm:$0xf]
    %v2104 = vld [vmem:[%s1 + $0x654] sm:$0xf]
    %v2105 = vld [vmem:[%s1 + $0x658] sm:$0xf]
    %v2106 = vld [vmem:[%s1 + $0x65c] sm:$0xf]
    %v2107 = vld [vmem:[%s1 + $0x660] sm:$0xf]
    %v2108 = vld [vmem:[%s1 + $0x664] sm:$0xf]
    %v2109 = vld [vmem:[%s1 + $0x668] sm:$0xf]
    %v2110 = vld [vmem:[%s1 + $0x66c] sm:$0xf]
    %v2111 = vld [vmem:[%s1 + $0x670] sm:$0xf]
    %v2112 = vld [vmem:[%s1 + $0x674] sm:$0xf]
    %v2113 = vld [vmem:[%s1 + $0x678] sm:$0xf]
    %v2114 = vld [vmem:[%s1 + $0x67c] sm:$0xf]
    %v2115 = vld [vmem:[%s1 + $0x680] sm:$0xf]
    %v2116 = vld [vmem:[%s1 + $0x684] sm:$0xf]
    %v2117 = vld [vmem:[%s1 + $0x688] sm:$0xf]
    %v2118 = vld [vmem:[%s1 + $0x68c] sm:$0xf]
    %v2119 = vld [vmem:[%s1 + $0x690] sm:$0xf]
    %v2120 = vld [vmem:[%s1 + $0x694] sm:$0xf]
    %v2121 = vld [vmem:[%s1 + $0x698] sm:$0xf]
    %v2122 = vld [vmem:[%s1 + $0x69c] sm:$0xf]
    %v2123 = vld [vmem:[%s1 + $0x6a0] sm:$0xf]
    %v2124 = vld [vmem:[%s1 + $0x6a4] sm:$0xf]
    %v2125 = vld [vmem:[%s1 + $0x6a8] sm:$0xf]
    %v2126 = vld [vmem:[%s1 + $0x6ac] sm:$0xf]
    %v2127 = vld [vmem:[%s1 + $0x6b0] sm:$0xf]
    %v2128 = vld [vmem:[%s1 + $0x6b4] sm:$0xf]
    %v2129 = vld [vmem:[%s1 + $0x6b8] sm:$0xf]
    %v2130 = vld [vmem:[%s1 + $0x6bc] sm:$0xf]
    %v2131 = vld [vmem:[%s1 + $0x6c0] sm:$0xf]
    %v2132 = vld [vmem:[%s1 + $0x6c4] sm:$0xf]
    %v2133 = vld [vmem:[%s1 + $0x6c8] sm:$0xf]
    %v2134 = vld [vmem:[%s1 + $0x6cc] sm:$0xf]
    %v2135 = vld [vmem:[%s1 + $0x6d0] sm:$0xf]
    %v2136 = vld [vmem:[%s1 + $0x6d4] sm:$0xf]
    %v2137 = vld [vmem:[%s1 + $0x6d8] sm:$0xf]
    %v2138 = vld [vmem:[%s1 + $0x6dc] sm:$0xf]
    %v2139 = vld [vmem:[%s1 + $0x6e0] sm:$0xf]
    %v2140 = vld [vmem:[%s1 + $0x6e4] sm:$0xf]
    %v2141 = vld [vmem:[%s1 + $0x6e8] sm:$0xf]
    %v2142 = vld [vmem:[%s1 + $0x6ec] sm:$0xf]
    %v2143 = vld [vmem:[%s1 + $0x6f0] sm:$0xf]
    %v2144 = vld [vmem:[%s1 + $0x6f4] sm:$0xf]
    %v2145 = vld [vmem:[%s1 + $0x6f8] sm:$0xf]
    %v2146 = vld [vmem:[%s1 + $0x6fc] sm:$0xf]
    %v2147 = vld [vmem:[%s1 + $0x700] sm:$0xf]
    %v2148 = vld [vmem:[%s1 + $0x704] sm:$0xf]
    %v2149 = vld [vmem:[%s1 + $0x708] sm:$0xf]
    %v2150 = vld [vmem:[%s1 + $0x70c] sm:$0xf]
    %v2151 = vld [vmem:[%s1 + $0x710] sm:$0xf]
    %v2152 = vld [vmem:[%s1 + $0x714] sm:$0xf]
    %v2153 = vld [vmem:[%s1 + $0x718] sm:$0xf]
    %v2154 = vld [vmem:[%s1 + $0x71c] sm:$0xf]
    %v2155 = vld [vmem:[%s1 + $0x720] sm:$0xf]
    %v2156 = vld [vmem:[%s1 + $0x724] sm:$0xf]
    %v2157 = vld [vmem:[%s1 + $0x728] sm:$0xf]
    %v2158 = vld [vmem:[%s1 + $0x72c] sm:$0xf]
    %v2159 = vld [vmem:[%s1 + $0x730] sm:$0xf]
    %v2160 = vld [vmem:[%s1 + $0x734] sm:$0xf]
    %v2161 = vld [vmem:[%s1 + $0x738] sm:$0xf]
    %v2162 = vld [vmem:[%s1 + $0x73c] sm:$0xf]
    %v2163 = vld [vmem:[%s1 + $0x740] sm:$0xf]
    %v2164 = vld [vmem:[%s1 + $0x744] sm:$0xf]
    %v2165 = vld [vmem:[%s1 + $0x748] sm:$0xf]
    %v2166 = vld [vmem:[%s1 + $0x74c] sm:$0xf]
    %v2167 = vld [vmem:[%s1 + $0x750] sm:$0xf]
    %v2168 = vld [vmem:[%s1 + $0x754] sm:$0xf]
    %v2169 = vld [vmem:[%s1 + $0x758] sm:$0xf]
    %v2170 = vld [vmem:[%s1 + $0x75c] sm:$0xf]
    %v2171 = vld [vmem:[%s1 + $0x760] sm:$0xf]
    %v2172 = vld [vmem:[%s1 + $0x764] sm:$0xf]
    %v2173 = vld [vmem:[%s1 + $0x768] sm:$0xf]
    %v2174 = vld [vmem:[%s1 + $0x76c] sm:$0xf]
    %v2175 = vld [vmem:[%s1 + $0x770] sm:$0xf]
    %v2176 = vld [vmem:[%s1 + $0x774] sm:$0xf]
    %v2177 = vld [vmem:[%s1 + $0x778] sm:$0xf]
    %v2178 = vld [vmem:[%s1 + $0x77c] sm:$0xf]
    %v2179 = vld [vmem:[%s1 + $0x780] sm:$0xf]
    %v2180 = vld [vmem:[%s1 + $0x784] sm:$0xf]
    %v2181 = vld [vmem:[%s1 + $0x788] sm:$0xf]
    %v2182 = vld [vmem:[%s1 + $0x78c] sm:$0xf]
    %v2183 = vld [vmem:[%s1 + $0x790] sm:$0xf]
    %v2184 = vld [vmem:[%s1 + $0x794] sm:$0xf]
    %v2185 = vld [vmem:[%s1 + $0x798] sm:$0xf]
    %v2186 = vld [vmem:[%s1 + $0x79c] sm:$0xf]
    %v2187 = vld [vmem:[%s1 + $0x7a0] sm:$0xf]
    %v2188 = vld [vmem:[%s1 + $0x7a4] sm:$0xf]
    %v2189 = vld [vmem:[%s1 + $0x7a8] sm:$0xf]
    %v2190 = vld [vmem:[%s1 + $0x7ac] sm:$0xf]
    %v2191 = vld [vmem:[%s1 + $0x7b0] sm:$0xf]
    %v2192 = vld [vmem:[%s1 + $0x7b4] sm:$0xf]
    %v2193 = vld [vmem:[%s1 + $0x7b8] sm:$0xf]
    %v2194 = vld [vmem:[%s1 + $0x7bc] sm:$0xf]
    %v2195 = vld [vmem:[%s1 + $0x7c0] sm:$0xf]
    %v2196 = vld [vmem:[%s1 + $0x7c4] sm:$0xf]
    %v2197 = vld [vmem:[%s1 + $0x7c8] sm:$0xf]
    %v2198 = vld [vmem:[%s1 + $0x7cc] sm:$0xf]
    %v2199 = vld [vmem:[%s1 + $0x7d0] sm:$0xf]
    %v2200 = vld [vmem:[%s1 + $0x7d4] sm:$0xf]
    %v2201 = vld [vmem:[%s1 + $0x7d8] sm:$0xf]
    %v2202 = vld [vmem:[%s1 + $0x7dc] sm:$0xf]
    %v2203 = vld [vmem:[%s1 + $0x7e0] sm:$0xf]
    %v2204 = vld [vmem:[%s1 + $0x7e4] sm:$0xf]
    %v2205 = vld [vmem:[%s1 + $0x7e8] sm:$0xf]
    %v2206 = vld [vmem:[%s1 + $0x7ec] sm:$0xf]
    %v2207 = vld [vmem:[%s1 + $0x7f0] sm:$0xf]
    %v2208 = vld [vmem:[%s1 + $0x7f4] sm:$0xf]
    %v2209 = vld [vmem:[%s1 + $0x7f8] sm:$0xf]
    %v2210 = vld [vmem:[%s1 + $0x7fc] sm:$0xf]
    %v2723 = vunpack.c.l.b16 %v1699
    %v2724 = vunpack.c.l.b16 %v1700
    %v2725 = vunpack.c.l.b16 %v1701
    %v2726 = vunpack.c.l.b16 %v1702
    %v2727 = vunpack.c.l.b16 %v1703
    %v2728 = vunpack.c.l.b16 %v1704
    %v2729 = vunpack.c.l.b16 %v1705
    %v2730 = vunpack.c.l.b16 %v1706
    %v2731 = vunpack.c.l.b16 %v1707
    %v2732 = vunpack.c.l.b16 %v1708
    %v2733 = vunpack.c.l.b16 %v1709
    %v2734 = vunpack.c.l.b16 %v1710
    %v2735 = vunpack.c.l.b16 %v1711
    %v2736 = vunpack.c.l.b16 %v1712
    %v2737 = vunpack.c.l.b16 %v1713
    %v2738 = vunpack.c.l.b16 %v1714
    %v2739 = vunpack.c.l.b16 %v1715
    %v2740 = vunpack.c.l.b16 %v1716
    %v2741 = vunpack.c.l.b16 %v1717
    %v2742 = vunpack.c.l.b16 %v1718
    %v2743 = vunpack.c.l.b16 %v1719
    %v2744 = vunpack.c.l.b16 %v1720
    %v2745 = vunpack.c.l.b16 %v1721
    %v2746 = vunpack.c.l.b16 %v1722
    %v2747 = vunpack.c.l.b16 %v1723
    %v2748 = vunpack.c.l.b16 %v1724
    %v2749 = vunpack.c.l.b16 %v1725
    %v2750 = vunpack.c.l.b16 %v1726
    %v2751 = vunpack.c.l.b16 %v1727
    %v2752 = vunpack.c.l.b16 %v1728
    %v2753 = vunpack.c.l.b16 %v1729
    %v2754 = vunpack.c.l.b16 %v1730
    %v2755 = vunpack.c.l.b16 %v1731
    %v2756 = vunpack.c.l.b16 %v1732
    %v2757 = vunpack.c.l.b16 %v1733
    %v2758 = vunpack.c.l.b16 %v1734
    %v2759 = vunpack.c.l.b16 %v1735
    %v2760 = vunpack.c.l.b16 %v1736
    %v2761 = vunpack.c.l.b16 %v1737
    %v2762 = vunpack.c.l.b16 %v1738
    %v2763 = vunpack.c.l.b16 %v1739
    %v2764 = vunpack.c.l.b16 %v1740
    %v2765 = vunpack.c.l.b16 %v1741
    %v2766 = vunpack.c.l.b16 %v1742
    %v2767 = vunpack.c.l.b16 %v1743
    %v2768 = vunpack.c.l.b16 %v1744
    %v2769 = vunpack.c.l.b16 %v1745
    %v2770 = vunpack.c.l.b16 %v1746
    %v2771 = vunpack.c.l.b16 %v1747
    %v2772 = vunpack.c.l.b16 %v1748
    %v2773 = vunpack.c.l.b16 %v1749
    %v2774 = vunpack.c.l.b16 %v1750
    %v2775 = vunpack.c.l.b16 %v1751
    %v2776 = vunpack.c.l.b16 %v1752
    %v2777 = vunpack.c.l.b16 %v1753
    %v2778 = vunpack.c.l.b16 %v1754
    %v2779 = vunpack.c.l.b16 %v1755
    %v2780 = vunpack.c.l.b16 %v1756
    %v2781 = vunpack.c.l.b16 %v1757
    %v2782 = vunpack.c.l.b16 %v1758
    %v2783 = vunpack.c.l.b16 %v1759
    %v2784 = vunpack.c.l.b16 %v1760
    %v2785 = vunpack.c.l.b16 %v1761
    %v2786 = vunpack.c.l.b16 %v1762
    %v2787 = vunpack.c.l.b16 %v1763
    %v2788 = vunpack.c.l.b16 %v1764
    %v2789 = vunpack.c.l.b16 %v1765
    %v2790 = vunpack.c.l.b16 %v1766
    %v2791 = vunpack.c.l.b16 %v1767
    %v2792 = vunpack.c.l.b16 %v1768
    %v2793 = vunpack.c.l.b16 %v1769
    %v2794 = vunpack.c.l.b16 %v1770
    %v2795 = vunpack.c.l.b16 %v1771
    %v2796 = vunpack.c.l.b16 %v1772
    %v2797 = vunpack.c.l.b16 %v1773
    %v2798 = vunpack.c.l.b16 %v1774
    %v2799 = vunpack.c.l.b16 %v1775
    %v2800 = vunpack.c.l.b16 %v1776
    %v2801 = vunpack.c.l.b16 %v1777
    %v2802 = vunpack.c.l.b16 %v1778
    %v2803 = vunpack.c.l.b16 %v1779
    %v2804 = vunpack.c.l.b16 %v1780
    %v2805 = vunpack.c.l.b16 %v1781
    %v2806 = vunpack.c.l.b16 %v1782
    %v2807 = vunpack.c.l.b16 %v1783
    %v2808 = vunpack.c.l.b16 %v1784
    %v2809 = vunpack.c.l.b16 %v1785
    %v2810 = vunpack.c.l.b16 %v1786
    %v2811 = vunpack.c.l.b16 %v1787
    %v2812 = vunpack.c.l.b16 %v1788
    %v2813 = vunpack.c.l.b16 %v1789
    %v2814 = vunpack.c.l.b16 %v1790
    %v2815 = vunpack.c.l.b16 %v1791
    %v2816 = vunpack.c.l.b16 %v1792
    %v2817 = vunpack.c.l.b16 %v1793
    %v2818 = vunpack.c.l.b16 %v1794
    %v2819 = vunpack.c.l.b16 %v1795
    %v2820 = vunpack.c.l.b16 %v1796
    %v2821 = vunpack.c.l.b16 %v1797
    %v2822 = vunpack.c.l.b16 %v1798
    %v2823 = vunpack.c.l.b16 %v1799
    %v2824 = vunpack.c.l.b16 %v1800
    %v2825 = vunpack.c.l.b16 %v1801
    %v2826 = vunpack.c.l.b16 %v1802
    %v2827 = vunpack.c.l.b16 %v1803
    %v2828 = vunpack.c.l.b16 %v1804
    %v2829 = vunpack.c.l.b16 %v1805
    %v2830 = vunpack.c.l.b16 %v1806
    %v2831 = vunpack.c.l.b16 %v1807
    %v2832 = vunpack.c.l.b16 %v1808
    %v2833 = vunpack.c.l.b16 %v1809
    %v2834 = vunpack.c.l.b16 %v1810
    %v2835 = vunpack.c.l.b16 %v1811
    %v2836 = vunpack.c.l.b16 %v1812
    %v2837 = vunpack.c.l.b16 %v1813
    %v2838 = vunpack.c.l.b16 %v1814
    %v2839 = vunpack.c.l.b16 %v1815
    %v2840 = vunpack.c.l.b16 %v1816
    %v2841 = vunpack.c.l.b16 %v1817
    %v2842 = vunpack.c.l.b16 %v1818
    %v2843 = vunpack.c.l.b16 %v1819
    %v2844 = vunpack.c.l.b16 %v1820
    %v2845 = vunpack.c.l.b16 %v1821
    %v2846 = vunpack.c.l.b16 %v1822
    %v2847 = vunpack.c.l.b16 %v1823
    %v2848 = vunpack.c.l.b16 %v1824
    %v2849 = vunpack.c.l.b16 %v1825
    %v2850 = vunpack.c.l.b16 %v1826
    %v2851 = vunpack.c.l.b16 %v1827
    %v2852 = vunpack.c.l.b16 %v1828
    %v2853 = vunpack.c.l.b16 %v1829
    %v2854 = vunpack.c.l.b16 %v1830
    %v2855 = vunpack.c.l.b16 %v1831
    %v2856 = vunpack.c.l.b16 %v1832
    %v2857 = vunpack.c.l.b16 %v1833
    %v2858 = vunpack.c.l.b16 %v1834
    %v2859 = vunpack.c.l.b16 %v1835
    %v2860 = vunpack.c.l.b16 %v1836
    %v2861 = vunpack.c.l.b16 %v1837
    %v2862 = vunpack.c.l.b16 %v1838
    %v2863 = vunpack.c.l.b16 %v1839
    %v2864 = vunpack.c.l.b16 %v1840
    %v2865 = vunpack.c.l.b16 %v1841
    %v2866 = vunpack.c.l.b16 %v1842
    %v2867 = vunpack.c.l.b16 %v1843
    %v2868 = vunpack.c.l.b16 %v1844
    %v2869 = vunpack.c.l.b16 %v1845
    %v2870 = vunpack.c.l.b16 %v1846
    %v2871 = vunpack.c.l.b16 %v1847
    %v2872 = vunpack.c.l.b16 %v1848
    %v2873 = vunpack.c.l.b16 %v1849
    %v2874 = vunpack.c.l.b16 %v1850
    %v2875 = vunpack.c.l.b16 %v1851
    %v2876 = vunpack.c.l.b16 %v1852
    %v2877 = vunpack.c.l.b16 %v1853
    %v2878 = vunpack.c.l.b16 %v1854
    %v2879 = vunpack.c.l.b16 %v1855
    %v2880 = vunpack.c.l.b16 %v1856
    %v2881 = vunpack.c.l.b16 %v1857
    %v2882 = vunpack.c.l.b16 %v1858
    %v2883 = vunpack.c.l.b16 %v1859
    %v2884 = vunpack.c.l.b16 %v1860
    %v2885 = vunpack.c.l.b16 %v1861
    %v2886 = vunpack.c.l.b16 %v1862
    %v2887 = vunpack.c.l.b16 %v1863
    %v2888 = vunpack.c.l.b16 %v1864
    %v2889 = vunpack.c.l.b16 %v1865
    %v2890 = vunpack.c.l.b16 %v1866
    %v2891 = vunpack.c.l.b16 %v1867
    %v2892 = vunpack.c.l.b16 %v1868
    %v2893 = vunpack.c.l.b16 %v1869
    %v2894 = vunpack.c.l.b16 %v1870
    %v2895 = vunpack.c.l.b16 %v1871
    %v2896 = vunpack.c.l.b16 %v1872
    %v2897 = vunpack.c.l.b16 %v1873
    %v2898 = vunpack.c.l.b16 %v1874
    %v2899 = vunpack.c.l.b16 %v1875
    %v2900 = vunpack.c.l.b16 %v1876
    %v2901 = vunpack.c.l.b16 %v1877
    %v2902 = vunpack.c.l.b16 %v1878
    %v2903 = vunpack.c.l.b16 %v1879
    %v2904 = vunpack.c.l.b16 %v1880
    %v2905 = vunpack.c.l.b16 %v1881
    %v2906 = vunpack.c.l.b16 %v1882
    %v2907 = vunpack.c.l.b16 %v1883
    %v2908 = vunpack.c.l.b16 %v1884
    %v2909 = vunpack.c.l.b16 %v1885
    %v2910 = vunpack.c.l.b16 %v1886
    %v2911 = vunpack.c.l.b16 %v1887
    %v2912 = vunpack.c.l.b16 %v1888
    %v2913 = vunpack.c.l.b16 %v1889
    %v2914 = vunpack.c.l.b16 %v1890
    %v2915 = vunpack.c.l.b16 %v1891
    %v2916 = vunpack.c.l.b16 %v1892
    %v2917 = vunpack.c.l.b16 %v1893
    %v2918 = vunpack.c.l.b16 %v1894
    %v2919 = vunpack.c.l.b16 %v1895
    %v2920 = vunpack.c.l.b16 %v1896
    %v2921 = vunpack.c.l.b16 %v1897
    %v2922 = vunpack.c.l.b16 %v1898
    %v2923 = vunpack.c.l.b16 %v1899
    %v2924 = vunpack.c.l.b16 %v1900
    %v2925 = vunpack.c.l.b16 %v1901
    %v2926 = vunpack.c.l.b16 %v1902
    %v2927 = vunpack.c.l.b16 %v1903
    %v2928 = vunpack.c.l.b16 %v1904
    %v2929 = vunpack.c.l.b16 %v1905
    %v2930 = vunpack.c.l.b16 %v1906
    %v2931 = vunpack.c.l.b16 %v1907
    %v2932 = vunpack.c.l.b16 %v1908
    %v2933 = vunpack.c.l.b16 %v1909
    %v2934 = vunpack.c.l.b16 %v1910
    %v2935 = vunpack.c.l.b16 %v1911
    %v2936 = vunpack.c.l.b16 %v1912
    %v2937 = vunpack.c.l.b16 %v1913
    %v2938 = vunpack.c.l.b16 %v1914
    %v2939 = vunpack.c.l.b16 %v1915
    %v2940 = vunpack.c.l.b16 %v1916
    %v2941 = vunpack.c.l.b16 %v1917
    %v2942 = vunpack.c.l.b16 %v1918
    %v2943 = vunpack.c.l.b16 %v1919
    %v2944 = vunpack.c.l.b16 %v1920
    %v2945 = vunpack.c.l.b16 %v1921
    %v2946 = vunpack.c.l.b16 %v1922
    %v2947 = vunpack.c.l.b16 %v1923
    %v2948 = vunpack.c.l.b16 %v1924
    %v2949 = vunpack.c.l.b16 %v1925
    %v2950 = vunpack.c.l.b16 %v1926
    %v2951 = vunpack.c.l.b16 %v1927
    %v2952 = vunpack.c.l.b16 %v1928
    %v2953 = vunpack.c.l.b16 %v1929
    %v2954 = vunpack.c.l.b16 %v1930
    %v2955 = vunpack.c.l.b16 %v1931
    %v2956 = vunpack.c.l.b16 %v1932
    %v2957 = vunpack.c.l.b16 %v1933
    %v2958 = vunpack.c.l.b16 %v1934
    %v2959 = vunpack.c.l.b16 %v1935
    %v2960 = vunpack.c.l.b16 %v1936
    %v2961 = vunpack.c.l.b16 %v1937
    %v2962 = vunpack.c.l.b16 %v1938
    %v2963 = vunpack.c.l.b16 %v1939
    %v2964 = vunpack.c.l.b16 %v1940
    %v2965 = vunpack.c.l.b16 %v1941
    %v2966 = vunpack.c.l.b16 %v1942
    %v2967 = vunpack.c.l.b16 %v1943
    %v2968 = vunpack.c.l.b16 %v1944
    %v2969 = vunpack.c.l.b16 %v1945
    %v2970 = vunpack.c.l.b16 %v1946
    %v2971 = vunpack.c.l.b16 %v1947
    %v2972 = vunpack.c.l.b16 %v1948
    %v2973 = vunpack.c.l.b16 %v1949
    %v2974 = vunpack.c.l.b16 %v1950
    %v2975 = vunpack.c.l.b16 %v1951
    %v2976 = vunpack.c.l.b16 %v1952
    %v2977 = vunpack.c.l.b16 %v1953
    %v2978 = vunpack.c.l.b16 %v1954
    %v2979 = vunpack.c.l.b16 %v1955
    %v2980 = vunpack.c.l.b16 %v1956
    %v2981 = vunpack.c.l.b16 %v1957
    %v2982 = vunpack.c.l.b16 %v1958
    %v2983 = vunpack.c.l.b16 %v1959
    %v2984 = vunpack.c.l.b16 %v1960
    %v2985 = vunpack.c.l.b16 %v1961
    %v2986 = vunpack.c.l.b16 %v1962
    %v2987 = vunpack.c.l.b16 %v1963
    %v2988 = vunpack.c.l.b16 %v1964
    %v2989 = vunpack.c.l.b16 %v1965
    %v2990 = vunpack.c.l.b16 %v1966
    %v2991 = vunpack.c.l.b16 %v1967
    %v2992 = vunpack.c.l.b16 %v1968
    %v2993 = vunpack.c.l.b16 %v1969
    %v2994 = vunpack.c.l.b16 %v1970
    %v2995 = vunpack.c.l.b16 %v1971
    %v2996 = vunpack.c.l.b16 %v1972
    %v2997 = vunpack.c.l.b16 %v1973
    %v2998 = vunpack.c.l.b16 %v1974
    %v2999 = vunpack.c.l.b16 %v1975
    %v3000 = vunpack.c.l.b16 %v1976
    %v3001 = vunpack.c.l.b16 %v1977
    %v3002 = vunpack.c.l.b16 %v1978
    %v3003 = vunpack.c.l.b16 %v1979
    %v3004 = vunpack.c.l.b16 %v1980
    %v3005 = vunpack.c.l.b16 %v1981
    %v3006 = vunpack.c.l.b16 %v1982
    %v3007 = vunpack.c.l.b16 %v1983
    %v3008 = vunpack.c.l.b16 %v1984
    %v3009 = vunpack.c.l.b16 %v1985
    %v3010 = vunpack.c.l.b16 %v1986
    %v3011 = vunpack.c.l.b16 %v1987
    %v3012 = vunpack.c.l.b16 %v1988
    %v3013 = vunpack.c.l.b16 %v1989
    %v3014 = vunpack.c.l.b16 %v1990
    %v3015 = vunpack.c.l.b16 %v1991
    %v3016 = vunpack.c.l.b16 %v1992
    %v3017 = vunpack.c.l.b16 %v1993
    %v3018 = vunpack.c.l.b16 %v1994
    %v3019 = vunpack.c.l.b16 %v1995
    %v3020 = vunpack.c.l.b16 %v1996
    %v3021 = vunpack.c.l.b16 %v1997
    %v3022 = vunpack.c.l.b16 %v1998
    %v3023 = vunpack.c.l.b16 %v1999
    %v3024 = vunpack.c.l.b16 %v2000
    %v3025 = vunpack.c.l.b16 %v2001
    %v3026 = vunpack.c.l.b16 %v2002
    %v3027 = vunpack.c.l.b16 %v2003
    %v3028 = vunpack.c.l.b16 %v2004
    %v3029 = vunpack.c.l.b16 %v2005
    %v3030 = vunpack.c.l.b16 %v2006
    %v3031 = vunpack.c.l.b16 %v2007
    %v3032 = vunpack.c.l.b16 %v2008
    %v3033 = vunpack.c.l.b16 %v2009
    %v3034 = vunpack.c.l.b16 %v2010
    %v3035 = vunpack.c.l.b16 %v2011
    %v3036 = vunpack.c.l.b16 %v2012
    %v3037 = vunpack.c.l.b16 %v2013
    %v3038 = vunpack.c.l.b16 %v2014
    %v3039 = vunpack.c.l.b16 %v2015
    %v3040 = vunpack.c.l.b16 %v2016
    %v3041 = vunpack.c.l.b16 %v2017
    %v3042 = vunpack.c.l.b16 %v2018
    %v3043 = vunpack.c.l.b16 %v2019
    %v3044 = vunpack.c.l.b16 %v2020
    %v3045 = vunpack.c.l.b16 %v2021
    %v3046 = vunpack.c.l.b16 %v2022
    %v3047 = vunpack.c.l.b16 %v2023
    %v3048 = vunpack.c.l.b16 %v2024
    %v3049 = vunpack.c.l.b16 %v2025
    %v3050 = vunpack.c.l.b16 %v2026
    %v3051 = vunpack.c.l.b16 %v2027
    %v3052 = vunpack.c.l.b16 %v2028
    %v3053 = vunpack.c.l.b16 %v2029
    %v3054 = vunpack.c.l.b16 %v2030
    %v3055 = vunpack.c.l.b16 %v2031
    %v3056 = vunpack.c.l.b16 %v2032
    %v3057 = vunpack.c.l.b16 %v2033
    %v3058 = vunpack.c.l.b16 %v2034
    %v3059 = vunpack.c.l.b16 %v2035
    %v3060 = vunpack.c.l.b16 %v2036
    %v3061 = vunpack.c.l.b16 %v2037
    %v3062 = vunpack.c.l.b16 %v2038
    %v3063 = vunpack.c.l.b16 %v2039
    %v3064 = vunpack.c.l.b16 %v2040
    %v3065 = vunpack.c.l.b16 %v2041
    %v3066 = vunpack.c.l.b16 %v2042
    %v3067 = vunpack.c.l.b16 %v2043
    %v3068 = vunpack.c.l.b16 %v2044
    %v3069 = vunpack.c.l.b16 %v2045
    %v3070 = vunpack.c.l.b16 %v2046
    %v3071 = vunpack.c.l.b16 %v2047
    %v3072 = vunpack.c.l.b16 %v2048
    %v3073 = vunpack.c.l.b16 %v2049
    %v3074 = vunpack.c.l.b16 %v2050
    %v3075 = vunpack.c.l.b16 %v2051
    %v3076 = vunpack.c.l.b16 %v2052
    %v3077 = vunpack.c.l.b16 %v2053
    %v3078 = vunpack.c.l.b16 %v2054
    %v3079 = vunpack.c.l.b16 %v2055
    %v3080 = vunpack.c.l.b16 %v2056
    %v3081 = vunpack.c.l.b16 %v2057
    %v3082 = vunpack.c.l.b16 %v2058
    %v3083 = vunpack.c.l.b16 %v2059
    %v3084 = vunpack.c.l.b16 %v2060
    %v3085 = vunpack.c.l.b16 %v2061
    %v3086 = vunpack.c.l.b16 %v2062
    %v3087 = vunpack.c.l.b16 %v2063
    %v3088 = vunpack.c.l.b16 %v2064
    %v3089 = vunpack.c.l.b16 %v2065
    %v3090 = vunpack.c.l.b16 %v2066
    %v3091 = vunpack.c.l.b16 %v2067
    %v3092 = vunpack.c.l.b16 %v2068
    %v3093 = vunpack.c.l.b16 %v2069
    %v3094 = vunpack.c.l.b16 %v2070
    %v3095 = vunpack.c.l.b16 %v2071
    %v3096 = vunpack.c.l.b16 %v2072
    %v3097 = vunpack.c.l.b16 %v2073
    %v3098 = vunpack.c.l.b16 %v2074
    %v3099 = vunpack.c.l.b16 %v2075
    %v3100 = vunpack.c.l.b16 %v2076
    %v3101 = vunpack.c.l.b16 %v2077
    %v3102 = vunpack.c.l.b16 %v2078
    %v3103 = vunpack.c.l.b16 %v2079
    %v3104 = vunpack.c.l.b16 %v2080
    %v3105 = vunpack.c.l.b16 %v2081
    %v3106 = vunpack.c.l.b16 %v2082
    %v3107 = vunpack.c.l.b16 %v2083
    %v3108 = vunpack.c.l.b16 %v2084
    %v3109 = vunpack.c.l.b16 %v2085
    %v3110 = vunpack.c.l.b16 %v2086
    %v3111 = vunpack.c.l.b16 %v2087
    %v3112 = vunpack.c.l.b16 %v2088
    %v3113 = vunpack.c.l.b16 %v2089
    %v3114 = vunpack.c.l.b16 %v2090
    %v3115 = vunpack.c.l.b16 %v2091
    %v3116 = vunpack.c.l.b16 %v2092
    %v3117 = vunpack.c.l.b16 %v2093
    %v3118 = vunpack.c.l.b16 %v2094
    %v3119 = vunpack.c.l.b16 %v2095
    %v3120 = vunpack.c.l.b16 %v2096
    %v3121 = vunpack.c.l.b16 %v2097
    %v3122 = vunpack.c.l.b16 %v2098
    %v3123 = vunpack.c.l.b16 %v2099
    %v3124 = vunpack.c.l.b16 %v2100
    %v3125 = vunpack.c.l.b16 %v2101
    %v3126 = vunpack.c.l.b16 %v2102
    %v3127 = vunpack.c.l.b16 %v2103
    %v3128 = vunpack.c.l.b16 %v2104
    %v3129 = vunpack.c.l.b16 %v2105
    %v3130 = vunpack.c.l.b16 %v2106
    %v3131 = vunpack.c.l.b16 %v2107
    %v3132 = vunpack.c.l.b16 %v2108
    %v3133 = vunpack.c.l.b16 %v2109
    %v3134 = vunpack.c.l.b16 %v2110
    %v3135 = vunpack.c.l.b16 %v2111
    %v3136 = vunpack.c.l.b16 %v2112
    %v3137 = vunpack.c.l.b16 %v2113
    %v3138 = vunpack.c.l.b16 %v2114
    %v3139 = vunpack.c.l.b16 %v2115
    %v3140 = vunpack.c.l.b16 %v2116
    %v3141 = vunpack.c.l.b16 %v2117
    %v3142 = vunpack.c.l.b16 %v2118
    %v3143 = vunpack.c.l.b16 %v2119
    %v3144 = vunpack.c.l.b16 %v2120
    %v3145 = vunpack.c.l.b16 %v2121
    %v3146 = vunpack.c.l.b16 %v2122
    %v3147 = vunpack.c.l.b16 %v2123
    %v3148 = vunpack.c.l.b16 %v2124
    %v3149 = vunpack.c.l.b16 %v2125
    %v3150 = vunpack.c.l.b16 %v2126
    %v3151 = vunpack.c.l.b16 %v2127
    %v3152 = vunpack.c.l.b16 %v2128
    %v3153 = vunpack.c.l.b16 %v2129
    %v3154 = vunpack.c.l.b16 %v2130
    %v3155 = vunpack.c.l.b16 %v2131
    %v3156 = vunpack.c.l.b16 %v2132
    %v3157 = vunpack.c.l.b16 %v2133
    %v3158 = vunpack.c.l.b16 %v2134
    %v3159 = vunpack.c.l.b16 %v2135
    %v3160 = vunpack.c.l.b16 %v2136
    %v3161 = vunpack.c.l.b16 %v2137
    %v3162 = vunpack.c.l.b16 %v2138
    %v3163 = vunpack.c.l.b16 %v2139
    %v3164 = vunpack.c.l.b16 %v2140
    %v3165 = vunpack.c.l.b16 %v2141
    %v3166 = vunpack.c.l.b16 %v2142
    %v3167 = vunpack.c.l.b16 %v2143
    %v3168 = vunpack.c.l.b16 %v2144
    %v3169 = vunpack.c.l.b16 %v2145
    %v3170 = vunpack.c.l.b16 %v2146
    %v3171 = vunpack.c.l.b16 %v2147
    %v3172 = vunpack.c.l.b16 %v2148
    %v3173 = vunpack.c.l.b16 %v2149
    %v3174 = vunpack.c.l.b16 %v2150
    %v3175 = vunpack.c.l.b16 %v2151
    %v3176 = vunpack.c.l.b16 %v2152
    %v3177 = vunpack.c.l.b16 %v2153
    %v3178 = vunpack.c.l.b16 %v2154
    %v3179 = vunpack.c.l.b16 %v2155
    %v3180 = vunpack.c.l.b16 %v2156
    %v3181 = vunpack.c.l.b16 %v2157
    %v3182 = vunpack.c.l.b16 %v2158
    %v3183 = vunpack.c.l.b16 %v2159
    %v3184 = vunpack.c.l.b16 %v2160
    %v3185 = vunpack.c.l.b16 %v2161
    %v3186 = vunpack.c.l.b16 %v2162
    %v3187 = vunpack.c.l.b16 %v2163
    %v3188 = vunpack.c.l.b16 %v2164
    %v3189 = vunpack.c.l.b16 %v2165
    %v3190 = vunpack.c.l.b16 %v2166
    %v3191 = vunpack.c.l.b16 %v2167
    %v3192 = vunpack.c.l.b16 %v2168
    %v3193 = vunpack.c.l.b16 %v2169
    %v3194 = vunpack.c.l.b16 %v2170
    %v3195 = vunpack.c.l.b16 %v2171
    %v3196 = vunpack.c.l.b16 %v2172
    %v3197 = vunpack.c.l.b16 %v2173
    %v3198 = vunpack.c.l.b16 %v2174
    %v3199 = vunpack.c.l.b16 %v2175
    %v3200 = vunpack.c.l.b16 %v2176
    %v3201 = vunpack.c.l.b16 %v2177
    %v3202 = vunpack.c.l.b16 %v2178
    %v3203 = vunpack.c.l.b16 %v2179
    %v3204 = vunpack.c.l.b16 %v2180
    %v3205 = vunpack.c.l.b16 %v2181
    %v3206 = vunpack.c.l.b16 %v2182
    %v3207 = vunpack.c.l.b16 %v2183
    %v3208 = vunpack.c.l.b16 %v2184
    %v3209 = vunpack.c.l.b16 %v2185
    %v3210 = vunpack.c.l.b16 %v2186
    %v3211 = vunpack.c.l.b16 %v2187
    %v3212 = vunpack.c.l.b16 %v2188
    %v3213 = vunpack.c.l.b16 %v2189
    %v3214 = vunpack.c.l.b16 %v2190
    %v3215 = vunpack.c.l.b16 %v2191
    %v3216 = vunpack.c.l.b16 %v2192
    %v3217 = vunpack.c.l.b16 %v2193
    %v3218 = vunpack.c.l.b16 %v2194
    %v3219 = vunpack.c.l.b16 %v2195
    %v3220 = vunpack.c.l.b16 %v2196
    %v3221 = vunpack.c.l.b16 %v2197
    %v3222 = vunpack.c.l.b16 %v2198
    %v3223 = vunpack.c.l.b16 %v2199
    %v3224 = vunpack.c.l.b16 %v2200
    %v3225 = vunpack.c.l.b16 %v2201
    %v3226 = vunpack.c.l.b16 %v2202
    %v3227 = vunpack.c.l.b16 %v2203
    %v3228 = vunpack.c.l.b16 %v2204
    %v3229 = vunpack.c.l.b16 %v2205
    %v3230 = vunpack.c.l.b16 %v2206
    %v3231 = vunpack.c.l.b16 %v2207
    %v3232 = vunpack.c.l.b16 %v2208
    %v3233 = vunpack.c.l.b16 %v2209
    %v3234 = vunpack.c.l.b16 %v2210
    %v3235 = vpack.c.b16 %v2724, %v2723
    %v3236 = vpack.c.b16 %v2726, %v2725
    %v3237 = vpack.c.b16 %v2728, %v2727
    %v3238 = vpack.c.b16 %v2730, %v2729
    %v3239 = vpack.c.b16 %v2732, %v2731
    %v3240 = vpack.c.b16 %v2734, %v2733
    %v3241 = vpack.c.b16 %v2736, %v2735
    %v3242 = vpack.c.b16 %v2738, %v2737
    %v3243 = vpack.c.b16 %v2740, %v2739
    %v3244 = vpack.c.b16 %v2742, %v2741
    %v3245 = vpack.c.b16 %v2744, %v2743
    %v3246 = vpack.c.b16 %v2746, %v2745
    %v3247 = vpack.c.b16 %v2748, %v2747
    %v3248 = vpack.c.b16 %v2750, %v2749
    %v3249 = vpack.c.b16 %v2752, %v2751
    %v3250 = vpack.c.b16 %v2754, %v2753
    %v3251 = vpack.c.b16 %v2756, %v2755
    %v3252 = vpack.c.b16 %v2758, %v2757
    %v3253 = vpack.c.b16 %v2760, %v2759
    %v3254 = vpack.c.b16 %v2762, %v2761
    %v3255 = vpack.c.b16 %v2764, %v2763
    %v3256 = vpack.c.b16 %v2766, %v2765
    %v3257 = vpack.c.b16 %v2768, %v2767
    %v3258 = vpack.c.b16 %v2770, %v2769
    %v3259 = vpack.c.b16 %v2772, %v2771
    %v3260 = vpack.c.b16 %v2774, %v2773
    %v3261 = vpack.c.b16 %v2776, %v2775
    %v3262 = vpack.c.b16 %v2778, %v2777
    %v3263 = vpack.c.b16 %v2780, %v2779
    %v3264 = vpack.c.b16 %v2782, %v2781
    %v3265 = vpack.c.b16 %v2784, %v2783
    %v3266 = vpack.c.b16 %v2786, %v2785
    %v3267 = vpack.c.b16 %v2788, %v2787
    %v3268 = vpack.c.b16 %v2790, %v2789
    %v3269 = vpack.c.b16 %v2792, %v2791
    %v3270 = vpack.c.b16 %v2794, %v2793
    %v3271 = vpack.c.b16 %v2796, %v2795
    %v3272 = vpack.c.b16 %v2798, %v2797
    %v3273 = vpack.c.b16 %v2800, %v2799
    %v3274 = vpack.c.b16 %v2802, %v2801
    %v3275 = vpack.c.b16 %v2804, %v2803
    %v3276 = vpack.c.b16 %v2806, %v2805
    %v3277 = vpack.c.b16 %v2808, %v2807
    %v3278 = vpack.c.b16 %v2810, %v2809
    %v3279 = vpack.c.b16 %v2812, %v2811
    %v3280 = vpack.c.b16 %v2814, %v2813
    %v3281 = vpack.c.b16 %v2816, %v2815
    %v3282 = vpack.c.b16 %v2818, %v2817
    %v3283 = vpack.c.b16 %v2820, %v2819
    %v3284 = vpack.c.b16 %v2822, %v2821
    %v3285 = vpack.c.b16 %v2824, %v2823
    %v3286 = vpack.c.b16 %v2826, %v2825
    %v3287 = vpack.c.b16 %v2828, %v2827
    %v3288 = vpack.c.b16 %v2830, %v2829
    %v3289 = vpack.c.b16 %v2832, %v2831
    %v3290 = vpack.c.b16 %v2834, %v2833
    %v3291 = vpack.c.b16 %v2836, %v2835
    %v3292 = vpack.c.b16 %v2838, %v2837
    %v3293 = vpack.c.b16 %v2840, %v2839
    %v3294 = vpack.c.b16 %v2842, %v2841
    %v3295 = vpack.c.b16 %v2844, %v2843
    %v3296 = vpack.c.b16 %v2846, %v2845
    %v3297 = vpack.c.b16 %v2848, %v2847
    %v3298 = vpack.c.b16 %v2850, %v2849
    %v3299 = vpack.c.b16 %v2852, %v2851
    %v3300 = vpack.c.b16 %v2854, %v2853
    %v3301 = vpack.c.b16 %v2856, %v2855
    %v3302 = vpack.c.b16 %v2858, %v2857
    %v3303 = vpack.c.b16 %v2860, %v2859
    %v3304 = vpack.c.b16 %v2862, %v2861
    %v3305 = vpack.c.b16 %v2864, %v2863
    %v3306 = vpack.c.b16 %v2866, %v2865
    %v3307 = vpack.c.b16 %v2868, %v2867
    %v3308 = vpack.c.b16 %v2870, %v2869
    %v3309 = vpack.c.b16 %v2872, %v2871
    %v3310 = vpack.c.b16 %v2874, %v2873
    %v3311 = vpack.c.b16 %v2876, %v2875
    %v3312 = vpack.c.b16 %v2878, %v2877
    %v3313 = vpack.c.b16 %v2880, %v2879
    %v3314 = vpack.c.b16 %v2882, %v2881
    %v3315 = vpack.c.b16 %v2884, %v2883
    %v3316 = vpack.c.b16 %v2886, %v2885
    %v3317 = vpack.c.b16 %v2888, %v2887
    %v3318 = vpack.c.b16 %v2890, %v2889
    %v3319 = vpack.c.b16 %v2892, %v2891
    %v3320 = vpack.c.b16 %v2894, %v2893
    %v3321 = vpack.c.b16 %v2896, %v2895
    %v3322 = vpack.c.b16 %v2898, %v2897
    %v3323 = vpack.c.b16 %v2900, %v2899
    %v3324 = vpack.c.b16 %v2902, %v2901
    %v3325 = vpack.c.b16 %v2904, %v2903
    %v3326 = vpack.c.b16 %v2906, %v2905
    %v3327 = vpack.c.b16 %v2908, %v2907
    %v3328 = vpack.c.b16 %v2910, %v2909
    %v3329 = vpack.c.b16 %v2912, %v2911
    %v3330 = vpack.c.b16 %v2914, %v2913
    %v3331 = vpack.c.b16 %v2916, %v2915
    %v3332 = vpack.c.b16 %v2918, %v2917
    %v3333 = vpack.c.b16 %v2920, %v2919
    %v3334 = vpack.c.b16 %v2922, %v2921
    %v3335 = vpack.c.b16 %v2924, %v2923
    %v3336 = vpack.c.b16 %v2926, %v2925
    %v3337 = vpack.c.b16 %v2928, %v2927
    %v3338 = vpack.c.b16 %v2930, %v2929
    %v3339 = vpack.c.b16 %v2932, %v2931
    %v3340 = vpack.c.b16 %v2934, %v2933
    %v3341 = vpack.c.b16 %v2936, %v2935
    %v3342 = vpack.c.b16 %v2938, %v2937
    %v3343 = vpack.c.b16 %v2940, %v2939
    %v3344 = vpack.c.b16 %v2942, %v2941
    %v3345 = vpack.c.b16 %v2944, %v2943
    %v3346 = vpack.c.b16 %v2946, %v2945
    %v3347 = vpack.c.b16 %v2948, %v2947
    %v3348 = vpack.c.b16 %v2950, %v2949
    %v3349 = vpack.c.b16 %v2952, %v2951
    %v3350 = vpack.c.b16 %v2954, %v2953
    %v3351 = vpack.c.b16 %v2956, %v2955
    %v3352 = vpack.c.b16 %v2958, %v2957
    %v3353 = vpack.c.b16 %v2960, %v2959
    %v3354 = vpack.c.b16 %v2962, %v2961
    %v3355 = vpack.c.b16 %v2964, %v2963
    %v3356 = vpack.c.b16 %v2966, %v2965
    %v3357 = vpack.c.b16 %v2968, %v2967
    %v3358 = vpack.c.b16 %v2970, %v2969
    %v3359 = vpack.c.b16 %v2972, %v2971
    %v3360 = vpack.c.b16 %v2974, %v2973
    %v3361 = vpack.c.b16 %v2976, %v2975
    %v3362 = vpack.c.b16 %v2978, %v2977
    %v3363 = vpack.c.b16 %v2980, %v2979
    %v3364 = vpack.c.b16 %v2982, %v2981
    %v3365 = vpack.c.b16 %v2984, %v2983
    %v3366 = vpack.c.b16 %v2986, %v2985
    %v3367 = vpack.c.b16 %v2988, %v2987
    %v3368 = vpack.c.b16 %v2990, %v2989
    %v3369 = vpack.c.b16 %v2992, %v2991
    %v3370 = vpack.c.b16 %v2994, %v2993
    %v3371 = vpack.c.b16 %v2996, %v2995
    %v3372 = vpack.c.b16 %v2998, %v2997
    %v3373 = vpack.c.b16 %v3000, %v2999
    %v3374 = vpack.c.b16 %v3002, %v3001
    %v3375 = vpack.c.b16 %v3004, %v3003
    %v3376 = vpack.c.b16 %v3006, %v3005
    %v3377 = vpack.c.b16 %v3008, %v3007
    %v3378 = vpack.c.b16 %v3010, %v3009
    %v3379 = vpack.c.b16 %v3012, %v3011
    %v3380 = vpack.c.b16 %v3014, %v3013
    %v3381 = vpack.c.b16 %v3016, %v3015
    %v3382 = vpack.c.b16 %v3018, %v3017
    %v3383 = vpack.c.b16 %v3020, %v3019
    %v3384 = vpack.c.b16 %v3022, %v3021
    %v3385 = vpack.c.b16 %v3024, %v3023
    %v3386 = vpack.c.b16 %v3026, %v3025
    %v3387 = vpack.c.b16 %v3028, %v3027
    %v3388 = vpack.c.b16 %v3030, %v3029
    %v3389 = vpack.c.b16 %v3032, %v3031
    %v3390 = vpack.c.b16 %v3034, %v3033
    %v3391 = vpack.c.b16 %v3036, %v3035
    %v3392 = vpack.c.b16 %v3038, %v3037
    %v3393 = vpack.c.b16 %v3040, %v3039
    %v3394 = vpack.c.b16 %v3042, %v3041
    %v3395 = vpack.c.b16 %v3044, %v3043
    %v3396 = vpack.c.b16 %v3046, %v3045
    %v3397 = vpack.c.b16 %v3048, %v3047
    %v3398 = vpack.c.b16 %v3050, %v3049
    %v3399 = vpack.c.b16 %v3052, %v3051
    %v3400 = vpack.c.b16 %v3054, %v3053
    %v3401 = vpack.c.b16 %v3056, %v3055
    %v3402 = vpack.c.b16 %v3058, %v3057
    %v3403 = vpack.c.b16 %v3060, %v3059
    %v3404 = vpack.c.b16 %v3062, %v3061
    %v3405 = vpack.c.b16 %v3064, %v3063
    %v3406 = vpack.c.b16 %v3066, %v3065
    %v3407 = vpack.c.b16 %v3068, %v3067
    %v3408 = vpack.c.b16 %v3070, %v3069
    %v3409 = vpack.c.b16 %v3072, %v3071
    %v3410 = vpack.c.b16 %v3074, %v3073
    %v3411 = vpack.c.b16 %v3076, %v3075
    %v3412 = vpack.c.b16 %v3078, %v3077
    %v3413 = vpack.c.b16 %v3080, %v3079
    %v3414 = vpack.c.b16 %v3082, %v3081
    %v3415 = vpack.c.b16 %v3084, %v3083
    %v3416 = vpack.c.b16 %v3086, %v3085
    %v3417 = vpack.c.b16 %v3088, %v3087
    %v3418 = vpack.c.b16 %v3090, %v3089
    %v3419 = vpack.c.b16 %v3092, %v3091
    %v3420 = vpack.c.b16 %v3094, %v3093
    %v3421 = vpack.c.b16 %v3096, %v3095
    %v3422 = vpack.c.b16 %v3098, %v3097
    %v3423 = vpack.c.b16 %v3100, %v3099
    %v3424 = vpack.c.b16 %v3102, %v3101
    %v3425 = vpack.c.b16 %v3104, %v3103
    %v3426 = vpack.c.b16 %v3106, %v3105
    %v3427 = vpack.c.b16 %v3108, %v3107
    %v3428 = vpack.c.b16 %v3110, %v3109
    %v3429 = vpack.c.b16 %v3112, %v3111
    %v3430 = vpack.c.b16 %v3114, %v3113
    %v3431 = vpack.c.b16 %v3116, %v3115
    %v3432 = vpack.c.b16 %v3118, %v3117
    %v3433 = vpack.c.b16 %v3120, %v3119
    %v3434 = vpack.c.b16 %v3122, %v3121
    %v3435 = vpack.c.b16 %v3124, %v3123
    %v3436 = vpack.c.b16 %v3126, %v3125
    %v3437 = vpack.c.b16 %v3128, %v3127
    %v3438 = vpack.c.b16 %v3130, %v3129
    %v3439 = vpack.c.b16 %v3132, %v3131
    %v3440 = vpack.c.b16 %v3134, %v3133
    %v3441 = vpack.c.b16 %v3136, %v3135
    %v3442 = vpack.c.b16 %v3138, %v3137
    %v3443 = vpack.c.b16 %v3140, %v3139
    %v3444 = vpack.c.b16 %v3142, %v3141
    %v3445 = vpack.c.b16 %v3144, %v3143
    %v3446 = vpack.c.b16 %v3146, %v3145
    %v3447 = vpack.c.b16 %v3148, %v3147
    %v3448 = vpack.c.b16 %v3150, %v3149
    %v3449 = vpack.c.b16 %v3152, %v3151
    %v3450 = vpack.c.b16 %v3154, %v3153
    %v3451 = vpack.c.b16 %v3156, %v3155
    %v3452 = vpack.c.b16 %v3158, %v3157
    %v3453 = vpack.c.b16 %v3160, %v3159
    %v3454 = vpack.c.b16 %v3162, %v3161
    %v3455 = vpack.c.b16 %v3164, %v3163
    %v3456 = vpack.c.b16 %v3166, %v3165
    %v3457 = vpack.c.b16 %v3168, %v3167
    %v3458 = vpack.c.b16 %v3170, %v3169
    %v3459 = vpack.c.b16 %v3172, %v3171
    %v3460 = vpack.c.b16 %v3174, %v3173
    %v3461 = vpack.c.b16 %v3176, %v3175
    %v3462 = vpack.c.b16 %v3178, %v3177
    %v3463 = vpack.c.b16 %v3180, %v3179
    %v3464 = vpack.c.b16 %v3182, %v3181
    %v3465 = vpack.c.b16 %v3184, %v3183
    %v3466 = vpack.c.b16 %v3186, %v3185
    %v3467 = vpack.c.b16 %v3188, %v3187
    %v3468 = vpack.c.b16 %v3190, %v3189
    %v3469 = vpack.c.b16 %v3192, %v3191
    %v3470 = vpack.c.b16 %v3194, %v3193
    %v3471 = vpack.c.b16 %v3196, %v3195
    %v3472 = vpack.c.b16 %v3198, %v3197
    %v3473 = vpack.c.b16 %v3200, %v3199
    %v3474 = vpack.c.b16 %v3202, %v3201
    %v3475 = vpack.c.b16 %v3204, %v3203
    %v3476 = vpack.c.b16 %v3206, %v3205
    %v3477 = vpack.c.b16 %v3208, %v3207
    %v3478 = vpack.c.b16 %v3210, %v3209
    %v3479 = vpack.c.b16 %v3212, %v3211
    %v3480 = vpack.c.b16 %v3214, %v3213
    %v3481 = vpack.c.b16 %v3216, %v3215
    %v3482 = vpack.c.b16 %v3218, %v3217
    %v3483 = vpack.c.b16 %v3220, %v3219
    %v3484 = vpack.c.b16 %v3222, %v3221
    %v3485 = vpack.c.b16 %v3224, %v3223
    %v3486 = vpack.c.b16 %v3226, %v3225
    %v3487 = vpack.c.b16 %v3228, %v3227
    %v3488 = vpack.c.b16 %v3230, %v3229
    %v3489 = vpack.c.b16 %v3232, %v3231
    %v3490 = vpack.c.b16 %v3234, %v3233
    %3747 = vmatprep.subr.bf16.mxu0 0
    %3748 = vmatpush1.bf16.msra.mxu0 %v3235
    %3749 = vmatprep.subr.bf16.mxu0 0
    %3750 = vmatpush1.bf16.msra.mxu0 %v3236
    %3751 = vmatprep.subr.bf16.mxu0 0
    %3752 = vmatpush1.bf16.msra.mxu0 %v3237
    %3753 = vmatprep.subr.bf16.mxu0 0
    %3754 = vmatpush1.bf16.msra.mxu0 %v3238
    %3755 = vmatprep.subr.bf16.mxu0 0
    %3756 = vmatpush1.bf16.msra.mxu0 %v3239
    %3757 = vmatprep.subr.bf16.mxu0 0
    %3758 = vmatpush1.bf16.msra.mxu0 %v3240
    %3759 = vmatprep.subr.bf16.mxu0 0
    %3760 = vmatpush1.bf16.msra.mxu0 %v3241
    %3761 = vmatprep.subr.bf16.mxu0 0
    %3762 = vmatpush1.bf16.msra.mxu0 %v3242
    %3763 = vmatprep.subr.bf16.mxu0 0
    %3764 = vmatpush1.bf16.msra.mxu0 %v3243
    %3765 = vmatprep.subr.bf16.mxu0 0
    %3766 = vmatpush1.bf16.msra.mxu0 %v3244
    %3767 = vmatprep.subr.bf16.mxu0 0
    %3768 = vmatpush1.bf16.msra.mxu0 %v3245
    %3769 = vmatprep.subr.bf16.mxu0 0
    %3770 = vmatpush1.bf16.msra.mxu0 %v3246
    %3771 = vmatprep.subr.bf16.mxu0 0
    %3772 = vmatpush1.bf16.msra.mxu0 %v3247
    %3773 = vmatprep.subr.bf16.mxu0 0
    %3774 = vmatpush1.bf16.msra.mxu0 %v3248
    %3775 = vmatprep.subr.bf16.mxu0 0
    %3776 = vmatpush1.bf16.msra.mxu0 %v3249
    %3777 = vmatprep.subr.bf16.mxu0 0
    %3778 = vmatpush1.bf16.msra.mxu0 %v3250
    %3779 = vmatprep.mubr.bf16.mxu0 %v612
    %3780 = vmatmul.mubr.bf16.gmra.mrb[0].mxu0 %v611
    %v3781 = vpop.f32.mrb[0].mxu0
    %v3782 = vadd.f32 0.0, %v3781
    %v3783 = vpop.f32.mrb[0].mxu0
    %v3784 = vpop.f32.mrb[0].mxu0
    %v3785 = vadd.f32 0.0, %v3784
    %v3786 = vpop.f32.mrb[0].mxu0
    %3787 = vmatprep.mubr.bf16.mxu0 %v644
    %3788 = vmatmul.mubr.bf16.gmra.mrb[0].mxu0 %v643
    %v3789 = vpop.f32.mrb[0].mxu0
    %v3790 = vadd.f32 0.0, %v3789
    %v3791 = vpop.f32.mrb[0].mxu0
    %v3792 = vpop.f32.mrb[0].mxu0
    %v3793 = vadd.f32 0.0, %v3792
    %v3794 = vpop.f32.mrb[0].mxu0
    %3795 = vmatprep.mubr.bf16.mxu0 %v676
    %3796 = vmatmul.mubr.bf16.gmra.mrb[0].mxu0 %v675
    %v3797 = vpop.f32.mrb[0].mxu0
    %v3798 = vadd.f32 0.0, %v3797
    %v3799 = vpop.f32.mrb[0].mxu0
    %v3800 = vpop.f32.mrb[0].mxu0
    %v3801 = vadd.f32 0.0, %v3800
    %v3802 = vpop.f32.mrb[0].mxu0
    %3803 = vmatprep.mubr.bf16.mxu0 %v708
    %3804 = vmatmul.mubr.bf16.gmra.mrb[0].mxu0 %v707
    %v3805 = vpop.f32.mrb[0].mxu0
    %v3806 = vadd.f32 0.0, %v3805
    %v3807 = vpop.f32.mrb[0].mxu0
    %v3808 = vpop.f32.mrb[0].mxu0
    %v3809 = vadd.f32 0.0, %v3808
    %v3810 = vpop.f32.mrb[0].mxu0
    %3811 = vmatprep.mubr.bf16.mxu0 %v740
    %3812 = vmatmul.mubr.bf16.gmra.mrb[0].mxu0 %v739
    %v3813 = vpop.f32.mrb[0].mxu0
    %v3814 = vadd.f32 0.0, %v3813
    %v3815 = vpop.f32.mrb[0].mxu0
    %v3816 = vpop.f32.mrb[0].mxu0
    %v3817 = vadd.f32 0.0, %v3816
    %v3818 = vpop.f32.mrb[0].mxu0
    %3819 = vmatprep.mubr.bf16.mxu0 %v772
    %3820 = vmatmul.mubr.bf16.gmra.mrb[0].mxu0 %v771
    %v3821 = vpop.f32.mrb[0].mxu0
    %v3822 = vadd.f32 0.0, %v3821
    %v3823 = vpop.f32.mrb[0].mxu0
    %v3824 = vpop.f32.mrb[0].mxu0
    %v3825 = vadd.f32 0.0, %v3824
    %v3826 = vpop.f32.mrb[0].mxu0
    %3827 = vmatprep.mubr.bf16.mxu0 %v804
    %3828 = vmatmul.mubr.bf16.gmra.mrb[0].mxu0 %v803
    %v3829 = vpop.f32.mrb[0].mxu0
    %v3830 = vadd.f32 0.0, %v3829
    %v3831 = vpop.f32.mrb[0].mxu0
    %v3832 = vpop.f32.mrb[0].mxu0
    %v3833 = vadd.f32 0.0, %v3832
    %v3834 = vpop.f32.mrb[0].mxu0
    %3835 = vmatprep.mubr.bf16.mxu0 %v836
    %3836 = vmatmul.mubr.bf16.gmra.mrb[0].mxu0 %v835
    %v3837 = vpop.f32.mrb[0].mxu0
    %v3838 = vadd.f32 0.0, %v3837
    %v3839 = vpop.f32.mrb[0].mxu0
    %v3840 = vpop.f32.mrb[0].mxu0
    %v3841 = vadd.f32 0.0, %v3840
    %v3842 = vpop.f32.mrb[0].mxu0
    %3843 = vmatprep.mubr.bf16.mxu0 %v868
    %3844 = vmatmul.mubr.bf16.gmra.mrb[0].mxu0 %v867
    %v3845 = vpop.f32.mrb[0].mxu0
    %v3846 = vadd.f32 0.0, %v3845
    %v3847 = vpop.f32.mrb[0].mxu0
    %v3848 = vpop.f32.mrb[0].mxu0
    %v3849 = vadd.f32 0.0, %v3848
    %v3850 = vpop.f32.mrb[0].mxu0
    %3851 = vmatprep.mubr.bf16.mxu0 %v900
    %3852 = vmatmul.mubr.bf16.gmra.mrb[0].mxu0 %v899
    %v3853 = vpop.f32.mrb[0].mxu0
    %v3854 = vadd.f32 0.0, %v3853
    %v3855 = vpop.f32.mrb[0].mxu0
    %v3856 = vpop.f32.mrb[0].mxu0
    %v3857 = vadd.f32 0.0, %v3856
    %v3858 = vpop.f32.mrb[0].mxu0
    %3859 = vmatprep.mubr.bf16.mxu0 %v932
    %3860 = vmatmul.mubr.bf16.gmra.mrb[0].mxu0 %v931
    %v3861 = vpop.f32.mrb[0].mxu0
    %v3862 = vadd.f32 0.0, %v3861
    %v3863 = vpop.f32.mrb[0].mxu0
    %v3864 = vpop.f32.mrb[0].mxu0
    %v3865 = vadd.f32 0.0, %v3864
    %v3866 = vpop.f32.mrb[0].mxu0
    %3867 = vmatprep.mubr.bf16.mxu0 %v964
    %3868 = vmatmul.mubr.bf16.gmra.mrb[0].mxu0 %v963
    %v3869 = vpop.f32.mrb[0].mxu0
    %v3870 = vadd.f32 0.0, %v3869
    %v3871 = vpop.f32.mrb[0].mxu0
    %v3872 = vpop.f32.mrb[0].mxu0
    %v3873 = vadd.f32 0.0, %v3872
    %v3874 = vpop.f32.mrb[0].mxu0
    %3875 = vmatprep.mubr.bf16.mxu0 %v996
    %3876 = vmatmul.mubr.bf16.gmra.mrb[0].mxu0 %v995
    %v3877 = vpop.f32.mrb[0].mxu0
    %v3878 = vadd.f32 0.0, %v3877
    %v3879 = vpop.f32.mrb[0].mxu0
    %v3880 = vpop.f32.mrb[0].mxu0
    %v3881 = vadd.f32 0.0, %v3880
    %v3882 = vpop.f32.mrb[0].mxu0
    %3883 = vmatprep.mubr.bf16.mxu0 %v1028
    %3884 = vmatmul.mubr.bf16.gmra.mrb[0].mxu0 %v1027
    %v3885 = vpop.f32.mrb[0].mxu0
    %v3886 = vadd.f32 0.0, %v3885
    %v3887 = vpop.f32.mrb[0].mxu0
    %v3888 = vpop.f32.mrb[0].mxu0
    %v3889 = vadd.f32 0.0, %v3888
    %v3890 = vpop.f32.mrb[0].mxu0
    %3891 = vmatprep.mubr.bf16.mxu0 %v1060
    %3892 = vmatmul.mubr.bf16.gmra.mrb[0].mxu0 %v1059
    %v3893 = vpop.f32.mrb[0].mxu0
    %v3894 = vadd.f32 0.0, %v3893
    %v3895 = vpop.f32.mrb[0].mxu0
    %v3896 = vpop.f32.mrb[0].mxu0
    %v3897 = vadd.f32 0.0, %v3896
    %v3898 = vpop.f32.mrb[0].mxu0
    %3899 = vmatprep.mubr.bf16.mxu0 %v1092
    %3900 = vmatmul.mubr.bf16.gmra.mrb[0].mxu0 %v1091
    %v3901 = vpop.f32.mrb[0].mxu0
    %v3902 = vadd.f32 0.0, %v3901
    %v3903 = vpop.f32.mrb[0].mxu0
    %v3904 = vpop.f32.mrb[0].mxu0
    %v3905 = vadd.f32 0.0, %v3904
    %v3906 = vpop.f32.mrb[0].mxu0
    %3907 = vmatprep.mubr.bf16.mxu0 %v1124
    %3908 = vmatmul.mubr.bf16.gmra.mrb[0].mxu0 %v1123
    %v3909 = vpop.f32.mrb[0].mxu0
    %v3910 = vadd.f32 0.0, %v3909
    %v3911 = vpop.f32.mrb[0].mxu0
    %v3912 = vpop.f32.mrb[0].mxu0
    %v3913 = vadd.f32 0.0, %v3912
    %v3914 = vpop.f32.mrb[0].mxu0
    %3915 = vmatprep.mubr.bf16.mxu0 %v1156
    %3916 = vmatmul.mubr.bf16.gmra.mrb[0].mxu0 %v1155
    %v3917 = vpop.f32.mrb[0].mxu0
    %v3918 = vadd.f32 0.0, %v3917
    %v3919 = vpop.f32.mrb[0].mxu0
    %v3920 = vpop.f32.mrb[0].mxu0
    %v3921 = vadd.f32 0.0, %v3920
    %v3922 = vpop.f32.mrb[0].mxu0
    %3923 = vmatprep.mubr.bf16.mxu0 %v1188
    %3924 = vmatmul.mubr.bf16.gmra.mrb[0].mxu0 %v1187
    %v3925 = vpop.f32.mrb[0].mxu0
    %v3926 = vadd.f32 0.0, %v3925
    %v3927 = vpop.f32.mrb[0].mxu0
    %v3928 = vpop.f32.mrb[0].mxu0
    %v3929 = vadd.f32 0.0, %v3928
    %v3930 = vpop.f32.mrb[0].mxu0
    %3931 = vmatprep.mubr.bf16.mxu0 %v1220
    %3932 = vmatmul.mubr.bf16.gmra.mrb[0].mxu0 %v1219
    %v3933 = vpop.f32.mrb[0].mxu0
    %v3934 = vadd.f32 0.0, %v3933
    %v3935 = vpop.f32.mrb[0].mxu0
    %v3936 = vpop.f32.mrb[0].mxu0
    %v3937 = vadd.f32 0.0, %v3936
    %v3938 = vpop.f32.mrb[0].mxu0
    %3939 = vmatprep.mubr.bf16.mxu0 %v1252
    %3940 = vmatmul.mubr.bf16.gmra.mrb[0].mxu0 %v1251
    %v3941 = vpop.f32.mrb[0].mxu0
    %v3942 = vadd.f32 0.0, %v3941
    %v3943 = vpop.f32.mrb[0].mxu0
    %v3944 = vpop.f32.mrb[0].mxu0
    %v3945 = vadd.f32 0.0, %v3944
    %v3946 = vpop.f32.mrb[0].mxu0
    %3947 = vmatprep.mubr.bf16.mxu0 %v1284
    %3948 = vmatmul.mubr.bf16.gmra.mrb[0].mxu0 %v1283
    %v3949 = vpop.f32.mrb[0].mxu0
    %v3950 = vadd.f32 0.0, %v3949
    %v3951 = vpop.f32.mrb[0].mxu0
    %v3952 = vpop.f32.mrb[0].mxu0
    %v3953 = vadd.f32 0.0, %v3952
    %v3954 = vpop.f32.mrb[0].mxu0
    %3955 = vmatprep.mubr.bf16.mxu0 %v1316
    %3956 = vmatmul.mubr.bf16.gmra.mrb[0].mxu0 %v1315
    %v3957 = vpop.f32.mrb[0].mxu0
    %v3958 = vadd.f32 0.0, %v3957
    %v3959 = vpop.f32.mrb[0].mxu0
    %v3960 = vpop.f32.mrb[0].mxu0
    %v3961 = vadd.f32 0.0, %v3960
    %v3962 = vpop.f32.mrb[0].mxu0
    %3963 = vmatprep.mubr.bf16.mxu0 %v1348
    %3964 = vmatmul.mubr.bf16.gmra.mrb[0].mxu0 %v1347
    %v3965 = vpop.f32.mrb[0].mxu0
    %v3966 = vadd.f32 0.0, %v3965
    %v3967 = vpop.f32.mrb[0].mxu0
    %v3968 = vpop.f32.mrb[0].mxu0
    %v3969 = vadd.f32 0.0, %v3968
    %v3970 = vpop.f32.mrb[0].mxu0
    %3971 = vmatprep.mubr.bf16.mxu0 %v1380
    %3972 = vmatmul.mubr.bf16.gmra.mrb[0].mxu0 %v1379
    %v3973 = vpop.f32.mrb[0].mxu0
    %v3974 = vadd.f32 0.0, %v3973
    %v3975 = vpop.f32.mrb[0].mxu0
    %v3976 = vpop.f32.mrb[0].mxu0
    %v3977 = vadd.f32 0.0, %v3976
    %v3978 = vpop.f32.mrb[0].mxu0
    %3979 = vmatprep.mubr.bf16.mxu0 %v1412
    %3980 = vmatmul.mubr.bf16.gmra.mrb[0].mxu0 %v1411
    %v3981 = vpop.f32.mrb[0].mxu0
    %v3982 = vadd.f32 0.0, %v3981
    %v3983 = vpop.f32.mrb[0].mxu0
    %v3984 = vpop.f32.mrb[0].mxu0
    %v3985 = vadd.f32 0.0, %v3984
    %v3986 = vpop.f32.mrb[0].mxu0
    %3987 = vmatprep.mubr.bf16.mxu0 %v1444
    %3988 = vmatmul.mubr.bf16.gmra.mrb[0].mxu0 %v1443
    %v3989 = vpop.f32.mrb[0].mxu0
    %v3990 = vadd.f32 0.0, %v3989
    %v3991 = vpop.f32.mrb[0].mxu0
    %v3992 = vpop.f32.mrb[0].mxu0
    %v3993 = vadd.f32 0.0, %v3992
    %v3994 = vpop.f32.mrb[0].mxu0
    %3995 = vmatprep.mubr.bf16.mxu0 %v1476
    %3996 = vmatmul.mubr.bf16.gmra.mrb[0].mxu0 %v1475
    %v3997 = vpop.f32.mrb[0].mxu0
    %v3998 = vadd.f32 0.0, %v3997
    %v3999 = vpop.f32.mrb[0].mxu0
    %v4000 = vpop.f32.mrb[0].mxu0
    %v4001 = vadd.f32 0.0, %v4000
    %v4002 = vpop.f32.mrb[0].mxu0
    %4003 = vmatprep.mubr.bf16.mxu0 %v1508
    %4004 = vmatmul.mubr.bf16.gmra.mrb[0].mxu0 %v1507
    %v4005 = vpop.f32.mrb[0].mxu0
    %v4006 = vadd.f32 0.0, %v4005
    %v4007 = vpop.f32.mrb[0].mxu0
    %v4008 = vpop.f32.mrb[0].mxu0
    %v4009 = vadd.f32 0.0, %v4008
    %v4010 = vpop.f32.mrb[0].mxu0
    %4011 = vmatprep.mubr.bf16.mxu0 %v1540
    %4012 = vmatmul.mubr.bf16.gmra.mrb[0].mxu0 %v1539
    %v4013 = vpop.f32.mrb[0].mxu0
    %v4014 = vadd.f32 0.0, %v4013
    %v4015 = vpop.f32.mrb[0].mxu0
    %v4016 = vpop.f32.mrb[0].mxu0
    %v4017 = vadd.f32 0.0, %v4016
    %v4018 = vpop.f32.mrb[0].mxu0
    %4019 = vmatprep.mubr.bf16.mxu0 %v1572
    %4020 = vmatmul.mubr.bf16.gmra.mrb[0].mxu0 %v1571
    %v4021 = vpop.f32.mrb[0].mxu0
    %v4022 = vadd.f32 0.0, %v4021
    %v4023 = vpop.f32.mrb[0].mxu0
    %v4024 = vpop.f32.mrb[0].mxu0
    %v4025 = vadd.f32 0.0, %v4024
    %v4026 = vpop.f32.mrb[0].mxu0
    %4027 = vmatprep.mubr.bf16.mxu0 %v1604
    %4028 = vmatmul.mubr.bf16.gmra.mrb[0].mxu0 %v1603
    %v4029 = vpop.f32.mrb[0].mxu0
    %v4030 = vadd.f32 0.0, %v4029
    %v4031 = vpop.f32.mrb[0].mxu0
    %v4032 = vpop.f32.mrb[0].mxu0
    %v4033 = vadd.f32 0.0, %v4032
    %v4034 = vpop.f32.mrb[0].mxu0
    %4035 = vdwg.mxu0
    %4036 = vmatprep.subr.bf16.mxu0 0
    %4037 = vmatpush1.bf16.msra.mxu0 %v3251
    %4038 = vmatprep.subr.bf16.mxu0 0
    %4039 = vmatpush1.bf16.msra.mxu0 %v3252
    %4040 = vmatprep.subr.bf16.mxu0 0
    %4041 = vmatpush1.bf16.msra.mxu0 %v3253
    %4042 = vmatprep.subr.bf16.mxu0 0
    %4043 = vmatpush1.bf16.msra.mxu0 %v3254
    %4044 = vmatprep.subr.bf16.mxu0 0
    %4045 = vmatpush1.bf16.msra.mxu0 %v3255
    %4046 = vmatprep.subr.bf16.mxu0 0
    %4047 = vmatpush1.bf16.msra.mxu0 %v3256
    %4048 = vmatprep.subr.bf16.mxu0 0
    %4049 = vmatpush1.bf16.msra.mxu0 %v3257
    %4050 = vmatprep.subr.bf16.mxu0 0
    %4051 = vmatpush1.bf16.msra.mxu0 %v3258
    %4052 = vmatprep.subr.bf16.mxu0 0
    %4053 = vmatpush1.bf16.msra.mxu0 %v3259
    %4054 = vmatprep.subr.bf16.mxu0 0
    %4055 = vmatpush1.bf16.msra.mxu0 %v3260
    %4056 = vmatprep.subr.bf16.mxu0 0
    %4057 = vmatpush1.bf16.msra.mxu0 %v3261
    %4058 = vmatprep.subr.bf16.mxu0 0
    %4059 = vmatpush1.bf16.msra.mxu0 %v3262
    %4060 = vmatprep.subr.bf16.mxu0 0
    %4061 = vmatpush1.bf16.msra.mxu0 %v3263
    %4062 = vmatprep.subr.bf16.mxu0 0
    %4063 = vmatpush1.bf16.msra.mxu0 %v3264
    %4064 = vmatprep.subr.bf16.mxu0 0
    %4065 = vmatpush1.bf16.msra.mxu0 %v3265
    %4066 = vmatprep.subr.bf16.mxu0 0
    %4067 = vmatpush1.bf16.msra.mxu0 %v3266
    %4068 = vmatprep.mubr.bf16.mxu0 %v614
    %4069 = vmatmul.mubr.bf16.gmra.mrb[0].mxu0 %v613
    %v4070 = vpop.f32.mrb[0].mxu0
    %v4071 = vadd.f32 %v3782, %v4070
    %v4072 = vpop.f32.mrb[0].mxu0
    %v4073 = vpop.f32.mrb[0].mxu0
    %v4074 = vadd.f32 %v3785, %v4073
    %v4075 = vpop.f32.mrb[0].mxu0
    %4076 = vmatprep.mubr.bf16.mxu0 %v646
    %4077 = vmatmul.mubr.bf16.gmra.mrb[0].mxu0 %v645
    %v4078 = vpop.f32.mrb[0].mxu0
    %v4079 = vadd.f32 %v3790, %v4078
    %v4080 = vpop.f32.mrb[0].mxu0
    %v4081 = vpop.f32.mrb[0].mxu0
    %v4082 = vadd.f32 %v3793, %v4081
    %v4083 = vpop.f32.mrb[0].mxu0
    %4084 = vmatprep.mubr.bf16.mxu0 %v678
    %4085 = vmatmul.mubr.bf16.gmra.mrb[0].mxu0 %v677
    %v4086 = vpop.f32.mrb[0].mxu0
    %v4087 = vadd.f32 %v3798, %v4086
    %v4088 = vpop.f32.mrb[0].mxu0
    %v4089 = vpop.f32.mrb[0].mxu0
    %v4090 = vadd.f32 %v3801, %v4089
    %v4091 = vpop.f32.mrb[0].mxu0
    %4092 = vmatprep.mubr.bf16.mxu0 %v710
    %4093 = vmatmul.mubr.bf16.gmra.mrb[0].mxu0 %v709
    %v4094 = vpop.f32.mrb[0].mxu0
    %v4095 = vadd.f32 %v3806, %v4094
    %v4096 = vpop.f32.mrb[0].mxu0
    %v4097 = vpop.f32.mrb[0].mxu0
    %v4098 = vadd.f32 %v3809, %v4097
    %v4099 = vpop.f32.mrb[0].mxu0
    %4100 = vmatprep.mubr.bf16.mxu0 %v742
    %4101 = vmatmul.mubr.bf16.gmra.mrb[0].mxu0 %v741
    %v4102 = vpop.f32.mrb[0].mxu0
    %v4103 = vadd.f32 %v3814, %v4102
    %v4104 = vpop.f32.mrb[0].mxu0
    %v4105 = vpop.f32.mrb[0].mxu0
    %v4106 = vadd.f32 %v3817, %v4105
    %v4107 = vpop.f32.mrb[0].mxu0
    %4108 = vmatprep.mubr.bf16.mxu0 %v774
    %4109 = vmatmul.mubr.bf16.gmra.mrb[0].mxu0 %v773
    %v4110 = vpop.f32.mrb[0].mxu0
    %v4111 = vadd.f32 %v3822, %v4110
    %v4112 = vpop.f32.mrb[0].mxu0
    %v4113 = vpop.f32.mrb[0].mxu0
    %v4114 = vadd.f32 %v3825, %v4113
    %v4115 = vpop.f32.mrb[0].mxu0
    %4116 = vmatprep.mubr.bf16.mxu0 %v806
    %4117 = vmatmul.mubr.bf16.gmra.mrb[0].mxu0 %v805
    %v4118 = vpop.f32.mrb[0].mxu0
    %v4119 = vadd.f32 %v3830, %v4118
    %v4120 = vpop.f32.mrb[0].mxu0
    %v4121 = vpop.f32.mrb[0].mxu0
    %v4122 = vadd.f32 %v3833, %v4121
    %v4123 = vpop.f32.mrb[0].mxu0
    %4124 = vmatprep.mubr.bf16.mxu0 %v838
    %4125 = vmatmul.mubr.bf16.gmra.mrb[0].mxu0 %v837
    %v4126 = vpop.f32.mrb[0].mxu0
    %v4127 = vadd.f32 %v3838, %v4126
    %v4128 = vpop.f32.mrb[0].mxu0
    %v4129 = vpop.f32.mrb[0].mxu0
    %v4130 = vadd.f32 %v3841, %v4129
    %v4131 = vpop.f32.mrb[0].mxu0
    %4132 = vmatprep.mubr.bf16.mxu0 %v870
    %4133 = vmatmul.mubr.bf16.gmra.mrb[0].mxu0 %v869
    %v4134 = vpop.f32.mrb[0].mxu0
    %v4135 = vadd.f32 %v3846, %v4134
    %v4136 = vpop.f32.mrb[0].mxu0
    %v4137 = vpop.f32.mrb[0].mxu0
    %v4138 = vadd.f32 %v3849, %v4137
    %v4139 = vpop.f32.mrb[0].mxu0
    %4140 = vmatprep.mubr.bf16.mxu0 %v902
    %4141 = vmatmul.mubr.bf16.gmra.mrb[0].mxu0 %v901
    %v4142 = vpop.f32.mrb[0].mxu0
    %v4143 = vadd.f32 %v3854, %v4142
    %v4144 = vpop.f32.mrb[0].mxu0
    %v4145 = vpop.f32.mrb[0].mxu0
    %v4146 = vadd.f32 %v3857, %v4145
    %v4147 = vpop.f32.mrb[0].mxu0
    %4148 = vmatprep.mubr.bf16.mxu0 %v934
    %4149 = vmatmul.mubr.bf16.gmra.mrb[0].mxu0 %v933
    %v4150 = vpop.f32.mrb[0].mxu0
    %v4151 = vadd.f32 %v3862, %v4150
    %v4152 = vpop.f32.mrb[0].mxu0
    %v4153 = vpop.f32.mrb[0].mxu0
    %v4154 = vadd.f32 %v3865, %v4153
    %v4155 = vpop.f32.mrb[0].mxu0
    %4156 = vmatprep.mubr.bf16.mxu0 %v966
    %4157 = vmatmul.mubr.bf16.gmra.mrb[0].mxu0 %v965
    %v4158 = vpop.f32.mrb[0].mxu0
    %v4159 = vadd.f32 %v3870, %v4158
    %v4160 = vpop.f32.mrb[0].mxu0
    %v4161 = vpop.f32.mrb[0].mxu0
    %v4162 = vadd.f32 %v3873, %v4161
    %v4163 = vpop.f32.mrb[0].mxu0
    %4164 = vmatprep.mubr.bf16.mxu0 %v998
    %4165 = vmatmul.mubr.bf16.gmra.mrb[0].mxu0 %v997
    %v4166 = vpop.f32.mrb[0].mxu0
    %v4167 = vadd.f32 %v3878, %v4166
    %v4168 = vpop.f32.mrb[0].mxu0
    %v4169 = vpop.f32.mrb[0].mxu0
    %v4170 = vadd.f32 %v3881, %v4169
    %v4171 = vpop.f32.mrb[0].mxu0
    %4172 = vmatprep.mubr.bf16.mxu0 %v1030
    %4173 = vmatmul.mubr.bf16.gmra.mrb[0].mxu0 %v1029
    %v4174 = vpop.f32.mrb[0].mxu0
    %v4175 = vadd.f32 %v3886, %v4174
    %v4176 = vpop.f32.mrb[0].mxu0
    %v4177 = vpop.f32.mrb[0].mxu0
    %v4178 = vadd.f32 %v3889, %v4177
    %v4179 = vpop.f32.mrb[0].mxu0
    %4180 = vmatprep.mubr.bf16.mxu0 %v1062
    %4181 = vmatmul.mubr.bf16.gmra.mrb[0].mxu0 %v1061
    %v4182 = vpop.f32.mrb[0].mxu0
    %v4183 = vadd.f32 %v3894, %v4182
    %v4184 = vpop.f32.mrb[0].mxu0
    %v4185 = vpop.f32.mrb[0].mxu0
    %v4186 = vadd.f32 %v3897, %v4185
    %v4187 = vpop.f32.mrb[0].mxu0
    %4188 = vmatprep.mubr.bf16.mxu0 %v1094
    %4189 = vmatmul.mubr.bf16.gmra.mrb[0].mxu0 %v1093
    %v4190 = vpop.f32.mrb[0].mxu0
    %v4191 = vadd.f32 %v3902, %v4190
    %v4192 = vpop.f32.mrb[0].mxu0
    %v4193 = vpop.f32.mrb[0].mxu0
    %v4194 = vadd.f32 %v3905, %v4193
    %v4195 = vpop.f32.mrb[0].mxu0
    %4196 = vmatprep.mubr.bf16.mxu0 %v1126
    %4197 = vmatmul.mubr.bf16.gmra.mrb[0].mxu0 %v1125
    %v4198 = vpop.f32.mrb[0].mxu0
    %v4199 = vadd.f32 %v3910, %v4198
    %v4200 = vpop.f32.mrb[0].mxu0
    %v4201 = vpop.f32.mrb[0].mxu0
    %v4202 = vadd.f32 %v3913, %v4201
    %v4203 = vpop.f32.mrb[0].mxu0
    %4204 = vmatprep.mubr.bf16.mxu0 %v1158
    %4205 = vmatmul.mubr.bf16.gmra.mrb[0].mxu0 %v1157
    %v4206 = vpop.f32.mrb[0].mxu0
    %v4207 = vadd.f32 %v3918, %v4206
    %v4208 = vpop.f32.mrb[0].mxu0
    %v4209 = vpop.f32.mrb[0].mxu0
    %v4210 = vadd.f32 %v3921, %v4209
    %v4211 = vpop.f32.mrb[0].mxu0
    %4212 = vmatprep.mubr.bf16.mxu0 %v1190
    %4213 = vmatmul.mubr.bf16.gmra.mrb[0].mxu0 %v1189
    %v4214 = vpop.f32.mrb[0].mxu0
    %v4215 = vadd.f32 %v3926, %v4214
    %v4216 = vpop.f32.mrb[0].mxu0
    %v4217 = vpop.f32.mrb[0].mxu0
    %v4218 = vadd.f32 %v3929, %v4217
    %v4219 = vpop.f32.mrb[0].mxu0
    %4220 = vmatprep.mubr.bf16.mxu0 %v1222
    %4221 = vmatmul.mubr.bf16.gmra.mrb[0].mxu0 %v1221
    %v4222 = vpop.f32.mrb[0].mxu0
    %v4223 = vadd.f32 %v3934, %v4222
    %v4224 = vpop.f32.mrb[0].mxu0
    %v4225 = vpop.f32.mrb[0].mxu0
    %v4226 = vadd.f32 %v3937, %v4225
    %v4227 = vpop.f32.mrb[0].mxu0
    %4228 = vmatprep.mubr.bf16.mxu0 %v1254
    %4229 = vmatmul.mubr.bf16.gmra.mrb[0].mxu0 %v1253
    %v4230 = vpop.f32.mrb[0].mxu0
    %v4231 = vadd.f32 %v3942, %v4230
    %v4232 = vpop.f32.mrb[0].mxu0
    %v4233 = vpop.f32.mrb[0].mxu0
    %v4234 = vadd.f32 %v3945, %v4233
    %v4235 = vpop.f32.mrb[0].mxu0
    %4236 = vmatprep.mubr.bf16.mxu0 %v1286
    %4237 = vmatmul.mubr.bf16.gmra.mrb[0].mxu0 %v1285
    %v4238 = vpop.f32.mrb[0].mxu0
    %v4239 = vadd.f32 %v3950, %v4238
    %v4240 = vpop.f32.mrb[0].mxu0
    %v4241 = vpop.f32.mrb[0].mxu0
    %v4242 = vadd.f32 %v3953, %v4241
    %v4243 = vpop.f32.mrb[0].mxu0
    %4244 = vmatprep.mubr.bf16.mxu0 %v1318
    %4245 = vmatmul.mubr.bf16.gmra.mrb[0].mxu0 %v1317
    %v4246 = vpop.f32.mrb[0].mxu0
    %v4247 = vadd.f32 %v3958, %v4246
    %v4248 = vpop.f32.mrb[0].mxu0
    %v4249 = vpop.f32.mrb[0].mxu0
    %v4250 = vadd.f32 %v3961, %v4249
    %v4251 = vpop.f32.mrb[0].mxu0
    %4252 = vmatprep.mubr.bf16.mxu0 %v1350
    %4253 = vmatmul.mubr.bf16.gmra.mrb[0].mxu0 %v1349
    %v4254 = vpop.f32.mrb[0].mxu0
    %v4255 = vadd.f32 %v3966, %v4254
    %v4256 = vpop.f32.mrb[0].mxu0
    %v4257 = vpop.f32.mrb[0].mxu0
    %v4258 = vadd.f32 %v3969, %v4257
    %v4259 = vpop.f32.mrb[0].mxu0
    %4260 = vmatprep.mubr.bf16.mxu0 %v1382
    %4261 = vmatmul.mubr.bf16.gmra.mrb[0].mxu0 %v1381
    %v4262 = vpop.f32.mrb[0].mxu0
    %v4263 = vadd.f32 %v3974, %v4262
    %v4264 = vpop.f32.mrb[0].mxu0
    %v4265 = vpop.f32.mrb[0].mxu0
    %v4266 = vadd.f32 %v3977, %v4265
    %v4267 = vpop.f32.mrb[0].mxu0
    %4268 = vmatprep.mubr.bf16.mxu0 %v1414
    %4269 = vmatmul.mubr.bf16.gmra.mrb[0].mxu0 %v1413
    %v4270 = vpop.f32.mrb[0].mxu0
    %v4271 = vadd.f32 %v3982, %v4270
    %v4272 = vpop.f32.mrb[0].mxu0
    %v4273 = vpop.f32.mrb[0].mxu0
    %v4274 = vadd.f32 %v3985, %v4273
    %v4275 = vpop.f32.mrb[0].mxu0
    %4276 = vmatprep.mubr.bf16.mxu0 %v1446
    %4277 = vmatmul.mubr.bf16.gmra.mrb[0].mxu0 %v1445
    %v4278 = vpop.f32.mrb[0].mxu0
    %v4279 = vadd.f32 %v3990, %v4278
    %v4280 = vpop.f32.mrb[0].mxu0
    %v4281 = vpop.f32.mrb[0].mxu0
    %v4282 = vadd.f32 %v3993, %v4281
    %v4283 = vpop.f32.mrb[0].mxu0
    %4284 = vmatprep.mubr.bf16.mxu0 %v1478
    %4285 = vmatmul.mubr.bf16.gmra.mrb[0].mxu0 %v1477
    %v4286 = vpop.f32.mrb[0].mxu0
    %v4287 = vadd.f32 %v3998, %v4286
    %v4288 = vpop.f32.mrb[0].mxu0
    %v4289 = vpop.f32.mrb[0].mxu0
    %v4290 = vadd.f32 %v4001, %v4289
    %v4291 = vpop.f32.mrb[0].mxu0
    %4292 = vmatprep.mubr.bf16.mxu0 %v1510
    %4293 = vmatmul.mubr.bf16.gmra.mrb[0].mxu0 %v1509
    %v4294 = vpop.f32.mrb[0].mxu0
    %v4295 = vadd.f32 %v4006, %v4294
    %v4296 = vpop.f32.mrb[0].mxu0
    %v4297 = vpop.f32.mrb[0].mxu0
    %v4298 = vadd.f32 %v4009, %v4297
    %v4299 = vpop.f32.mrb[0].mxu0
    %4300 = vmatprep.mubr.bf16.mxu0 %v1542
    %4301 = vmatmul.mubr.bf16.gmra.mrb[0].mxu0 %v1541
    %v4302 = vpop.f32.mrb[0].mxu0
    %v4303 = vadd.f32 %v4014, %v4302
    %v4304 = vpop.f32.mrb[0].mxu0
    %v4305 = vpop.f32.mrb[0].mxu0
    %v4306 = vadd.f32 %v4017, %v4305
    %v4307 = vpop.f32.mrb[0].mxu0
    %4308 = vmatprep.mubr.bf16.mxu0 %v1574
    %4309 = vmatmul.mubr.bf16.gmra.mrb[0].mxu0 %v1573
    %v4310 = vpop.f32.mrb[0].mxu0
    %v4311 = vadd.f32 %v4022, %v4310
    %v4312 = vpop.f32.mrb[0].mxu0
    %v4313 = vpop.f32.mrb[0].mxu0
    %v4314 = vadd.f32 %v4025, %v4313
    %v4315 = vpop.f32.mrb[0].mxu0
    %4316 = vmatprep.mubr.bf16.mxu0 %v1606
    %4317 = vmatmul.mubr.bf16.gmra.mrb[0].mxu0 %v1605
    %v4318 = vpop.f32.mrb[0].mxu0
    %v4319 = vadd.f32 %v4030, %v4318
    %v4320 = vpop.f32.mrb[0].mxu0
    %v4321 = vpop.f32.mrb[0].mxu0
    %v4322 = vadd.f32 %v4033, %v4321
    %v4323 = vpop.f32.mrb[0].mxu0
    %4324 = vdwg.mxu0
    %4325 = vmatprep.subr.bf16.mxu0 0
    %4326 = vmatpush1.bf16.msra.mxu0 %v3267
    %4327 = vmatprep.subr.bf16.mxu0 0
    %4328 = vmatpush1.bf16.msra.mxu0 %v3268
    %4329 = vmatprep.subr.bf16.mxu0 0
    %4330 = vmatpush1.bf16.msra.mxu0 %v3269
    %4331 = vmatprep.subr.bf16.mxu0 0
    %4332 = vmatpush1.bf16.msra.mxu0 %v3270
    %4333 = vmatprep.subr.bf16.mxu0 0
    %4334 = vmatpush1.bf16.msra.mxu0 %v3271
    %4335 = vmatprep.subr.bf16.mxu0 0
    %4336 = vmatpush1.bf16.msra.mxu0 %v3272
    %4337 = vmatprep.subr.bf16.mxu0 0
    %4338 = vmatpush1.bf16.msra.mxu0 %v3273
    %4339 = vmatprep.subr.bf16.mxu0 0
    %4340 = vmatpush1.bf16.msra.mxu0 %v3274
    %4341 = vmatprep.subr.bf16.mxu0 0
    %4342 = vmatpush1.bf16.msra.mxu0 %v3275
    %4343 = vmatprep.subr.bf16.mxu0 0
    %4344 = vmatpush1.bf16.msra.mxu0 %v3276
    %4345 = vmatprep.subr.bf16.mxu0 0
    %4346 = vmatpush1.bf16.msra.mxu0 %v3277
    %4347 = vmatprep.subr.bf16.mxu0 0
    %4348 = vmatpush1.bf16.msra.mxu0 %v3278
    %4349 = vmatprep.subr.bf16.mxu0 0
    %4350 = vmatpush1.bf16.msra.mxu0 %v3279
    %4351 = vmatprep.subr.bf16.mxu0 0
    %4352 = vmatpush1.bf16.msra.mxu0 %v3280
    %4353 = vmatprep.subr.bf16.mxu0 0
    %4354 = vmatpush1.bf16.msra.mxu0 %v3281
    %4355 = vmatprep.subr.bf16.mxu0 0
    %4356 = vmatpush1.bf16.msra.mxu0 %v3282
    %4357 = vmatprep.mubr.bf16.mxu0 %v616
    %4358 = vmatmul.mubr.bf16.gmra.mrb[0].mxu0 %v615
    %v4359 = vpop.f32.mrb[0].mxu0
    %v4360 = vadd.f32 %v4071, %v4359
    %v4361 = vpop.f32.mrb[0].mxu0
    %v4362 = vpop.f32.mrb[0].mxu0
    %v4363 = vadd.f32 %v4074, %v4362
    %v4364 = vpop.f32.mrb[0].mxu0
    %4365 = vmatprep.mubr.bf16.mxu0 %v648
    %4366 = vmatmul.mubr.bf16.gmra.mrb[0].mxu0 %v647
    %v4367 = vpop.f32.mrb[0].mxu0
    %v4368 = vadd.f32 %v4079, %v4367
    %v4369 = vpop.f32.mrb[0].mxu0
    %v4370 = vpop.f32.mrb[0].mxu0
    %v4371 = vadd.f32 %v4082, %v4370
    %v4372 = vpop.f32.mrb[0].mxu0
    %4373 = vmatprep.mubr.bf16.mxu0 %v680
    %4374 = vmatmul.mubr.bf16.gmra.mrb[0].mxu0 %v679
    %v4375 = vpop.f32.mrb[0].mxu0
    %v4376 = vadd.f32 %v4087, %v4375
    %v4377 = vpop.f32.mrb[0].mxu0
    %v4378 = vpop.f32.mrb[0].mxu0
    %v4379 = vadd.f32 %v4090, %v4378
    %v4380 = vpop.f32.mrb[0].mxu0
    %4381 = vmatprep.mubr.bf16.mxu0 %v712
    %4382 = vmatmul.mubr.bf16.gmra.mrb[0].mxu0 %v711
    %v4383 = vpop.f32.mrb[0].mxu0
    %v4384 = vadd.f32 %v4095, %v4383
    %v4385 = vpop.f32.mrb[0].mxu0
    %v4386 = vpop.f32.mrb[0].mxu0
    %v4387 = vadd.f32 %v4098, %v4386
    %v4388 = vpop.f32.mrb[0].mxu0
    %4389 = vmatprep.mubr.bf16.mxu0 %v744
    %4390 = vmatmul.mubr.bf16.gmra.mrb[0].mxu0 %v743
    %v4391 = vpop.f32.mrb[0].mxu0
    %v4392 = vadd.f32 %v4103, %v4391
    %v4393 = vpop.f32.mrb[0].mxu0
    %v4394 = vpop.f32.mrb[0].mxu0
    %v4395 = vadd.f32 %v4106, %v4394
    %v4396 = vpop.f32.mrb[0].mxu0
    %4397 = vmatprep.mubr.bf16.mxu0 %v776
    %4398 = vmatmul.mubr.bf16.gmra.mrb[0].mxu0 %v775
    %v4399 = vpop.f32.mrb[0].mxu0
    %v4400 = vadd.f32 %v4111, %v4399
    %v4401 = vpop.f32.mrb[0].mxu0
    %v4402 = vpop.f32.mrb[0].mxu0
    %v4403 = vadd.f32 %v4114, %v4402
    %v4404 = vpop.f32.mrb[0].mxu0
    %4405 = vmatprep.mubr.bf16.mxu0 %v808
    %4406 = vmatmul.mubr.bf16.gmra.mrb[0].mxu0 %v807
    %v4407 = vpop.f32.mrb[0].mxu0
    %v4408 = vadd.f32 %v4119, %v4407
    %v4409 = vpop.f32.mrb[0].mxu0
    %v4410 = vpop.f32.mrb[0].mxu0
    %v4411 = vadd.f32 %v4122, %v4410
    %v4412 = vpop.f32.mrb[0].mxu0
    %4413 = vmatprep.mubr.bf16.mxu0 %v840
    %4414 = vmatmul.mubr.bf16.gmra.mrb[0].mxu0 %v839
    %v4415 = vpop.f32.mrb[0].mxu0
    %v4416 = vadd.f32 %v4127, %v4415
    %v4417 = vpop.f32.mrb[0].mxu0
    %v4418 = vpop.f32.mrb[0].mxu0
    %v4419 = vadd.f32 %v4130, %v4418
    %v4420 = vpop.f32.mrb[0].mxu0
    %4421 = vmatprep.mubr.bf16.mxu0 %v872
    %4422 = vmatmul.mubr.bf16.gmra.mrb[0].mxu0 %v871
    %v4423 = vpop.f32.mrb[0].mxu0
    %v4424 = vadd.f32 %v4135, %v4423
    %v4425 = vpop.f32.mrb[0].mxu0
    %v4426 = vpop.f32.mrb[0].mxu0
    %v4427 = vadd.f32 %v4138, %v4426
    %v4428 = vpop.f32.mrb[0].mxu0
    %4429 = vmatprep.mubr.bf16.mxu0 %v904
    %4430 = vmatmul.mubr.bf16.gmra.mrb[0].mxu0 %v903
    %v4431 = vpop.f32.mrb[0].mxu0
    %v4432 = vadd.f32 %v4143, %v4431
    %v4433 = vpop.f32.mrb[0].mxu0
    %v4434 = vpop.f32.mrb[0].mxu0
    %v4435 = vadd.f32 %v4146, %v4434
    %v4436 = vpop.f32.mrb[0].mxu0
    %4437 = vmatprep.mubr.bf16.mxu0 %v936
    %4438 = vmatmul.mubr.bf16.gmra.mrb[0].mxu0 %v935
    %v4439 = vpop.f32.mrb[0].mxu0
    %v4440 = vadd.f32 %v4151, %v4439
    %v4441 = vpop.f32.mrb[0].mxu0
    %v4442 = vpop.f32.mrb[0].mxu0
    %v4443 = vadd.f32 %v4154, %v4442
    %v4444 = vpop.f32.mrb[0].mxu0
    %4445 = vmatprep.mubr.bf16.mxu0 %v968
    %4446 = vmatmul.mubr.bf16.gmra.mrb[0].mxu0 %v967
    %v4447 = vpop.f32.mrb[0].mxu0
    %v4448 = vadd.f32 %v4159, %v4447
    %v4449 = vpop.f32.mrb[0].mxu0
    %v4450 = vpop.f32.mrb[0].mxu0
    %v4451 = vadd.f32 %v4162, %v4450
    %v4452 = vpop.f32.mrb[0].mxu0
    %4453 = vmatprep.mubr.bf16.mxu0 %v1000
    %4454 = vmatmul.mubr.bf16.gmra.mrb[0].mxu0 %v999
    %v4455 = vpop.f32.mrb[0].mxu0
    %v4456 = vadd.f32 %v4167, %v4455
    %v4457 = vpop.f32.mrb[0].mxu0
    %v4458 = vpop.f32.mrb[0].mxu0
    %v4459 = vadd.f32 %v4170, %v4458
    %v4460 = vpop.f32.mrb[0].mxu0
    %4461 = vmatprep.mubr.bf16.mxu0 %v1032
    %4462 = vmatmul.mubr.bf16.gmra.mrb[0].mxu0 %v1031
    %v4463 = vpop.f32.mrb[0].mxu0
    %v4464 = vadd.f32 %v4175, %v4463
    %v4465 = vpop.f32.mrb[0].mxu0
    %v4466 = vpop.f32.mrb[0].mxu0
    %v4467 = vadd.f32 %v4178, %v4466
    %v4468 = vpop.f32.mrb[0].mxu0
    %4469 = vmatprep.mubr.bf16.mxu0 %v1064
    %4470 = vmatmul.mubr.bf16.gmra.mrb[0].mxu0 %v1063
    %v4471 = vpop.f32.mrb[0].mxu0
    %v4472 = vadd.f32 %v4183, %v4471
    %v4473 = vpop.f32.mrb[0].mxu0
    %v4474 = vpop.f32.mrb[0].mxu0
    %v4475 = vadd.f32 %v4186, %v4474
    %v4476 = vpop.f32.mrb[0].mxu0
    %4477 = vmatprep.mubr.bf16.mxu0 %v1096
    %4478 = vmatmul.mubr.bf16.gmra.mrb[0].mxu0 %v1095
    %v4479 = vpop.f32.mrb[0].mxu0
    %v4480 = vadd.f32 %v4191, %v4479
    %v4481 = vpop.f32.mrb[0].mxu0
    %v4482 = vpop.f32.mrb[0].mxu0
    %v4483 = vadd.f32 %v4194, %v4482
    %v4484 = vpop.f32.mrb[0].mxu0
    %4485 = vmatprep.mubr.bf16.mxu0 %v1128
    %4486 = vmatmul.mubr.bf16.gmra.mrb[0].mxu0 %v1127
    %v4487 = vpop.f32.mrb[0].mxu0
    %v4488 = vadd.f32 %v4199, %v4487
    %v4489 = vpop.f32.mrb[0].mxu0
    %v4490 = vpop.f32.mrb[0].mxu0
    %v4491 = vadd.f32 %v4202, %v4490
    %v4492 = vpop.f32.mrb[0].mxu0
    %4493 = vmatprep.mubr.bf16.mxu0 %v1160
    %4494 = vmatmul.mubr.bf16.gmra.mrb[0].mxu0 %v1159
    %v4495 = vpop.f32.mrb[0].mxu0
    %v4496 = vadd.f32 %v4207, %v4495
    %v4497 = vpop.f32.mrb[0].mxu0
    %v4498 = vpop.f32.mrb[0].mxu0
    %v4499 = vadd.f32 %v4210, %v4498
    %v4500 = vpop.f32.mrb[0].mxu0
    %4501 = vmatprep.mubr.bf16.mxu0 %v1192
    %4502 = vmatmul.mubr.bf16.gmra.mrb[0].mxu0 %v1191
    %v4503 = vpop.f32.mrb[0].mxu0
    %v4504 = vadd.f32 %v4215, %v4503
    %v4505 = vpop.f32.mrb[0].mxu0
    %v4506 = vpop.f32.mrb[0].mxu0
    %v4507 = vadd.f32 %v4218, %v4506
    %v4508 = vpop.f32.mrb[0].mxu0
    %4509 = vmatprep.mubr.bf16.mxu0 %v1224
    %4510 = vmatmul.mubr.bf16.gmra.mrb[0].mxu0 %v1223
    %v4511 = vpop.f32.mrb[0].mxu0
    %v4512 = vadd.f32 %v4223, %v4511
    %v4513 = vpop.f32.mrb[0].mxu0
    %v4514 = vpop.f32.mrb[0].mxu0
    %v4515 = vadd.f32 %v4226, %v4514
    %v4516 = vpop.f32.mrb[0].mxu0
    %4517 = vmatprep.mubr.bf16.mxu0 %v1256
    %4518 = vmatmul.mubr.bf16.gmra.mrb[0].mxu0 %v1255
    %v4519 = vpop.f32.mrb[0].mxu0
    %v4520 = vadd.f32 %v4231, %v4519
    %v4521 = vpop.f32.mrb[0].mxu0
    %v4522 = vpop.f32.mrb[0].mxu0
    %v4523 = vadd.f32 %v4234, %v4522
    %v4524 = vpop.f32.mrb[0].mxu0
    %4525 = vmatprep.mubr.bf16.mxu0 %v1288
    %4526 = vmatmul.mubr.bf16.gmra.mrb[0].mxu0 %v1287
    %v4527 = vpop.f32.mrb[0].mxu0
    %v4528 = vadd.f32 %v4239, %v4527
    %v4529 = vpop.f32.mrb[0].mxu0
    %v4530 = vpop.f32.mrb[0].mxu0
    %v4531 = vadd.f32 %v4242, %v4530
    %v4532 = vpop.f32.mrb[0].mxu0
    %4533 = vmatprep.mubr.bf16.mxu0 %v1320
    %4534 = vmatmul.mubr.bf16.gmra.mrb[0].mxu0 %v1319
    %v4535 = vpop.f32.mrb[0].mxu0
    %v4536 = vadd.f32 %v4247, %v4535
    %v4537 = vpop.f32.mrb[0].mxu0
    %v4538 = vpop.f32.mrb[0].mxu0
    %v4539 = vadd.f32 %v4250, %v4538
    %v4540 = vpop.f32.mrb[0].mxu0
    %4541 = vmatprep.mubr.bf16.mxu0 %v1352
    %4542 = vmatmul.mubr.bf16.gmra.mrb[0].mxu0 %v1351
    %v4543 = vpop.f32.mrb[0].mxu0
    %v4544 = vadd.f32 %v4255, %v4543
    %v4545 = vpop.f32.mrb[0].mxu0
    %v4546 = vpop.f32.mrb[0].mxu0
    %v4547 = vadd.f32 %v4258, %v4546
    %v4548 = vpop.f32.mrb[0].mxu0
    %4549 = vmatprep.mubr.bf16.mxu0 %v1384
    %4550 = vmatmul.mubr.bf16.gmra.mrb[0].mxu0 %v1383
    %v4551 = vpop.f32.mrb[0].mxu0
    %v4552 = vadd.f32 %v4263, %v4551
    %v4553 = vpop.f32.mrb[0].mxu0
    %v4554 = vpop.f32.mrb[0].mxu0
    %v4555 = vadd.f32 %v4266, %v4554
    %v4556 = vpop.f32.mrb[0].mxu0
    %4557 = vmatprep.mubr.bf16.mxu0 %v1416
    %4558 = vmatmul.mubr.bf16.gmra.mrb[0].mxu0 %v1415
    %v4559 = vpop.f32.mrb[0].mxu0
    %v4560 = vadd.f32 %v4271, %v4559
    %v4561 = vpop.f32.mrb[0].mxu0
    %v4562 = vpop.f32.mrb[0].mxu0
    %v4563 = vadd.f32 %v4274, %v4562
    %v4564 = vpop.f32.mrb[0].mxu0
    %4565 = vmatprep.mubr.bf16.mxu0 %v1448
    %4566 = vmatmul.mubr.bf16.gmra.mrb[0].mxu0 %v1447
    %v4567 = vpop.f32.mrb[0].mxu0
    %v4568 = vadd.f32 %v4279, %v4567
    %v4569 = vpop.f32.mrb[0].mxu0
    %v4570 = vpop.f32.mrb[0].mxu0
    %v4571 = vadd.f32 %v4282, %v4570
    %v4572 = vpop.f32.mrb[0].mxu0
    %4573 = vmatprep.mubr.bf16.mxu0 %v1480
    %4574 = vmatmul.mubr.bf16.gmra.mrb[0].mxu0 %v1479
    %v4575 = vpop.f32.mrb[0].mxu0
    %v4576 = vadd.f32 %v4287, %v4575
    %v4577 = vpop.f32.mrb[0].mxu0
    %v4578 = vpop.f32.mrb[0].mxu0
    %v4579 = vadd.f32 %v4290, %v4578
    %v4580 = vpop.f32.mrb[0].mxu0
    %4581 = vmatprep.mubr.bf16.mxu0 %v1512
    %4582 = vmatmul.mubr.bf16.gmra.mrb[0].mxu0 %v1511
    %v4583 = vpop.f32.mrb[0].mxu0
    %v4584 = vadd.f32 %v4295, %v4583
    %v4585 = vpop.f32.mrb[0].mxu0
    %v4586 = vpop.f32.mrb[0].mxu0
    %v4587 = vadd.f32 %v4298, %v4586
    %v4588 = vpop.f32.mrb[0].mxu0
    %4589 = vmatprep.mubr.bf16.mxu0 %v1544
    %4590 = vmatmul.mubr.bf16.gmra.mrb[0].mxu0 %v1543
    %v4591 = vpop.f32.mrb[0].mxu0
    %v4592 = vadd.f32 %v4303, %v4591
    %v4593 = vpop.f32.mrb[0].mxu0
    %v4594 = vpop.f32.mrb[0].mxu0
    %v4595 = vadd.f32 %v4306, %v4594
    %v4596 = vpop.f32.mrb[0].mxu0
    %4597 = vmatprep.mubr.bf16.mxu0 %v1576
    %4598 = vmatmul.mubr.bf16.gmra.mrb[0].mxu0 %v1575
    %v4599 = vpop.f32.mrb[0].mxu0
    %v4600 = vadd.f32 %v4311, %v4599
    %v4601 = vpop.f32.mrb[0].mxu0
    %v4602 = vpop.f32.mrb[0].mxu0
    %v4603 = vadd.f32 %v4314, %v4602
    %v4604 = vpop.f32.mrb[0].mxu0
    %4605 = vmatprep.mubr.bf16.mxu0 %v1608
    %4606 = vmatmul.mubr.bf16.gmra.mrb[0].mxu0 %v1607
    %v4607 = vpop.f32.mrb[0].mxu0
    %v4608 = vadd.f32 %v4319, %v4607
    %v4609 = vpop.f32.mrb[0].mxu0
    %v4610 = vpop.f32.mrb[0].mxu0
    %v4611 = vadd.f32 %v4322, %v4610
    %v4612 = vpop.f32.mrb[0].mxu0
    %4613 = vdwg.mxu0
    %4614 = vmatprep.subr.bf16.mxu0 0
    %4615 = vmatpush1.bf16.msra.mxu0 %v3283
    %4616 = vmatprep.subr.bf16.mxu0 0
    %4617 = vmatpush1.bf16.msra.mxu0 %v3284
    %4618 = vmatprep.subr.bf16.mxu0 0
    %4619 = vmatpush1.bf16.msra.mxu0 %v3285
    %4620 = vmatprep.subr.bf16.mxu0 0
    %4621 = vmatpush1.bf16.msra.mxu0 %v3286
    %4622 = vmatprep.subr.bf16.mxu0 0
    %4623 = vmatpush1.bf16.msra.mxu0 %v3287
    %4624 = vmatprep.subr.bf16.mxu0 0
    %4625 = vmatpush1.bf16.msra.mxu0 %v3288
    %4626 = vmatprep.subr.bf16.mxu0 0
    %4627 = vmatpush1.bf16.msra.mxu0 %v3289
    %4628 = vmatprep.subr.bf16.mxu0 0
    %4629 = vmatpush1.bf16.msra.mxu0 %v3290
    %4630 = vmatprep.subr.bf16.mxu0 0
    %4631 = vmatpush1.bf16.msra.mxu0 %v3291
    %4632 = vmatprep.subr.bf16.mxu0 0
    %4633 = vmatpush1.bf16.msra.mxu0 %v3292
    %4634 = vmatprep.subr.bf16.mxu0 0
    %4635 = vmatpush1.bf16.msra.mxu0 %v3293
    %4636 = vmatprep.subr.bf16.mxu0 0
    %4637 = vmatpush1.bf16.msra.mxu0 %v3294
    %4638 = vmatprep.subr.bf16.mxu0 0
    %4639 = vmatpush1.bf16.msra.mxu0 %v3295
    %4640 = vmatprep.subr.bf16.mxu0 0
    %4641 = vmatpush1.bf16.msra.mxu0 %v3296
    %4642 = vmatprep.subr.bf16.mxu0 0
    %4643 = vmatpush1.bf16.msra.mxu0 %v3297
    %4644 = vmatprep.subr.bf16.mxu0 0
    %4645 = vmatpush1.bf16.msra.mxu0 %v3298
    %4646 = vmatprep.mubr.bf16.mxu0 %v618
    %4647 = vmatmul.mubr.bf16.gmra.mrb[0].mxu0 %v617
    %v4648 = vpop.f32.mrb[0].mxu0
    %v4649 = vadd.f32 %v4360, %v4648
    %v4650 = vpop.f32.mrb[0].mxu0
    %v4651 = vpop.f32.mrb[0].mxu0
    %v4652 = vadd.f32 %v4363, %v4651
    %v4653 = vpop.f32.mrb[0].mxu0
    %4654 = vmatprep.mubr.bf16.mxu0 %v650
    %4655 = vmatmul.mubr.bf16.gmra.mrb[0].mxu0 %v649
    %v4656 = vpop.f32.mrb[0].mxu0
    %v4657 = vadd.f32 %v4368, %v4656
    %v4658 = vpop.f32.mrb[0].mxu0
    %v4659 = vpop.f32.mrb[0].mxu0
    %v4660 = vadd.f32 %v4371, %v4659
    %v4661 = vpop.f32.mrb[0].mxu0
    %4662 = vmatprep.mubr.bf16.mxu0 %v682
    %4663 = vmatmul.mubr.bf16.gmra.mrb[0].mxu0 %v681
    %v4664 = vpop.f32.mrb[0].mxu0
    %v4665 = vadd.f32 %v4376, %v4664
    %v4666 = vpop.f32.mrb[0].mxu0
    %v4667 = vpop.f32.mrb[0].mxu0
    %v4668 = vadd.f32 %v4379, %v4667
    %v4669 = vpop.f32.mrb[0].mxu0
    %4670 = vmatprep.mubr.bf16.mxu0 %v714
    %4671 = vmatmul.mubr.bf16.gmra.mrb[0].mxu0 %v713
    %v4672 = vpop.f32.mrb[0].mxu0
    %v4673 = vadd.f32 %v4384, %v4672
    %v4674 = vpop.f32.mrb[0].mxu0
    %v4675 = vpop.f32.mrb[0].mxu0
    %v4676 = vadd.f32 %v4387, %v4675
    %v4677 = vpop.f32.mrb[0].mxu0
    %4678 = vmatprep.mubr.bf16.mxu0 %v746
    %4679 = vmatmul.mubr.bf16.gmra.mrb[0].mxu0 %v745
    %v4680 = vpop.f32.mrb[0].mxu0
    %v4681 = vadd.f32 %v4392, %v4680
    %v4682 = vpop.f32.mrb[0].mxu0
    %v4683 = vpop.f32.mrb[0].mxu0
    %v4684 = vadd.f32 %v4395, %v4683
    %v4685 = vpop.f32.mrb[0].mxu0
    %4686 = vmatprep.mubr.bf16.mxu0 %v778
    %4687 = vmatmul.mubr.bf16.gmra.mrb[0].mxu0 %v777
    %v4688 = vpop.f32.mrb[0].mxu0
    %v4689 = vadd.f32 %v4400, %v4688
    %v4690 = vpop.f32.mrb[0].mxu0
    %v4691 = vpop.f32.mrb[0].mxu0
    %v4692 = vadd.f32 %v4403, %v4691
    %v4693 = vpop.f32.mrb[0].mxu0
    %4694 = vmatprep.mubr.bf16.mxu0 %v810
    %4695 = vmatmul.mubr.bf16.gmra.mrb[0].mxu0 %v809
    %v4696 = vpop.f32.mrb[0].mxu0
    %v4697 = vadd.f32 %v4408, %v4696
    %v4698 = vpop.f32.mrb[0].mxu0
    %v4699 = vpop.f32.mrb[0].mxu0
    %v4700 = vadd.f32 %v4411, %v4699
    %v4701 = vpop.f32.mrb[0].mxu0
    %4702 = vmatprep.mubr.bf16.mxu0 %v842
    %4703 = vmatmul.mubr.bf16.gmra.mrb[0].mxu0 %v841
    %v4704 = vpop.f32.mrb[0].mxu0
    %v4705 = vadd.f32 %v4416, %v4704
    %v4706 = vpop.f32.mrb[0].mxu0
    %v4707 = vpop.f32.mrb[0].mxu0
    %v4708 = vadd.f32 %v4419, %v4707
    %v4709 = vpop.f32.mrb[0].mxu0
    %4710 = vmatprep.mubr.bf16.mxu0 %v874
    %4711 = vmatmul.mubr.bf16.gmra.mrb[0].mxu0 %v873
    %v4712 = vpop.f32.mrb[0].mxu0
    %v4713 = vadd.f32 %v4424, %v4712
    %v4714 = vpop.f32.mrb[0].mxu0
    %v4715 = vpop.f32.mrb[0].mxu0
    %v4716 = vadd.f32 %v4427, %v4715
    %v4717 = vpop.f32.mrb[0].mxu0
    %4718 = vmatprep.mubr.bf16.mxu0 %v906
    %4719 = vmatmul.mubr.bf16.gmra.mrb[0].mxu0 %v905
    %v4720 = vpop.f32.mrb[0].mxu0
    %v4721 = vadd.f32 %v4432, %v4720
    %v4722 = vpop.f32.mrb[0].mxu0
    %v4723 = vpop.f32.mrb[0].mxu0
    %v4724 = vadd.f32 %v4435, %v4723
    %v4725 = vpop.f32.mrb[0].mxu0
    %4726 = vmatprep.mubr.bf16.mxu0 %v938
    %4727 = vmatmul.mubr.bf16.gmra.mrb[0].mxu0 %v937
    %v4728 = vpop.f32.mrb[0].mxu0
    %v4729 = vadd.f32 %v4440, %v4728
    %v4730 = vpop.f32.mrb[0].mxu0
    %v4731 = vpop.f32.mrb[0].mxu0
    %v4732 = vadd.f32 %v4443, %v4731
    %v4733 = vpop.f32.mrb[0].mxu0
    %4734 = vmatprep.mubr.bf16.mxu0 %v970
    %4735 = vmatmul.mubr.bf16.gmra.mrb[0].mxu0 %v969
    %v4736 = vpop.f32.mrb[0].mxu0
    %v4737 = vadd.f32 %v4448, %v4736
    %v4738 = vpop.f32.mrb[0].mxu0
    %v4739 = vpop.f32.mrb[0].mxu0
    %v4740 = vadd.f32 %v4451, %v4739
    %v4741 = vpop.f32.mrb[0].mxu0
    %4742 = vmatprep.mubr.bf16.mxu0 %v1002
    %4743 = vmatmul.mubr.bf16.gmra.mrb[0].mxu0 %v1001
    %v4744 = vpop.f32.mrb[0].mxu0
    %v4745 = vadd.f32 %v4456, %v4744
    %v4746 = vpop.f32.mrb[0].mxu0
    %v4747 = vpop.f32.mrb[0].mxu0
    %v4748 = vadd.f32 %v4459, %v4747
    %v4749 = vpop.f32.mrb[0].mxu0
    %4750 = vmatprep.mubr.bf16.mxu0 %v1034
    %4751 = vmatmul.mubr.bf16.gmra.mrb[0].mxu0 %v1033
    %v4752 = vpop.f32.mrb[0].mxu0
    %v4753 = vadd.f32 %v4464, %v4752
    %v4754 = vpop.f32.mrb[0].mxu0
    %v4755 = vpop.f32.mrb[0].mxu0
    %v4756 = vadd.f32 %v4467, %v4755
    %v4757 = vpop.f32.mrb[0].mxu0
    %4758 = vmatprep.mubr.bf16.mxu0 %v1066
    %4759 = vmatmul.mubr.bf16.gmra.mrb[0].mxu0 %v1065
    %v4760 = vpop.f32.mrb[0].mxu0
    %v4761 = vadd.f32 %v4472, %v4760
    %v4762 = vpop.f32.mrb[0].mxu0
    %v4763 = vpop.f32.mrb[0].mxu0
    %v4764 = vadd.f32 %v4475, %v4763
    %v4765 = vpop.f32.mrb[0].mxu0
    %4766 = vmatprep.mubr.bf16.mxu0 %v1098
    %4767 = vmatmul.mubr.bf16.gmra.mrb[0].mxu0 %v1097
    %v4768 = vpop.f32.mrb[0].mxu0
    %v4769 = vadd.f32 %v4480, %v4768
    %v4770 = vpop.f32.mrb[0].mxu0
    %v4771 = vpop.f32.mrb[0].mxu0
    %v4772 = vadd.f32 %v4483, %v4771
    %v4773 = vpop.f32.mrb[0].mxu0
    %4774 = vmatprep.mubr.bf16.mxu0 %v1130
    %4775 = vmatmul.mubr.bf16.gmra.mrb[0].mxu0 %v1129
    %v4776 = vpop.f32.mrb[0].mxu0
    %v4777 = vadd.f32 %v4488, %v4776
    %v4778 = vpop.f32.mrb[0].mxu0
    %v4779 = vpop.f32.mrb[0].mxu0
    %v4780 = vadd.f32 %v4491, %v4779
    %v4781 = vpop.f32.mrb[0].mxu0
    %4782 = vmatprep.mubr.bf16.mxu0 %v1162
    %4783 = vmatmul.mubr.bf16.gmra.mrb[0].mxu0 %v1161
    %v4784 = vpop.f32.mrb[0].mxu0
    %v4785 = vadd.f32 %v4496, %v4784
    %v4786 = vpop.f32.mrb[0].mxu0
    %v4787 = vpop.f32.mrb[0].mxu0
    %v4788 = vadd.f32 %v4499, %v4787
    %v4789 = vpop.f32.mrb[0].mxu0
    %4790 = vmatprep.mubr.bf16.mxu0 %v1194
    %4791 = vmatmul.mubr.bf16.gmra.mrb[0].mxu0 %v1193
    %v4792 = vpop.f32.mrb[0].mxu0
    %v4793 = vadd.f32 %v4504, %v4792
    %v4794 = vpop.f32.mrb[0].mxu0
    %v4795 = vpop.f32.mrb[0].mxu0
    %v4796 = vadd.f32 %v4507, %v4795
    %v4797 = vpop.f32.mrb[0].mxu0
    %4798 = vmatprep.mubr.bf16.mxu0 %v1226
    %4799 = vmatmul.mubr.bf16.gmra.mrb[0].mxu0 %v1225
    %v4800 = vpop.f32.mrb[0].mxu0
    %v4801 = vadd.f32 %v4512, %v4800
    %v4802 = vpop.f32.mrb[0].mxu0
    %v4803 = vpop.f32.mrb[0].mxu0
    %v4804 = vadd.f32 %v4515, %v4803
    %v4805 = vpop.f32.mrb[0].mxu0
    %4806 = vmatprep.mubr.bf16.mxu0 %v1258
    %4807 = vmatmul.mubr.bf16.gmra.mrb[0].mxu0 %v1257
    %v4808 = vpop.f32.mrb[0].mxu0
    %v4809 = vadd.f32 %v4520, %v4808
    %v4810 = vpop.f32.mrb[0].mxu0
    %v4811 = vpop.f32.mrb[0].mxu0
    %v4812 = vadd.f32 %v4523, %v4811
    %v4813 = vpop.f32.mrb[0].mxu0
    %4814 = vmatprep.mubr.bf16.mxu0 %v1290
    %4815 = vmatmul.mubr.bf16.gmra.mrb[0].mxu0 %v1289
    %v4816 = vpop.f32.mrb[0].mxu0
    %v4817 = vadd.f32 %v4528, %v4816
    %v4818 = vpop.f32.mrb[0].mxu0
    %v4819 = vpop.f32.mrb[0].mxu0
    %v4820 = vadd.f32 %v4531, %v4819
    %v4821 = vpop.f32.mrb[0].mxu0
    %4822 = vmatprep.mubr.bf16.mxu0 %v1322
    %4823 = vmatmul.mubr.bf16.gmra.mrb[0].mxu0 %v1321
    %v4824 = vpop.f32.mrb[0].mxu0
    %v4825 = vadd.f32 %v4536, %v4824
    %v4826 = vpop.f32.mrb[0].mxu0
    %v4827 = vpop.f32.mrb[0].mxu0
    %v4828 = vadd.f32 %v4539, %v4827
    %v4829 = vpop.f32.mrb[0].mxu0
    %4830 = vmatprep.mubr.bf16.mxu0 %v1354
    %4831 = vmatmul.mubr.bf16.gmra.mrb[0].mxu0 %v1353
    %v4832 = vpop.f32.mrb[0].mxu0
    %v4833 = vadd.f32 %v4544, %v4832
    %v4834 = vpop.f32.mrb[0].mxu0
    %v4835 = vpop.f32.mrb[0].mxu0
    %v4836 = vadd.f32 %v4547, %v4835
    %v4837 = vpop.f32.mrb[0].mxu0
    %4838 = vmatprep.mubr.bf16.mxu0 %v1386
    %4839 = vmatmul.mubr.bf16.gmra.mrb[0].mxu0 %v1385
    %v4840 = vpop.f32.mrb[0].mxu0
    %v4841 = vadd.f32 %v4552, %v4840
    %v4842 = vpop.f32.mrb[0].mxu0
    %v4843 = vpop.f32.mrb[0].mxu0
    %v4844 = vadd.f32 %v4555, %v4843
    %v4845 = vpop.f32.mrb[0].mxu0
    %4846 = vmatprep.mubr.bf16.mxu0 %v1418
    %4847 = vmatmul.mubr.bf16.gmra.mrb[0].mxu0 %v1417
    %v4848 = vpop.f32.mrb[0].mxu0
    %v4849 = vadd.f32 %v4560, %v4848
    %v4850 = vpop.f32.mrb[0].mxu0
    %v4851 = vpop.f32.mrb[0].mxu0
    %v4852 = vadd.f32 %v4563, %v4851
    %v4853 = vpop.f32.mrb[0].mxu0
    %4854 = vmatprep.mubr.bf16.mxu0 %v1450
    %4855 = vmatmul.mubr.bf16.gmra.mrb[0].mxu0 %v1449
    %v4856 = vpop.f32.mrb[0].mxu0
    %v4857 = vadd.f32 %v4568, %v4856
    %v4858 = vpop.f32.mrb[0].mxu0
    %v4859 = vpop.f32.mrb[0].mxu0
    %v4860 = vadd.f32 %v4571, %v4859
    %v4861 = vpop.f32.mrb[0].mxu0
    %4862 = vmatprep.mubr.bf16.mxu0 %v1482
    %4863 = vmatmul.mubr.bf16.gmra.mrb[0].mxu0 %v1481
    %v4864 = vpop.f32.mrb[0].mxu0
    %v4865 = vadd.f32 %v4576, %v4864
    %v4866 = vpop.f32.mrb[0].mxu0
    %v4867 = vpop.f32.mrb[0].mxu0
    %v4868 = vadd.f32 %v4579, %v4867
    %v4869 = vpop.f32.mrb[0].mxu0
    %4870 = vmatprep.mubr.bf16.mxu0 %v1514
    %4871 = vmatmul.mubr.bf16.gmra.mrb[0].mxu0 %v1513
    %v4872 = vpop.f32.mrb[0].mxu0
    %v4873 = vadd.f32 %v4584, %v4872
    %v4874 = vpop.f32.mrb[0].mxu0
    %v4875 = vpop.f32.mrb[0].mxu0
    %v4876 = vadd.f32 %v4587, %v4875
    %v4877 = vpop.f32.mrb[0].mxu0
    %4878 = vmatprep.mubr.bf16.mxu0 %v1546
    %4879 = vmatmul.mubr.bf16.gmra.mrb[0].mxu0 %v1545
    %v4880 = vpop.f32.mrb[0].mxu0
    %v4881 = vadd.f32 %v4592, %v4880
    %v4882 = vpop.f32.mrb[0].mxu0
    %v4883 = vpop.f32.mrb[0].mxu0
    %v4884 = vadd.f32 %v4595, %v4883
    %v4885 = vpop.f32.mrb[0].mxu0
    %4886 = vmatprep.mubr.bf16.mxu0 %v1578
    %4887 = vmatmul.mubr.bf16.gmra.mrb[0].mxu0 %v1577
    %v4888 = vpop.f32.mrb[0].mxu0
    %v4889 = vadd.f32 %v4600, %v4888
    %v4890 = vpop.f32.mrb[0].mxu0
    %v4891 = vpop.f32.mrb[0].mxu0
    %v4892 = vadd.f32 %v4603, %v4891
    %v4893 = vpop.f32.mrb[0].mxu0
    %4894 = vmatprep.mubr.bf16.mxu0 %v1610
    %4895 = vmatmul.mubr.bf16.gmra.mrb[0].mxu0 %v1609
    %v4896 = vpop.f32.mrb[0].mxu0
    %v4897 = vadd.f32 %v4608, %v4896
    %v4898 = vpop.f32.mrb[0].mxu0
    %v4899 = vpop.f32.mrb[0].mxu0
    %v4900 = vadd.f32 %v4611, %v4899
    %v4901 = vpop.f32.mrb[0].mxu0
    %4902 = vdwg.mxu0
    %4903 = vmatprep.subr.bf16.mxu0 0
    %4904 = vmatpush1.bf16.msra.mxu0 %v3299
    %4905 = vmatprep.subr.bf16.mxu0 0
    %4906 = vmatpush1.bf16.msra.mxu0 %v3300
    %4907 = vmatprep.subr.bf16.mxu0 0
    %4908 = vmatpush1.bf16.msra.mxu0 %v3301
    %4909 = vmatprep.subr.bf16.mxu0 0
    %4910 = vmatpush1.bf16.msra.mxu0 %v3302
    %4911 = vmatprep.subr.bf16.mxu0 0
    %4912 = vmatpush1.bf16.msra.mxu0 %v3303
    %4913 = vmatprep.subr.bf16.mxu0 0
    %4914 = vmatpush1.bf16.msra.mxu0 %v3304
    %4915 = vmatprep.subr.bf16.mxu0 0
    %4916 = vmatpush1.bf16.msra.mxu0 %v3305
    %4917 = vmatprep.subr.bf16.mxu0 0
    %4918 = vmatpush1.bf16.msra.mxu0 %v3306
    %4919 = vmatprep.subr.bf16.mxu0 0
    %4920 = vmatpush1.bf16.msra.mxu0 %v3307
    %4921 = vmatprep.subr.bf16.mxu0 0
    %4922 = vmatpush1.bf16.msra.mxu0 %v3308
    %4923 = vmatprep.subr.bf16.mxu0 0
    %4924 = vmatpush1.bf16.msra.mxu0 %v3309
    %4925 = vmatprep.subr.bf16.mxu0 0
    %4926 = vmatpush1.bf16.msra.mxu0 %v3310
    %4927 = vmatprep.subr.bf16.mxu0 0
    %4928 = vmatpush1.bf16.msra.mxu0 %v3311
    %4929 = vmatprep.subr.bf16.mxu0 0
    %4930 = vmatpush1.bf16.msra.mxu0 %v3312
    %4931 = vmatprep.subr.bf16.mxu0 0
    %4932 = vmatpush1.bf16.msra.mxu0 %v3313
    %4933 = vmatprep.subr.bf16.mxu0 0
    %4934 = vmatpush1.bf16.msra.mxu0 %v3314
    %4935 = vmatprep.mubr.bf16.mxu0 %v620
    %4936 = vmatmul.mubr.bf16.gmra.mrb[0].mxu0 %v619
    %v4937 = vpop.f32.mrb[0].mxu0
    %v4938 = vadd.f32 %v4649, %v4937
    %v4939 = vpop.f32.mrb[0].mxu0
    %v4940 = vpop.f32.mrb[0].mxu0
    %v4941 = vadd.f32 %v4652, %v4940
    %v4942 = vpop.f32.mrb[0].mxu0
    %4943 = vmatprep.mubr.bf16.mxu0 %v652
    %4944 = vmatmul.mubr.bf16.gmra.mrb[0].mxu0 %v651
    %v4945 = vpop.f32.mrb[0].mxu0
    %v4946 = vadd.f32 %v4657, %v4945
    %v4947 = vpop.f32.mrb[0].mxu0
    %v4948 = vpop.f32.mrb[0].mxu0
    %v4949 = vadd.f32 %v4660, %v4948
    %v4950 = vpop.f32.mrb[0].mxu0
    %4951 = vmatprep.mubr.bf16.mxu0 %v684
    %4952 = vmatmul.mubr.bf16.gmra.mrb[0].mxu0 %v683
    %v4953 = vpop.f32.mrb[0].mxu0
    %v4954 = vadd.f32 %v4665, %v4953
    %v4955 = vpop.f32.mrb[0].mxu0
    %v4956 = vpop.f32.mrb[0].mxu0
    %v4957 = vadd.f32 %v4668, %v4956
    %v4958 = vpop.f32.mrb[0].mxu0
    %4959 = vmatprep.mubr.bf16.mxu0 %v716
    %4960 = vmatmul.mubr.bf16.gmra.mrb[0].mxu0 %v715
    %v4961 = vpop.f32.mrb[0].mxu0
    %v4962 = vadd.f32 %v4673, %v4961
    %v4963 = vpop.f32.mrb[0].mxu0
    %v4964 = vpop.f32.mrb[0].mxu0
    %v4965 = vadd.f32 %v4676, %v4964
    %v4966 = vpop.f32.mrb[0].mxu0
    %4967 = vmatprep.mubr.bf16.mxu0 %v748
    %4968 = vmatmul.mubr.bf16.gmra.mrb[0].mxu0 %v747
    %v4969 = vpop.f32.mrb[0].mxu0
    %v4970 = vadd.f32 %v4681, %v4969
    %v4971 = vpop.f32.mrb[0].mxu0
    %v4972 = vpop.f32.mrb[0].mxu0
    %v4973 = vadd.f32 %v4684, %v4972
    %v4974 = vpop.f32.mrb[0].mxu0
    %4975 = vmatprep.mubr.bf16.mxu0 %v780
    %4976 = vmatmul.mubr.bf16.gmra.mrb[0].mxu0 %v779
    %v4977 = vpop.f32.mrb[0].mxu0
    %v4978 = vadd.f32 %v4689, %v4977
    %v4979 = vpop.f32.mrb[0].mxu0
    %v4980 = vpop.f32.mrb[0].mxu0
    %v4981 = vadd.f32 %v4692, %v4980
    %v4982 = vpop.f32.mrb[0].mxu0
    %4983 = vmatprep.mubr.bf16.mxu0 %v812
    %4984 = vmatmul.mubr.bf16.gmra.mrb[0].mxu0 %v811
    %v4985 = vpop.f32.mrb[0].mxu0
    %v4986 = vadd.f32 %v4697, %v4985
    %v4987 = vpop.f32.mrb[0].mxu0
    %v4988 = vpop.f32.mrb[0].mxu0
    %v4989 = vadd.f32 %v4700, %v4988
    %v4990 = vpop.f32.mrb[0].mxu0
    %4991 = vmatprep.mubr.bf16.mxu0 %v844
    %4992 = vmatmul.mubr.bf16.gmra.mrb[0].mxu0 %v843
    %v4993 = vpop.f32.mrb[0].mxu0
    %v4994 = vadd.f32 %v4705, %v4993
    %v4995 = vpop.f32.mrb[0].mxu0
    %v4996 = vpop.f32.mrb[0].mxu0
    %v4997 = vadd.f32 %v4708, %v4996
    %v4998 = vpop.f32.mrb[0].mxu0
    %4999 = vmatprep.mubr.bf16.mxu0 %v876
    %5000 = vmatmul.mubr.bf16.gmra.mrb[0].mxu0 %v875
    %v5001 = vpop.f32.mrb[0].mxu0
    %v5002 = vadd.f32 %v4713, %v5001
    %v5003 = vpop.f32.mrb[0].mxu0
    %v5004 = vpop.f32.mrb[0].mxu0
    %v5005 = vadd.f32 %v4716, %v5004
    %v5006 = vpop.f32.mrb[0].mxu0
    %5007 = vmatprep.mubr.bf16.mxu0 %v908
    %5008 = vmatmul.mubr.bf16.gmra.mrb[0].mxu0 %v907
    %v5009 = vpop.f32.mrb[0].mxu0
    %v5010 = vadd.f32 %v4721, %v5009
    %v5011 = vpop.f32.mrb[0].mxu0
    %v5012 = vpop.f32.mrb[0].mxu0
    %v5013 = vadd.f32 %v4724, %v5012
    %v5014 = vpop.f32.mrb[0].mxu0
    %5015 = vmatprep.mubr.bf16.mxu0 %v940
    %5016 = vmatmul.mubr.bf16.gmra.mrb[0].mxu0 %v939
    %v5017 = vpop.f32.mrb[0].mxu0
    %v5018 = vadd.f32 %v4729, %v5017
    %v5019 = vpop.f32.mrb[0].mxu0
    %v5020 = vpop.f32.mrb[0].mxu0
    %v5021 = vadd.f32 %v4732, %v5020
    %v5022 = vpop.f32.mrb[0].mxu0
    %5023 = vmatprep.mubr.bf16.mxu0 %v972
    %5024 = vmatmul.mubr.bf16.gmra.mrb[0].mxu0 %v971
    %v5025 = vpop.f32.mrb[0].mxu0
    %v5026 = vadd.f32 %v4737, %v5025
    %v5027 = vpop.f32.mrb[0].mxu0
    %v5028 = vpop.f32.mrb[0].mxu0
    %v5029 = vadd.f32 %v4740, %v5028
    %v5030 = vpop.f32.mrb[0].mxu0
    %5031 = vmatprep.mubr.bf16.mxu0 %v1004
    %5032 = vmatmul.mubr.bf16.gmra.mrb[0].mxu0 %v1003
    %v5033 = vpop.f32.mrb[0].mxu0
    %v5034 = vadd.f32 %v4745, %v5033
    %v5035 = vpop.f32.mrb[0].mxu0
    %v5036 = vpop.f32.mrb[0].mxu0
    %v5037 = vadd.f32 %v4748, %v5036
    %v5038 = vpop.f32.mrb[0].mxu0
    %5039 = vmatprep.mubr.bf16.mxu0 %v1036
    %5040 = vmatmul.mubr.bf16.gmra.mrb[0].mxu0 %v1035
    %v5041 = vpop.f32.mrb[0].mxu0
    %v5042 = vadd.f32 %v4753, %v5041
    %v5043 = vpop.f32.mrb[0].mxu0
    %v5044 = vpop.f32.mrb[0].mxu0
    %v5045 = vadd.f32 %v4756, %v5044
    %v5046 = vpop.f32.mrb[0].mxu0
    %5047 = vmatprep.mubr.bf16.mxu0 %v1068
    %5048 = vmatmul.mubr.bf16.gmra.mrb[0].mxu0 %v1067
    %v5049 = vpop.f32.mrb[0].mxu0
    %v5050 = vadd.f32 %v4761, %v5049
    %v5051 = vpop.f32.mrb[0].mxu0
    %v5052 = vpop.f32.mrb[0].mxu0
    %v5053 = vadd.f32 %v4764, %v5052
    %v5054 = vpop.f32.mrb[0].mxu0
    %5055 = vmatprep.mubr.bf16.mxu0 %v1100
    %5056 = vmatmul.mubr.bf16.gmra.mrb[0].mxu0 %v1099
    %v5057 = vpop.f32.mrb[0].mxu0
    %v5058 = vadd.f32 %v4769, %v5057
    %v5059 = vpop.f32.mrb[0].mxu0
    %v5060 = vpop.f32.mrb[0].mxu0
    %v5061 = vadd.f32 %v4772, %v5060
    %v5062 = vpop.f32.mrb[0].mxu0
    %5063 = vmatprep.mubr.bf16.mxu0 %v1132
    %5064 = vmatmul.mubr.bf16.gmra.mrb[0].mxu0 %v1131
    %v5065 = vpop.f32.mrb[0].mxu0
    %v5066 = vadd.f32 %v4777, %v5065
    %v5067 = vpop.f32.mrb[0].mxu0
    %v5068 = vpop.f32.mrb[0].mxu0
    %v5069 = vadd.f32 %v4780, %v5068
    %v5070 = vpop.f32.mrb[0].mxu0
    %5071 = vmatprep.mubr.bf16.mxu0 %v1164
    %5072 = vmatmul.mubr.bf16.gmra.mrb[0].mxu0 %v1163
    %v5073 = vpop.f32.mrb[0].mxu0
    %v5074 = vadd.f32 %v4785, %v5073
    %v5075 = vpop.f32.mrb[0].mxu0
    %v5076 = vpop.f32.mrb[0].mxu0
    %v5077 = vadd.f32 %v4788, %v5076
    %v5078 = vpop.f32.mrb[0].mxu0
    %5079 = vmatprep.mubr.bf16.mxu0 %v1196
    %5080 = vmatmul.mubr.bf16.gmra.mrb[0].mxu0 %v1195
    %v5081 = vpop.f32.mrb[0].mxu0
    %v5082 = vadd.f32 %v4793, %v5081
    %v5083 = vpop.f32.mrb[0].mxu0
    %v5084 = vpop.f32.mrb[0].mxu0
    %v5085 = vadd.f32 %v4796, %v5084
    %v5086 = vpop.f32.mrb[0].mxu0
    %5087 = vmatprep.mubr.bf16.mxu0 %v1228
    %5088 = vmatmul.mubr.bf16.gmra.mrb[0].mxu0 %v1227
    %v5089 = vpop.f32.mrb[0].mxu0
    %v5090 = vadd.f32 %v4801, %v5089
    %v5091 = vpop.f32.mrb[0].mxu0
    %v5092 = vpop.f32.mrb[0].mxu0
    %v5093 = vadd.f32 %v4804, %v5092
    %v5094 = vpop.f32.mrb[0].mxu0
    %5095 = vmatprep.mubr.bf16.mxu0 %v1260
    %5096 = vmatmul.mubr.bf16.gmra.mrb[0].mxu0 %v1259
    %v5097 = vpop.f32.mrb[0].mxu0
    %v5098 = vadd.f32 %v4809, %v5097
    %v5099 = vpop.f32.mrb[0].mxu0
    %v5100 = vpop.f32.mrb[0].mxu0
    %v5101 = vadd.f32 %v4812, %v5100
    %v5102 = vpop.f32.mrb[0].mxu0
    %5103 = vmatprep.mubr.bf16.mxu0 %v1292
    %5104 = vmatmul.mubr.bf16.gmra.mrb[0].mxu0 %v1291
    %v5105 = vpop.f32.mrb[0].mxu0
    %v5106 = vadd.f32 %v4817, %v5105
    %v5107 = vpop.f32.mrb[0].mxu0
    %v5108 = vpop.f32.mrb[0].mxu0
    %v5109 = vadd.f32 %v4820, %v5108
    %v5110 = vpop.f32.mrb[0].mxu0
    %5111 = vmatprep.mubr.bf16.mxu0 %v1324
    %5112 = vmatmul.mubr.bf16.gmra.mrb[0].mxu0 %v1323
    %v5113 = vpop.f32.mrb[0].mxu0
    %v5114 = vadd.f32 %v4825, %v5113
    %v5115 = vpop.f32.mrb[0].mxu0
    %v5116 = vpop.f32.mrb[0].mxu0
    %v5117 = vadd.f32 %v4828, %v5116
    %v5118 = vpop.f32.mrb[0].mxu0
    %5119 = vmatprep.mubr.bf16.mxu0 %v1356
    %5120 = vmatmul.mubr.bf16.gmra.mrb[0].mxu0 %v1355
    %v5121 = vpop.f32.mrb[0].mxu0
    %v5122 = vadd.f32 %v4833, %v5121
    %v5123 = vpop.f32.mrb[0].mxu0
    %v5124 = vpop.f32.mrb[0].mxu0
    %v5125 = vadd.f32 %v4836, %v5124
    %v5126 = vpop.f32.mrb[0].mxu0
    %5127 = vmatprep.mubr.bf16.mxu0 %v1388
    %5128 = vmatmul.mubr.bf16.gmra.mrb[0].mxu0 %v1387
    %v5129 = vpop.f32.mrb[0].mxu0
    %v5130 = vadd.f32 %v4841, %v5129
    %v5131 = vpop.f32.mrb[0].mxu0
    %v5132 = vpop.f32.mrb[0].mxu0
    %v5133 = vadd.f32 %v4844, %v5132
    %v5134 = vpop.f32.mrb[0].mxu0
    %5135 = vmatprep.mubr.bf16.mxu0 %v1420
    %5136 = vmatmul.mubr.bf16.gmra.mrb[0].mxu0 %v1419
    %v5137 = vpop.f32.mrb[0].mxu0
    %v5138 = vadd.f32 %v4849, %v5137
    %v5139 = vpop.f32.mrb[0].mxu0
    %v5140 = vpop.f32.mrb[0].mxu0
    %v5141 = vadd.f32 %v4852, %v5140
    %v5142 = vpop.f32.mrb[0].mxu0
    %5143 = vmatprep.mubr.bf16.mxu0 %v1452
    %5144 = vmatmul.mubr.bf16.gmra.mrb[0].mxu0 %v1451
    %v5145 = vpop.f32.mrb[0].mxu0
    %v5146 = vadd.f32 %v4857, %v5145
    %v5147 = vpop.f32.mrb[0].mxu0
    %v5148 = vpop.f32.mrb[0].mxu0
    %v5149 = vadd.f32 %v4860, %v5148
    %v5150 = vpop.f32.mrb[0].mxu0
    %5151 = vmatprep.mubr.bf16.mxu0 %v1484
    %5152 = vmatmul.mubr.bf16.gmra.mrb[0].mxu0 %v1483
    %v5153 = vpop.f32.mrb[0].mxu0
    %v5154 = vadd.f32 %v4865, %v5153
    %v5155 = vpop.f32.mrb[0].mxu0
    %v5156 = vpop.f32.mrb[0].mxu0
    %v5157 = vadd.f32 %v4868, %v5156
    %v5158 = vpop.f32.mrb[0].mxu0
    %5159 = vmatprep.mubr.bf16.mxu0 %v1516
    %5160 = vmatmul.mubr.bf16.gmra.mrb[0].mxu0 %v1515
    %v5161 = vpop.f32.mrb[0].mxu0
    %v5162 = vadd.f32 %v4873, %v5161
    %v5163 = vpop.f32.mrb[0].mxu0
    %v5164 = vpop.f32.mrb[0].mxu0
    %v5165 = vadd.f32 %v4876, %v5164
    %v5166 = vpop.f32.mrb[0].mxu0
    %5167 = vmatprep.mubr.bf16.mxu0 %v1548
    %5168 = vmatmul.mubr.bf16.gmra.mrb[0].mxu0 %v1547
    %v5169 = vpop.f32.mrb[0].mxu0
    %v5170 = vadd.f32 %v4881, %v5169
    %v5171 = vpop.f32.mrb[0].mxu0
    %v5172 = vpop.f32.mrb[0].mxu0
    %v5173 = vadd.f32 %v4884, %v5172
    %v5174 = vpop.f32.mrb[0].mxu0
    %5175 = vmatprep.mubr.bf16.mxu0 %v1580
    %5176 = vmatmul.mubr.bf16.gmra.mrb[0].mxu0 %v1579
    %v5177 = vpop.f32.mrb[0].mxu0
    %v5178 = vadd.f32 %v4889, %v5177
    %v5179 = vpop.f32.mrb[0].mxu0
    %v5180 = vpop.f32.mrb[0].mxu0
    %v5181 = vadd.f32 %v4892, %v5180
    %v5182 = vpop.f32.mrb[0].mxu0
    %5183 = vmatprep.mubr.bf16.mxu0 %v1612
    %5184 = vmatmul.mubr.bf16.gmra.mrb[0].mxu0 %v1611
    %v5185 = vpop.f32.mrb[0].mxu0
    %v5186 = vadd.f32 %v4897, %v5185
    %v5187 = vpop.f32.mrb[0].mxu0
    %v5188 = vpop.f32.mrb[0].mxu0
    %v5189 = vadd.f32 %v4900, %v5188
    %v5190 = vpop.f32.mrb[0].mxu0
    %5191 = vdwg.mxu0
    %5192 = vmatprep.subr.bf16.mxu0 0
    %5193 = vmatpush1.bf16.msra.mxu0 %v3315
    %5194 = vmatprep.subr.bf16.mxu0 0
    %5195 = vmatpush1.bf16.msra.mxu0 %v3316
    %5196 = vmatprep.subr.bf16.mxu0 0
    %5197 = vmatpush1.bf16.msra.mxu0 %v3317
    %5198 = vmatprep.subr.bf16.mxu0 0
    %5199 = vmatpush1.bf16.msra.mxu0 %v3318
    %5200 = vmatprep.subr.bf16.mxu0 0
    %5201 = vmatpush1.bf16.msra.mxu0 %v3319
    %5202 = vmatprep.subr.bf16.mxu0 0
    %5203 = vmatpush1.bf16.msra.mxu0 %v3320
    %5204 = vmatprep.subr.bf16.mxu0 0
    %5205 = vmatpush1.bf16.msra.mxu0 %v3321
    %5206 = vmatprep.subr.bf16.mxu0 0
    %5207 = vmatpush1.bf16.msra.mxu0 %v3322
    %5208 = vmatprep.subr.bf16.mxu0 0
    %5209 = vmatpush1.bf16.msra.mxu0 %v3323
    %5210 = vmatprep.subr.bf16.mxu0 0
    %5211 = vmatpush1.bf16.msra.mxu0 %v3324
    %5212 = vmatprep.subr.bf16.mxu0 0
    %5213 = vmatpush1.bf16.msra.mxu0 %v3325
    %5214 = vmatprep.subr.bf16.mxu0 0
    %5215 = vmatpush1.bf16.msra.mxu0 %v3326
    %5216 = vmatprep.subr.bf16.mxu0 0
    %5217 = vmatpush1.bf16.msra.mxu0 %v3327
    %5218 = vmatprep.subr.bf16.mxu0 0
    %5219 = vmatpush1.bf16.msra.mxu0 %v3328
    %5220 = vmatprep.subr.bf16.mxu0 0
    %5221 = vmatpush1.bf16.msra.mxu0 %v3329
    %5222 = vmatprep.subr.bf16.mxu0 0
    %5223 = vmatpush1.bf16.msra.mxu0 %v3330
    %5224 = vmatprep.mubr.bf16.mxu0 %v622
    %5225 = vmatmul.mubr.bf16.gmra.mrb[0].mxu0 %v621
    %v5226 = vpop.f32.mrb[0].mxu0
    %v5227 = vadd.f32 %v4938, %v5226
    %v5228 = vpop.f32.mrb[0].mxu0
    %v5229 = vpop.f32.mrb[0].mxu0
    %v5230 = vadd.f32 %v4941, %v5229
    %v5231 = vpop.f32.mrb[0].mxu0
    %5232 = vmatprep.mubr.bf16.mxu0 %v654
    %5233 = vmatmul.mubr.bf16.gmra.mrb[0].mxu0 %v653
    %v5234 = vpop.f32.mrb[0].mxu0
    %v5235 = vadd.f32 %v4946, %v5234
    %v5236 = vpop.f32.mrb[0].mxu0
    %v5237 = vpop.f32.mrb[0].mxu0
    %v5238 = vadd.f32 %v4949, %v5237
    %v5239 = vpop.f32.mrb[0].mxu0
    %5240 = vmatprep.mubr.bf16.mxu0 %v686
    %5241 = vmatmul.mubr.bf16.gmra.mrb[0].mxu0 %v685
    %v5242 = vpop.f32.mrb[0].mxu0
    %v5243 = vadd.f32 %v4954, %v5242
    %v5244 = vpop.f32.mrb[0].mxu0
    %v5245 = vpop.f32.mrb[0].mxu0
    %v5246 = vadd.f32 %v4957, %v5245
    %v5247 = vpop.f32.mrb[0].mxu0
    %5248 = vmatprep.mubr.bf16.mxu0 %v718
    %5249 = vmatmul.mubr.bf16.gmra.mrb[0].mxu0 %v717
    %v5250 = vpop.f32.mrb[0].mxu0
    %v5251 = vadd.f32 %v4962, %v5250
    %v5252 = vpop.f32.mrb[0].mxu0
    %v5253 = vpop.f32.mrb[0].mxu0
    %v5254 = vadd.f32 %v4965, %v5253
    %v5255 = vpop.f32.mrb[0].mxu0
    %5256 = vmatprep.mubr.bf16.mxu0 %v750
    %5257 = vmatmul.mubr.bf16.gmra.mrb[0].mxu0 %v749
    %v5258 = vpop.f32.mrb[0].mxu0
    %v5259 = vadd.f32 %v4970, %v5258
    %v5260 = vpop.f32.mrb[0].mxu0
    %v5261 = vpop.f32.mrb[0].mxu0
    %v5262 = vadd.f32 %v4973, %v5261
    %v5263 = vpop.f32.mrb[0].mxu0
    %5264 = vmatprep.mubr.bf16.mxu0 %v782
    %5265 = vmatmul.mubr.bf16.gmra.mrb[0].mxu0 %v781
    %v5266 = vpop.f32.mrb[0].mxu0
    %v5267 = vadd.f32 %v4978, %v5266
    %v5268 = vpop.f32.mrb[0].mxu0
    %v5269 = vpop.f32.mrb[0].mxu0
    %v5270 = vadd.f32 %v4981, %v5269
    %v5271 = vpop.f32.mrb[0].mxu0
    %5272 = vmatprep.mubr.bf16.mxu0 %v814
    %5273 = vmatmul.mubr.bf16.gmra.mrb[0].mxu0 %v813
    %v5274 = vpop.f32.mrb[0].mxu0
    %v5275 = vadd.f32 %v4986, %v5274
    %v5276 = vpop.f32.mrb[0].mxu0
    %v5277 = vpop.f32.mrb[0].mxu0
    %v5278 = vadd.f32 %v4989, %v5277
    %v5279 = vpop.f32.mrb[0].mxu0
    %5280 = vmatprep.mubr.bf16.mxu0 %v846
    %5281 = vmatmul.mubr.bf16.gmra.mrb[0].mxu0 %v845
    %v5282 = vpop.f32.mrb[0].mxu0
    %v5283 = vadd.f32 %v4994, %v5282
    %v5284 = vpop.f32.mrb[0].mxu0
    %v5285 = vpop.f32.mrb[0].mxu0
    %v5286 = vadd.f32 %v4997, %v5285
    %v5287 = vpop.f32.mrb[0].mxu0
    %5288 = vmatprep.mubr.bf16.mxu0 %v878
    %5289 = vmatmul.mubr.bf16.gmra.mrb[0].mxu0 %v877
    %v5290 = vpop.f32.mrb[0].mxu0
    %v5291 = vadd.f32 %v5002, %v5290
    %v5292 = vpop.f32.mrb[0].mxu0
    %v5293 = vpop.f32.mrb[0].mxu0
    %v5294 = vadd.f32 %v5005, %v5293
    %v5295 = vpop.f32.mrb[0].mxu0
    %5296 = vmatprep.mubr.bf16.mxu0 %v910
    %5297 = vmatmul.mubr.bf16.gmra.mrb[0].mxu0 %v909
    %v5298 = vpop.f32.mrb[0].mxu0
    %v5299 = vadd.f32 %v5010, %v5298
    %v5300 = vpop.f32.mrb[0].mxu0
    %v5301 = vpop.f32.mrb[0].mxu0
    %v5302 = vadd.f32 %v5013, %v5301
    %v5303 = vpop.f32.mrb[0].mxu0
    %5304 = vmatprep.mubr.bf16.mxu0 %v942
    %5305 = vmatmul.mubr.bf16.gmra.mrb[0].mxu0 %v941
    %v5306 = vpop.f32.mrb[0].mxu0
    %v5307 = vadd.f32 %v5018, %v5306
    %v5308 = vpop.f32.mrb[0].mxu0
    %v5309 = vpop.f32.mrb[0].mxu0
    %v5310 = vadd.f32 %v5021, %v5309
    %v5311 = vpop.f32.mrb[0].mxu0
    %5312 = vmatprep.mubr.bf16.mxu0 %v974
    %5313 = vmatmul.mubr.bf16.gmra.mrb[0].mxu0 %v973
    %v5314 = vpop.f32.mrb[0].mxu0
    %v5315 = vadd.f32 %v5026, %v5314
    %v5316 = vpop.f32.mrb[0].mxu0
    %v5317 = vpop.f32.mrb[0].mxu0
    %v5318 = vadd.f32 %v5029, %v5317
    %v5319 = vpop.f32.mrb[0].mxu0
    %5320 = vmatprep.mubr.bf16.mxu0 %v1006
    %5321 = vmatmul.mubr.bf16.gmra.mrb[0].mxu0 %v1005
    %v5322 = vpop.f32.mrb[0].mxu0
    %v5323 = vadd.f32 %v5034, %v5322
    %v5324 = vpop.f32.mrb[0].mxu0
    %v5325 = vpop.f32.mrb[0].mxu0
    %v5326 = vadd.f32 %v5037, %v5325
    %v5327 = vpop.f32.mrb[0].mxu0
    %5328 = vmatprep.mubr.bf16.mxu0 %v1038
    %5329 = vmatmul.mubr.bf16.gmra.mrb[0].mxu0 %v1037
    %v5330 = vpop.f32.mrb[0].mxu0
    %v5331 = vadd.f32 %v5042, %v5330
    %v5332 = vpop.f32.mrb[0].mxu0
    %v5333 = vpop.f32.mrb[0].mxu0
    %v5334 = vadd.f32 %v5045, %v5333
    %v5335 = vpop.f32.mrb[0].mxu0
    %5336 = vmatprep.mubr.bf16.mxu0 %v1070
    %5337 = vmatmul.mubr.bf16.gmra.mrb[0].mxu0 %v1069
    %v5338 = vpop.f32.mrb[0].mxu0
    %v5339 = vadd.f32 %v5050, %v5338
    %v5340 = vpop.f32.mrb[0].mxu0
    %v5341 = vpop.f32.mrb[0].mxu0
    %v5342 = vadd.f32 %v5053, %v5341
    %v5343 = vpop.f32.mrb[0].mxu0
    %5344 = vmatprep.mubr.bf16.mxu0 %v1102
    %5345 = vmatmul.mubr.bf16.gmra.mrb[0].mxu0 %v1101
    %v5346 = vpop.f32.mrb[0].mxu0
    %v5347 = vadd.f32 %v5058, %v5346
    %v5348 = vpop.f32.mrb[0].mxu0
    %v5349 = vpop.f32.mrb[0].mxu0
    %v5350 = vadd.f32 %v5061, %v5349
    %v5351 = vpop.f32.mrb[0].mxu0
    %5352 = vmatprep.mubr.bf16.mxu0 %v1134
    %5353 = vmatmul.mubr.bf16.gmra.mrb[0].mxu0 %v1133
    %v5354 = vpop.f32.mrb[0].mxu0
    %v5355 = vadd.f32 %v5066, %v5354
    %v5356 = vpop.f32.mrb[0].mxu0
    %v5357 = vpop.f32.mrb[0].mxu0
    %v5358 = vadd.f32 %v5069, %v5357
    %v5359 = vpop.f32.mrb[0].mxu0
    %5360 = vmatprep.mubr.bf16.mxu0 %v1166
    %5361 = vmatmul.mubr.bf16.gmra.mrb[0].mxu0 %v1165
    %v5362 = vpop.f32.mrb[0].mxu0
    %v5363 = vadd.f32 %v5074, %v5362
    %v5364 = vpop.f32.mrb[0].mxu0
    %v5365 = vpop.f32.mrb[0].mxu0
    %v5366 = vadd.f32 %v5077, %v5365
    %v5367 = vpop.f32.mrb[0].mxu0
    %5368 = vmatprep.mubr.bf16.mxu0 %v1198
    %5369 = vmatmul.mubr.bf16.gmra.mrb[0].mxu0 %v1197
    %v5370 = vpop.f32.mrb[0].mxu0
    %v5371 = vadd.f32 %v5082, %v5370
    %v5372 = vpop.f32.mrb[0].mxu0
    %v5373 = vpop.f32.mrb[0].mxu0
    %v5374 = vadd.f32 %v5085, %v5373
    %v5375 = vpop.f32.mrb[0].mxu0
    %5376 = vmatprep.mubr.bf16.mxu0 %v1230
    %5377 = vmatmul.mubr.bf16.gmra.mrb[0].mxu0 %v1229
    %v5378 = vpop.f32.mrb[0].mxu0
    %v5379 = vadd.f32 %v5090, %v5378
    %v5380 = vpop.f32.mrb[0].mxu0
    %v5381 = vpop.f32.mrb[0].mxu0
    %v5382 = vadd.f32 %v5093, %v5381
    %v5383 = vpop.f32.mrb[0].mxu0
    %5384 = vmatprep.mubr.bf16.mxu0 %v1262
    %5385 = vmatmul.mubr.bf16.gmra.mrb[0].mxu0 %v1261
    %v5386 = vpop.f32.mrb[0].mxu0
    %v5387 = vadd.f32 %v5098, %v5386
    %v5388 = vpop.f32.mrb[0].mxu0
    %v5389 = vpop.f32.mrb[0].mxu0
    %v5390 = vadd.f32 %v5101, %v5389
    %v5391 = vpop.f32.mrb[0].mxu0
    %5392 = vmatprep.mubr.bf16.mxu0 %v1294
    %5393 = vmatmul.mubr.bf16.gmra.mrb[0].mxu0 %v1293
    %v5394 = vpop.f32.mrb[0].mxu0
    %v5395 = vadd.f32 %v5106, %v5394
    %v5396 = vpop.f32.mrb[0].mxu0
    %v5397 = vpop.f32.mrb[0].mxu0
    %v5398 = vadd.f32 %v5109, %v5397
    %v5399 = vpop.f32.mrb[0].mxu0
    %5400 = vmatprep.mubr.bf16.mxu0 %v1326
    %5401 = vmatmul.mubr.bf16.gmra.mrb[0].mxu0 %v1325
    %v5402 = vpop.f32.mrb[0].mxu0
    %v5403 = vadd.f32 %v5114, %v5402
    %v5404 = vpop.f32.mrb[0].mxu0
    %v5405 = vpop.f32.mrb[0].mxu0
    %v5406 = vadd.f32 %v5117, %v5405
    %v5407 = vpop.f32.mrb[0].mxu0
    %5408 = vmatprep.mubr.bf16.mxu0 %v1358
    %5409 = vmatmul.mubr.bf16.gmra.mrb[0].mxu0 %v1357
    %v5410 = vpop.f32.mrb[0].mxu0
    %v5411 = vadd.f32 %v5122, %v5410
    %v5412 = vpop.f32.mrb[0].mxu0
    %v5413 = vpop.f32.mrb[0].mxu0
    %v5414 = vadd.f32 %v5125, %v5413
    %v5415 = vpop.f32.mrb[0].mxu0
    %5416 = vmatprep.mubr.bf16.mxu0 %v1390
    %5417 = vmatmul.mubr.bf16.gmra.mrb[0].mxu0 %v1389
    %v5418 = vpop.f32.mrb[0].mxu0
    %v5419 = vadd.f32 %v5130, %v5418
    %v5420 = vpop.f32.mrb[0].mxu0
    %v5421 = vpop.f32.mrb[0].mxu0
    %v5422 = vadd.f32 %v5133, %v5421
    %v5423 = vpop.f32.mrb[0].mxu0
    %5424 = vmatprep.mubr.bf16.mxu0 %v1422
    %5425 = vmatmul.mubr.bf16.gmra.mrb[0].mxu0 %v1421
    %v5426 = vpop.f32.mrb[0].mxu0
    %v5427 = vadd.f32 %v5138, %v5426
    %v5428 = vpop.f32.mrb[0].mxu0
    %v5429 = vpop.f32.mrb[0].mxu0
    %v5430 = vadd.f32 %v5141, %v5429
    %v5431 = vpop.f32.mrb[0].mxu0
    %5432 = vmatprep.mubr.bf16.mxu0 %v1454
    %5433 = vmatmul.mubr.bf16.gmra.mrb[0].mxu0 %v1453
    %v5434 = vpop.f32.mrb[0].mxu0
    %v5435 = vadd.f32 %v5146, %v5434
    %v5436 = vpop.f32.mrb[0].mxu0
    %v5437 = vpop.f32.mrb[0].mxu0
    %v5438 = vadd.f32 %v5149, %v5437
    %v5439 = vpop.f32.mrb[0].mxu0
    %5440 = vmatprep.mubr.bf16.mxu0 %v1486
    %5441 = vmatmul.mubr.bf16.gmra.mrb[0].mxu0 %v1485
    %v5442 = vpop.f32.mrb[0].mxu0
    %v5443 = vadd.f32 %v5154, %v5442
    %v5444 = vpop.f32.mrb[0].mxu0
    %v5445 = vpop.f32.mrb[0].mxu0
    %v5446 = vadd.f32 %v5157, %v5445
    %v5447 = vpop.f32.mrb[0].mxu0
    %5448 = vmatprep.mubr.bf16.mxu0 %v1518
    %5449 = vmatmul.mubr.bf16.gmra.mrb[0].mxu0 %v1517
    %v5450 = vpop.f32.mrb[0].mxu0
    %v5451 = vadd.f32 %v5162, %v5450
    %v5452 = vpop.f32.mrb[0].mxu0
    %v5453 = vpop.f32.mrb[0].mxu0
    %v5454 = vadd.f32 %v5165, %v5453
    %v5455 = vpop.f32.mrb[0].mxu0
    %5456 = vmatprep.mubr.bf16.mxu0 %v1550
    %5457 = vmatmul.mubr.bf16.gmra.mrb[0].mxu0 %v1549
    %v5458 = vpop.f32.mrb[0].mxu0
    %v5459 = vadd.f32 %v5170, %v5458
    %v5460 = vpop.f32.mrb[0].mxu0
    %v5461 = vpop.f32.mrb[0].mxu0
    %v5462 = vadd.f32 %v5173, %v5461
    %v5463 = vpop.f32.mrb[0].mxu0
    %5464 = vmatprep.mubr.bf16.mxu0 %v1582
    %5465 = vmatmul.mubr.bf16.gmra.mrb[0].mxu0 %v1581
    %v5466 = vpop.f32.mrb[0].mxu0
    %v5467 = vadd.f32 %v5178, %v5466
    %v5468 = vpop.f32.mrb[0].mxu0
    %v5469 = vpop.f32.mrb[0].mxu0
    %v5470 = vadd.f32 %v5181, %v5469
    %v5471 = vpop.f32.mrb[0].mxu0
    %5472 = vmatprep.mubr.bf16.mxu0 %v1614
    %5473 = vmatmul.mubr.bf16.gmra.mrb[0].mxu0 %v1613
    %v5474 = vpop.f32.mrb[0].mxu0
    %v5475 = vadd.f32 %v5186, %v5474
    %v5476 = vpop.f32.mrb[0].mxu0
    %v5477 = vpop.f32.mrb[0].mxu0
    %v5478 = vadd.f32 %v5189, %v5477
    %v5479 = vpop.f32.mrb[0].mxu0
    %5480 = vdwg.mxu0
    %5481 = vmatprep.subr.bf16.mxu0 0
    %5482 = vmatpush1.bf16.msra.mxu0 %v3331
    %5483 = vmatprep.subr.bf16.mxu0 0
    %5484 = vmatpush1.bf16.msra.mxu0 %v3332
    %5485 = vmatprep.subr.bf16.mxu0 0
    %5486 = vmatpush1.bf16.msra.mxu0 %v3333
    %5487 = vmatprep.subr.bf16.mxu0 0
    %5488 = vmatpush1.bf16.msra.mxu0 %v3334
    %5489 = vmatprep.subr.bf16.mxu0 0
    %5490 = vmatpush1.bf16.msra.mxu0 %v3335
    %5491 = vmatprep.subr.bf16.mxu0 0
    %5492 = vmatpush1.bf16.msra.mxu0 %v3336
    %5493 = vmatprep.subr.bf16.mxu0 0
    %5494 = vmatpush1.bf16.msra.mxu0 %v3337
    %5495 = vmatprep.subr.bf16.mxu0 0
    %5496 = vmatpush1.bf16.msra.mxu0 %v3338
    %5497 = vmatprep.subr.bf16.mxu0 0
    %5498 = vmatpush1.bf16.msra.mxu0 %v3339
    %5499 = vmatprep.subr.bf16.mxu0 0
    %5500 = vmatpush1.bf16.msra.mxu0 %v3340
    %5501 = vmatprep.subr.bf16.mxu0 0
    %5502 = vmatpush1.bf16.msra.mxu0 %v3341
    %5503 = vmatprep.subr.bf16.mxu0 0
    %5504 = vmatpush1.bf16.msra.mxu0 %v3342
    %5505 = vmatprep.subr.bf16.mxu0 0
    %5506 = vmatpush1.bf16.msra.mxu0 %v3343
    %5507 = vmatprep.subr.bf16.mxu0 0
    %5508 = vmatpush1.bf16.msra.mxu0 %v3344
    %5509 = vmatprep.subr.bf16.mxu0 0
    %5510 = vmatpush1.bf16.msra.mxu0 %v3345
    %5511 = vmatprep.subr.bf16.mxu0 0
    %5512 = vmatpush1.bf16.msra.mxu0 %v3346
    %5513 = vmatprep.mubr.bf16.mxu0 %v624
    %5514 = vmatmul.mubr.bf16.gmra.mrb[0].mxu0 %v623
    %v5515 = vpop.f32.mrb[0].mxu0
    %v5516 = vadd.f32 %v5227, %v5515
    %v5517 = vpop.f32.mrb[0].mxu0
    %v5518 = vpop.f32.mrb[0].mxu0
    %v5519 = vadd.f32 %v5230, %v5518
    %v5520 = vpop.f32.mrb[0].mxu0
    %5521 = vmatprep.mubr.bf16.mxu0 %v656
    %5522 = vmatmul.mubr.bf16.gmra.mrb[0].mxu0 %v655
    %v5523 = vpop.f32.mrb[0].mxu0
    %v5524 = vadd.f32 %v5235, %v5523
    %v5525 = vpop.f32.mrb[0].mxu0
    %v5526 = vpop.f32.mrb[0].mxu0
    %v5527 = vadd.f32 %v5238, %v5526
    %v5528 = vpop.f32.mrb[0].mxu0
    %5529 = vmatprep.mubr.bf16.mxu0 %v688
    %5530 = vmatmul.mubr.bf16.gmra.mrb[0].mxu0 %v687
    %v5531 = vpop.f32.mrb[0].mxu0
    %v5532 = vadd.f32 %v5243, %v5531
    %v5533 = vpop.f32.mrb[0].mxu0
    %v5534 = vpop.f32.mrb[0].mxu0
    %v5535 = vadd.f32 %v5246, %v5534
    %v5536 = vpop.f32.mrb[0].mxu0
    %5537 = vmatprep.mubr.bf16.mxu0 %v720
    %5538 = vmatmul.mubr.bf16.gmra.mrb[0].mxu0 %v719
    %v5539 = vpop.f32.mrb[0].mxu0
    %v5540 = vadd.f32 %v5251, %v5539
    %v5541 = vpop.f32.mrb[0].mxu0
    %v5542 = vpop.f32.mrb[0].mxu0
    %v5543 = vadd.f32 %v5254, %v5542
    %v5544 = vpop.f32.mrb[0].mxu0
    %5545 = vmatprep.mubr.bf16.mxu0 %v752
    %5546 = vmatmul.mubr.bf16.gmra.mrb[0].mxu0 %v751
    %v5547 = vpop.f32.mrb[0].mxu0
    %v5548 = vadd.f32 %v5259, %v5547
    %v5549 = vpop.f32.mrb[0].mxu0
    %v5550 = vpop.f32.mrb[0].mxu0
    %v5551 = vadd.f32 %v5262, %v5550
    %v5552 = vpop.f32.mrb[0].mxu0
    %5553 = vmatprep.mubr.bf16.mxu0 %v784
    %5554 = vmatmul.mubr.bf16.gmra.mrb[0].mxu0 %v783
    %v5555 = vpop.f32.mrb[0].mxu0
    %v5556 = vadd.f32 %v5267, %v5555
    %v5557 = vpop.f32.mrb[0].mxu0
    %v5558 = vpop.f32.mrb[0].mxu0
    %v5559 = vadd.f32 %v5270, %v5558
    %v5560 = vpop.f32.mrb[0].mxu0
    %5561 = vmatprep.mubr.bf16.mxu0 %v816
    %5562 = vmatmul.mubr.bf16.gmra.mrb[0].mxu0 %v815
    %v5563 = vpop.f32.mrb[0].mxu0
    %v5564 = vadd.f32 %v5275, %v5563
    %v5565 = vpop.f32.mrb[0].mxu0
    %v5566 = vpop.f32.mrb[0].mxu0
    %v5567 = vadd.f32 %v5278, %v5566
    %v5568 = vpop.f32.mrb[0].mxu0
    %5569 = vmatprep.mubr.bf16.mxu0 %v848
    %5570 = vmatmul.mubr.bf16.gmra.mrb[0].mxu0 %v847
    %v5571 = vpop.f32.mrb[0].mxu0
    %v5572 = vadd.f32 %v5283, %v5571
    %v5573 = vpop.f32.mrb[0].mxu0
    %v5574 = vpop.f32.mrb[0].mxu0
    %v5575 = vadd.f32 %v5286, %v5574
    %v5576 = vpop.f32.mrb[0].mxu0
    %5577 = vmatprep.mubr.bf16.mxu0 %v880
    %5578 = vmatmul.mubr.bf16.gmra.mrb[0].mxu0 %v879
    %v5579 = vpop.f32.mrb[0].mxu0
    %v5580 = vadd.f32 %v5291, %v5579
    %v5581 = vpop.f32.mrb[0].mxu0
    %v5582 = vpop.f32.mrb[0].mxu0
    %v5583 = vadd.f32 %v5294, %v5582
    %v5584 = vpop.f32.mrb[0].mxu0
    %5585 = vmatprep.mubr.bf16.mxu0 %v912
    %5586 = vmatmul.mubr.bf16.gmra.mrb[0].mxu0 %v911
    %v5587 = vpop.f32.mrb[0].mxu0
    %v5588 = vadd.f32 %v5299, %v5587
    %v5589 = vpop.f32.mrb[0].mxu0
    %v5590 = vpop.f32.mrb[0].mxu0
    %v5591 = vadd.f32 %v5302, %v5590
    %v5592 = vpop.f32.mrb[0].mxu0
    %5593 = vmatprep.mubr.bf16.mxu0 %v944
    %5594 = vmatmul.mubr.bf16.gmra.mrb[0].mxu0 %v943
    %v5595 = vpop.f32.mrb[0].mxu0
    %v5596 = vadd.f32 %v5307, %v5595
    %v5597 = vpop.f32.mrb[0].mxu0
    %v5598 = vpop.f32.mrb[0].mxu0
    %v5599 = vadd.f32 %v5310, %v5598
    %v5600 = vpop.f32.mrb[0].mxu0
    %5601 = vmatprep.mubr.bf16.mxu0 %v976
    %5602 = vmatmul.mubr.bf16.gmra.mrb[0].mxu0 %v975
    %v5603 = vpop.f32.mrb[0].mxu0
    %v5604 = vadd.f32 %v5315, %v5603
    %v5605 = vpop.f32.mrb[0].mxu0
    %v5606 = vpop.f32.mrb[0].mxu0
    %v5607 = vadd.f32 %v5318, %v5606
    %v5608 = vpop.f32.mrb[0].mxu0
    %5609 = vmatprep.mubr.bf16.mxu0 %v1008
    %5610 = vmatmul.mubr.bf16.gmra.mrb[0].mxu0 %v1007
    %v5611 = vpop.f32.mrb[0].mxu0
    %v5612 = vadd.f32 %v5323, %v5611
    %v5613 = vpop.f32.mrb[0].mxu0
    %v5614 = vpop.f32.mrb[0].mxu0
    %v5615 = vadd.f32 %v5326, %v5614
    %v5616 = vpop.f32.mrb[0].mxu0
    %5617 = vmatprep.mubr.bf16.mxu0 %v1040
    %5618 = vmatmul.mubr.bf16.gmra.mrb[0].mxu0 %v1039
    %v5619 = vpop.f32.mrb[0].mxu0
    %v5620 = vadd.f32 %v5331, %v5619
    %v5621 = vpop.f32.mrb[0].mxu0
    %v5622 = vpop.f32.mrb[0].mxu0
    %v5623 = vadd.f32 %v5334, %v5622
    %v5624 = vpop.f32.mrb[0].mxu0
    %5625 = vmatprep.mubr.bf16.mxu0 %v1072
    %5626 = vmatmul.mubr.bf16.gmra.mrb[0].mxu0 %v1071
    %v5627 = vpop.f32.mrb[0].mxu0
    %v5628 = vadd.f32 %v5339, %v5627
    %v5629 = vpop.f32.mrb[0].mxu0
    %v5630 = vpop.f32.mrb[0].mxu0
    %v5631 = vadd.f32 %v5342, %v5630
    %v5632 = vpop.f32.mrb[0].mxu0
    %5633 = vmatprep.mubr.bf16.mxu0 %v1104
    %5634 = vmatmul.mubr.bf16.gmra.mrb[0].mxu0 %v1103
    %v5635 = vpop.f32.mrb[0].mxu0
    %v5636 = vadd.f32 %v5347, %v5635
    %v5637 = vpop.f32.mrb[0].mxu0
    %v5638 = vpop.f32.mrb[0].mxu0
    %v5639 = vadd.f32 %v5350, %v5638
    %v5640 = vpop.f32.mrb[0].mxu0
    %5641 = vmatprep.mubr.bf16.mxu0 %v1136
    %5642 = vmatmul.mubr.bf16.gmra.mrb[0].mxu0 %v1135
    %v5643 = vpop.f32.mrb[0].mxu0
    %v5644 = vadd.f32 %v5355, %v5643
    %v5645 = vpop.f32.mrb[0].mxu0
    %v5646 = vpop.f32.mrb[0].mxu0
    %v5647 = vadd.f32 %v5358, %v5646
    %v5648 = vpop.f32.mrb[0].mxu0
    %5649 = vmatprep.mubr.bf16.mxu0 %v1168
    %5650 = vmatmul.mubr.bf16.gmra.mrb[0].mxu0 %v1167
    %v5651 = vpop.f32.mrb[0].mxu0
    %v5652 = vadd.f32 %v5363, %v5651
    %v5653 = vpop.f32.mrb[0].mxu0
    %v5654 = vpop.f32.mrb[0].mxu0
    %v5655 = vadd.f32 %v5366, %v5654
    %v5656 = vpop.f32.mrb[0].mxu0
    %5657 = vmatprep.mubr.bf16.mxu0 %v1200
    %5658 = vmatmul.mubr.bf16.gmra.mrb[0].mxu0 %v1199
    %v5659 = vpop.f32.mrb[0].mxu0
    %v5660 = vadd.f32 %v5371, %v5659
    %v5661 = vpop.f32.mrb[0].mxu0
    %v5662 = vpop.f32.mrb[0].mxu0
    %v5663 = vadd.f32 %v5374, %v5662
    %v5664 = vpop.f32.mrb[0].mxu0
    %5665 = vmatprep.mubr.bf16.mxu0 %v1232
    %5666 = vmatmul.mubr.bf16.gmra.mrb[0].mxu0 %v1231
    %v5667 = vpop.f32.mrb[0].mxu0
    %v5668 = vadd.f32 %v5379, %v5667
    %v5669 = vpop.f32.mrb[0].mxu0
    %v5670 = vpop.f32.mrb[0].mxu0
    %v5671 = vadd.f32 %v5382, %v5670
    %v5672 = vpop.f32.mrb[0].mxu0
    %5673 = vmatprep.mubr.bf16.mxu0 %v1264
    %5674 = vmatmul.mubr.bf16.gmra.mrb[0].mxu0 %v1263
    %v5675 = vpop.f32.mrb[0].mxu0
    %v5676 = vadd.f32 %v5387, %v5675
    %v5677 = vpop.f32.mrb[0].mxu0
    %v5678 = vpop.f32.mrb[0].mxu0
    %v5679 = vadd.f32 %v5390, %v5678
    %v5680 = vpop.f32.mrb[0].mxu0
    %5681 = vmatprep.mubr.bf16.mxu0 %v1296
    %5682 = vmatmul.mubr.bf16.gmra.mrb[0].mxu0 %v1295
    %v5683 = vpop.f32.mrb[0].mxu0
    %v5684 = vadd.f32 %v5395, %v5683
    %v5685 = vpop.f32.mrb[0].mxu0
    %v5686 = vpop.f32.mrb[0].mxu0
    %v5687 = vadd.f32 %v5398, %v5686
    %v5688 = vpop.f32.mrb[0].mxu0
    %5689 = vmatprep.mubr.bf16.mxu0 %v1328
    %5690 = vmatmul.mubr.bf16.gmra.mrb[0].mxu0 %v1327
    %v5691 = vpop.f32.mrb[0].mxu0
    %v5692 = vadd.f32 %v5403, %v5691
    %v5693 = vpop.f32.mrb[0].mxu0
    %v5694 = vpop.f32.mrb[0].mxu0
    %v5695 = vadd.f32 %v5406, %v5694
    %v5696 = vpop.f32.mrb[0].mxu0
    %5697 = vmatprep.mubr.bf16.mxu0 %v1360
    %5698 = vmatmul.mubr.bf16.gmra.mrb[0].mxu0 %v1359
    %v5699 = vpop.f32.mrb[0].mxu0
    %v5700 = vadd.f32 %v5411, %v5699
    %v5701 = vpop.f32.mrb[0].mxu0
    %v5702 = vpop.f32.mrb[0].mxu0
    %v5703 = vadd.f32 %v5414, %v5702
    %v5704 = vpop.f32.mrb[0].mxu0
    %5705 = vmatprep.mubr.bf16.mxu0 %v1392
    %5706 = vmatmul.mubr.bf16.gmra.mrb[0].mxu0 %v1391
    %v5707 = vpop.f32.mrb[0].mxu0
    %v5708 = vadd.f32 %v5419, %v5707
    %v5709 = vpop.f32.mrb[0].mxu0
    %v5710 = vpop.f32.mrb[0].mxu0
    %v5711 = vadd.f32 %v5422, %v5710
    %v5712 = vpop.f32.mrb[0].mxu0
    %5713 = vmatprep.mubr.bf16.mxu0 %v1424
    %5714 = vmatmul.mubr.bf16.gmra.mrb[0].mxu0 %v1423
    %v5715 = vpop.f32.mrb[0].mxu0
    %v5716 = vadd.f32 %v5427, %v5715
    %v5717 = vpop.f32.mrb[0].mxu0
    %v5718 = vpop.f32.mrb[0].mxu0
    %v5719 = vadd.f32 %v5430, %v5718
    %v5720 = vpop.f32.mrb[0].mxu0
    %5721 = vmatprep.mubr.bf16.mxu0 %v1456
    %5722 = vmatmul.mubr.bf16.gmra.mrb[0].mxu0 %v1455
    %v5723 = vpop.f32.mrb[0].mxu0
    %v5724 = vadd.f32 %v5435, %v5723
    %v5725 = vpop.f32.mrb[0].mxu0
    %v5726 = vpop.f32.mrb[0].mxu0
    %v5727 = vadd.f32 %v5438, %v5726
    %v5728 = vpop.f32.mrb[0].mxu0
    %5729 = vmatprep.mubr.bf16.mxu0 %v1488
    %5730 = vmatmul.mubr.bf16.gmra.mrb[0].mxu0 %v1487
    %v5731 = vpop.f32.mrb[0].mxu0
    %v5732 = vadd.f32 %v5443, %v5731
    %v5733 = vpop.f32.mrb[0].mxu0
    %v5734 = vpop.f32.mrb[0].mxu0
    %v5735 = vadd.f32 %v5446, %v5734
    %v5736 = vpop.f32.mrb[0].mxu0
    %5737 = vmatprep.mubr.bf16.mxu0 %v1520
    %5738 = vmatmul.mubr.bf16.gmra.mrb[0].mxu0 %v1519
    %v5739 = vpop.f32.mrb[0].mxu0
    %v5740 = vadd.f32 %v5451, %v5739
    %v5741 = vpop.f32.mrb[0].mxu0
    %v5742 = vpop.f32.mrb[0].mxu0
    %v5743 = vadd.f32 %v5454, %v5742
    %v5744 = vpop.f32.mrb[0].mxu0
    %5745 = vmatprep.mubr.bf16.mxu0 %v1552
    %5746 = vmatmul.mubr.bf16.gmra.mrb[0].mxu0 %v1551
    %v5747 = vpop.f32.mrb[0].mxu0
    %v5748 = vadd.f32 %v5459, %v5747
    %v5749 = vpop.f32.mrb[0].mxu0
    %v5750 = vpop.f32.mrb[0].mxu0
    %v5751 = vadd.f32 %v5462, %v5750
    %v5752 = vpop.f32.mrb[0].mxu0
    %5753 = vmatprep.mubr.bf16.mxu0 %v1584
    %5754 = vmatmul.mubr.bf16.gmra.mrb[0].mxu0 %v1583
    %v5755 = vpop.f32.mrb[0].mxu0
    %v5756 = vadd.f32 %v5467, %v5755
    %v5757 = vpop.f32.mrb[0].mxu0
    %v5758 = vpop.f32.mrb[0].mxu0
    %v5759 = vadd.f32 %v5470, %v5758
    %v5760 = vpop.f32.mrb[0].mxu0
    %5761 = vmatprep.mubr.bf16.mxu0 %v1616
    %5762 = vmatmul.mubr.bf16.gmra.mrb[0].mxu0 %v1615
    %v5763 = vpop.f32.mrb[0].mxu0
    %v5764 = vadd.f32 %v5475, %v5763
    %v5765 = vpop.f32.mrb[0].mxu0
    %v5766 = vpop.f32.mrb[0].mxu0
    %v5767 = vadd.f32 %v5478, %v5766
    %v5768 = vpop.f32.mrb[0].mxu0
    %5769 = vdwg.mxu0
    %5770 = vmatprep.subr.bf16.mxu0 0
    %5771 = vmatpush1.bf16.msra.mxu0 %v3347
    %5772 = vmatprep.subr.bf16.mxu0 0
    %5773 = vmatpush1.bf16.msra.mxu0 %v3348
    %5774 = vmatprep.subr.bf16.mxu0 0
    %5775 = vmatpush1.bf16.msra.mxu0 %v3349
    %5776 = vmatprep.subr.bf16.mxu0 0
    %5777 = vmatpush1.bf16.msra.mxu0 %v3350
    %5778 = vmatprep.subr.bf16.mxu0 0
    %5779 = vmatpush1.bf16.msra.mxu0 %v3351
    %5780 = vmatprep.subr.bf16.mxu0 0
    %5781 = vmatpush1.bf16.msra.mxu0 %v3352
    %5782 = vmatprep.subr.bf16.mxu0 0
    %5783 = vmatpush1.bf16.msra.mxu0 %v3353
    %5784 = vmatprep.subr.bf16.mxu0 0
    %5785 = vmatpush1.bf16.msra.mxu0 %v3354
    %5786 = vmatprep.subr.bf16.mxu0 0
    %5787 = vmatpush1.bf16.msra.mxu0 %v3355
    %5788 = vmatprep.subr.bf16.mxu0 0
    %5789 = vmatpush1.bf16.msra.mxu0 %v3356
    %5790 = vmatprep.subr.bf16.mxu0 0
    %5791 = vmatpush1.bf16.msra.mxu0 %v3357
    %5792 = vmatprep.subr.bf16.mxu0 0
    %5793 = vmatpush1.bf16.msra.mxu0 %v3358
    %5794 = vmatprep.subr.bf16.mxu0 0
    %5795 = vmatpush1.bf16.msra.mxu0 %v3359
    %5796 = vmatprep.subr.bf16.mxu0 0
    %5797 = vmatpush1.bf16.msra.mxu0 %v3360
    %5798 = vmatprep.subr.bf16.mxu0 0
    %5799 = vmatpush1.bf16.msra.mxu0 %v3361
    %5800 = vmatprep.subr.bf16.mxu0 0
    %5801 = vmatpush1.bf16.msra.mxu0 %v3362
    %5802 = vmatprep.mubr.bf16.mxu0 %v626
    %5803 = vmatmul.mubr.bf16.gmra.mrb[0].mxu0 %v625
    %v5804 = vpop.f32.mrb[0].mxu0
    %v5805 = vadd.f32 %v5516, %v5804
    %v5806 = vpop.f32.mrb[0].mxu0
    %v5807 = vpop.f32.mrb[0].mxu0
    %v5808 = vadd.f32 %v5519, %v5807
    %v5809 = vpop.f32.mrb[0].mxu0
    %5810 = vmatprep.mubr.bf16.mxu0 %v658
    %5811 = vmatmul.mubr.bf16.gmra.mrb[0].mxu0 %v657
    %v5812 = vpop.f32.mrb[0].mxu0
    %v5813 = vadd.f32 %v5524, %v5812
    %v5814 = vpop.f32.mrb[0].mxu0
    %v5815 = vpop.f32.mrb[0].mxu0
    %v5816 = vadd.f32 %v5527, %v5815
    %v5817 = vpop.f32.mrb[0].mxu0
    %5818 = vmatprep.mubr.bf16.mxu0 %v690
    %5819 = vmatmul.mubr.bf16.gmra.mrb[0].mxu0 %v689
    %v5820 = vpop.f32.mrb[0].mxu0
    %v5821 = vadd.f32 %v5532, %v5820
    %v5822 = vpop.f32.mrb[0].mxu0
    %v5823 = vpop.f32.mrb[0].mxu0
    %v5824 = vadd.f32 %v5535, %v5823
    %v5825 = vpop.f32.mrb[0].mxu0
    %5826 = vmatprep.mubr.bf16.mxu0 %v722
    %5827 = vmatmul.mubr.bf16.gmra.mrb[0].mxu0 %v721
    %v5828 = vpop.f32.mrb[0].mxu0
    %v5829 = vadd.f32 %v5540, %v5828
    %v5830 = vpop.f32.mrb[0].mxu0
    %v5831 = vpop.f32.mrb[0].mxu0
    %v5832 = vadd.f32 %v5543, %v5831
    %v5833 = vpop.f32.mrb[0].mxu0
    %5834 = vmatprep.mubr.bf16.mxu0 %v754
    %5835 = vmatmul.mubr.bf16.gmra.mrb[0].mxu0 %v753
    %v5836 = vpop.f32.mrb[0].mxu0
    %v5837 = vadd.f32 %v5548, %v5836
    %v5838 = vpop.f32.mrb[0].mxu0
    %v5839 = vpop.f32.mrb[0].mxu0
    %v5840 = vadd.f32 %v5551, %v5839
    %v5841 = vpop.f32.mrb[0].mxu0
    %5842 = vmatprep.mubr.bf16.mxu0 %v786
    %5843 = vmatmul.mubr.bf16.gmra.mrb[0].mxu0 %v785
    %v5844 = vpop.f32.mrb[0].mxu0
    %v5845 = vadd.f32 %v5556, %v5844
    %v5846 = vpop.f32.mrb[0].mxu0
    %v5847 = vpop.f32.mrb[0].mxu0
    %v5848 = vadd.f32 %v5559, %v5847
    %v5849 = vpop.f32.mrb[0].mxu0
    %5850 = vmatprep.mubr.bf16.mxu0 %v818
    %5851 = vmatmul.mubr.bf16.gmra.mrb[0].mxu0 %v817
    %v5852 = vpop.f32.mrb[0].mxu0
    %v5853 = vadd.f32 %v5564, %v5852
    %v5854 = vpop.f32.mrb[0].mxu0
    %v5855 = vpop.f32.mrb[0].mxu0
    %v5856 = vadd.f32 %v5567, %v5855
    %v5857 = vpop.f32.mrb[0].mxu0
    %5858 = vmatprep.mubr.bf16.mxu0 %v850
    %5859 = vmatmul.mubr.bf16.gmra.mrb[0].mxu0 %v849
    %v5860 = vpop.f32.mrb[0].mxu0
    %v5861 = vadd.f32 %v5572, %v5860
    %v5862 = vpop.f32.mrb[0].mxu0
    %v5863 = vpop.f32.mrb[0].mxu0
    %v5864 = vadd.f32 %v5575, %v5863
    %v5865 = vpop.f32.mrb[0].mxu0
    %5866 = vmatprep.mubr.bf16.mxu0 %v882
    %5867 = vmatmul.mubr.bf16.gmra.mrb[0].mxu0 %v881
    %v5868 = vpop.f32.mrb[0].mxu0
    %v5869 = vadd.f32 %v5580, %v5868
    %v5870 = vpop.f32.mrb[0].mxu0
    %v5871 = vpop.f32.mrb[0].mxu0
    %v5872 = vadd.f32 %v5583, %v5871
    %v5873 = vpop.f32.mrb[0].mxu0
    %5874 = vmatprep.mubr.bf16.mxu0 %v914
    %5875 = vmatmul.mubr.bf16.gmra.mrb[0].mxu0 %v913
    %v5876 = vpop.f32.mrb[0].mxu0
    %v5877 = vadd.f32 %v5588, %v5876
    %v5878 = vpop.f32.mrb[0].mxu0
    %v5879 = vpop.f32.mrb[0].mxu0
    %v5880 = vadd.f32 %v5591, %v5879
    %v5881 = vpop.f32.mrb[0].mxu0
    %5882 = vmatprep.mubr.bf16.mxu0 %v946
    %5883 = vmatmul.mubr.bf16.gmra.mrb[0].mxu0 %v945
    %v5884 = vpop.f32.mrb[0].mxu0
    %v5885 = vadd.f32 %v5596, %v5884
    %v5886 = vpop.f32.mrb[0].mxu0
    %v5887 = vpop.f32.mrb[0].mxu0
    %v5888 = vadd.f32 %v5599, %v5887
    %v5889 = vpop.f32.mrb[0].mxu0
    %5890 = vmatprep.mubr.bf16.mxu0 %v978
    %5891 = vmatmul.mubr.bf16.gmra.mrb[0].mxu0 %v977
    %v5892 = vpop.f32.mrb[0].mxu0
    %v5893 = vadd.f32 %v5604, %v5892
    %v5894 = vpop.f32.mrb[0].mxu0
    %v5895 = vpop.f32.mrb[0].mxu0
    %v5896 = vadd.f32 %v5607, %v5895
    %v5897 = vpop.f32.mrb[0].mxu0
    %5898 = vmatprep.mubr.bf16.mxu0 %v1010
    %5899 = vmatmul.mubr.bf16.gmra.mrb[0].mxu0 %v1009
    %v5900 = vpop.f32.mrb[0].mxu0
    %v5901 = vadd.f32 %v5612, %v5900
    %v5902 = vpop.f32.mrb[0].mxu0
    %v5903 = vpop.f32.mrb[0].mxu0
    %v5904 = vadd.f32 %v5615, %v5903
    %v5905 = vpop.f32.mrb[0].mxu0
    %5906 = vmatprep.mubr.bf16.mxu0 %v1042
    %5907 = vmatmul.mubr.bf16.gmra.mrb[0].mxu0 %v1041
    %v5908 = vpop.f32.mrb[0].mxu0
    %v5909 = vadd.f32 %v5620, %v5908
    %v5910 = vpop.f32.mrb[0].mxu0
    %v5911 = vpop.f32.mrb[0].mxu0
    %v5912 = vadd.f32 %v5623, %v5911
    %v5913 = vpop.f32.mrb[0].mxu0
    %5914 = vmatprep.mubr.bf16.mxu0 %v1074
    %5915 = vmatmul.mubr.bf16.gmra.mrb[0].mxu0 %v1073
    %v5916 = vpop.f32.mrb[0].mxu0
    %v5917 = vadd.f32 %v5628, %v5916
    %v5918 = vpop.f32.mrb[0].mxu0
    %v5919 = vpop.f32.mrb[0].mxu0
    %v5920 = vadd.f32 %v5631, %v5919
    %v5921 = vpop.f32.mrb[0].mxu0
    %5922 = vmatprep.mubr.bf16.mxu0 %v1106
    %5923 = vmatmul.mubr.bf16.gmra.mrb[0].mxu0 %v1105
    %v5924 = vpop.f32.mrb[0].mxu0
    %v5925 = vadd.f32 %v5636, %v5924
    %v5926 = vpop.f32.mrb[0].mxu0
    %v5927 = vpop.f32.mrb[0].mxu0
    %v5928 = vadd.f32 %v5639, %v5927
    %v5929 = vpop.f32.mrb[0].mxu0
    %5930 = vmatprep.mubr.bf16.mxu0 %v1138
    %5931 = vmatmul.mubr.bf16.gmra.mrb[0].mxu0 %v1137
    %v5932 = vpop.f32.mrb[0].mxu0
    %v5933 = vadd.f32 %v5644, %v5932
    %v5934 = vpop.f32.mrb[0].mxu0
    %v5935 = vpop.f32.mrb[0].mxu0
    %v5936 = vadd.f32 %v5647, %v5935
    %v5937 = vpop.f32.mrb[0].mxu0
    %5938 = vmatprep.mubr.bf16.mxu0 %v1170
    %5939 = vmatmul.mubr.bf16.gmra.mrb[0].mxu0 %v1169
    %v5940 = vpop.f32.mrb[0].mxu0
    %v5941 = vadd.f32 %v5652, %v5940
    %v5942 = vpop.f32.mrb[0].mxu0
    %v5943 = vpop.f32.mrb[0].mxu0
    %v5944 = vadd.f32 %v5655, %v5943
    %v5945 = vpop.f32.mrb[0].mxu0
    %5946 = vmatprep.mubr.bf16.mxu0 %v1202
    %5947 = vmatmul.mubr.bf16.gmra.mrb[0].mxu0 %v1201
    %v5948 = vpop.f32.mrb[0].mxu0
    %v5949 = vadd.f32 %v5660, %v5948
    %v5950 = vpop.f32.mrb[0].mxu0
    %v5951 = vpop.f32.mrb[0].mxu0
    %v5952 = vadd.f32 %v5663, %v5951
    %v5953 = vpop.f32.mrb[0].mxu0
    %5954 = vmatprep.mubr.bf16.mxu0 %v1234
    %5955 = vmatmul.mubr.bf16.gmra.mrb[0].mxu0 %v1233
    %v5956 = vpop.f32.mrb[0].mxu0
    %v5957 = vadd.f32 %v5668, %v5956
    %v5958 = vpop.f32.mrb[0].mxu0
    %v5959 = vpop.f32.mrb[0].mxu0
    %v5960 = vadd.f32 %v5671, %v5959
    %v5961 = vpop.f32.mrb[0].mxu0
    %5962 = vmatprep.mubr.bf16.mxu0 %v1266
    %5963 = vmatmul.mubr.bf16.gmra.mrb[0].mxu0 %v1265
    %v5964 = vpop.f32.mrb[0].mxu0
    %v5965 = vadd.f32 %v5676, %v5964
    %v5966 = vpop.f32.mrb[0].mxu0
    %v5967 = vpop.f32.mrb[0].mxu0
    %v5968 = vadd.f32 %v5679, %v5967
    %v5969 = vpop.f32.mrb[0].mxu0
    %5970 = vmatprep.mubr.bf16.mxu0 %v1298
    %5971 = vmatmul.mubr.bf16.gmra.mrb[0].mxu0 %v1297
    %v5972 = vpop.f32.mrb[0].mxu0
    %v5973 = vadd.f32 %v5684, %v5972
    %v5974 = vpop.f32.mrb[0].mxu0
    %v5975 = vpop.f32.mrb[0].mxu0
    %v5976 = vadd.f32 %v5687, %v5975
    %v5977 = vpop.f32.mrb[0].mxu0
    %5978 = vmatprep.mubr.bf16.mxu0 %v1330
    %5979 = vmatmul.mubr.bf16.gmra.mrb[0].mxu0 %v1329
    %v5980 = vpop.f32.mrb[0].mxu0
    %v5981 = vadd.f32 %v5692, %v5980
    %v5982 = vpop.f32.mrb[0].mxu0
    %v5983 = vpop.f32.mrb[0].mxu0
    %v5984 = vadd.f32 %v5695, %v5983
    %v5985 = vpop.f32.mrb[0].mxu0
    %5986 = vmatprep.mubr.bf16.mxu0 %v1362
    %5987 = vmatmul.mubr.bf16.gmra.mrb[0].mxu0 %v1361
    %v5988 = vpop.f32.mrb[0].mxu0
    %v5989 = vadd.f32 %v5700, %v5988
    %v5990 = vpop.f32.mrb[0].mxu0
    %v5991 = vpop.f32.mrb[0].mxu0
    %v5992 = vadd.f32 %v5703, %v5991
    %v5993 = vpop.f32.mrb[0].mxu0
    %5994 = vmatprep.mubr.bf16.mxu0 %v1394
    %5995 = vmatmul.mubr.bf16.gmra.mrb[0].mxu0 %v1393
    %v5996 = vpop.f32.mrb[0].mxu0
    %v5997 = vadd.f32 %v5708, %v5996
    %v5998 = vpop.f32.mrb[0].mxu0
    %v5999 = vpop.f32.mrb[0].mxu0
    %v6000 = vadd.f32 %v5711, %v5999
    %v6001 = vpop.f32.mrb[0].mxu0
    %6002 = vmatprep.mubr.bf16.mxu0 %v1426
    %6003 = vmatmul.mubr.bf16.gmra.mrb[0].mxu0 %v1425
    %v6004 = vpop.f32.mrb[0].mxu0
    %v6005 = vadd.f32 %v5716, %v6004
    %v6006 = vpop.f32.mrb[0].mxu0
    %v6007 = vpop.f32.mrb[0].mxu0
    %v6008 = vadd.f32 %v5719, %v6007
    %v6009 = vpop.f32.mrb[0].mxu0
    %6010 = vmatprep.mubr.bf16.mxu0 %v1458
    %6011 = vmatmul.mubr.bf16.gmra.mrb[0].mxu0 %v1457
    %v6012 = vpop.f32.mrb[0].mxu0
    %v6013 = vadd.f32 %v5724, %v6012
    %v6014 = vpop.f32.mrb[0].mxu0
    %v6015 = vpop.f32.mrb[0].mxu0
    %v6016 = vadd.f32 %v5727, %v6015
    %v6017 = vpop.f32.mrb[0].mxu0
    %6018 = vmatprep.mubr.bf16.mxu0 %v1490
    %6019 = vmatmul.mubr.bf16.gmra.mrb[0].mxu0 %v1489
    %v6020 = vpop.f32.mrb[0].mxu0
    %v6021 = vadd.f32 %v5732, %v6020
    %v6022 = vpop.f32.mrb[0].mxu0
    %v6023 = vpop.f32.mrb[0].mxu0
    %v6024 = vadd.f32 %v5735, %v6023
    %v6025 = vpop.f32.mrb[0].mxu0
    %6026 = vmatprep.mubr.bf16.mxu0 %v1522
    %6027 = vmatmul.mubr.bf16.gmra.mrb[0].mxu0 %v1521
    %v6028 = vpop.f32.mrb[0].mxu0
    %v6029 = vadd.f32 %v5740, %v6028
    %v6030 = vpop.f32.mrb[0].mxu0
    %v6031 = vpop.f32.mrb[0].mxu0
    %v6032 = vadd.f32 %v5743, %v6031
    %v6033 = vpop.f32.mrb[0].mxu0
    %6034 = vmatprep.mubr.bf16.mxu0 %v1554
    %6035 = vmatmul.mubr.bf16.gmra.mrb[0].mxu0 %v1553
    %v6036 = vpop.f32.mrb[0].mxu0
    %v6037 = vadd.f32 %v5748, %v6036
    %v6038 = vpop.f32.mrb[0].mxu0
    %v6039 = vpop.f32.mrb[0].mxu0
    %v6040 = vadd.f32 %v5751, %v6039
    %v6041 = vpop.f32.mrb[0].mxu0
    %6042 = vmatprep.mubr.bf16.mxu0 %v1586
    %6043 = vmatmul.mubr.bf16.gmra.mrb[0].mxu0 %v1585
    %v6044 = vpop.f32.mrb[0].mxu0
    %v6045 = vadd.f32 %v5756, %v6044
    %v6046 = vpop.f32.mrb[0].mxu0
    %v6047 = vpop.f32.mrb[0].mxu0
    %v6048 = vadd.f32 %v5759, %v6047
    %v6049 = vpop.f32.mrb[0].mxu0
    %6050 = vmatprep.mubr.bf16.mxu0 %v1618
    %6051 = vmatmul.mubr.bf16.gmra.mrb[0].mxu0 %v1617
    %v6052 = vpop.f32.mrb[0].mxu0
    %v6053 = vadd.f32 %v5764, %v6052
    %v6054 = vpop.f32.mrb[0].mxu0
    %v6055 = vpop.f32.mrb[0].mxu0
    %v6056 = vadd.f32 %v5767, %v6055
    %v6057 = vpop.f32.mrb[0].mxu0
    %6058 = vdwg.mxu0
    %6059 = vmatprep.subr.bf16.mxu0 0
    %6060 = vmatpush1.bf16.msra.mxu0 %v3363
    %6061 = vmatprep.subr.bf16.mxu0 0
    %6062 = vmatpush1.bf16.msra.mxu0 %v3364
    %6063 = vmatprep.subr.bf16.mxu0 0
    %6064 = vmatpush1.bf16.msra.mxu0 %v3365
    %6065 = vmatprep.subr.bf16.mxu0 0
    %6066 = vmatpush1.bf16.msra.mxu0 %v3366
    %6067 = vmatprep.subr.bf16.mxu0 0
    %6068 = vmatpush1.bf16.msra.mxu0 %v3367
    %6069 = vmatprep.subr.bf16.mxu0 0
    %6070 = vmatpush1.bf16.msra.mxu0 %v3368
    %6071 = vmatprep.subr.bf16.mxu0 0
    %6072 = vmatpush1.bf16.msra.mxu0 %v3369
    %6073 = vmatprep.subr.bf16.mxu0 0
    %6074 = vmatpush1.bf16.msra.mxu0 %v3370
    %6075 = vmatprep.subr.bf16.mxu0 0
    %6076 = vmatpush1.bf16.msra.mxu0 %v3371
    %6077 = vmatprep.subr.bf16.mxu0 0
    %6078 = vmatpush1.bf16.msra.mxu0 %v3372
    %6079 = vmatprep.subr.bf16.mxu0 0
    %6080 = vmatpush1.bf16.msra.mxu0 %v3373
    %6081 = vmatprep.subr.bf16.mxu0 0
    %6082 = vmatpush1.bf16.msra.mxu0 %v3374
    %6083 = vmatprep.subr.bf16.mxu0 0
    %6084 = vmatpush1.bf16.msra.mxu0 %v3375
    %6085 = vmatprep.subr.bf16.mxu0 0
    %6086 = vmatpush1.bf16.msra.mxu0 %v3376
    %6087 = vmatprep.subr.bf16.mxu0 0
    %6088 = vmatpush1.bf16.msra.mxu0 %v3377
    %6089 = vmatprep.subr.bf16.mxu0 0
    %6090 = vmatpush1.bf16.msra.mxu0 %v3378
    %6091 = vmatprep.mubr.bf16.mxu0 %v628
    %6092 = vmatmul.mubr.bf16.gmra.mrb[0].mxu0 %v627
    %v6093 = vpop.f32.mrb[0].mxu0
    %v6094 = vadd.f32 %v5805, %v6093
    %v6095 = vpop.f32.mrb[0].mxu0
    %v6096 = vpop.f32.mrb[0].mxu0
    %v6097 = vadd.f32 %v5808, %v6096
    %v6098 = vpop.f32.mrb[0].mxu0
    %6099 = vmatprep.mubr.bf16.mxu0 %v660
    %6100 = vmatmul.mubr.bf16.gmra.mrb[0].mxu0 %v659
    %v6101 = vpop.f32.mrb[0].mxu0
    %v6102 = vadd.f32 %v5813, %v6101
    %v6103 = vpop.f32.mrb[0].mxu0
    %v6104 = vpop.f32.mrb[0].mxu0
    %v6105 = vadd.f32 %v5816, %v6104
    %v6106 = vpop.f32.mrb[0].mxu0
    %6107 = vmatprep.mubr.bf16.mxu0 %v692
    %6108 = vmatmul.mubr.bf16.gmra.mrb[0].mxu0 %v691
    %v6109 = vpop.f32.mrb[0].mxu0
    %v6110 = vadd.f32 %v5821, %v6109
    %v6111 = vpop.f32.mrb[0].mxu0
    %v6112 = vpop.f32.mrb[0].mxu0
    %v6113 = vadd.f32 %v5824, %v6112
    %v6114 = vpop.f32.mrb[0].mxu0
    %6115 = vmatprep.mubr.bf16.mxu0 %v724
    %6116 = vmatmul.mubr.bf16.gmra.mrb[0].mxu0 %v723
    %v6117 = vpop.f32.mrb[0].mxu0
    %v6118 = vadd.f32 %v5829, %v6117
    %v6119 = vpop.f32.mrb[0].mxu0
    %v6120 = vpop.f32.mrb[0].mxu0
    %v6121 = vadd.f32 %v5832, %v6120
    %v6122 = vpop.f32.mrb[0].mxu0
    %6123 = vmatprep.mubr.bf16.mxu0 %v756
    %6124 = vmatmul.mubr.bf16.gmra.mrb[0].mxu0 %v755
    %v6125 = vpop.f32.mrb[0].mxu0
    %v6126 = vadd.f32 %v5837, %v6125
    %v6127 = vpop.f32.mrb[0].mxu0
    %v6128 = vpop.f32.mrb[0].mxu0
    %v6129 = vadd.f32 %v5840, %v6128
    %v6130 = vpop.f32.mrb[0].mxu0
    %6131 = vmatprep.mubr.bf16.mxu0 %v788
    %6132 = vmatmul.mubr.bf16.gmra.mrb[0].mxu0 %v787
    %v6133 = vpop.f32.mrb[0].mxu0
    %v6134 = vadd.f32 %v5845, %v6133
    %v6135 = vpop.f32.mrb[0].mxu0
    %v6136 = vpop.f32.mrb[0].mxu0
    %v6137 = vadd.f32 %v5848, %v6136
    %v6138 = vpop.f32.mrb[0].mxu0
    %6139 = vmatprep.mubr.bf16.mxu0 %v820
    %6140 = vmatmul.mubr.bf16.gmra.mrb[0].mxu0 %v819
    %v6141 = vpop.f32.mrb[0].mxu0
    %v6142 = vadd.f32 %v5853, %v6141
    %v6143 = vpop.f32.mrb[0].mxu0
    %v6144 = vpop.f32.mrb[0].mxu0
    %v6145 = vadd.f32 %v5856, %v6144
    %v6146 = vpop.f32.mrb[0].mxu0
    %6147 = vmatprep.mubr.bf16.mxu0 %v852
    %6148 = vmatmul.mubr.bf16.gmra.mrb[0].mxu0 %v851
    %v6149 = vpop.f32.mrb[0].mxu0
    %v6150 = vadd.f32 %v5861, %v6149
    %v6151 = vpop.f32.mrb[0].mxu0
    %v6152 = vpop.f32.mrb[0].mxu0
    %v6153 = vadd.f32 %v5864, %v6152
    %v6154 = vpop.f32.mrb[0].mxu0
    %6155 = vmatprep.mubr.bf16.mxu0 %v884
    %6156 = vmatmul.mubr.bf16.gmra.mrb[0].mxu0 %v883
    %v6157 = vpop.f32.mrb[0].mxu0
    %v6158 = vadd.f32 %v5869, %v6157
    %v6159 = vpop.f32.mrb[0].mxu0
    %v6160 = vpop.f32.mrb[0].mxu0
    %v6161 = vadd.f32 %v5872, %v6160
    %v6162 = vpop.f32.mrb[0].mxu0
    %6163 = vmatprep.mubr.bf16.mxu0 %v916
    %6164 = vmatmul.mubr.bf16.gmra.mrb[0].mxu0 %v915
    %v6165 = vpop.f32.mrb[0].mxu0
    %v6166 = vadd.f32 %v5877, %v6165
    %v6167 = vpop.f32.mrb[0].mxu0
    %v6168 = vpop.f32.mrb[0].mxu0
    %v6169 = vadd.f32 %v5880, %v6168
    %v6170 = vpop.f32.mrb[0].mxu0
    %6171 = vmatprep.mubr.bf16.mxu0 %v948
    %6172 = vmatmul.mubr.bf16.gmra.mrb[0].mxu0 %v947
    %v6173 = vpop.f32.mrb[0].mxu0
    %v6174 = vadd.f32 %v5885, %v6173
    %v6175 = vpop.f32.mrb[0].mxu0
    %v6176 = vpop.f32.mrb[0].mxu0
    %v6177 = vadd.f32 %v5888, %v6176
    %v6178 = vpop.f32.mrb[0].mxu0
    %6179 = vmatprep.mubr.bf16.mxu0 %v980
    %6180 = vmatmul.mubr.bf16.gmra.mrb[0].mxu0 %v979
    %v6181 = vpop.f32.mrb[0].mxu0
    %v6182 = vadd.f32 %v5893, %v6181
    %v6183 = vpop.f32.mrb[0].mxu0
    %v6184 = vpop.f32.mrb[0].mxu0
    %v6185 = vadd.f32 %v5896, %v6184
    %v6186 = vpop.f32.mrb[0].mxu0
    %6187 = vmatprep.mubr.bf16.mxu0 %v1012
    %6188 = vmatmul.mubr.bf16.gmra.mrb[0].mxu0 %v1011
    %v6189 = vpop.f32.mrb[0].mxu0
    %v6190 = vadd.f32 %v5901, %v6189
    %v6191 = vpop.f32.mrb[0].mxu0
    %v6192 = vpop.f32.mrb[0].mxu0
    %v6193 = vadd.f32 %v5904, %v6192
    %v6194 = vpop.f32.mrb[0].mxu0
    %6195 = vmatprep.mubr.bf16.mxu0 %v1044
    %6196 = vmatmul.mubr.bf16.gmra.mrb[0].mxu0 %v1043
    %v6197 = vpop.f32.mrb[0].mxu0
    %v6198 = vadd.f32 %v5909, %v6197
    %v6199 = vpop.f32.mrb[0].mxu0
    %v6200 = vpop.f32.mrb[0].mxu0
    %v6201 = vadd.f32 %v5912, %v6200
    %v6202 = vpop.f32.mrb[0].mxu0
    %6203 = vmatprep.mubr.bf16.mxu0 %v1076
    %6204 = vmatmul.mubr.bf16.gmra.mrb[0].mxu0 %v1075
    %v6205 = vpop.f32.mrb[0].mxu0
    %v6206 = vadd.f32 %v5917, %v6205
    %v6207 = vpop.f32.mrb[0].mxu0
    %v6208 = vpop.f32.mrb[0].mxu0
    %v6209 = vadd.f32 %v5920, %v6208
    %v6210 = vpop.f32.mrb[0].mxu0
    %6211 = vmatprep.mubr.bf16.mxu0 %v1108
    %6212 = vmatmul.mubr.bf16.gmra.mrb[0].mxu0 %v1107
    %v6213 = vpop.f32.mrb[0].mxu0
    %v6214 = vadd.f32 %v5925, %v6213
    %v6215 = vpop.f32.mrb[0].mxu0
    %v6216 = vpop.f32.mrb[0].mxu0
    %v6217 = vadd.f32 %v5928, %v6216
    %v6218 = vpop.f32.mrb[0].mxu0
    %6219 = vmatprep.mubr.bf16.mxu0 %v1140
    %6220 = vmatmul.mubr.bf16.gmra.mrb[0].mxu0 %v1139
    %v6221 = vpop.f32.mrb[0].mxu0
    %v6222 = vadd.f32 %v5933, %v6221
    %v6223 = vpop.f32.mrb[0].mxu0
    %v6224 = vpop.f32.mrb[0].mxu0
    %v6225 = vadd.f32 %v5936, %v6224
    %v6226 = vpop.f32.mrb[0].mxu0
    %6227 = vmatprep.mubr.bf16.mxu0 %v1172
    %6228 = vmatmul.mubr.bf16.gmra.mrb[0].mxu0 %v1171
    %v6229 = vpop.f32.mrb[0].mxu0
    %v6230 = vadd.f32 %v5941, %v6229
    %v6231 = vpop.f32.mrb[0].mxu0
    %v6232 = vpop.f32.mrb[0].mxu0
    %v6233 = vadd.f32 %v5944, %v6232
    %v6234 = vpop.f32.mrb[0].mxu0
    %6235 = vmatprep.mubr.bf16.mxu0 %v1204
    %6236 = vmatmul.mubr.bf16.gmra.mrb[0].mxu0 %v1203
    %v6237 = vpop.f32.mrb[0].mxu0
    %v6238 = vadd.f32 %v5949, %v6237
    %v6239 = vpop.f32.mrb[0].mxu0
    %v6240 = vpop.f32.mrb[0].mxu0
    %v6241 = vadd.f32 %v5952, %v6240
    %v6242 = vpop.f32.mrb[0].mxu0
    %6243 = vmatprep.mubr.bf16.mxu0 %v1236
    %6244 = vmatmul.mubr.bf16.gmra.mrb[0].mxu0 %v1235
    %v6245 = vpop.f32.mrb[0].mxu0
    %v6246 = vadd.f32 %v5957, %v6245
    %v6247 = vpop.f32.mrb[0].mxu0
    %v6248 = vpop.f32.mrb[0].mxu0
    %v6249 = vadd.f32 %v5960, %v6248
    %v6250 = vpop.f32.mrb[0].mxu0
    %6251 = vmatprep.mubr.bf16.mxu0 %v1268
    %6252 = vmatmul.mubr.bf16.gmra.mrb[0].mxu0 %v1267
    %v6253 = vpop.f32.mrb[0].mxu0
    %v6254 = vadd.f32 %v5965, %v6253
    %v6255 = vpop.f32.mrb[0].mxu0
    %v6256 = vpop.f32.mrb[0].mxu0
    %v6257 = vadd.f32 %v5968, %v6256
    %v6258 = vpop.f32.mrb[0].mxu0
    %6259 = vmatprep.mubr.bf16.mxu0 %v1300
    %6260 = vmatmul.mubr.bf16.gmra.mrb[0].mxu0 %v1299
    %v6261 = vpop.f32.mrb[0].mxu0
    %v6262 = vadd.f32 %v5973, %v6261
    %v6263 = vpop.f32.mrb[0].mxu0
    %v6264 = vpop.f32.mrb[0].mxu0
    %v6265 = vadd.f32 %v5976, %v6264
    %v6266 = vpop.f32.mrb[0].mxu0
    %6267 = vmatprep.mubr.bf16.mxu0 %v1332
    %6268 = vmatmul.mubr.bf16.gmra.mrb[0].mxu0 %v1331
    %v6269 = vpop.f32.mrb[0].mxu0
    %v6270 = vadd.f32 %v5981, %v6269
    %v6271 = vpop.f32.mrb[0].mxu0
    %v6272 = vpop.f32.mrb[0].mxu0
    %v6273 = vadd.f32 %v5984, %v6272
    %v6274 = vpop.f32.mrb[0].mxu0
    %6275 = vmatprep.mubr.bf16.mxu0 %v1364
    %6276 = vmatmul.mubr.bf16.gmra.mrb[0].mxu0 %v1363
    %v6277 = vpop.f32.mrb[0].mxu0
    %v6278 = vadd.f32 %v5989, %v6277
    %v6279 = vpop.f32.mrb[0].mxu0
    %v6280 = vpop.f32.mrb[0].mxu0
    %v6281 = vadd.f32 %v5992, %v6280
    %v6282 = vpop.f32.mrb[0].mxu0
    %6283 = vmatprep.mubr.bf16.mxu0 %v1396
    %6284 = vmatmul.mubr.bf16.gmra.mrb[0].mxu0 %v1395
    %v6285 = vpop.f32.mrb[0].mxu0
    %v6286 = vadd.f32 %v5997, %v6285
    %v6287 = vpop.f32.mrb[0].mxu0
    %v6288 = vpop.f32.mrb[0].mxu0
    %v6289 = vadd.f32 %v6000, %v6288
    %v6290 = vpop.f32.mrb[0].mxu0
    %6291 = vmatprep.mubr.bf16.mxu0 %v1428
    %6292 = vmatmul.mubr.bf16.gmra.mrb[0].mxu0 %v1427
    %v6293 = vpop.f32.mrb[0].mxu0
    %v6294 = vadd.f32 %v6005, %v6293
    %v6295 = vpop.f32.mrb[0].mxu0
    %v6296 = vpop.f32.mrb[0].mxu0
    %v6297 = vadd.f32 %v6008, %v6296
    %v6298 = vpop.f32.mrb[0].mxu0
    %6299 = vmatprep.mubr.bf16.mxu0 %v1460
    %6300 = vmatmul.mubr.bf16.gmra.mrb[0].mxu0 %v1459
    %v6301 = vpop.f32.mrb[0].mxu0
    %v6302 = vadd.f32 %v6013, %v6301
    %v6303 = vpop.f32.mrb[0].mxu0
    %v6304 = vpop.f32.mrb[0].mxu0
    %v6305 = vadd.f32 %v6016, %v6304
    %v6306 = vpop.f32.mrb[0].mxu0
    %6307 = vmatprep.mubr.bf16.mxu0 %v1492
    %6308 = vmatmul.mubr.bf16.gmra.mrb[0].mxu0 %v1491
    %v6309 = vpop.f32.mrb[0].mxu0
    %v6310 = vadd.f32 %v6021, %v6309
    %v6311 = vpop.f32.mrb[0].mxu0
    %v6312 = vpop.f32.mrb[0].mxu0
    %v6313 = vadd.f32 %v6024, %v6312
    %v6314 = vpop.f32.mrb[0].mxu0
    %6315 = vmatprep.mubr.bf16.mxu0 %v1524
    %6316 = vmatmul.mubr.bf16.gmra.mrb[0].mxu0 %v1523
    %v6317 = vpop.f32.mrb[0].mxu0
    %v6318 = vadd.f32 %v6029, %v6317
    %v6319 = vpop.f32.mrb[0].mxu0
    %v6320 = vpop.f32.mrb[0].mxu0
    %v6321 = vadd.f32 %v6032, %v6320
    %v6322 = vpop.f32.mrb[0].mxu0
    %6323 = vmatprep.mubr.bf16.mxu0 %v1556
    %6324 = vmatmul.mubr.bf16.gmra.mrb[0].mxu0 %v1555
    %v6325 = vpop.f32.mrb[0].mxu0
    %v6326 = vadd.f32 %v6037, %v6325
    %v6327 = vpop.f32.mrb[0].mxu0
    %v6328 = vpop.f32.mrb[0].mxu0
    %v6329 = vadd.f32 %v6040, %v6328
    %v6330 = vpop.f32.mrb[0].mxu0
    %6331 = vmatprep.mubr.bf16.mxu0 %v1588
    %6332 = vmatmul.mubr.bf16.gmra.mrb[0].mxu0 %v1587
    %v6333 = vpop.f32.mrb[0].mxu0
    %v6334 = vadd.f32 %v6045, %v6333
    %v6335 = vpop.f32.mrb[0].mxu0
    %v6336 = vpop.f32.mrb[0].mxu0
    %v6337 = vadd.f32 %v6048, %v6336
    %v6338 = vpop.f32.mrb[0].mxu0
    %6339 = vmatprep.mubr.bf16.mxu0 %v1620
    %6340 = vmatmul.mubr.bf16.gmra.mrb[0].mxu0 %v1619
    %v6341 = vpop.f32.mrb[0].mxu0
    %v6342 = vadd.f32 %v6053, %v6341
    %v6343 = vpop.f32.mrb[0].mxu0
    %v6344 = vpop.f32.mrb[0].mxu0
    %v6345 = vadd.f32 %v6056, %v6344
    %v6346 = vpop.f32.mrb[0].mxu0
    %6347 = vdwg.mxu0
    %6348 = vmatprep.subr.bf16.mxu0 0
    %6349 = vmatpush1.bf16.msra.mxu0 %v3379
    %6350 = vmatprep.subr.bf16.mxu0 0
    %6351 = vmatpush1.bf16.msra.mxu0 %v3380
    %6352 = vmatprep.subr.bf16.mxu0 0
    %6353 = vmatpush1.bf16.msra.mxu0 %v3381
    %6354 = vmatprep.subr.bf16.mxu0 0
    %6355 = vmatpush1.bf16.msra.mxu0 %v3382
    %6356 = vmatprep.subr.bf16.mxu0 0
    %6357 = vmatpush1.bf16.msra.mxu0 %v3383
    %6358 = vmatprep.subr.bf16.mxu0 0
    %6359 = vmatpush1.bf16.msra.mxu0 %v3384
    %6360 = vmatprep.subr.bf16.mxu0 0
    %6361 = vmatpush1.bf16.msra.mxu0 %v3385
    %6362 = vmatprep.subr.bf16.mxu0 0
    %6363 = vmatpush1.bf16.msra.mxu0 %v3386
    %6364 = vmatprep.subr.bf16.mxu0 0
    %6365 = vmatpush1.bf16.msra.mxu0 %v3387
    %6366 = vmatprep.subr.bf16.mxu0 0
    %6367 = vmatpush1.bf16.msra.mxu0 %v3388
    %6368 = vmatprep.subr.bf16.mxu0 0
    %6369 = vmatpush1.bf16.msra.mxu0 %v3389
    %6370 = vmatprep.subr.bf16.mxu0 0
    %6371 = vmatpush1.bf16.msra.mxu0 %v3390
    %6372 = vmatprep.subr.bf16.mxu0 0
    %6373 = vmatpush1.bf16.msra.mxu0 %v3391
    %6374 = vmatprep.subr.bf16.mxu0 0
    %6375 = vmatpush1.bf16.msra.mxu0 %v3392
    %6376 = vmatprep.subr.bf16.mxu0 0
    %6377 = vmatpush1.bf16.msra.mxu0 %v3393
    %6378 = vmatprep.subr.bf16.mxu0 0
    %6379 = vmatpush1.bf16.msra.mxu0 %v3394
    %6380 = vmatprep.mubr.bf16.mxu0 %v630
    %6381 = vmatmul.mubr.bf16.gmra.mrb[0].mxu0 %v629
    %v6382 = vpop.f32.mrb[0].mxu0
    %v6383 = vadd.f32 %v6094, %v6382
    %v6384 = vpop.f32.mrb[0].mxu0
    %v6385 = vpop.f32.mrb[0].mxu0
    %v6386 = vadd.f32 %v6097, %v6385
    %v6387 = vpop.f32.mrb[0].mxu0
    %6388 = vmatprep.mubr.bf16.mxu0 %v662
    %6389 = vmatmul.mubr.bf16.gmra.mrb[0].mxu0 %v661
    %v6390 = vpop.f32.mrb[0].mxu0
    %v6391 = vadd.f32 %v6102, %v6390
    %v6392 = vpop.f32.mrb[0].mxu0
    %v6393 = vpop.f32.mrb[0].mxu0
    %v6394 = vadd.f32 %v6105, %v6393
    %v6395 = vpop.f32.mrb[0].mxu0
    %6396 = vmatprep.mubr.bf16.mxu0 %v694
    %6397 = vmatmul.mubr.bf16.gmra.mrb[0].mxu0 %v693
    %v6398 = vpop.f32.mrb[0].mxu0
    %v6399 = vadd.f32 %v6110, %v6398
    %v6400 = vpop.f32.mrb[0].mxu0
    %v6401 = vpop.f32.mrb[0].mxu0
    %v6402 = vadd.f32 %v6113, %v6401
    %v6403 = vpop.f32.mrb[0].mxu0
    %6404 = vmatprep.mubr.bf16.mxu0 %v726
    %6405 = vmatmul.mubr.bf16.gmra.mrb[0].mxu0 %v725
    %v6406 = vpop.f32.mrb[0].mxu0
    %v6407 = vadd.f32 %v6118, %v6406
    %v6408 = vpop.f32.mrb[0].mxu0
    %v6409 = vpop.f32.mrb[0].mxu0
    %v6410 = vadd.f32 %v6121, %v6409
    %v6411 = vpop.f32.mrb[0].mxu0
    %6412 = vmatprep.mubr.bf16.mxu0 %v758
    %6413 = vmatmul.mubr.bf16.gmra.mrb[0].mxu0 %v757
    %v6414 = vpop.f32.mrb[0].mxu0
    %v6415 = vadd.f32 %v6126, %v6414
    %v6416 = vpop.f32.mrb[0].mxu0
    %v6417 = vpop.f32.mrb[0].mxu0
    %v6418 = vadd.f32 %v6129, %v6417
    %v6419 = vpop.f32.mrb[0].mxu0
    %6420 = vmatprep.mubr.bf16.mxu0 %v790
    %6421 = vmatmul.mubr.bf16.gmra.mrb[0].mxu0 %v789
    %v6422 = vpop.f32.mrb[0].mxu0
    %v6423 = vadd.f32 %v6134, %v6422
    %v6424 = vpop.f32.mrb[0].mxu0
    %v6425 = vpop.f32.mrb[0].mxu0
    %v6426 = vadd.f32 %v6137, %v6425
    %v6427 = vpop.f32.mrb[0].mxu0
    %6428 = vmatprep.mubr.bf16.mxu0 %v822
    %6429 = vmatmul.mubr.bf16.gmra.mrb[0].mxu0 %v821
    %v6430 = vpop.f32.mrb[0].mxu0
    %v6431 = vadd.f32 %v6142, %v6430
    %v6432 = vpop.f32.mrb[0].mxu0
    %v6433 = vpop.f32.mrb[0].mxu0
    %v6434 = vadd.f32 %v6145, %v6433
    %v6435 = vpop.f32.mrb[0].mxu0
    %6436 = vmatprep.mubr.bf16.mxu0 %v854
    %6437 = vmatmul.mubr.bf16.gmra.mrb[0].mxu0 %v853
    %v6438 = vpop.f32.mrb[0].mxu0
    %v6439 = vadd.f32 %v6150, %v6438
    %v6440 = vpop.f32.mrb[0].mxu0
    %v6441 = vpop.f32.mrb[0].mxu0
    %v6442 = vadd.f32 %v6153, %v6441
    %v6443 = vpop.f32.mrb[0].mxu0
    %6444 = vmatprep.mubr.bf16.mxu0 %v886
    %6445 = vmatmul.mubr.bf16.gmra.mrb[0].mxu0 %v885
    %v6446 = vpop.f32.mrb[0].mxu0
    %v6447 = vadd.f32 %v6158, %v6446
    %v6448 = vpop.f32.mrb[0].mxu0
    %v6449 = vpop.f32.mrb[0].mxu0
    %v6450 = vadd.f32 %v6161, %v6449
    %v6451 = vpop.f32.mrb[0].mxu0
    %6452 = vmatprep.mubr.bf16.mxu0 %v918
    %6453 = vmatmul.mubr.bf16.gmra.mrb[0].mxu0 %v917
    %v6454 = vpop.f32.mrb[0].mxu0
    %v6455 = vadd.f32 %v6166, %v6454
    %v6456 = vpop.f32.mrb[0].mxu0
    %v6457 = vpop.f32.mrb[0].mxu0
    %v6458 = vadd.f32 %v6169, %v6457
    %v6459 = vpop.f32.mrb[0].mxu0
    %6460 = vmatprep.mubr.bf16.mxu0 %v950
    %6461 = vmatmul.mubr.bf16.gmra.mrb[0].mxu0 %v949
    %v6462 = vpop.f32.mrb[0].mxu0
    %v6463 = vadd.f32 %v6174, %v6462
    %v6464 = vpop.f32.mrb[0].mxu0
    %v6465 = vpop.f32.mrb[0].mxu0
    %v6466 = vadd.f32 %v6177, %v6465
    %v6467 = vpop.f32.mrb[0].mxu0
    %6468 = vmatprep.mubr.bf16.mxu0 %v982
    %6469 = vmatmul.mubr.bf16.gmra.mrb[0].mxu0 %v981
    %v6470 = vpop.f32.mrb[0].mxu0
    %v6471 = vadd.f32 %v6182, %v6470
    %v6472 = vpop.f32.mrb[0].mxu0
    %v6473 = vpop.f32.mrb[0].mxu0
    %v6474 = vadd.f32 %v6185, %v6473
    %v6475 = vpop.f32.mrb[0].mxu0
    %6476 = vmatprep.mubr.bf16.mxu0 %v1014
    %6477 = vmatmul.mubr.bf16.gmra.mrb[0].mxu0 %v1013
    %v6478 = vpop.f32.mrb[0].mxu0
    %v6479 = vadd.f32 %v6190, %v6478
    %v6480 = vpop.f32.mrb[0].mxu0
    %v6481 = vpop.f32.mrb[0].mxu0
    %v6482 = vadd.f32 %v6193, %v6481
    %v6483 = vpop.f32.mrb[0].mxu0
    %6484 = vmatprep.mubr.bf16.mxu0 %v1046
    %6485 = vmatmul.mubr.bf16.gmra.mrb[0].mxu0 %v1045
    %v6486 = vpop.f32.mrb[0].mxu0
    %v6487 = vadd.f32 %v6198, %v6486
    %v6488 = vpop.f32.mrb[0].mxu0
    %v6489 = vpop.f32.mrb[0].mxu0
    %v6490 = vadd.f32 %v6201, %v6489
    %v6491 = vpop.f32.mrb[0].mxu0
    %6492 = vmatprep.mubr.bf16.mxu0 %v1078
    %6493 = vmatmul.mubr.bf16.gmra.mrb[0].mxu0 %v1077
    %v6494 = vpop.f32.mrb[0].mxu0
    %v6495 = vadd.f32 %v6206, %v6494
    %v6496 = vpop.f32.mrb[0].mxu0
    %v6497 = vpop.f32.mrb[0].mxu0
    %v6498 = vadd.f32 %v6209, %v6497
    %v6499 = vpop.f32.mrb[0].mxu0
    %6500 = vmatprep.mubr.bf16.mxu0 %v1110
    %6501 = vmatmul.mubr.bf16.gmra.mrb[0].mxu0 %v1109
    %v6502 = vpop.f32.mrb[0].mxu0
    %v6503 = vadd.f32 %v6214, %v6502
    %v6504 = vpop.f32.mrb[0].mxu0
    %v6505 = vpop.f32.mrb[0].mxu0
    %v6506 = vadd.f32 %v6217, %v6505
    %v6507 = vpop.f32.mrb[0].mxu0
    %6508 = vmatprep.mubr.bf16.mxu0 %v1142
    %6509 = vmatmul.mubr.bf16.gmra.mrb[0].mxu0 %v1141
    %v6510 = vpop.f32.mrb[0].mxu0
    %v6511 = vadd.f32 %v6222, %v6510
    %v6512 = vpop.f32.mrb[0].mxu0
    %v6513 = vpop.f32.mrb[0].mxu0
    %v6514 = vadd.f32 %v6225, %v6513
    %v6515 = vpop.f32.mrb[0].mxu0
    %6516 = vmatprep.mubr.bf16.mxu0 %v1174
    %6517 = vmatmul.mubr.bf16.gmra.mrb[0].mxu0 %v1173
    %v6518 = vpop.f32.mrb[0].mxu0
    %v6519 = vadd.f32 %v6230, %v6518
    %v6520 = vpop.f32.mrb[0].mxu0
    %v6521 = vpop.f32.mrb[0].mxu0
    %v6522 = vadd.f32 %v6233, %v6521
    %v6523 = vpop.f32.mrb[0].mxu0
    %6524 = vmatprep.mubr.bf16.mxu0 %v1206
    %6525 = vmatmul.mubr.bf16.gmra.mrb[0].mxu0 %v1205
    %v6526 = vpop.f32.mrb[0].mxu0
    %v6527 = vadd.f32 %v6238, %v6526
    %v6528 = vpop.f32.mrb[0].mxu0
    %v6529 = vpop.f32.mrb[0].mxu0
    %v6530 = vadd.f32 %v6241, %v6529
    %v6531 = vpop.f32.mrb[0].mxu0
    %6532 = vmatprep.mubr.bf16.mxu0 %v1238
    %6533 = vmatmul.mubr.bf16.gmra.mrb[0].mxu0 %v1237
    %v6534 = vpop.f32.mrb[0].mxu0
    %v6535 = vadd.f32 %v6246, %v6534
    %v6536 = vpop.f32.mrb[0].mxu0
    %v6537 = vpop.f32.mrb[0].mxu0
    %v6538 = vadd.f32 %v6249, %v6537
    %v6539 = vpop.f32.mrb[0].mxu0
    %6540 = vmatprep.mubr.bf16.mxu0 %v1270
    %6541 = vmatmul.mubr.bf16.gmra.mrb[0].mxu0 %v1269
    %v6542 = vpop.f32.mrb[0].mxu0
    %v6543 = vadd.f32 %v6254, %v6542
    %v6544 = vpop.f32.mrb[0].mxu0
    %v6545 = vpop.f32.mrb[0].mxu0
    %v6546 = vadd.f32 %v6257, %v6545
    %v6547 = vpop.f32.mrb[0].mxu0
    %6548 = vmatprep.mubr.bf16.mxu0 %v1302
    %6549 = vmatmul.mubr.bf16.gmra.mrb[0].mxu0 %v1301
    %v6550 = vpop.f32.mrb[0].mxu0
    %v6551 = vadd.f32 %v6262, %v6550
    %v6552 = vpop.f32.mrb[0].mxu0
    %v6553 = vpop.f32.mrb[0].mxu0
    %v6554 = vadd.f32 %v6265, %v6553
    %v6555 = vpop.f32.mrb[0].mxu0
    %6556 = vmatprep.mubr.bf16.mxu0 %v1334
    %6557 = vmatmul.mubr.bf16.gmra.mrb[0].mxu0 %v1333
    %v6558 = vpop.f32.mrb[0].mxu0
    %v6559 = vadd.f32 %v6270, %v6558
    %v6560 = vpop.f32.mrb[0].mxu0
    %v6561 = vpop.f32.mrb[0].mxu0
    %v6562 = vadd.f32 %v6273, %v6561
    %v6563 = vpop.f32.mrb[0].mxu0
    %6564 = vmatprep.mubr.bf16.mxu0 %v1366
    %6565 = vmatmul.mubr.bf16.gmra.mrb[0].mxu0 %v1365
    %v6566 = vpop.f32.mrb[0].mxu0
    %v6567 = vadd.f32 %v6278, %v6566
    %v6568 = vpop.f32.mrb[0].mxu0
    %v6569 = vpop.f32.mrb[0].mxu0
    %v6570 = vadd.f32 %v6281, %v6569
    %v6571 = vpop.f32.mrb[0].mxu0
    %6572 = vmatprep.mubr.bf16.mxu0 %v1398
    %6573 = vmatmul.mubr.bf16.gmra.mrb[0].mxu0 %v1397
    %v6574 = vpop.f32.mrb[0].mxu0
    %v6575 = vadd.f32 %v6286, %v6574
    %v6576 = vpop.f32.mrb[0].mxu0
    %v6577 = vpop.f32.mrb[0].mxu0
    %v6578 = vadd.f32 %v6289, %v6577
    %v6579 = vpop.f32.mrb[0].mxu0
    %6580 = vmatprep.mubr.bf16.mxu0 %v1430
    %6581 = vmatmul.mubr.bf16.gmra.mrb[0].mxu0 %v1429
    %v6582 = vpop.f32.mrb[0].mxu0
    %v6583 = vadd.f32 %v6294, %v6582
    %v6584 = vpop.f32.mrb[0].mxu0
    %v6585 = vpop.f32.mrb[0].mxu0
    %v6586 = vadd.f32 %v6297, %v6585
    %v6587 = vpop.f32.mrb[0].mxu0
    %6588 = vmatprep.mubr.bf16.mxu0 %v1462
    %6589 = vmatmul.mubr.bf16.gmra.mrb[0].mxu0 %v1461
    %v6590 = vpop.f32.mrb[0].mxu0
    %v6591 = vadd.f32 %v6302, %v6590
    %v6592 = vpop.f32.mrb[0].mxu0
    %v6593 = vpop.f32.mrb[0].mxu0
    %v6594 = vadd.f32 %v6305, %v6593
    %v6595 = vpop.f32.mrb[0].mxu0
    %6596 = vmatprep.mubr.bf16.mxu0 %v1494
    %6597 = vmatmul.mubr.bf16.gmra.mrb[0].mxu0 %v1493
    %v6598 = vpop.f32.mrb[0].mxu0
    %v6599 = vadd.f32 %v6310, %v6598
    %v6600 = vpop.f32.mrb[0].mxu0
    %v6601 = vpop.f32.mrb[0].mxu0
    %v6602 = vadd.f32 %v6313, %v6601
    %v6603 = vpop.f32.mrb[0].mxu0
    %6604 = vmatprep.mubr.bf16.mxu0 %v1526
    %6605 = vmatmul.mubr.bf16.gmra.mrb[0].mxu0 %v1525
    %v6606 = vpop.f32.mrb[0].mxu0
    %v6607 = vadd.f32 %v6318, %v6606
    %v6608 = vpop.f32.mrb[0].mxu0
    %v6609 = vpop.f32.mrb[0].mxu0
    %v6610 = vadd.f32 %v6321, %v6609
    %v6611 = vpop.f32.mrb[0].mxu0
    %6612 = vmatprep.mubr.bf16.mxu0 %v1558
    %6613 = vmatmul.mubr.bf16.gmra.mrb[0].mxu0 %v1557
    %v6614 = vpop.f32.mrb[0].mxu0
    %v6615 = vadd.f32 %v6326, %v6614
    %v6616 = vpop.f32.mrb[0].mxu0
    %v6617 = vpop.f32.mrb[0].mxu0
    %v6618 = vadd.f32 %v6329, %v6617
    %v6619 = vpop.f32.mrb[0].mxu0
    %6620 = vmatprep.mubr.bf16.mxu0 %v1590
    %6621 = vmatmul.mubr.bf16.gmra.mrb[0].mxu0 %v1589
    %v6622 = vpop.f32.mrb[0].mxu0
    %v6623 = vadd.f32 %v6334, %v6622
    %v6624 = vpop.f32.mrb[0].mxu0
    %v6625 = vpop.f32.mrb[0].mxu0
    %v6626 = vadd.f32 %v6337, %v6625
    %v6627 = vpop.f32.mrb[0].mxu0
    %6628 = vmatprep.mubr.bf16.mxu0 %v1622
    %6629 = vmatmul.mubr.bf16.gmra.mrb[0].mxu0 %v1621
    %v6630 = vpop.f32.mrb[0].mxu0
    %v6631 = vadd.f32 %v6342, %v6630
    %v6632 = vpop.f32.mrb[0].mxu0
    %v6633 = vpop.f32.mrb[0].mxu0
    %v6634 = vadd.f32 %v6345, %v6633
    %v6635 = vpop.f32.mrb[0].mxu0
    %6636 = vdwg.mxu0
    %6637 = vmatprep.subr.bf16.mxu0 0
    %6638 = vmatpush1.bf16.msra.mxu0 %v3395
    %6639 = vmatprep.subr.bf16.mxu0 0
    %6640 = vmatpush1.bf16.msra.mxu0 %v3396
    %6641 = vmatprep.subr.bf16.mxu0 0
    %6642 = vmatpush1.bf16.msra.mxu0 %v3397
    %6643 = vmatprep.subr.bf16.mxu0 0
    %6644 = vmatpush1.bf16.msra.mxu0 %v3398
    %6645 = vmatprep.subr.bf16.mxu0 0
    %6646 = vmatpush1.bf16.msra.mxu0 %v3399
    %6647 = vmatprep.subr.bf16.mxu0 0
    %6648 = vmatpush1.bf16.msra.mxu0 %v3400
    %6649 = vmatprep.subr.bf16.mxu0 0
    %6650 = vmatpush1.bf16.msra.mxu0 %v3401
    %6651 = vmatprep.subr.bf16.mxu0 0
    %6652 = vmatpush1.bf16.msra.mxu0 %v3402
    %6653 = vmatprep.subr.bf16.mxu0 0
    %6654 = vmatpush1.bf16.msra.mxu0 %v3403
    %6655 = vmatprep.subr.bf16.mxu0 0
    %6656 = vmatpush1.bf16.msra.mxu0 %v3404
    %6657 = vmatprep.subr.bf16.mxu0 0
    %6658 = vmatpush1.bf16.msra.mxu0 %v3405
    %6659 = vmatprep.subr.bf16.mxu0 0
    %6660 = vmatpush1.bf16.msra.mxu0 %v3406
    %6661 = vmatprep.subr.bf16.mxu0 0
    %6662 = vmatpush1.bf16.msra.mxu0 %v3407
    %6663 = vmatprep.subr.bf16.mxu0 0
    %6664 = vmatpush1.bf16.msra.mxu0 %v3408
    %6665 = vmatprep.subr.bf16.mxu0 0
    %6666 = vmatpush1.bf16.msra.mxu0 %v3409
    %6667 = vmatprep.subr.bf16.mxu0 0
    %6668 = vmatpush1.bf16.msra.mxu0 %v3410
    %6669 = vmatprep.mubr.bf16.mxu0 %v632
    %6670 = vmatmul.mubr.bf16.gmra.mrb[0].mxu0 %v631
    %v6671 = vpop.f32.mrb[0].mxu0
    %v6672 = vadd.f32 %v6383, %v6671
    %v6673 = vpop.f32.mrb[0].mxu0
    %v6674 = vpop.f32.mrb[0].mxu0
    %v6675 = vadd.f32 %v6386, %v6674
    %v6676 = vpop.f32.mrb[0].mxu0
    %6677 = vmatprep.mubr.bf16.mxu0 %v664
    %6678 = vmatmul.mubr.bf16.gmra.mrb[0].mxu0 %v663
    %v6679 = vpop.f32.mrb[0].mxu0
    %v6680 = vadd.f32 %v6391, %v6679
    %v6681 = vpop.f32.mrb[0].mxu0
    %v6682 = vpop.f32.mrb[0].mxu0
    %v6683 = vadd.f32 %v6394, %v6682
    %v6684 = vpop.f32.mrb[0].mxu0
    %6685 = vmatprep.mubr.bf16.mxu0 %v696
    %6686 = vmatmul.mubr.bf16.gmra.mrb[0].mxu0 %v695
    %v6687 = vpop.f32.mrb[0].mxu0
    %v6688 = vadd.f32 %v6399, %v6687
    %v6689 = vpop.f32.mrb[0].mxu0
    %v6690 = vpop.f32.mrb[0].mxu0
    %v6691 = vadd.f32 %v6402, %v6690
    %v6692 = vpop.f32.mrb[0].mxu0
    %6693 = vmatprep.mubr.bf16.mxu0 %v728
    %6694 = vmatmul.mubr.bf16.gmra.mrb[0].mxu0 %v727
    %v6695 = vpop.f32.mrb[0].mxu0
    %v6696 = vadd.f32 %v6407, %v6695
    %v6697 = vpop.f32.mrb[0].mxu0
    %v6698 = vpop.f32.mrb[0].mxu0
    %v6699 = vadd.f32 %v6410, %v6698
    %v6700 = vpop.f32.mrb[0].mxu0
    %6701 = vmatprep.mubr.bf16.mxu0 %v760
    %6702 = vmatmul.mubr.bf16.gmra.mrb[0].mxu0 %v759
    %v6703 = vpop.f32.mrb[0].mxu0
    %v6704 = vadd.f32 %v6415, %v6703
    %v6705 = vpop.f32.mrb[0].mxu0
    %v6706 = vpop.f32.mrb[0].mxu0
    %v6707 = vadd.f32 %v6418, %v6706
    %v6708 = vpop.f32.mrb[0].mxu0
    %6709 = vmatprep.mubr.bf16.mxu0 %v792
    %6710 = vmatmul.mubr.bf16.gmra.mrb[0].mxu0 %v791
    %v6711 = vpop.f32.mrb[0].mxu0
    %v6712 = vadd.f32 %v6423, %v6711
    %v6713 = vpop.f32.mrb[0].mxu0
    %v6714 = vpop.f32.mrb[0].mxu0
    %v6715 = vadd.f32 %v6426, %v6714
    %v6716 = vpop.f32.mrb[0].mxu0
    %6717 = vmatprep.mubr.bf16.mxu0 %v824
    %6718 = vmatmul.mubr.bf16.gmra.mrb[0].mxu0 %v823
    %v6719 = vpop.f32.mrb[0].mxu0
    %v6720 = vadd.f32 %v6431, %v6719
    %v6721 = vpop.f32.mrb[0].mxu0
    %v6722 = vpop.f32.mrb[0].mxu0
    %v6723 = vadd.f32 %v6434, %v6722
    %v6724 = vpop.f32.mrb[0].mxu0
    %6725 = vmatprep.mubr.bf16.mxu0 %v856
    %6726 = vmatmul.mubr.bf16.gmra.mrb[0].mxu0 %v855
    %v6727 = vpop.f32.mrb[0].mxu0
    %v6728 = vadd.f32 %v6439, %v6727
    %v6729 = vpop.f32.mrb[0].mxu0
    %v6730 = vpop.f32.mrb[0].mxu0
    %v6731 = vadd.f32 %v6442, %v6730
    %v6732 = vpop.f32.mrb[0].mxu0
    %6733 = vmatprep.mubr.bf16.mxu0 %v888
    %6734 = vmatmul.mubr.bf16.gmra.mrb[0].mxu0 %v887
    %v6735 = vpop.f32.mrb[0].mxu0
    %v6736 = vadd.f32 %v6447, %v6735
    %v6737 = vpop.f32.mrb[0].mxu0
    %v6738 = vpop.f32.mrb[0].mxu0
    %v6739 = vadd.f32 %v6450, %v6738
    %v6740 = vpop.f32.mrb[0].mxu0
    %6741 = vmatprep.mubr.bf16.mxu0 %v920
    %6742 = vmatmul.mubr.bf16.gmra.mrb[0].mxu0 %v919
    %v6743 = vpop.f32.mrb[0].mxu0
    %v6744 = vadd.f32 %v6455, %v6743
    %v6745 = vpop.f32.mrb[0].mxu0
    %v6746 = vpop.f32.mrb[0].mxu0
    %v6747 = vadd.f32 %v6458, %v6746
    %v6748 = vpop.f32.mrb[0].mxu0
    %6749 = vmatprep.mubr.bf16.mxu0 %v952
    %6750 = vmatmul.mubr.bf16.gmra.mrb[0].mxu0 %v951
    %v6751 = vpop.f32.mrb[0].mxu0
    %v6752 = vadd.f32 %v6463, %v6751
    %v6753 = vpop.f32.mrb[0].mxu0
    %v6754 = vpop.f32.mrb[0].mxu0
    %v6755 = vadd.f32 %v6466, %v6754
    %v6756 = vpop.f32.mrb[0].mxu0
    %6757 = vmatprep.mubr.bf16.mxu0 %v984
    %6758 = vmatmul.mubr.bf16.gmra.mrb[0].mxu0 %v983
    %v6759 = vpop.f32.mrb[0].mxu0
    %v6760 = vadd.f32 %v6471, %v6759
    %v6761 = vpop.f32.mrb[0].mxu0
    %v6762 = vpop.f32.mrb[0].mxu0
    %v6763 = vadd.f32 %v6474, %v6762
    %v6764 = vpop.f32.mrb[0].mxu0
    %6765 = vmatprep.mubr.bf16.mxu0 %v1016
    %6766 = vmatmul.mubr.bf16.gmra.mrb[0].mxu0 %v1015
    %v6767 = vpop.f32.mrb[0].mxu0
    %v6768 = vadd.f32 %v6479, %v6767
    %v6769 = vpop.f32.mrb[0].mxu0
    %v6770 = vpop.f32.mrb[0].mxu0
    %v6771 = vadd.f32 %v6482, %v6770
    %v6772 = vpop.f32.mrb[0].mxu0
    %6773 = vmatprep.mubr.bf16.mxu0 %v1048
    %6774 = vmatmul.mubr.bf16.gmra.mrb[0].mxu0 %v1047
    %v6775 = vpop.f32.mrb[0].mxu0
    %v6776 = vadd.f32 %v6487, %v6775
    %v6777 = vpop.f32.mrb[0].mxu0
    %v6778 = vpop.f32.mrb[0].mxu0
    %v6779 = vadd.f32 %v6490, %v6778
    %v6780 = vpop.f32.mrb[0].mxu0
    %6781 = vmatprep.mubr.bf16.mxu0 %v1080
    %6782 = vmatmul.mubr.bf16.gmra.mrb[0].mxu0 %v1079
    %v6783 = vpop.f32.mrb[0].mxu0
    %v6784 = vadd.f32 %v6495, %v6783
    %v6785 = vpop.f32.mrb[0].mxu0
    %v6786 = vpop.f32.mrb[0].mxu0
    %v6787 = vadd.f32 %v6498, %v6786
    %v6788 = vpop.f32.mrb[0].mxu0
    %6789 = vmatprep.mubr.bf16.mxu0 %v1112
    %6790 = vmatmul.mubr.bf16.gmra.mrb[0].mxu0 %v1111
    %v6791 = vpop.f32.mrb[0].mxu0
    %v6792 = vadd.f32 %v6503, %v6791
    %v6793 = vpop.f32.mrb[0].mxu0
    %v6794 = vpop.f32.mrb[0].mxu0
    %v6795 = vadd.f32 %v6506, %v6794
    %v6796 = vpop.f32.mrb[0].mxu0
    %6797 = vmatprep.mubr.bf16.mxu0 %v1144
    %6798 = vmatmul.mubr.bf16.gmra.mrb[0].mxu0 %v1143
    %v6799 = vpop.f32.mrb[0].mxu0
    %v6800 = vadd.f32 %v6511, %v6799
    %v6801 = vpop.f32.mrb[0].mxu0
    %v6802 = vpop.f32.mrb[0].mxu0
    %v6803 = vadd.f32 %v6514, %v6802
    %v6804 = vpop.f32.mrb[0].mxu0
    %6805 = vmatprep.mubr.bf16.mxu0 %v1176
    %6806 = vmatmul.mubr.bf16.gmra.mrb[0].mxu0 %v1175
    %v6807 = vpop.f32.mrb[0].mxu0
    %v6808 = vadd.f32 %v6519, %v6807
    %v6809 = vpop.f32.mrb[0].mxu0
    %v6810 = vpop.f32.mrb[0].mxu0
    %v6811 = vadd.f32 %v6522, %v6810
    %v6812 = vpop.f32.mrb[0].mxu0
    %6813 = vmatprep.mubr.bf16.mxu0 %v1208
    %6814 = vmatmul.mubr.bf16.gmra.mrb[0].mxu0 %v1207
    %v6815 = vpop.f32.mrb[0].mxu0
    %v6816 = vadd.f32 %v6527, %v6815
    %v6817 = vpop.f32.mrb[0].mxu0
    %v6818 = vpop.f32.mrb[0].mxu0
    %v6819 = vadd.f32 %v6530, %v6818
    %v6820 = vpop.f32.mrb[0].mxu0
    %6821 = vmatprep.mubr.bf16.mxu0 %v1240
    %6822 = vmatmul.mubr.bf16.gmra.mrb[0].mxu0 %v1239
    %v6823 = vpop.f32.mrb[0].mxu0
    %v6824 = vadd.f32 %v6535, %v6823
    %v6825 = vpop.f32.mrb[0].mxu0
    %v6826 = vpop.f32.mrb[0].mxu0
    %v6827 = vadd.f32 %v6538, %v6826
    %v6828 = vpop.f32.mrb[0].mxu0
    %6829 = vmatprep.mubr.bf16.mxu0 %v1272
    %6830 = vmatmul.mubr.bf16.gmra.mrb[0].mxu0 %v1271
    %v6831 = vpop.f32.mrb[0].mxu0
    %v6832 = vadd.f32 %v6543, %v6831
    %v6833 = vpop.f32.mrb[0].mxu0
    %v6834 = vpop.f32.mrb[0].mxu0
    %v6835 = vadd.f32 %v6546, %v6834
    %v6836 = vpop.f32.mrb[0].mxu0
    %6837 = vmatprep.mubr.bf16.mxu0 %v1304
    %6838 = vmatmul.mubr.bf16.gmra.mrb[0].mxu0 %v1303
    %v6839 = vpop.f32.mrb[0].mxu0
    %v6840 = vadd.f32 %v6551, %v6839
    %v6841 = vpop.f32.mrb[0].mxu0
    %v6842 = vpop.f32.mrb[0].mxu0
    %v6843 = vadd.f32 %v6554, %v6842
    %v6844 = vpop.f32.mrb[0].mxu0
    %6845 = vmatprep.mubr.bf16.mxu0 %v1336
    %6846 = vmatmul.mubr.bf16.gmra.mrb[0].mxu0 %v1335
    %v6847 = vpop.f32.mrb[0].mxu0
    %v6848 = vadd.f32 %v6559, %v6847
    %v6849 = vpop.f32.mrb[0].mxu0
    %v6850 = vpop.f32.mrb[0].mxu0
    %v6851 = vadd.f32 %v6562, %v6850
    %v6852 = vpop.f32.mrb[0].mxu0
    %6853 = vmatprep.mubr.bf16.mxu0 %v1368
    %6854 = vmatmul.mubr.bf16.gmra.mrb[0].mxu0 %v1367
    %v6855 = vpop.f32.mrb[0].mxu0
    %v6856 = vadd.f32 %v6567, %v6855
    %v6857 = vpop.f32.mrb[0].mxu0
    %v6858 = vpop.f32.mrb[0].mxu0
    %v6859 = vadd.f32 %v6570, %v6858
    %v6860 = vpop.f32.mrb[0].mxu0
    %6861 = vmatprep.mubr.bf16.mxu0 %v1400
    %6862 = vmatmul.mubr.bf16.gmra.mrb[0].mxu0 %v1399
    %v6863 = vpop.f32.mrb[0].mxu0
    %v6864 = vadd.f32 %v6575, %v6863
    %v6865 = vpop.f32.mrb[0].mxu0
    %v6866 = vpop.f32.mrb[0].mxu0
    %v6867 = vadd.f32 %v6578, %v6866
    %v6868 = vpop.f32.mrb[0].mxu0
    %6869 = vmatprep.mubr.bf16.mxu0 %v1432
    %6870 = vmatmul.mubr.bf16.gmra.mrb[0].mxu0 %v1431
    %v6871 = vpop.f32.mrb[0].mxu0
    %v6872 = vadd.f32 %v6583, %v6871
    %v6873 = vpop.f32.mrb[0].mxu0
    %v6874 = vpop.f32.mrb[0].mxu0
    %v6875 = vadd.f32 %v6586, %v6874
    %v6876 = vpop.f32.mrb[0].mxu0
    %6877 = vmatprep.mubr.bf16.mxu0 %v1464
    %6878 = vmatmul.mubr.bf16.gmra.mrb[0].mxu0 %v1463
    %v6879 = vpop.f32.mrb[0].mxu0
    %v6880 = vadd.f32 %v6591, %v6879
    %v6881 = vpop.f32.mrb[0].mxu0
    %v6882 = vpop.f32.mrb[0].mxu0
    %v6883 = vadd.f32 %v6594, %v6882
    %v6884 = vpop.f32.mrb[0].mxu0
    %6885 = vmatprep.mubr.bf16.mxu0 %v1496
    %6886 = vmatmul.mubr.bf16.gmra.mrb[0].mxu0 %v1495
    %v6887 = vpop.f32.mrb[0].mxu0
    %v6888 = vadd.f32 %v6599, %v6887
    %v6889 = vpop.f32.mrb[0].mxu0
    %v6890 = vpop.f32.mrb[0].mxu0
    %v6891 = vadd.f32 %v6602, %v6890
    %v6892 = vpop.f32.mrb[0].mxu0
    %6893 = vmatprep.mubr.bf16.mxu0 %v1528
    %6894 = vmatmul.mubr.bf16.gmra.mrb[0].mxu0 %v1527
    %v6895 = vpop.f32.mrb[0].mxu0
    %v6896 = vadd.f32 %v6607, %v6895
    %v6897 = vpop.f32.mrb[0].mxu0
    %v6898 = vpop.f32.mrb[0].mxu0
    %v6899 = vadd.f32 %v6610, %v6898
    %v6900 = vpop.f32.mrb[0].mxu0
    %6901 = vmatprep.mubr.bf16.mxu0 %v1560
    %6902 = vmatmul.mubr.bf16.gmra.mrb[0].mxu0 %v1559
    %v6903 = vpop.f32.mrb[0].mxu0
    %v6904 = vadd.f32 %v6615, %v6903
    %v6905 = vpop.f32.mrb[0].mxu0
    %v6906 = vpop.f32.mrb[0].mxu0
    %v6907 = vadd.f32 %v6618, %v6906
    %v6908 = vpop.f32.mrb[0].mxu0
    %6909 = vmatprep.mubr.bf16.mxu0 %v1592
    %6910 = vmatmul.mubr.bf16.gmra.mrb[0].mxu0 %v1591
    %v6911 = vpop.f32.mrb[0].mxu0
    %v6912 = vadd.f32 %v6623, %v6911
    %v6913 = vpop.f32.mrb[0].mxu0
    %v6914 = vpop.f32.mrb[0].mxu0
    %v6915 = vadd.f32 %v6626, %v6914
    %v6916 = vpop.f32.mrb[0].mxu0
    %6917 = vmatprep.mubr.bf16.mxu0 %v1624
    %6918 = vmatmul.mubr.bf16.gmra.mrb[0].mxu0 %v1623
    %v6919 = vpop.f32.mrb[0].mxu0
    %v6920 = vadd.f32 %v6631, %v6919
    %v6921 = vpop.f32.mrb[0].mxu0
    %v6922 = vpop.f32.mrb[0].mxu0
    %v6923 = vadd.f32 %v6634, %v6922
    %v6924 = vpop.f32.mrb[0].mxu0
    %6925 = vdwg.mxu0
    %6926 = vmatprep.subr.bf16.mxu0 0
    %6927 = vmatpush1.bf16.msra.mxu0 %v3411
    %6928 = vmatprep.subr.bf16.mxu0 0
    %6929 = vmatpush1.bf16.msra.mxu0 %v3412
    %6930 = vmatprep.subr.bf16.mxu0 0
    %6931 = vmatpush1.bf16.msra.mxu0 %v3413
    %6932 = vmatprep.subr.bf16.mxu0 0
    %6933 = vmatpush1.bf16.msra.mxu0 %v3414
    %6934 = vmatprep.subr.bf16.mxu0 0
    %6935 = vmatpush1.bf16.msra.mxu0 %v3415
    %6936 = vmatprep.subr.bf16.mxu0 0
    %6937 = vmatpush1.bf16.msra.mxu0 %v3416
    %6938 = vmatprep.subr.bf16.mxu0 0
    %6939 = vmatpush1.bf16.msra.mxu0 %v3417
    %6940 = vmatprep.subr.bf16.mxu0 0
    %6941 = vmatpush1.bf16.msra.mxu0 %v3418
    %6942 = vmatprep.subr.bf16.mxu0 0
    %6943 = vmatpush1.bf16.msra.mxu0 %v3419
    %6944 = vmatprep.subr.bf16.mxu0 0
    %6945 = vmatpush1.bf16.msra.mxu0 %v3420
    %6946 = vmatprep.subr.bf16.mxu0 0
    %6947 = vmatpush1.bf16.msra.mxu0 %v3421
    %6948 = vmatprep.subr.bf16.mxu0 0
    %6949 = vmatpush1.bf16.msra.mxu0 %v3422
    %6950 = vmatprep.subr.bf16.mxu0 0
    %6951 = vmatpush1.bf16.msra.mxu0 %v3423
    %6952 = vmatprep.subr.bf16.mxu0 0
    %6953 = vmatpush1.bf16.msra.mxu0 %v3424
    %6954 = vmatprep.subr.bf16.mxu0 0
    %6955 = vmatpush1.bf16.msra.mxu0 %v3425
    %6956 = vmatprep.subr.bf16.mxu0 0
    %6957 = vmatpush1.bf16.msra.mxu0 %v3426
    %6958 = vmatprep.mubr.bf16.mxu0 %v634
    %6959 = vmatmul.mubr.bf16.gmra.mrb[0].mxu0 %v633
    %v6960 = vpop.f32.mrb[0].mxu0
    %v6961 = vadd.f32 %v6672, %v6960
    %v6962 = vpop.f32.mrb[0].mxu0
    %v6963 = vpop.f32.mrb[0].mxu0
    %v6964 = vadd.f32 %v6675, %v6963
    %v6965 = vpop.f32.mrb[0].mxu0
    %6966 = vmatprep.mubr.bf16.mxu0 %v666
    %6967 = vmatmul.mubr.bf16.gmra.mrb[0].mxu0 %v665
    %v6968 = vpop.f32.mrb[0].mxu0
    %v6969 = vadd.f32 %v6680, %v6968
    %v6970 = vpop.f32.mrb[0].mxu0
    %v6971 = vpop.f32.mrb[0].mxu0
    %v6972 = vadd.f32 %v6683, %v6971
    %v6973 = vpop.f32.mrb[0].mxu0
    %6974 = vmatprep.mubr.bf16.mxu0 %v698
    %6975 = vmatmul.mubr.bf16.gmra.mrb[0].mxu0 %v697
    %v6976 = vpop.f32.mrb[0].mxu0
    %v6977 = vadd.f32 %v6688, %v6976
    %v6978 = vpop.f32.mrb[0].mxu0
    %v6979 = vpop.f32.mrb[0].mxu0
    %v6980 = vadd.f32 %v6691, %v6979
    %v6981 = vpop.f32.mrb[0].mxu0
    %6982 = vmatprep.mubr.bf16.mxu0 %v730
    %6983 = vmatmul.mubr.bf16.gmra.mrb[0].mxu0 %v729
    %v6984 = vpop.f32.mrb[0].mxu0
    %v6985 = vadd.f32 %v6696, %v6984
    %v6986 = vpop.f32.mrb[0].mxu0
    %v6987 = vpop.f32.mrb[0].mxu0
    %v6988 = vadd.f32 %v6699, %v6987
    %v6989 = vpop.f32.mrb[0].mxu0
    %6990 = vmatprep.mubr.bf16.mxu0 %v762
    %6991 = vmatmul.mubr.bf16.gmra.mrb[0].mxu0 %v761
    %v6992 = vpop.f32.mrb[0].mxu0
    %v6993 = vadd.f32 %v6704, %v6992
    %v6994 = vpop.f32.mrb[0].mxu0
    %v6995 = vpop.f32.mrb[0].mxu0
    %v6996 = vadd.f32 %v6707, %v6995
    %v6997 = vpop.f32.mrb[0].mxu0
    %6998 = vmatprep.mubr.bf16.mxu0 %v794
    %6999 = vmatmul.mubr.bf16.gmra.mrb[0].mxu0 %v793
    %v7000 = vpop.f32.mrb[0].mxu0
    %v7001 = vadd.f32 %v6712, %v7000
    %v7002 = vpop.f32.mrb[0].mxu0
    %v7003 = vpop.f32.mrb[0].mxu0
    %v7004 = vadd.f32 %v6715, %v7003
    %v7005 = vpop.f32.mrb[0].mxu0
    %7006 = vmatprep.mubr.bf16.mxu0 %v826
    %7007 = vmatmul.mubr.bf16.gmra.mrb[0].mxu0 %v825
    %v7008 = vpop.f32.mrb[0].mxu0
    %v7009 = vadd.f32 %v6720, %v7008
    %v7010 = vpop.f32.mrb[0].mxu0
    %v7011 = vpop.f32.mrb[0].mxu0
    %v7012 = vadd.f32 %v6723, %v7011
    %v7013 = vpop.f32.mrb[0].mxu0
    %7014 = vmatprep.mubr.bf16.mxu0 %v858
    %7015 = vmatmul.mubr.bf16.gmra.mrb[0].mxu0 %v857
    %v7016 = vpop.f32.mrb[0].mxu0
    %v7017 = vadd.f32 %v6728, %v7016
    %v7018 = vpop.f32.mrb[0].mxu0
    %v7019 = vpop.f32.mrb[0].mxu0
    %v7020 = vadd.f32 %v6731, %v7019
    %v7021 = vpop.f32.mrb[0].mxu0
    %7022 = vmatprep.mubr.bf16.mxu0 %v890
    %7023 = vmatmul.mubr.bf16.gmra.mrb[0].mxu0 %v889
    %v7024 = vpop.f32.mrb[0].mxu0
    %v7025 = vadd.f32 %v6736, %v7024
    %v7026 = vpop.f32.mrb[0].mxu0
    %v7027 = vpop.f32.mrb[0].mxu0
    %v7028 = vadd.f32 %v6739, %v7027
    %v7029 = vpop.f32.mrb[0].mxu0
    %7030 = vmatprep.mubr.bf16.mxu0 %v922
    %7031 = vmatmul.mubr.bf16.gmra.mrb[0].mxu0 %v921
    %v7032 = vpop.f32.mrb[0].mxu0
    %v7033 = vadd.f32 %v6744, %v7032
    %v7034 = vpop.f32.mrb[0].mxu0
    %v7035 = vpop.f32.mrb[0].mxu0
    %v7036 = vadd.f32 %v6747, %v7035
    %v7037 = vpop.f32.mrb[0].mxu0
    %7038 = vmatprep.mubr.bf16.mxu0 %v954
    %7039 = vmatmul.mubr.bf16.gmra.mrb[0].mxu0 %v953
    %v7040 = vpop.f32.mrb[0].mxu0
    %v7041 = vadd.f32 %v6752, %v7040
    %v7042 = vpop.f32.mrb[0].mxu0
    %v7043 = vpop.f32.mrb[0].mxu0
    %v7044 = vadd.f32 %v6755, %v7043
    %v7045 = vpop.f32.mrb[0].mxu0
    %7046 = vmatprep.mubr.bf16.mxu0 %v986
    %7047 = vmatmul.mubr.bf16.gmra.mrb[0].mxu0 %v985
    %v7048 = vpop.f32.mrb[0].mxu0
    %v7049 = vadd.f32 %v6760, %v7048
    %v7050 = vpop.f32.mrb[0].mxu0
    %v7051 = vpop.f32.mrb[0].mxu0
    %v7052 = vadd.f32 %v6763, %v7051
    %v7053 = vpop.f32.mrb[0].mxu0
    %7054 = vmatprep.mubr.bf16.mxu0 %v1018
    %7055 = vmatmul.mubr.bf16.gmra.mrb[0].mxu0 %v1017
    %v7056 = vpop.f32.mrb[0].mxu0
    %v7057 = vadd.f32 %v6768, %v7056
    %v7058 = vpop.f32.mrb[0].mxu0
    %v7059 = vpop.f32.mrb[0].mxu0
    %v7060 = vadd.f32 %v6771, %v7059
    %v7061 = vpop.f32.mrb[0].mxu0
    %7062 = vmatprep.mubr.bf16.mxu0 %v1050
    %7063 = vmatmul.mubr.bf16.gmra.mrb[0].mxu0 %v1049
    %v7064 = vpop.f32.mrb[0].mxu0
    %v7065 = vadd.f32 %v6776, %v7064
    %v7066 = vpop.f32.mrb[0].mxu0
    %v7067 = vpop.f32.mrb[0].mxu0
    %v7068 = vadd.f32 %v6779, %v7067
    %v7069 = vpop.f32.mrb[0].mxu0
    %7070 = vmatprep.mubr.bf16.mxu0 %v1082
    %7071 = vmatmul.mubr.bf16.gmra.mrb[0].mxu0 %v1081
    %v7072 = vpop.f32.mrb[0].mxu0
    %v7073 = vadd.f32 %v6784, %v7072
    %v7074 = vpop.f32.mrb[0].mxu0
    %v7075 = vpop.f32.mrb[0].mxu0
    %v7076 = vadd.f32 %v6787, %v7075
    %v7077 = vpop.f32.mrb[0].mxu0
    %7078 = vmatprep.mubr.bf16.mxu0 %v1114
    %7079 = vmatmul.mubr.bf16.gmra.mrb[0].mxu0 %v1113
    %v7080 = vpop.f32.mrb[0].mxu0
    %v7081 = vadd.f32 %v6792, %v7080
    %v7082 = vpop.f32.mrb[0].mxu0
    %v7083 = vpop.f32.mrb[0].mxu0
    %v7084 = vadd.f32 %v6795, %v7083
    %v7085 = vpop.f32.mrb[0].mxu0
    %7086 = vmatprep.mubr.bf16.mxu0 %v1146
    %7087 = vmatmul.mubr.bf16.gmra.mrb[0].mxu0 %v1145
    %v7088 = vpop.f32.mrb[0].mxu0
    %v7089 = vadd.f32 %v6800, %v7088
    %v7090 = vpop.f32.mrb[0].mxu0
    %v7091 = vpop.f32.mrb[0].mxu0
    %v7092 = vadd.f32 %v6803, %v7091
    %v7093 = vpop.f32.mrb[0].mxu0
    %7094 = vmatprep.mubr.bf16.mxu0 %v1178
    %7095 = vmatmul.mubr.bf16.gmra.mrb[0].mxu0 %v1177
    %v7096 = vpop.f32.mrb[0].mxu0
    %v7097 = vadd.f32 %v6808, %v7096
    %v7098 = vpop.f32.mrb[0].mxu0
    %v7099 = vpop.f32.mrb[0].mxu0
    %v7100 = vadd.f32 %v6811, %v7099
    %v7101 = vpop.f32.mrb[0].mxu0
    %7102 = vmatprep.mubr.bf16.mxu0 %v1210
    %7103 = vmatmul.mubr.bf16.gmra.mrb[0].mxu0 %v1209
    %v7104 = vpop.f32.mrb[0].mxu0
    %v7105 = vadd.f32 %v6816, %v7104
    %v7106 = vpop.f32.mrb[0].mxu0
    %v7107 = vpop.f32.mrb[0].mxu0
    %v7108 = vadd.f32 %v6819, %v7107
    %v7109 = vpop.f32.mrb[0].mxu0
    %7110 = vmatprep.mubr.bf16.mxu0 %v1242
    %7111 = vmatmul.mubr.bf16.gmra.mrb[0].mxu0 %v1241
    %v7112 = vpop.f32.mrb[0].mxu0
    %v7113 = vadd.f32 %v6824, %v7112
    %v7114 = vpop.f32.mrb[0].mxu0
    %v7115 = vpop.f32.mrb[0].mxu0
    %v7116 = vadd.f32 %v6827, %v7115
    %v7117 = vpop.f32.mrb[0].mxu0
    %7118 = vmatprep.mubr.bf16.mxu0 %v1274
    %7119 = vmatmul.mubr.bf16.gmra.mrb[0].mxu0 %v1273
    %v7120 = vpop.f32.mrb[0].mxu0
    %v7121 = vadd.f32 %v6832, %v7120
    %v7122 = vpop.f32.mrb[0].mxu0
    %v7123 = vpop.f32.mrb[0].mxu0
    %v7124 = vadd.f32 %v6835, %v7123
    %v7125 = vpop.f32.mrb[0].mxu0
    %7126 = vmatprep.mubr.bf16.mxu0 %v1306
    %7127 = vmatmul.mubr.bf16.gmra.mrb[0].mxu0 %v1305
    %v7128 = vpop.f32.mrb[0].mxu0
    %v7129 = vadd.f32 %v6840, %v7128
    %v7130 = vpop.f32.mrb[0].mxu0
    %v7131 = vpop.f32.mrb[0].mxu0
    %v7132 = vadd.f32 %v6843, %v7131
    %v7133 = vpop.f32.mrb[0].mxu0
    %7134 = vmatprep.mubr.bf16.mxu0 %v1338
    %7135 = vmatmul.mubr.bf16.gmra.mrb[0].mxu0 %v1337
    %v7136 = vpop.f32.mrb[0].mxu0
    %v7137 = vadd.f32 %v6848, %v7136
    %v7138 = vpop.f32.mrb[0].mxu0
    %v7139 = vpop.f32.mrb[0].mxu0
    %v7140 = vadd.f32 %v6851, %v7139
    %v7141 = vpop.f32.mrb[0].mxu0
    %7142 = vmatprep.mubr.bf16.mxu0 %v1370
    %7143 = vmatmul.mubr.bf16.gmra.mrb[0].mxu0 %v1369
    %v7144 = vpop.f32.mrb[0].mxu0
    %v7145 = vadd.f32 %v6856, %v7144
    %v7146 = vpop.f32.mrb[0].mxu0
    %v7147 = vpop.f32.mrb[0].mxu0
    %v7148 = vadd.f32 %v6859, %v7147
    %v7149 = vpop.f32.mrb[0].mxu0
    %7150 = vmatprep.mubr.bf16.mxu0 %v1402
    %7151 = vmatmul.mubr.bf16.gmra.mrb[0].mxu0 %v1401
    %v7152 = vpop.f32.mrb[0].mxu0
    %v7153 = vadd.f32 %v6864, %v7152
    %v7154 = vpop.f32.mrb[0].mxu0
    %v7155 = vpop.f32.mrb[0].mxu0
    %v7156 = vadd.f32 %v6867, %v7155
    %v7157 = vpop.f32.mrb[0].mxu0
    %7158 = vmatprep.mubr.bf16.mxu0 %v1434
    %7159 = vmatmul.mubr.bf16.gmra.mrb[0].mxu0 %v1433
    %v7160 = vpop.f32.mrb[0].mxu0
    %v7161 = vadd.f32 %v6872, %v7160
    %v7162 = vpop.f32.mrb[0].mxu0
    %v7163 = vpop.f32.mrb[0].mxu0
    %v7164 = vadd.f32 %v6875, %v7163
    %v7165 = vpop.f32.mrb[0].mxu0
    %7166 = vmatprep.mubr.bf16.mxu0 %v1466
    %7167 = vmatmul.mubr.bf16.gmra.mrb[0].mxu0 %v1465
    %v7168 = vpop.f32.mrb[0].mxu0
    %v7169 = vadd.f32 %v6880, %v7168
    %v7170 = vpop.f32.mrb[0].mxu0
    %v7171 = vpop.f32.mrb[0].mxu0
    %v7172 = vadd.f32 %v6883, %v7171
    %v7173 = vpop.f32.mrb[0].mxu0
    %7174 = vmatprep.mubr.bf16.mxu0 %v1498
    %7175 = vmatmul.mubr.bf16.gmra.mrb[0].mxu0 %v1497
    %v7176 = vpop.f32.mrb[0].mxu0
    %v7177 = vadd.f32 %v6888, %v7176
    %v7178 = vpop.f32.mrb[0].mxu0
    %v7179 = vpop.f32.mrb[0].mxu0
    %v7180 = vadd.f32 %v6891, %v7179
    %v7181 = vpop.f32.mrb[0].mxu0
    %7182 = vmatprep.mubr.bf16.mxu0 %v1530
    %7183 = vmatmul.mubr.bf16.gmra.mrb[0].mxu0 %v1529
    %v7184 = vpop.f32.mrb[0].mxu0
    %v7185 = vadd.f32 %v6896, %v7184
    %v7186 = vpop.f32.mrb[0].mxu0
    %v7187 = vpop.f32.mrb[0].mxu0
    %v7188 = vadd.f32 %v6899, %v7187
    %v7189 = vpop.f32.mrb[0].mxu0
    %7190 = vmatprep.mubr.bf16.mxu0 %v1562
    %7191 = vmatmul.mubr.bf16.gmra.mrb[0].mxu0 %v1561
    %v7192 = vpop.f32.mrb[0].mxu0
    %v7193 = vadd.f32 %v6904, %v7192
    %v7194 = vpop.f32.mrb[0].mxu0
    %v7195 = vpop.f32.mrb[0].mxu0
    %v7196 = vadd.f32 %v6907, %v7195
    %v7197 = vpop.f32.mrb[0].mxu0
    %7198 = vmatprep.mubr.bf16.mxu0 %v1594
    %7199 = vmatmul.mubr.bf16.gmra.mrb[0].mxu0 %v1593
    %v7200 = vpop.f32.mrb[0].mxu0
    %v7201 = vadd.f32 %v6912, %v7200
    %v7202 = vpop.f32.mrb[0].mxu0
    %v7203 = vpop.f32.mrb[0].mxu0
    %v7204 = vadd.f32 %v6915, %v7203
    %v7205 = vpop.f32.mrb[0].mxu0
    %7206 = vmatprep.mubr.bf16.mxu0 %v1626
    %7207 = vmatmul.mubr.bf16.gmra.mrb[0].mxu0 %v1625
    %v7208 = vpop.f32.mrb[0].mxu0
    %v7209 = vadd.f32 %v6920, %v7208
    %v7210 = vpop.f32.mrb[0].mxu0
    %v7211 = vpop.f32.mrb[0].mxu0
    %v7212 = vadd.f32 %v6923, %v7211
    %v7213 = vpop.f32.mrb[0].mxu0
    %7214 = vdwg.mxu0
    %7215 = vmatprep.subr.bf16.mxu0 0
    %7216 = vmatpush1.bf16.msra.mxu0 %v3427
    %7217 = vmatprep.subr.bf16.mxu0 0
    %7218 = vmatpush1.bf16.msra.mxu0 %v3428
    %7219 = vmatprep.subr.bf16.mxu0 0
    %7220 = vmatpush1.bf16.msra.mxu0 %v3429
    %7221 = vmatprep.subr.bf16.mxu0 0
    %7222 = vmatpush1.bf16.msra.mxu0 %v3430
    %7223 = vmatprep.subr.bf16.mxu0 0
    %7224 = vmatpush1.bf16.msra.mxu0 %v3431
    %7225 = vmatprep.subr.bf16.mxu0 0
    %7226 = vmatpush1.bf16.msra.mxu0 %v3432
    %7227 = vmatprep.subr.bf16.mxu0 0
    %7228 = vmatpush1.bf16.msra.mxu0 %v3433
    %7229 = vmatprep.subr.bf16.mxu0 0
    %7230 = vmatpush1.bf16.msra.mxu0 %v3434
    %7231 = vmatprep.subr.bf16.mxu0 0
    %7232 = vmatpush1.bf16.msra.mxu0 %v3435
    %7233 = vmatprep.subr.bf16.mxu0 0
    %7234 = vmatpush1.bf16.msra.mxu0 %v3436
    %7235 = vmatprep.subr.bf16.mxu0 0
    %7236 = vmatpush1.bf16.msra.mxu0 %v3437
    %7237 = vmatprep.subr.bf16.mxu0 0
    %7238 = vmatpush1.bf16.msra.mxu0 %v3438
    %7239 = vmatprep.subr.bf16.mxu0 0
    %7240 = vmatpush1.bf16.msra.mxu0 %v3439
    %7241 = vmatprep.subr.bf16.mxu0 0
    %7242 = vmatpush1.bf16.msra.mxu0 %v3440
    %7243 = vmatprep.subr.bf16.mxu0 0
    %7244 = vmatpush1.bf16.msra.mxu0 %v3441
    %7245 = vmatprep.subr.bf16.mxu0 0
    %7246 = vmatpush1.bf16.msra.mxu0 %v3442
    %7247 = vmatprep.mubr.bf16.mxu0 %v636
    %7248 = vmatmul.mubr.bf16.gmra.mrb[0].mxu0 %v635
    %v7249 = vpop.f32.mrb[0].mxu0
    %v7250 = vadd.f32 %v6961, %v7249
    %v7251 = vpop.f32.mrb[0].mxu0
    %v7252 = vpop.f32.mrb[0].mxu0
    %v7253 = vadd.f32 %v6964, %v7252
    %v7254 = vpop.f32.mrb[0].mxu0
    %7255 = vmatprep.mubr.bf16.mxu0 %v668
    %7256 = vmatmul.mubr.bf16.gmra.mrb[0].mxu0 %v667
    %v7257 = vpop.f32.mrb[0].mxu0
    %v7258 = vadd.f32 %v6969, %v7257
    %v7259 = vpop.f32.mrb[0].mxu0
    %v7260 = vpop.f32.mrb[0].mxu0
    %v7261 = vadd.f32 %v6972, %v7260
    %v7262 = vpop.f32.mrb[0].mxu0
    %7263 = vmatprep.mubr.bf16.mxu0 %v700
    %7264 = vmatmul.mubr.bf16.gmra.mrb[0].mxu0 %v699
    %v7265 = vpop.f32.mrb[0].mxu0
    %v7266 = vadd.f32 %v6977, %v7265
    %v7267 = vpop.f32.mrb[0].mxu0
    %v7268 = vpop.f32.mrb[0].mxu0
    %v7269 = vadd.f32 %v6980, %v7268
    %v7270 = vpop.f32.mrb[0].mxu0
    %7271 = vmatprep.mubr.bf16.mxu0 %v732
    %7272 = vmatmul.mubr.bf16.gmra.mrb[0].mxu0 %v731
    %v7273 = vpop.f32.mrb[0].mxu0
    %v7274 = vadd.f32 %v6985, %v7273
    %v7275 = vpop.f32.mrb[0].mxu0
    %v7276 = vpop.f32.mrb[0].mxu0
    %v7277 = vadd.f32 %v6988, %v7276
    %v7278 = vpop.f32.mrb[0].mxu0
    %7279 = vmatprep.mubr.bf16.mxu0 %v764
    %7280 = vmatmul.mubr.bf16.gmra.mrb[0].mxu0 %v763
    %v7281 = vpop.f32.mrb[0].mxu0
    %v7282 = vadd.f32 %v6993, %v7281
    %v7283 = vpop.f32.mrb[0].mxu0
    %v7284 = vpop.f32.mrb[0].mxu0
    %v7285 = vadd.f32 %v6996, %v7284
    %v7286 = vpop.f32.mrb[0].mxu0
    %7287 = vmatprep.mubr.bf16.mxu0 %v796
    %7288 = vmatmul.mubr.bf16.gmra.mrb[0].mxu0 %v795
    %v7289 = vpop.f32.mrb[0].mxu0
    %v7290 = vadd.f32 %v7001, %v7289
    %v7291 = vpop.f32.mrb[0].mxu0
    %v7292 = vpop.f32.mrb[0].mxu0
    %v7293 = vadd.f32 %v7004, %v7292
    %v7294 = vpop.f32.mrb[0].mxu0
    %7295 = vmatprep.mubr.bf16.mxu0 %v828
    %7296 = vmatmul.mubr.bf16.gmra.mrb[0].mxu0 %v827
    %v7297 = vpop.f32.mrb[0].mxu0
    %v7298 = vadd.f32 %v7009, %v7297
    %v7299 = vpop.f32.mrb[0].mxu0
    %v7300 = vpop.f32.mrb[0].mxu0
    %v7301 = vadd.f32 %v7012, %v7300
    %v7302 = vpop.f32.mrb[0].mxu0
    %7303 = vmatprep.mubr.bf16.mxu0 %v860
    %7304 = vmatmul.mubr.bf16.gmra.mrb[0].mxu0 %v859
    %v7305 = vpop.f32.mrb[0].mxu0
    %v7306 = vadd.f32 %v7017, %v7305
    %v7307 = vpop.f32.mrb[0].mxu0
    %v7308 = vpop.f32.mrb[0].mxu0
    %v7309 = vadd.f32 %v7020, %v7308
    %v7310 = vpop.f32.mrb[0].mxu0
    %7311 = vmatprep.mubr.bf16.mxu0 %v892
    %7312 = vmatmul.mubr.bf16.gmra.mrb[0].mxu0 %v891
    %v7313 = vpop.f32.mrb[0].mxu0
    %v7314 = vadd.f32 %v7025, %v7313
    %v7315 = vpop.f32.mrb[0].mxu0
    %v7316 = vpop.f32.mrb[0].mxu0
    %v7317 = vadd.f32 %v7028, %v7316
    %v7318 = vpop.f32.mrb[0].mxu0
    %7319 = vmatprep.mubr.bf16.mxu0 %v924
    %7320 = vmatmul.mubr.bf16.gmra.mrb[0].mxu0 %v923
    %v7321 = vpop.f32.mrb[0].mxu0
    %v7322 = vadd.f32 %v7033, %v7321
    %v7323 = vpop.f32.mrb[0].mxu0
    %v7324 = vpop.f32.mrb[0].mxu0
    %v7325 = vadd.f32 %v7036, %v7324
    %v7326 = vpop.f32.mrb[0].mxu0
    %7327 = vmatprep.mubr.bf16.mxu0 %v956
    %7328 = vmatmul.mubr.bf16.gmra.mrb[0].mxu0 %v955
    %v7329 = vpop.f32.mrb[0].mxu0
    %v7330 = vadd.f32 %v7041, %v7329
    %v7331 = vpop.f32.mrb[0].mxu0
    %v7332 = vpop.f32.mrb[0].mxu0
    %v7333 = vadd.f32 %v7044, %v7332
    %v7334 = vpop.f32.mrb[0].mxu0
    %7335 = vmatprep.mubr.bf16.mxu0 %v988
    %7336 = vmatmul.mubr.bf16.gmra.mrb[0].mxu0 %v987
    %v7337 = vpop.f32.mrb[0].mxu0
    %v7338 = vadd.f32 %v7049, %v7337
    %v7339 = vpop.f32.mrb[0].mxu0
    %v7340 = vpop.f32.mrb[0].mxu0
    %v7341 = vadd.f32 %v7052, %v7340
    %v7342 = vpop.f32.mrb[0].mxu0
    %7343 = vmatprep.mubr.bf16.mxu0 %v1020
    %7344 = vmatmul.mubr.bf16.gmra.mrb[0].mxu0 %v1019
    %v7345 = vpop.f32.mrb[0].mxu0
    %v7346 = vadd.f32 %v7057, %v7345
    %v7347 = vpop.f32.mrb[0].mxu0
    %v7348 = vpop.f32.mrb[0].mxu0
    %v7349 = vadd.f32 %v7060, %v7348
    %v7350 = vpop.f32.mrb[0].mxu0
    %7351 = vmatprep.mubr.bf16.mxu0 %v1052
    %7352 = vmatmul.mubr.bf16.gmra.mrb[0].mxu0 %v1051
    %v7353 = vpop.f32.mrb[0].mxu0
    %v7354 = vadd.f32 %v7065, %v7353
    %v7355 = vpop.f32.mrb[0].mxu0
    %v7356 = vpop.f32.mrb[0].mxu0
    %v7357 = vadd.f32 %v7068, %v7356
    %v7358 = vpop.f32.mrb[0].mxu0
    %7359 = vmatprep.mubr.bf16.mxu0 %v1084
    %7360 = vmatmul.mubr.bf16.gmra.mrb[0].mxu0 %v1083
    %v7361 = vpop.f32.mrb[0].mxu0
    %v7362 = vadd.f32 %v7073, %v7361
    %v7363 = vpop.f32.mrb[0].mxu0
    %v7364 = vpop.f32.mrb[0].mxu0
    %v7365 = vadd.f32 %v7076, %v7364
    %v7366 = vpop.f32.mrb[0].mxu0
    %7367 = vmatprep.mubr.bf16.mxu0 %v1116
    %7368 = vmatmul.mubr.bf16.gmra.mrb[0].mxu0 %v1115
    %v7369 = vpop.f32.mrb[0].mxu0
    %v7370 = vadd.f32 %v7081, %v7369
    %v7371 = vpop.f32.mrb[0].mxu0
    %v7372 = vpop.f32.mrb[0].mxu0
    %v7373 = vadd.f32 %v7084, %v7372
    %v7374 = vpop.f32.mrb[0].mxu0
    %7375 = vmatprep.mubr.bf16.mxu0 %v1148
    %7376 = vmatmul.mubr.bf16.gmra.mrb[0].mxu0 %v1147
    %v7377 = vpop.f32.mrb[0].mxu0
    %v7378 = vadd.f32 %v7089, %v7377
    %v7379 = vpop.f32.mrb[0].mxu0
    %v7380 = vpop.f32.mrb[0].mxu0
    %v7381 = vadd.f32 %v7092, %v7380
    %v7382 = vpop.f32.mrb[0].mxu0
    %7383 = vmatprep.mubr.bf16.mxu0 %v1180
    %7384 = vmatmul.mubr.bf16.gmra.mrb[0].mxu0 %v1179
    %v7385 = vpop.f32.mrb[0].mxu0
    %v7386 = vadd.f32 %v7097, %v7385
    %v7387 = vpop.f32.mrb[0].mxu0
    %v7388 = vpop.f32.mrb[0].mxu0
    %v7389 = vadd.f32 %v7100, %v7388
    %v7390 = vpop.f32.mrb[0].mxu0
    %7391 = vmatprep.mubr.bf16.mxu0 %v1212
    %7392 = vmatmul.mubr.bf16.gmra.mrb[0].mxu0 %v1211
    %v7393 = vpop.f32.mrb[0].mxu0
    %v7394 = vadd.f32 %v7105, %v7393
    %v7395 = vpop.f32.mrb[0].mxu0
    %v7396 = vpop.f32.mrb[0].mxu0
    %v7397 = vadd.f32 %v7108, %v7396
    %v7398 = vpop.f32.mrb[0].mxu0
    %7399 = vmatprep.mubr.bf16.mxu0 %v1244
    %7400 = vmatmul.mubr.bf16.gmra.mrb[0].mxu0 %v1243
    %v7401 = vpop.f32.mrb[0].mxu0
    %v7402 = vadd.f32 %v7113, %v7401
    %v7403 = vpop.f32.mrb[0].mxu0
    %v7404 = vpop.f32.mrb[0].mxu0
    %v7405 = vadd.f32 %v7116, %v7404
    %v7406 = vpop.f32.mrb[0].mxu0
    %7407 = vmatprep.mubr.bf16.mxu0 %v1276
    %7408 = vmatmul.mubr.bf16.gmra.mrb[0].mxu0 %v1275
    %v7409 = vpop.f32.mrb[0].mxu0
    %v7410 = vadd.f32 %v7121, %v7409
    %v7411 = vpop.f32.mrb[0].mxu0
    %v7412 = vpop.f32.mrb[0].mxu0
    %v7413 = vadd.f32 %v7124, %v7412
    %v7414 = vpop.f32.mrb[0].mxu0
    %7415 = vmatprep.mubr.bf16.mxu0 %v1308
    %7416 = vmatmul.mubr.bf16.gmra.mrb[0].mxu0 %v1307
    %v7417 = vpop.f32.mrb[0].mxu0
    %v7418 = vadd.f32 %v7129, %v7417
    %v7419 = vpop.f32.mrb[0].mxu0
    %v7420 = vpop.f32.mrb[0].mxu0
    %v7421 = vadd.f32 %v7132, %v7420
    %v7422 = vpop.f32.mrb[0].mxu0
    %7423 = vmatprep.mubr.bf16.mxu0 %v1340
    %7424 = vmatmul.mubr.bf16.gmra.mrb[0].mxu0 %v1339
    %v7425 = vpop.f32.mrb[0].mxu0
    %v7426 = vadd.f32 %v7137, %v7425
    %v7427 = vpop.f32.mrb[0].mxu0
    %v7428 = vpop.f32.mrb[0].mxu0
    %v7429 = vadd.f32 %v7140, %v7428
    %v7430 = vpop.f32.mrb[0].mxu0
    %7431 = vmatprep.mubr.bf16.mxu0 %v1372
    %7432 = vmatmul.mubr.bf16.gmra.mrb[0].mxu0 %v1371
    %v7433 = vpop.f32.mrb[0].mxu0
    %v7434 = vadd.f32 %v7145, %v7433
    %v7435 = vpop.f32.mrb[0].mxu0
    %v7436 = vpop.f32.mrb[0].mxu0
    %v7437 = vadd.f32 %v7148, %v7436
    %v7438 = vpop.f32.mrb[0].mxu0
    %7439 = vmatprep.mubr.bf16.mxu0 %v1404
    %7440 = vmatmul.mubr.bf16.gmra.mrb[0].mxu0 %v1403
    %v7441 = vpop.f32.mrb[0].mxu0
    %v7442 = vadd.f32 %v7153, %v7441
    %v7443 = vpop.f32.mrb[0].mxu0
    %v7444 = vpop.f32.mrb[0].mxu0
    %v7445 = vadd.f32 %v7156, %v7444
    %v7446 = vpop.f32.mrb[0].mxu0
    %7447 = vmatprep.mubr.bf16.mxu0 %v1436
    %7448 = vmatmul.mubr.bf16.gmra.mrb[0].mxu0 %v1435
    %v7449 = vpop.f32.mrb[0].mxu0
    %v7450 = vadd.f32 %v7161, %v7449
    %v7451 = vpop.f32.mrb[0].mxu0
    %v7452 = vpop.f32.mrb[0].mxu0
    %v7453 = vadd.f32 %v7164, %v7452
    %v7454 = vpop.f32.mrb[0].mxu0
    %7455 = vmatprep.mubr.bf16.mxu0 %v1468
    %7456 = vmatmul.mubr.bf16.gmra.mrb[0].mxu0 %v1467
    %v7457 = vpop.f32.mrb[0].mxu0
    %v7458 = vadd.f32 %v7169, %v7457
    %v7459 = vpop.f32.mrb[0].mxu0
    %v7460 = vpop.f32.mrb[0].mxu0
    %v7461 = vadd.f32 %v7172, %v7460
    %v7462 = vpop.f32.mrb[0].mxu0
    %7463 = vmatprep.mubr.bf16.mxu0 %v1500
    %7464 = vmatmul.mubr.bf16.gmra.mrb[0].mxu0 %v1499
    %v7465 = vpop.f32.mrb[0].mxu0
    %v7466 = vadd.f32 %v7177, %v7465
    %v7467 = vpop.f32.mrb[0].mxu0
    %v7468 = vpop.f32.mrb[0].mxu0
    %v7469 = vadd.f32 %v7180, %v7468
    %v7470 = vpop.f32.mrb[0].mxu0
    %7471 = vmatprep.mubr.bf16.mxu0 %v1532
    %7472 = vmatmul.mubr.bf16.gmra.mrb[0].mxu0 %v1531
    %v7473 = vpop.f32.mrb[0].mxu0
    %v7474 = vadd.f32 %v7185, %v7473
    %v7475 = vpop.f32.mrb[0].mxu0
    %v7476 = vpop.f32.mrb[0].mxu0
    %v7477 = vadd.f32 %v7188, %v7476
    %v7478 = vpop.f32.mrb[0].mxu0
    %7479 = vmatprep.mubr.bf16.mxu0 %v1564
    %7480 = vmatmul.mubr.bf16.gmra.mrb[0].mxu0 %v1563
    %v7481 = vpop.f32.mrb[0].mxu0
    %v7482 = vadd.f32 %v7193, %v7481
    %v7483 = vpop.f32.mrb[0].mxu0
    %v7484 = vpop.f32.mrb[0].mxu0
    %v7485 = vadd.f32 %v7196, %v7484
    %v7486 = vpop.f32.mrb[0].mxu0
    %7487 = vmatprep.mubr.bf16.mxu0 %v1596
    %7488 = vmatmul.mubr.bf16.gmra.mrb[0].mxu0 %v1595
    %v7489 = vpop.f32.mrb[0].mxu0
    %v7490 = vadd.f32 %v7201, %v7489
    %v7491 = vpop.f32.mrb[0].mxu0
    %v7492 = vpop.f32.mrb[0].mxu0
    %v7493 = vadd.f32 %v7204, %v7492
    %v7494 = vpop.f32.mrb[0].mxu0
    %7495 = vmatprep.mubr.bf16.mxu0 %v1628
    %7496 = vmatmul.mubr.bf16.gmra.mrb[0].mxu0 %v1627
    %v7497 = vpop.f32.mrb[0].mxu0
    %v7498 = vadd.f32 %v7209, %v7497
    %v7499 = vpop.f32.mrb[0].mxu0
    %v7500 = vpop.f32.mrb[0].mxu0
    %v7501 = vadd.f32 %v7212, %v7500
    %v7502 = vpop.f32.mrb[0].mxu0
    %7503 = vdwg.mxu0
    %7504 = vmatprep.subr.bf16.mxu0 0
    %7505 = vmatpush1.bf16.msra.mxu0 %v3443
    %7506 = vmatprep.subr.bf16.mxu0 0
    %7507 = vmatpush1.bf16.msra.mxu0 %v3444
    %7508 = vmatprep.subr.bf16.mxu0 0
    %7509 = vmatpush1.bf16.msra.mxu0 %v3445
    %7510 = vmatprep.subr.bf16.mxu0 0
    %7511 = vmatpush1.bf16.msra.mxu0 %v3446
    %7512 = vmatprep.subr.bf16.mxu0 0
    %7513 = vmatpush1.bf16.msra.mxu0 %v3447
    %7514 = vmatprep.subr.bf16.mxu0 0
    %7515 = vmatpush1.bf16.msra.mxu0 %v3448
    %7516 = vmatprep.subr.bf16.mxu0 0
    %7517 = vmatpush1.bf16.msra.mxu0 %v3449
    %7518 = vmatprep.subr.bf16.mxu0 0
    %7519 = vmatpush1.bf16.msra.mxu0 %v3450
    %7520 = vmatprep.subr.bf16.mxu0 0
    %7521 = vmatpush1.bf16.msra.mxu0 %v3451
    %7522 = vmatprep.subr.bf16.mxu0 0
    %7523 = vmatpush1.bf16.msra.mxu0 %v3452
    %7524 = vmatprep.subr.bf16.mxu0 0
    %7525 = vmatpush1.bf16.msra.mxu0 %v3453
    %7526 = vmatprep.subr.bf16.mxu0 0
    %7527 = vmatpush1.bf16.msra.mxu0 %v3454
    %7528 = vmatprep.subr.bf16.mxu0 0
    %7529 = vmatpush1.bf16.msra.mxu0 %v3455
    %7530 = vmatprep.subr.bf16.mxu0 0
    %7531 = vmatpush1.bf16.msra.mxu0 %v3456
    %7532 = vmatprep.subr.bf16.mxu0 0
    %7533 = vmatpush1.bf16.msra.mxu0 %v3457
    %7534 = vmatprep.subr.bf16.mxu0 0
    %7535 = vmatpush1.bf16.msra.mxu0 %v3458
    %7536 = vmatprep.mubr.bf16.mxu0 %v638
    %7537 = vmatmul.mubr.bf16.gmra.mrb[0].mxu0 %v637
    %v7538 = vpop.f32.mrb[0].mxu0
    %v7539 = vadd.f32 %v7250, %v7538
    %v7540 = vpop.f32.mrb[0].mxu0
    %v7541 = vpop.f32.mrb[0].mxu0
    %v7542 = vadd.f32 %v7253, %v7541
    %v7543 = vpop.f32.mrb[0].mxu0
    %7544 = vmatprep.mubr.bf16.mxu0 %v670
    %7545 = vmatmul.mubr.bf16.gmra.mrb[0].mxu0 %v669
    %v7546 = vpop.f32.mrb[0].mxu0
    %v7547 = vadd.f32 %v7258, %v7546
    %v7548 = vpop.f32.mrb[0].mxu0
    %v7549 = vpop.f32.mrb[0].mxu0
    %v7550 = vadd.f32 %v7261, %v7549
    %v7551 = vpop.f32.mrb[0].mxu0
    %7552 = vmatprep.mubr.bf16.mxu0 %v702
    %7553 = vmatmul.mubr.bf16.gmra.mrb[0].mxu0 %v701
    %v7554 = vpop.f32.mrb[0].mxu0
    %v7555 = vadd.f32 %v7266, %v7554
    %v7556 = vpop.f32.mrb[0].mxu0
    %v7557 = vpop.f32.mrb[0].mxu0
    %v7558 = vadd.f32 %v7269, %v7557
    %v7559 = vpop.f32.mrb[0].mxu0
    %7560 = vmatprep.mubr.bf16.mxu0 %v734
    %7561 = vmatmul.mubr.bf16.gmra.mrb[0].mxu0 %v733
    %v7562 = vpop.f32.mrb[0].mxu0
    %v7563 = vadd.f32 %v7274, %v7562
    %v7564 = vpop.f32.mrb[0].mxu0
    %v7565 = vpop.f32.mrb[0].mxu0
    %v7566 = vadd.f32 %v7277, %v7565
    %v7567 = vpop.f32.mrb[0].mxu0
    %7568 = vmatprep.mubr.bf16.mxu0 %v766
    %7569 = vmatmul.mubr.bf16.gmra.mrb[0].mxu0 %v765
    %v7570 = vpop.f32.mrb[0].mxu0
    %v7571 = vadd.f32 %v7282, %v7570
    %v7572 = vpop.f32.mrb[0].mxu0
    %v7573 = vpop.f32.mrb[0].mxu0
    %v7574 = vadd.f32 %v7285, %v7573
    %v7575 = vpop.f32.mrb[0].mxu0
    %7576 = vmatprep.mubr.bf16.mxu0 %v798
    %7577 = vmatmul.mubr.bf16.gmra.mrb[0].mxu0 %v797
    %v7578 = vpop.f32.mrb[0].mxu0
    %v7579 = vadd.f32 %v7290, %v7578
    %v7580 = vpop.f32.mrb[0].mxu0
    %v7581 = vpop.f32.mrb[0].mxu0
    %v7582 = vadd.f32 %v7293, %v7581
    %v7583 = vpop.f32.mrb[0].mxu0
    %7584 = vmatprep.mubr.bf16.mxu0 %v830
    %7585 = vmatmul.mubr.bf16.gmra.mrb[0].mxu0 %v829
    %v7586 = vpop.f32.mrb[0].mxu0
    %v7587 = vadd.f32 %v7298, %v7586
    %v7588 = vpop.f32.mrb[0].mxu0
    %v7589 = vpop.f32.mrb[0].mxu0
    %v7590 = vadd.f32 %v7301, %v7589
    %v7591 = vpop.f32.mrb[0].mxu0
    %7592 = vmatprep.mubr.bf16.mxu0 %v862
    %7593 = vmatmul.mubr.bf16.gmra.mrb[0].mxu0 %v861
    %v7594 = vpop.f32.mrb[0].mxu0
    %v7595 = vadd.f32 %v7306, %v7594
    %v7596 = vpop.f32.mrb[0].mxu0
    %v7597 = vpop.f32.mrb[0].mxu0
    %v7598 = vadd.f32 %v7309, %v7597
    %v7599 = vpop.f32.mrb[0].mxu0
    %7600 = vmatprep.mubr.bf16.mxu0 %v894
    %7601 = vmatmul.mubr.bf16.gmra.mrb[0].mxu0 %v893
    %v7602 = vpop.f32.mrb[0].mxu0
    %v7603 = vadd.f32 %v7314, %v7602
    %v7604 = vpop.f32.mrb[0].mxu0
    %v7605 = vpop.f32.mrb[0].mxu0
    %v7606 = vadd.f32 %v7317, %v7605
    %v7607 = vpop.f32.mrb[0].mxu0
    %7608 = vmatprep.mubr.bf16.mxu0 %v926
    %7609 = vmatmul.mubr.bf16.gmra.mrb[0].mxu0 %v925
    %v7610 = vpop.f32.mrb[0].mxu0
    %v7611 = vadd.f32 %v7322, %v7610
    %v7612 = vpop.f32.mrb[0].mxu0
    %v7613 = vpop.f32.mrb[0].mxu0
    %v7614 = vadd.f32 %v7325, %v7613
    %v7615 = vpop.f32.mrb[0].mxu0
    %7616 = vmatprep.mubr.bf16.mxu0 %v958
    %7617 = vmatmul.mubr.bf16.gmra.mrb[0].mxu0 %v957
    %v7618 = vpop.f32.mrb[0].mxu0
    %v7619 = vadd.f32 %v7330, %v7618
    %v7620 = vpop.f32.mrb[0].mxu0
    %v7621 = vpop.f32.mrb[0].mxu0
    %v7622 = vadd.f32 %v7333, %v7621
    %v7623 = vpop.f32.mrb[0].mxu0
    %7624 = vmatprep.mubr.bf16.mxu0 %v990
    %7625 = vmatmul.mubr.bf16.gmra.mrb[0].mxu0 %v989
    %v7626 = vpop.f32.mrb[0].mxu0
    %v7627 = vadd.f32 %v7338, %v7626
    %v7628 = vpop.f32.mrb[0].mxu0
    %v7629 = vpop.f32.mrb[0].mxu0
    %v7630 = vadd.f32 %v7341, %v7629
    %v7631 = vpop.f32.mrb[0].mxu0
    %7632 = vmatprep.mubr.bf16.mxu0 %v1022
    %7633 = vmatmul.mubr.bf16.gmra.mrb[0].mxu0 %v1021
    %v7634 = vpop.f32.mrb[0].mxu0
    %v7635 = vadd.f32 %v7346, %v7634
    %v7636 = vpop.f32.mrb[0].mxu0
    %v7637 = vpop.f32.mrb[0].mxu0
    %v7638 = vadd.f32 %v7349, %v7637
    %v7639 = vpop.f32.mrb[0].mxu0
    %7640 = vmatprep.mubr.bf16.mxu0 %v1054
    %7641 = vmatmul.mubr.bf16.gmra.mrb[0].mxu0 %v1053
    %v7642 = vpop.f32.mrb[0].mxu0
    %v7643 = vadd.f32 %v7354, %v7642
    %v7644 = vpop.f32.mrb[0].mxu0
    %v7645 = vpop.f32.mrb[0].mxu0
    %v7646 = vadd.f32 %v7357, %v7645
    %v7647 = vpop.f32.mrb[0].mxu0
    %7648 = vmatprep.mubr.bf16.mxu0 %v1086
    %7649 = vmatmul.mubr.bf16.gmra.mrb[0].mxu0 %v1085
    %v7650 = vpop.f32.mrb[0].mxu0
    %v7651 = vadd.f32 %v7362, %v7650
    %v7652 = vpop.f32.mrb[0].mxu0
    %v7653 = vpop.f32.mrb[0].mxu0
    %v7654 = vadd.f32 %v7365, %v7653
    %v7655 = vpop.f32.mrb[0].mxu0
    %7656 = vmatprep.mubr.bf16.mxu0 %v1118
    %7657 = vmatmul.mubr.bf16.gmra.mrb[0].mxu0 %v1117
    %v7658 = vpop.f32.mrb[0].mxu0
    %v7659 = vadd.f32 %v7370, %v7658
    %v7660 = vpop.f32.mrb[0].mxu0
    %v7661 = vpop.f32.mrb[0].mxu0
    %v7662 = vadd.f32 %v7373, %v7661
    %v7663 = vpop.f32.mrb[0].mxu0
    %7664 = vmatprep.mubr.bf16.mxu0 %v1150
    %7665 = vmatmul.mubr.bf16.gmra.mrb[0].mxu0 %v1149
    %v7666 = vpop.f32.mrb[0].mxu0
    %v7667 = vadd.f32 %v7378, %v7666
    %v7668 = vpop.f32.mrb[0].mxu0
    %v7669 = vpop.f32.mrb[0].mxu0
    %v7670 = vadd.f32 %v7381, %v7669
    %v7671 = vpop.f32.mrb[0].mxu0
    %7672 = vmatprep.mubr.bf16.mxu0 %v1182
    %7673 = vmatmul.mubr.bf16.gmra.mrb[0].mxu0 %v1181
    %v7674 = vpop.f32.mrb[0].mxu0
    %v7675 = vadd.f32 %v7386, %v7674
    %v7676 = vpop.f32.mrb[0].mxu0
    %v7677 = vpop.f32.mrb[0].mxu0
    %v7678 = vadd.f32 %v7389, %v7677
    %v7679 = vpop.f32.mrb[0].mxu0
    %7680 = vmatprep.mubr.bf16.mxu0 %v1214
    %7681 = vmatmul.mubr.bf16.gmra.mrb[0].mxu0 %v1213
    %v7682 = vpop.f32.mrb[0].mxu0
    %v7683 = vadd.f32 %v7394, %v7682
    %v7684 = vpop.f32.mrb[0].mxu0
    %v7685 = vpop.f32.mrb[0].mxu0
    %v7686 = vadd.f32 %v7397, %v7685
    %v7687 = vpop.f32.mrb[0].mxu0
    %7688 = vmatprep.mubr.bf16.mxu0 %v1246
    %7689 = vmatmul.mubr.bf16.gmra.mrb[0].mxu0 %v1245
    %v7690 = vpop.f32.mrb[0].mxu0
    %v7691 = vadd.f32 %v7402, %v7690
    %v7692 = vpop.f32.mrb[0].mxu0
    %v7693 = vpop.f32.mrb[0].mxu0
    %v7694 = vadd.f32 %v7405, %v7693
    %v7695 = vpop.f32.mrb[0].mxu0
    %7696 = vmatprep.mubr.bf16.mxu0 %v1278
    %7697 = vmatmul.mubr.bf16.gmra.mrb[0].mxu0 %v1277
    %v7698 = vpop.f32.mrb[0].mxu0
    %v7699 = vadd.f32 %v7410, %v7698
    %v7700 = vpop.f32.mrb[0].mxu0
    %v7701 = vpop.f32.mrb[0].mxu0
    %v7702 = vadd.f32 %v7413, %v7701
    %v7703 = vpop.f32.mrb[0].mxu0
    %7704 = vmatprep.mubr.bf16.mxu0 %v1310
    %7705 = vmatmul.mubr.bf16.gmra.mrb[0].mxu0 %v1309
    %v7706 = vpop.f32.mrb[0].mxu0
    %v7707 = vadd.f32 %v7418, %v7706
    %v7708 = vpop.f32.mrb[0].mxu0
    %v7709 = vpop.f32.mrb[0].mxu0
    %v7710 = vadd.f32 %v7421, %v7709
    %v7711 = vpop.f32.mrb[0].mxu0
    %7712 = vmatprep.mubr.bf16.mxu0 %v1342
    %7713 = vmatmul.mubr.bf16.gmra.mrb[0].mxu0 %v1341
    %v7714 = vpop.f32.mrb[0].mxu0
    %v7715 = vadd.f32 %v7426, %v7714
    %v7716 = vpop.f32.mrb[0].mxu0
    %v7717 = vpop.f32.mrb[0].mxu0
    %v7718 = vadd.f32 %v7429, %v7717
    %v7719 = vpop.f32.mrb[0].mxu0
    %7720 = vmatprep.mubr.bf16.mxu0 %v1374
    %7721 = vmatmul.mubr.bf16.gmra.mrb[0].mxu0 %v1373
    %v7722 = vpop.f32.mrb[0].mxu0
    %v7723 = vadd.f32 %v7434, %v7722
    %v7724 = vpop.f32.mrb[0].mxu0
    %v7725 = vpop.f32.mrb[0].mxu0
    %v7726 = vadd.f32 %v7437, %v7725
    %v7727 = vpop.f32.mrb[0].mxu0
    %7728 = vmatprep.mubr.bf16.mxu0 %v1406
    %7729 = vmatmul.mubr.bf16.gmra.mrb[0].mxu0 %v1405
    %v7730 = vpop.f32.mrb[0].mxu0
    %v7731 = vadd.f32 %v7442, %v7730
    %v7732 = vpop.f32.mrb[0].mxu0
    %v7733 = vpop.f32.mrb[0].mxu0
    %v7734 = vadd.f32 %v7445, %v7733
    %v7735 = vpop.f32.mrb[0].mxu0
    %7736 = vmatprep.mubr.bf16.mxu0 %v1438
    %7737 = vmatmul.mubr.bf16.gmra.mrb[0].mxu0 %v1437
    %v7738 = vpop.f32.mrb[0].mxu0
    %v7739 = vadd.f32 %v7450, %v7738
    %v7740 = vpop.f32.mrb[0].mxu0
    %v7741 = vpop.f32.mrb[0].mxu0
    %v7742 = vadd.f32 %v7453, %v7741
    %v7743 = vpop.f32.mrb[0].mxu0
    %7744 = vmatprep.mubr.bf16.mxu0 %v1470
    %7745 = vmatmul.mubr.bf16.gmra.mrb[0].mxu0 %v1469
    %v7746 = vpop.f32.mrb[0].mxu0
    %v7747 = vadd.f32 %v7458, %v7746
    %v7748 = vpop.f32.mrb[0].mxu0
    %v7749 = vpop.f32.mrb[0].mxu0
    %v7750 = vadd.f32 %v7461, %v7749
    %v7751 = vpop.f32.mrb[0].mxu0
    %7752 = vmatprep.mubr.bf16.mxu0 %v1502
    %7753 = vmatmul.mubr.bf16.gmra.mrb[0].mxu0 %v1501
    %v7754 = vpop.f32.mrb[0].mxu0
    %v7755 = vadd.f32 %v7466, %v7754
    %v7756 = vpop.f32.mrb[0].mxu0
    %v7757 = vpop.f32.mrb[0].mxu0
    %v7758 = vadd.f32 %v7469, %v7757
    %v7759 = vpop.f32.mrb[0].mxu0
    %7760 = vmatprep.mubr.bf16.mxu0 %v1534
    %7761 = vmatmul.mubr.bf16.gmra.mrb[0].mxu0 %v1533
    %v7762 = vpop.f32.mrb[0].mxu0
    %v7763 = vadd.f32 %v7474, %v7762
    %v7764 = vpop.f32.mrb[0].mxu0
    %v7765 = vpop.f32.mrb[0].mxu0
    %v7766 = vadd.f32 %v7477, %v7765
    %v7767 = vpop.f32.mrb[0].mxu0
    %7768 = vmatprep.mubr.bf16.mxu0 %v1566
    %7769 = vmatmul.mubr.bf16.gmra.mrb[0].mxu0 %v1565
    %v7770 = vpop.f32.mrb[0].mxu0
    %v7771 = vadd.f32 %v7482, %v7770
    %v7772 = vpop.f32.mrb[0].mxu0
    %v7773 = vpop.f32.mrb[0].mxu0
    %v7774 = vadd.f32 %v7485, %v7773
    %v7775 = vpop.f32.mrb[0].mxu0
    %7776 = vmatprep.mubr.bf16.mxu0 %v1598
    %7777 = vmatmul.mubr.bf16.gmra.mrb[0].mxu0 %v1597
    %v7778 = vpop.f32.mrb[0].mxu0
    %v7779 = vadd.f32 %v7490, %v7778
    %v7780 = vpop.f32.mrb[0].mxu0
    %v7781 = vpop.f32.mrb[0].mxu0
    %v7782 = vadd.f32 %v7493, %v7781
    %v7783 = vpop.f32.mrb[0].mxu0
    %7784 = vmatprep.mubr.bf16.mxu0 %v1630
    %7785 = vmatmul.mubr.bf16.gmra.mrb[0].mxu0 %v1629
    %v7786 = vpop.f32.mrb[0].mxu0
    %v7787 = vadd.f32 %v7498, %v7786
    %v7788 = vpop.f32.mrb[0].mxu0
    %v7789 = vpop.f32.mrb[0].mxu0
    %v7790 = vadd.f32 %v7501, %v7789
    %v7791 = vpop.f32.mrb[0].mxu0
    %7792 = vdwg.mxu0
    %7793 = vmatprep.subr.bf16.mxu0 0
    %7794 = vmatpush1.bf16.msra.mxu0 %v3459
    %7795 = vmatprep.subr.bf16.mxu0 0
    %7796 = vmatpush1.bf16.msra.mxu0 %v3460
    %7797 = vmatprep.subr.bf16.mxu0 0
    %7798 = vmatpush1.bf16.msra.mxu0 %v3461
    %7799 = vmatprep.subr.bf16.mxu0 0
    %7800 = vmatpush1.bf16.msra.mxu0 %v3462
    %7801 = vmatprep.subr.bf16.mxu0 0
    %7802 = vmatpush1.bf16.msra.mxu0 %v3463
    %7803 = vmatprep.subr.bf16.mxu0 0
    %7804 = vmatpush1.bf16.msra.mxu0 %v3464
    %7805 = vmatprep.subr.bf16.mxu0 0
    %7806 = vmatpush1.bf16.msra.mxu0 %v3465
    %7807 = vmatprep.subr.bf16.mxu0 0
    %7808 = vmatpush1.bf16.msra.mxu0 %v3466
    %7809 = vmatprep.subr.bf16.mxu0 0
    %7810 = vmatpush1.bf16.msra.mxu0 %v3467
    %7811 = vmatprep.subr.bf16.mxu0 0
    %7812 = vmatpush1.bf16.msra.mxu0 %v3468
    %7813 = vmatprep.subr.bf16.mxu0 0
    %7814 = vmatpush1.bf16.msra.mxu0 %v3469
    %7815 = vmatprep.subr.bf16.mxu0 0
    %7816 = vmatpush1.bf16.msra.mxu0 %v3470
    %7817 = vmatprep.subr.bf16.mxu0 0
    %7818 = vmatpush1.bf16.msra.mxu0 %v3471
    %7819 = vmatprep.subr.bf16.mxu0 0
    %7820 = vmatpush1.bf16.msra.mxu0 %v3472
    %7821 = vmatprep.subr.bf16.mxu0 0
    %7822 = vmatpush1.bf16.msra.mxu0 %v3473
    %7823 = vmatprep.subr.bf16.mxu0 0
    %7824 = vmatpush1.bf16.msra.mxu0 %v3474
    %7825 = vmatprep.mubr.bf16.mxu0 %v640
    %7826 = vmatmul.mubr.bf16.gmra.mrb[0].mxu0 %v639
    %v7827 = vpop.f32.mrb[0].mxu0
    %v7828 = vadd.f32 %v7539, %v7827
    %v7829 = vpop.f32.mrb[0].mxu0
    %v7830 = vpop.f32.mrb[0].mxu0
    %v7831 = vadd.f32 %v7542, %v7830
    %v7832 = vpop.f32.mrb[0].mxu0
    %7833 = vmatprep.mubr.bf16.mxu0 %v672
    %7834 = vmatmul.mubr.bf16.gmra.mrb[0].mxu0 %v671
    %v7835 = vpop.f32.mrb[0].mxu0
    %v7836 = vadd.f32 %v7547, %v7835
    %v7837 = vpop.f32.mrb[0].mxu0
    %v7838 = vpop.f32.mrb[0].mxu0
    %v7839 = vadd.f32 %v7550, %v7838
    %v7840 = vpop.f32.mrb[0].mxu0
    %7841 = vmatprep.mubr.bf16.mxu0 %v704
    %7842 = vmatmul.mubr.bf16.gmra.mrb[0].mxu0 %v703
    %v7843 = vpop.f32.mrb[0].mxu0
    %v7844 = vadd.f32 %v7555, %v7843
    %v7845 = vpop.f32.mrb[0].mxu0
    %v7846 = vpop.f32.mrb[0].mxu0
    %v7847 = vadd.f32 %v7558, %v7846
    %v7848 = vpop.f32.mrb[0].mxu0
    %7849 = vmatprep.mubr.bf16.mxu0 %v736
    %7850 = vmatmul.mubr.bf16.gmra.mrb[0].mxu0 %v735
    %v7851 = vpop.f32.mrb[0].mxu0
    %v7852 = vadd.f32 %v7563, %v7851
    %v7853 = vpop.f32.mrb[0].mxu0
    %v7854 = vpop.f32.mrb[0].mxu0
    %v7855 = vadd.f32 %v7566, %v7854
    %v7856 = vpop.f32.mrb[0].mxu0
    %7857 = vmatprep.mubr.bf16.mxu0 %v768
    %7858 = vmatmul.mubr.bf16.gmra.mrb[0].mxu0 %v767
    %v7859 = vpop.f32.mrb[0].mxu0
    %v7860 = vadd.f32 %v7571, %v7859
    %v7861 = vpop.f32.mrb[0].mxu0
    %v7862 = vpop.f32.mrb[0].mxu0
    %v7863 = vadd.f32 %v7574, %v7862
    %v7864 = vpop.f32.mrb[0].mxu0
    %7865 = vmatprep.mubr.bf16.mxu0 %v800
    %7866 = vmatmul.mubr.bf16.gmra.mrb[0].mxu0 %v799
    %v7867 = vpop.f32.mrb[0].mxu0
    %v7868 = vadd.f32 %v7579, %v7867
    %v7869 = vpop.f32.mrb[0].mxu0
    %v7870 = vpop.f32.mrb[0].mxu0
    %v7871 = vadd.f32 %v7582, %v7870
    %v7872 = vpop.f32.mrb[0].mxu0
    %7873 = vmatprep.mubr.bf16.mxu0 %v832
    %7874 = vmatmul.mubr.bf16.gmra.mrb[0].mxu0 %v831
    %v7875 = vpop.f32.mrb[0].mxu0
    %v7876 = vadd.f32 %v7587, %v7875
    %v7877 = vpop.f32.mrb[0].mxu0
    %v7878 = vpop.f32.mrb[0].mxu0
    %v7879 = vadd.f32 %v7590, %v7878
    %v7880 = vpop.f32.mrb[0].mxu0
    %7881 = vmatprep.mubr.bf16.mxu0 %v864
    %7882 = vmatmul.mubr.bf16.gmra.mrb[0].mxu0 %v863
    %v7883 = vpop.f32.mrb[0].mxu0
    %v7884 = vadd.f32 %v7595, %v7883
    %v7885 = vpop.f32.mrb[0].mxu0
    %v7886 = vpop.f32.mrb[0].mxu0
    %v7887 = vadd.f32 %v7598, %v7886
    %v7888 = vpop.f32.mrb[0].mxu0
    %7889 = vmatprep.mubr.bf16.mxu0 %v896
    %7890 = vmatmul.mubr.bf16.gmra.mrb[0].mxu0 %v895
    %v7891 = vpop.f32.mrb[0].mxu0
    %v7892 = vadd.f32 %v7603, %v7891
    %v7893 = vpop.f32.mrb[0].mxu0
    %v7894 = vpop.f32.mrb[0].mxu0
    %v7895 = vadd.f32 %v7606, %v7894
    %v7896 = vpop.f32.mrb[0].mxu0
    %7897 = vmatprep.mubr.bf16.mxu0 %v928
    %7898 = vmatmul.mubr.bf16.gmra.mrb[0].mxu0 %v927
    %v7899 = vpop.f32.mrb[0].mxu0
    %v7900 = vadd.f32 %v7611, %v7899
    %v7901 = vpop.f32.mrb[0].mxu0
    %v7902 = vpop.f32.mrb[0].mxu0
    %v7903 = vadd.f32 %v7614, %v7902
    %v7904 = vpop.f32.mrb[0].mxu0
    %7905 = vmatprep.mubr.bf16.mxu0 %v960
    %7906 = vmatmul.mubr.bf16.gmra.mrb[0].mxu0 %v959
    %v7907 = vpop.f32.mrb[0].mxu0
    %v7908 = vadd.f32 %v7619, %v7907
    %v7909 = vpop.f32.mrb[0].mxu0
    %v7910 = vpop.f32.mrb[0].mxu0
    %v7911 = vadd.f32 %v7622, %v7910
    %v7912 = vpop.f32.mrb[0].mxu0
    %7913 = vmatprep.mubr.bf16.mxu0 %v992
    %7914 = vmatmul.mubr.bf16.gmra.mrb[0].mxu0 %v991
    %v7915 = vpop.f32.mrb[0].mxu0
    %v7916 = vadd.f32 %v7627, %v7915
    %v7917 = vpop.f32.mrb[0].mxu0
    %v7918 = vpop.f32.mrb[0].mxu0
    %v7919 = vadd.f32 %v7630, %v7918
    %v7920 = vpop.f32.mrb[0].mxu0
    %7921 = vmatprep.mubr.bf16.mxu0 %v1024
    %7922 = vmatmul.mubr.bf16.gmra.mrb[0].mxu0 %v1023
    %v7923 = vpop.f32.mrb[0].mxu0
    %v7924 = vadd.f32 %v7635, %v7923
    %v7925 = vpop.f32.mrb[0].mxu0
    %v7926 = vpop.f32.mrb[0].mxu0
    %v7927 = vadd.f32 %v7638, %v7926
    %v7928 = vpop.f32.mrb[0].mxu0
    %7929 = vmatprep.mubr.bf16.mxu0 %v1056
    %7930 = vmatmul.mubr.bf16.gmra.mrb[0].mxu0 %v1055
    %v7931 = vpop.f32.mrb[0].mxu0
    %v7932 = vadd.f32 %v7643, %v7931
    %v7933 = vpop.f32.mrb[0].mxu0
    %v7934 = vpop.f32.mrb[0].mxu0
    %v7935 = vadd.f32 %v7646, %v7934
    %v7936 = vpop.f32.mrb[0].mxu0
    %7937 = vmatprep.mubr.bf16.mxu0 %v1088
    %7938 = vmatmul.mubr.bf16.gmra.mrb[0].mxu0 %v1087
    %v7939 = vpop.f32.mrb[0].mxu0
    %v7940 = vadd.f32 %v7651, %v7939
    %v7941 = vpop.f32.mrb[0].mxu0
    %v7942 = vpop.f32.mrb[0].mxu0
    %v7943 = vadd.f32 %v7654, %v7942
    %v7944 = vpop.f32.mrb[0].mxu0
    %7945 = vmatprep.mubr.bf16.mxu0 %v1120
    %7946 = vmatmul.mubr.bf16.gmra.mrb[0].mxu0 %v1119
    %v7947 = vpop.f32.mrb[0].mxu0
    %v7948 = vadd.f32 %v7659, %v7947
    %v7949 = vpop.f32.mrb[0].mxu0
    %v7950 = vpop.f32.mrb[0].mxu0
    %v7951 = vadd.f32 %v7662, %v7950
    %v7952 = vpop.f32.mrb[0].mxu0
    %7953 = vmatprep.mubr.bf16.mxu0 %v1152
    %7954 = vmatmul.mubr.bf16.gmra.mrb[0].mxu0 %v1151
    %v7955 = vpop.f32.mrb[0].mxu0
    %v7956 = vadd.f32 %v7667, %v7955
    %v7957 = vpop.f32.mrb[0].mxu0
    %v7958 = vpop.f32.mrb[0].mxu0
    %v7959 = vadd.f32 %v7670, %v7958
    %v7960 = vpop.f32.mrb[0].mxu0
    %7961 = vmatprep.mubr.bf16.mxu0 %v1184
    %7962 = vmatmul.mubr.bf16.gmra.mrb[0].mxu0 %v1183
    %v7963 = vpop.f32.mrb[0].mxu0
    %v7964 = vadd.f32 %v7675, %v7963
    %v7965 = vpop.f32.mrb[0].mxu0
    %v7966 = vpop.f32.mrb[0].mxu0
    %v7967 = vadd.f32 %v7678, %v7966
    %v7968 = vpop.f32.mrb[0].mxu0
    %7969 = vmatprep.mubr.bf16.mxu0 %v1216
    %7970 = vmatmul.mubr.bf16.gmra.mrb[0].mxu0 %v1215
    %v7971 = vpop.f32.mrb[0].mxu0
    %v7972 = vadd.f32 %v7683, %v7971
    %v7973 = vpop.f32.mrb[0].mxu0
    %v7974 = vpop.f32.mrb[0].mxu0
    %v7975 = vadd.f32 %v7686, %v7974
    %v7976 = vpop.f32.mrb[0].mxu0
    %7977 = vmatprep.mubr.bf16.mxu0 %v1248
    %7978 = vmatmul.mubr.bf16.gmra.mrb[0].mxu0 %v1247
    %v7979 = vpop.f32.mrb[0].mxu0
    %v7980 = vadd.f32 %v7691, %v7979
    %v7981 = vpop.f32.mrb[0].mxu0
    %v7982 = vpop.f32.mrb[0].mxu0
    %v7983 = vadd.f32 %v7694, %v7982
    %v7984 = vpop.f32.mrb[0].mxu0
    %7985 = vmatprep.mubr.bf16.mxu0 %v1280
    %7986 = vmatmul.mubr.bf16.gmra.mrb[0].mxu0 %v1279
    %v7987 = vpop.f32.mrb[0].mxu0
    %v7988 = vadd.f32 %v7699, %v7987
    %v7989 = vpop.f32.mrb[0].mxu0
    %v7990 = vpop.f32.mrb[0].mxu0
    %v7991 = vadd.f32 %v7702, %v7990
    %v7992 = vpop.f32.mrb[0].mxu0
    %7993 = vmatprep.mubr.bf16.mxu0 %v1312
    %7994 = vmatmul.mubr.bf16.gmra.mrb[0].mxu0 %v1311
    %v7995 = vpop.f32.mrb[0].mxu0
    %v7996 = vadd.f32 %v7707, %v7995
    %v7997 = vpop.f32.mrb[0].mxu0
    %v7998 = vpop.f32.mrb[0].mxu0
    %v7999 = vadd.f32 %v7710, %v7998
    %v8000 = vpop.f32.mrb[0].mxu0
    %8001 = vmatprep.mubr.bf16.mxu0 %v1344
    %8002 = vmatmul.mubr.bf16.gmra.mrb[0].mxu0 %v1343
    %v8003 = vpop.f32.mrb[0].mxu0
    %v8004 = vadd.f32 %v7715, %v8003
    %v8005 = vpop.f32.mrb[0].mxu0
    %v8006 = vpop.f32.mrb[0].mxu0
    %v8007 = vadd.f32 %v7718, %v8006
    %v8008 = vpop.f32.mrb[0].mxu0
    %8009 = vmatprep.mubr.bf16.mxu0 %v1376
    %8010 = vmatmul.mubr.bf16.gmra.mrb[0].mxu0 %v1375
    %v8011 = vpop.f32.mrb[0].mxu0
    %v8012 = vadd.f32 %v7723, %v8011
    %v8013 = vpop.f32.mrb[0].mxu0
    %v8014 = vpop.f32.mrb[0].mxu0
    %v8015 = vadd.f32 %v7726, %v8014
    %v8016 = vpop.f32.mrb[0].mxu0
    %8017 = vmatprep.mubr.bf16.mxu0 %v1408
    %8018 = vmatmul.mubr.bf16.gmra.mrb[0].mxu0 %v1407
    %v8019 = vpop.f32.mrb[0].mxu0
    %v8020 = vadd.f32 %v7731, %v8019
    %v8021 = vpop.f32.mrb[0].mxu0
    %v8022 = vpop.f32.mrb[0].mxu0
    %v8023 = vadd.f32 %v7734, %v8022
    %v8024 = vpop.f32.mrb[0].mxu0
    %8025 = vmatprep.mubr.bf16.mxu0 %v1440
    %8026 = vmatmul.mubr.bf16.gmra.mrb[0].mxu0 %v1439
    %v8027 = vpop.f32.mrb[0].mxu0
    %v8028 = vadd.f32 %v7739, %v8027
    %v8029 = vpop.f32.mrb[0].mxu0
    %v8030 = vpop.f32.mrb[0].mxu0
    %v8031 = vadd.f32 %v7742, %v8030
    %v8032 = vpop.f32.mrb[0].mxu0
    %8033 = vmatprep.mubr.bf16.mxu0 %v1472
    %8034 = vmatmul.mubr.bf16.gmra.mrb[0].mxu0 %v1471
    %v8035 = vpop.f32.mrb[0].mxu0
    %v8036 = vadd.f32 %v7747, %v8035
    %v8037 = vpop.f32.mrb[0].mxu0
    %v8038 = vpop.f32.mrb[0].mxu0
    %v8039 = vadd.f32 %v7750, %v8038
    %v8040 = vpop.f32.mrb[0].mxu0
    %8041 = vmatprep.mubr.bf16.mxu0 %v1504
    %8042 = vmatmul.mubr.bf16.gmra.mrb[0].mxu0 %v1503
    %v8043 = vpop.f32.mrb[0].mxu0
    %v8044 = vadd.f32 %v7755, %v8043
    %v8045 = vpop.f32.mrb[0].mxu0
    %v8046 = vpop.f32.mrb[0].mxu0
    %v8047 = vadd.f32 %v7758, %v8046
    %v8048 = vpop.f32.mrb[0].mxu0
    %8049 = vmatprep.mubr.bf16.mxu0 %v1536
    %8050 = vmatmul.mubr.bf16.gmra.mrb[0].mxu0 %v1535
    %v8051 = vpop.f32.mrb[0].mxu0
    %v8052 = vadd.f32 %v7763, %v8051
    %v8053 = vpop.f32.mrb[0].mxu0
    %v8054 = vpop.f32.mrb[0].mxu0
    %v8055 = vadd.f32 %v7766, %v8054
    %v8056 = vpop.f32.mrb[0].mxu0
    %8057 = vmatprep.mubr.bf16.mxu0 %v1568
    %8058 = vmatmul.mubr.bf16.gmra.mrb[0].mxu0 %v1567
    %v8059 = vpop.f32.mrb[0].mxu0
    %v8060 = vadd.f32 %v7771, %v8059
    %v8061 = vpop.f32.mrb[0].mxu0
    %v8062 = vpop.f32.mrb[0].mxu0
    %v8063 = vadd.f32 %v7774, %v8062
    %v8064 = vpop.f32.mrb[0].mxu0
    %8065 = vmatprep.mubr.bf16.mxu0 %v1600
    %8066 = vmatmul.mubr.bf16.gmra.mrb[0].mxu0 %v1599
    %v8067 = vpop.f32.mrb[0].mxu0
    %v8068 = vadd.f32 %v7779, %v8067
    %v8069 = vpop.f32.mrb[0].mxu0
    %v8070 = vpop.f32.mrb[0].mxu0
    %v8071 = vadd.f32 %v7782, %v8070
    %v8072 = vpop.f32.mrb[0].mxu0
    %8073 = vmatprep.mubr.bf16.mxu0 %v1632
    %8074 = vmatmul.mubr.bf16.gmra.mrb[0].mxu0 %v1631
    %v8075 = vpop.f32.mrb[0].mxu0
    %v8076 = vadd.f32 %v7787, %v8075
    %v8077 = vpop.f32.mrb[0].mxu0
    %v8078 = vpop.f32.mrb[0].mxu0
    %v8079 = vadd.f32 %v7790, %v8078
    %v8080 = vpop.f32.mrb[0].mxu0
    %8081 = vdwg.mxu0
    %8082 = vmatprep.subr.bf16.mxu0 0
    %8083 = vmatpush1.bf16.msra.mxu0 %v3475
    %8084 = vmatprep.subr.bf16.mxu0 0
    %8085 = vmatpush1.bf16.msra.mxu0 %v3476
    %8086 = vmatprep.subr.bf16.mxu0 0
    %8087 = vmatpush1.bf16.msra.mxu0 %v3477
    %8088 = vmatprep.subr.bf16.mxu0 0
    %8089 = vmatpush1.bf16.msra.mxu0 %v3478
    %8090 = vmatprep.subr.bf16.mxu0 0
    %8091 = vmatpush1.bf16.msra.mxu0 %v3479
    %8092 = vmatprep.subr.bf16.mxu0 0
    %8093 = vmatpush1.bf16.msra.mxu0 %v3480
    %8094 = vmatprep.subr.bf16.mxu0 0
    %8095 = vmatpush1.bf16.msra.mxu0 %v3481
    %8096 = vmatprep.subr.bf16.mxu0 0
    %8097 = vmatpush1.bf16.msra.mxu0 %v3482
    %8098 = vmatprep.subr.bf16.mxu0 0
    %8099 = vmatpush1.bf16.msra.mxu0 %v3483
    %8100 = vmatprep.subr.bf16.mxu0 0
    %8101 = vmatpush1.bf16.msra.mxu0 %v3484
    %8102 = vmatprep.subr.bf16.mxu0 0
    %8103 = vmatpush1.bf16.msra.mxu0 %v3485
    %8104 = vmatprep.subr.bf16.mxu0 0
    %8105 = vmatpush1.bf16.msra.mxu0 %v3486
    %8106 = vmatprep.subr.bf16.mxu0 0
    %8107 = vmatpush1.bf16.msra.mxu0 %v3487
    %8108 = vmatprep.subr.bf16.mxu0 0
    %8109 = vmatpush1.bf16.msra.mxu0 %v3488
    %8110 = vmatprep.subr.bf16.mxu0 0
    %8111 = vmatpush1.bf16.msra.mxu0 %v3489
    %8112 = vmatprep.subr.bf16.mxu0 0
    %8113 = vmatpush1.bf16.msra.mxu0 %v3490
    %8114 = vmatprep.mubr.bf16.mxu0 %v642
    %8115 = vmatmul.mubr.bf16.gmra.mrb[0].mxu0 %v641
    %v8116 = vpop.f32.mrb[0].mxu0
    %v8117 = vadd.f32 %v7828, %v8116
    %v8118 = vpop.f32.mrb[0].mxu0
    %v8119 = vpop.f32.mrb[0].mxu0
    %v8120 = vadd.f32 %v7831, %v8119
    %v8121 = vpop.f32.mrb[0].mxu0
    %8122 = vmatprep.mubr.bf16.mxu0 %v674
    %8123 = vmatmul.mubr.bf16.gmra.mrb[0].mxu0 %v673
    %v8124 = vpop.f32.mrb[0].mxu0
    %v8125 = vadd.f32 %v7836, %v8124
    %v8126 = vpop.f32.mrb[0].mxu0
    %v8127 = vpop.f32.mrb[0].mxu0
    %v8128 = vadd.f32 %v7839, %v8127
    %v8129 = vpop.f32.mrb[0].mxu0
    %8130 = vmatprep.mubr.bf16.mxu0 %v706
    %8131 = vmatmul.mubr.bf16.gmra.mrb[0].mxu0 %v705
    %v8132 = vpop.f32.mrb[0].mxu0
    %v8133 = vadd.f32 %v7844, %v8132
    %v8134 = vpop.f32.mrb[0].mxu0
    %v8135 = vpop.f32.mrb[0].mxu0
    %v8136 = vadd.f32 %v7847, %v8135
    %v8137 = vpop.f32.mrb[0].mxu0
    %8138 = vmatprep.mubr.bf16.mxu0 %v738
    %8139 = vmatmul.mubr.bf16.gmra.mrb[0].mxu0 %v737
    %v8140 = vpop.f32.mrb[0].mxu0
    %v8141 = vadd.f32 %v7852, %v8140
    %v8142 = vpop.f32.mrb[0].mxu0
    %v8143 = vpop.f32.mrb[0].mxu0
    %v8144 = vadd.f32 %v7855, %v8143
    %v8145 = vpop.f32.mrb[0].mxu0
    %8146 = vmatprep.mubr.bf16.mxu0 %v770
    %8147 = vmatmul.mubr.bf16.gmra.mrb[0].mxu0 %v769
    %v8148 = vpop.f32.mrb[0].mxu0
    %v8149 = vadd.f32 %v7860, %v8148
    %v8150 = vpop.f32.mrb[0].mxu0
    %v8151 = vpop.f32.mrb[0].mxu0
    %v8152 = vadd.f32 %v7863, %v8151
    %v8153 = vpop.f32.mrb[0].mxu0
    %8154 = vmatprep.mubr.bf16.mxu0 %v802
    %8155 = vmatmul.mubr.bf16.gmra.mrb[0].mxu0 %v801
    %v8156 = vpop.f32.mrb[0].mxu0
    %v8157 = vadd.f32 %v7868, %v8156
    %v8158 = vpop.f32.mrb[0].mxu0
    %v8159 = vpop.f32.mrb[0].mxu0
    %v8160 = vadd.f32 %v7871, %v8159
    %v8161 = vpop.f32.mrb[0].mxu0
    %8162 = vmatprep.mubr.bf16.mxu0 %v834
    %8163 = vmatmul.mubr.bf16.gmra.mrb[0].mxu0 %v833
    %v8164 = vpop.f32.mrb[0].mxu0
    %v8165 = vadd.f32 %v7876, %v8164
    %v8166 = vpop.f32.mrb[0].mxu0
    %v8167 = vpop.f32.mrb[0].mxu0
    %v8168 = vadd.f32 %v7879, %v8167
    %v8169 = vpop.f32.mrb[0].mxu0
    %8170 = vmatprep.mubr.bf16.mxu0 %v866
    %8171 = vmatmul.mubr.bf16.gmra.mrb[0].mxu0 %v865
    %v8172 = vpop.f32.mrb[0].mxu0
    %v8173 = vadd.f32 %v7884, %v8172
    %v8174 = vpop.f32.mrb[0].mxu0
    %v8175 = vpop.f32.mrb[0].mxu0
    %v8176 = vadd.f32 %v7887, %v8175
    %v8177 = vpop.f32.mrb[0].mxu0
    %8178 = vmatprep.mubr.bf16.mxu0 %v898
    %8179 = vmatmul.mubr.bf16.gmra.mrb[0].mxu0 %v897
    %v8180 = vpop.f32.mrb[0].mxu0
    %v8181 = vadd.f32 %v7892, %v8180
    %v8182 = vpop.f32.mrb[0].mxu0
    %v8183 = vpop.f32.mrb[0].mxu0
    %v8184 = vadd.f32 %v7895, %v8183
    %v8185 = vpop.f32.mrb[0].mxu0
    %8186 = vmatprep.mubr.bf16.mxu0 %v930
    %8187 = vmatmul.mubr.bf16.gmra.mrb[0].mxu0 %v929
    %v8188 = vpop.f32.mrb[0].mxu0
    %v8189 = vadd.f32 %v7900, %v8188
    %v8190 = vpop.f32.mrb[0].mxu0
    %v8191 = vpop.f32.mrb[0].mxu0
    %v8192 = vadd.f32 %v7903, %v8191
    %v8193 = vpop.f32.mrb[0].mxu0
    %8194 = vmatprep.mubr.bf16.mxu0 %v962
    %8195 = vmatmul.mubr.bf16.gmra.mrb[0].mxu0 %v961
    %v8196 = vpop.f32.mrb[0].mxu0
    %v8197 = vadd.f32 %v7908, %v8196
    %v8198 = vpop.f32.mrb[0].mxu0
    %v8199 = vpop.f32.mrb[0].mxu0
    %v8200 = vadd.f32 %v7911, %v8199
    %v8201 = vpop.f32.mrb[0].mxu0
    %8202 = vmatprep.mubr.bf16.mxu0 %v994
    %8203 = vmatmul.mubr.bf16.gmra.mrb[0].mxu0 %v993
    %v8204 = vpop.f32.mrb[0].mxu0
    %v8205 = vadd.f32 %v7916, %v8204
    %v8206 = vpop.f32.mrb[0].mxu0
    %v8207 = vpop.f32.mrb[0].mxu0
    %v8208 = vadd.f32 %v7919, %v8207
    %v8209 = vpop.f32.mrb[0].mxu0
    %8210 = vmatprep.mubr.bf16.mxu0 %v1026
    %8211 = vmatmul.mubr.bf16.gmra.mrb[0].mxu0 %v1025
    %v8212 = vpop.f32.mrb[0].mxu0
    %v8213 = vadd.f32 %v7924, %v8212
    %v8214 = vpop.f32.mrb[0].mxu0
    %v8215 = vpop.f32.mrb[0].mxu0
    %v8216 = vadd.f32 %v7927, %v8215
    %v8217 = vpop.f32.mrb[0].mxu0
    %8218 = vmatprep.mubr.bf16.mxu0 %v1058
    %8219 = vmatmul.mubr.bf16.gmra.mrb[0].mxu0 %v1057
    %v8220 = vpop.f32.mrb[0].mxu0
    %v8221 = vadd.f32 %v7932, %v8220
    %v8222 = vpop.f32.mrb[0].mxu0
    %v8223 = vpop.f32.mrb[0].mxu0
    %v8224 = vadd.f32 %v7935, %v8223
    %v8225 = vpop.f32.mrb[0].mxu0
    %8226 = vmatprep.mubr.bf16.mxu0 %v1090
    %8227 = vmatmul.mubr.bf16.gmra.mrb[0].mxu0 %v1089
    %v8228 = vpop.f32.mrb[0].mxu0
    %v8229 = vadd.f32 %v7940, %v8228
    %v8230 = vpop.f32.mrb[0].mxu0
    %v8231 = vpop.f32.mrb[0].mxu0
    %v8232 = vadd.f32 %v7943, %v8231
    %v8233 = vpop.f32.mrb[0].mxu0
    %8234 = vmatprep.mubr.bf16.mxu0 %v1122
    %8235 = vmatmul.mubr.bf16.gmra.mrb[0].mxu0 %v1121
    %v8236 = vpop.f32.mrb[0].mxu0
    %v8237 = vadd.f32 %v7948, %v8236
    %v8238 = vpop.f32.mrb[0].mxu0
    %v8239 = vpop.f32.mrb[0].mxu0
    %v8240 = vadd.f32 %v7951, %v8239
    %v8241 = vpop.f32.mrb[0].mxu0
    %8242 = vmatprep.mubr.bf16.mxu0 %v1154
    %8243 = vmatmul.mubr.bf16.gmra.mrb[0].mxu0 %v1153
    %v8244 = vpop.f32.mrb[0].mxu0
    %v8245 = vadd.f32 %v7956, %v8244
    %v8246 = vpop.f32.mrb[0].mxu0
    %v8247 = vpop.f32.mrb[0].mxu0
    %v8248 = vadd.f32 %v7959, %v8247
    %v8249 = vpop.f32.mrb[0].mxu0
    %8250 = vmatprep.mubr.bf16.mxu0 %v1186
    %8251 = vmatmul.mubr.bf16.gmra.mrb[0].mxu0 %v1185
    %v8252 = vpop.f32.mrb[0].mxu0
    %v8253 = vadd.f32 %v7964, %v8252
    %v8254 = vpop.f32.mrb[0].mxu0
    %v8255 = vpop.f32.mrb[0].mxu0
    %v8256 = vadd.f32 %v7967, %v8255
    %v8257 = vpop.f32.mrb[0].mxu0
    %8258 = vmatprep.mubr.bf16.mxu0 %v1218
    %8259 = vmatmul.mubr.bf16.gmra.mrb[0].mxu0 %v1217
    %v8260 = vpop.f32.mrb[0].mxu0
    %v8261 = vadd.f32 %v7972, %v8260
    %v8262 = vpop.f32.mrb[0].mxu0
    %v8263 = vpop.f32.mrb[0].mxu0
    %v8264 = vadd.f32 %v7975, %v8263
    %v8265 = vpop.f32.mrb[0].mxu0
    %8266 = vmatprep.mubr.bf16.mxu0 %v1250
    %8267 = vmatmul.mubr.bf16.gmra.mrb[0].mxu0 %v1249
    %v8268 = vpop.f32.mrb[0].mxu0
    %v8269 = vadd.f32 %v7980, %v8268
    %v8270 = vpop.f32.mrb[0].mxu0
    %v8271 = vpop.f32.mrb[0].mxu0
    %v8272 = vadd.f32 %v7983, %v8271
    %v8273 = vpop.f32.mrb[0].mxu0
    %8274 = vmatprep.mubr.bf16.mxu0 %v1282
    %8275 = vmatmul.mubr.bf16.gmra.mrb[0].mxu0 %v1281
    %v8276 = vpop.f32.mrb[0].mxu0
    %v8277 = vadd.f32 %v7988, %v8276
    %v8278 = vpop.f32.mrb[0].mxu0
    %v8279 = vpop.f32.mrb[0].mxu0
    %v8280 = vadd.f32 %v7991, %v8279
    %v8281 = vpop.f32.mrb[0].mxu0
    %8282 = vmatprep.mubr.bf16.mxu0 %v1314
    %8283 = vmatmul.mubr.bf16.gmra.mrb[0].mxu0 %v1313
    %v8284 = vpop.f32.mrb[0].mxu0
    %v8285 = vadd.f32 %v7996, %v8284
    %v8286 = vpop.f32.mrb[0].mxu0
    %v8287 = vpop.f32.mrb[0].mxu0
    %v8288 = vadd.f32 %v7999, %v8287
    %v8289 = vpop.f32.mrb[0].mxu0
    %8290 = vmatprep.mubr.bf16.mxu0 %v1346
    %8291 = vmatmul.mubr.bf16.gmra.mrb[0].mxu0 %v1345
    %v8292 = vpop.f32.mrb[0].mxu0
    %v8293 = vadd.f32 %v8004, %v8292
    %v8294 = vpop.f32.mrb[0].mxu0
    %v8295 = vpop.f32.mrb[0].mxu0
    %v8296 = vadd.f32 %v8007, %v8295
    %v8297 = vpop.f32.mrb[0].mxu0
    %8298 = vmatprep.mubr.bf16.mxu0 %v1378
    %8299 = vmatmul.mubr.bf16.gmra.mrb[0].mxu0 %v1377
    %v8300 = vpop.f32.mrb[0].mxu0
    %v8301 = vadd.f32 %v8012, %v8300
    %v8302 = vpop.f32.mrb[0].mxu0
    %v8303 = vpop.f32.mrb[0].mxu0
    %v8304 = vadd.f32 %v8015, %v8303
    %v8305 = vpop.f32.mrb[0].mxu0
    %8306 = vmatprep.mubr.bf16.mxu0 %v1410
    %8307 = vmatmul.mubr.bf16.gmra.mrb[0].mxu0 %v1409
    %v8308 = vpop.f32.mrb[0].mxu0
    %v8309 = vadd.f32 %v8020, %v8308
    %v8310 = vpop.f32.mrb[0].mxu0
    %v8311 = vpop.f32.mrb[0].mxu0
    %v8312 = vadd.f32 %v8023, %v8311
    %v8313 = vpop.f32.mrb[0].mxu0
    %8314 = vmatprep.mubr.bf16.mxu0 %v1442
    %8315 = vmatmul.mubr.bf16.gmra.mrb[0].mxu0 %v1441
    %v8316 = vpop.f32.mrb[0].mxu0
    %v8317 = vadd.f32 %v8028, %v8316
    %v8318 = vpop.f32.mrb[0].mxu0
    %v8319 = vpop.f32.mrb[0].mxu0
    %v8320 = vadd.f32 %v8031, %v8319
    %v8321 = vpop.f32.mrb[0].mxu0
    %8322 = vmatprep.mubr.bf16.mxu0 %v1474
    %8323 = vmatmul.mubr.bf16.gmra.mrb[0].mxu0 %v1473
    %v8324 = vpop.f32.mrb[0].mxu0
    %v8325 = vadd.f32 %v8036, %v8324
    %v8326 = vpop.f32.mrb[0].mxu0
    %v8327 = vpop.f32.mrb[0].mxu0
    %v8328 = vadd.f32 %v8039, %v8327
    %v8329 = vpop.f32.mrb[0].mxu0
    %8330 = vmatprep.mubr.bf16.mxu0 %v1506
    %8331 = vmatmul.mubr.bf16.gmra.mrb[0].mxu0 %v1505
    %v8332 = vpop.f32.mrb[0].mxu0
    %v8333 = vadd.f32 %v8044, %v8332
    %v8334 = vpop.f32.mrb[0].mxu0
    %v8335 = vpop.f32.mrb[0].mxu0
    %v8336 = vadd.f32 %v8047, %v8335
    %v8337 = vpop.f32.mrb[0].mxu0
    %8338 = vmatprep.mubr.bf16.mxu0 %v1538
    %8339 = vmatmul.mubr.bf16.gmra.mrb[0].mxu0 %v1537
    %v8340 = vpop.f32.mrb[0].mxu0
    %v8341 = vadd.f32 %v8052, %v8340
    %v8342 = vpop.f32.mrb[0].mxu0
    %v8343 = vpop.f32.mrb[0].mxu0
    %v8344 = vadd.f32 %v8055, %v8343
    %v8345 = vpop.f32.mrb[0].mxu0
    %8346 = vmatprep.mubr.bf16.mxu0 %v1570
    %8347 = vmatmul.mubr.bf16.gmra.mrb[0].mxu0 %v1569
    %v8348 = vpop.f32.mrb[0].mxu0
    %v8349 = vadd.f32 %v8060, %v8348
    %v8350 = vpop.f32.mrb[0].mxu0
    %v8351 = vpop.f32.mrb[0].mxu0
    %v8352 = vadd.f32 %v8063, %v8351
    %v8353 = vpop.f32.mrb[0].mxu0
    %8354 = vmatprep.mubr.bf16.mxu0 %v1602
    %8355 = vmatmul.mubr.bf16.gmra.mrb[0].mxu0 %v1601
    %v8356 = vpop.f32.mrb[0].mxu0
    %v8357 = vadd.f32 %v8068, %v8356
    %v8358 = vpop.f32.mrb[0].mxu0
    %v8359 = vpop.f32.mrb[0].mxu0
    %v8360 = vadd.f32 %v8071, %v8359
    %v8361 = vpop.f32.mrb[0].mxu0
    %8362 = vmatprep.mubr.bf16.mxu0 %v1634
    %8363 = vmatmul.mubr.bf16.gmra.mrb[0].mxu0 %v1633
    %v8364 = vpop.f32.mrb[0].mxu0
    %v8365 = vadd.f32 %v8076, %v8364
    %v8366 = vpop.f32.mrb[0].mxu0
    %v8367 = vpop.f32.mrb[0].mxu0
    %v8368 = vadd.f32 %v8079, %v8367
    %v8369 = vpop.f32.mrb[0].mxu0
    %8370 = vdwg.mxu0
    %v8371 = vadd.f32 %v1635, %v8117
    %v8372 = vadd.f32 %v1636, %v8120
    %v8373 = vadd.f32 %v1637, %v8125
    %v8374 = vadd.f32 %v1638, %v8128
    %v8375 = vadd.f32 %v1639, %v8133
    %v8376 = vadd.f32 %v1640, %v8136
    %v8377 = vadd.f32 %v1641, %v8141
    %v8378 = vadd.f32 %v1642, %v8144
    %v8379 = vadd.f32 %v1643, %v8149
    %v8380 = vadd.f32 %v1644, %v8152
    %v8381 = vadd.f32 %v1645, %v8157
    %v8382 = vadd.f32 %v1646, %v8160
    %v8383 = vadd.f32 %v1647, %v8165
    %v8384 = vadd.f32 %v1648, %v8168
    %v8385 = vadd.f32 %v1649, %v8173
    %v8386 = vadd.f32 %v1650, %v8176
    %v8387 = vadd.f32 %v1651, %v8181
    %v8388 = vadd.f32 %v1652, %v8184
    %v8389 = vadd.f32 %v1653, %v8189
    %v8390 = vadd.f32 %v1654, %v8192
    %v8391 = vadd.f32 %v1655, %v8197
    %v8392 = vadd.f32 %v1656, %v8200
    %v8393 = vadd.f32 %v1657, %v8205
    %v8394 = vadd.f32 %v1658, %v8208
    %v8395 = vadd.f32 %v1659, %v8213
    %v8396 = vadd.f32 %v1660, %v8216
    %v8397 = vadd.f32 %v1661, %v8221
    %v8398 = vadd.f32 %v1662, %v8224
    %v8399 = vadd.f32 %v1663, %v8229
    %v8400 = vadd.f32 %v1664, %v8232
    %v8401 = vadd.f32 %v1665, %v8237
    %v8402 = vadd.f32 %v1666, %v8240
    %v8403 = vadd.f32 %v1667, %v8245
    %v8404 = vadd.f32 %v1668, %v8248
    %v8405 = vadd.f32 %v1669, %v8253
    %v8406 = vadd.f32 %v1670, %v8256
    %v8407 = vadd.f32 %v1671, %v8261
    %v8408 = vadd.f32 %v1672, %v8264
    %v8409 = vadd.f32 %v1673, %v8269
    %v8410 = vadd.f32 %v1674, %v8272
    %v8411 = vadd.f32 %v1675, %v8277
    %v8412 = vadd.f32 %v1676, %v8280
    %v8413 = vadd.f32 %v1677, %v8285
    %v8414 = vadd.f32 %v1678, %v8288
    %v8415 = vadd.f32 %v1679, %v8293
    %v8416 = vadd.f32 %v1680, %v8296
    %v8417 = vadd.f32 %v1681, %v8301
    %v8418 = vadd.f32 %v1682, %v8304
    %v8419 = vadd.f32 %v1683, %v8309
    %v8420 = vadd.f32 %v1684, %v8312
    %v8421 = vadd.f32 %v1685, %v8317
    %v8422 = vadd.f32 %v1686, %v8320
    %v8423 = vadd.f32 %v1687, %v8325
    %v8424 = vadd.f32 %v1688, %v8328
    %v8425 = vadd.f32 %v1689, %v8333
    %v8426 = vadd.f32 %v1690, %v8336
    %v8427 = vadd.f32 %v1691, %v8341
    %v8428 = vadd.f32 %v1692, %v8344
    %v8429 = vadd.f32 %v1693, %v8349
    %v8430 = vadd.f32 %v1694, %v8352
    %v8431 = vadd.f32 %v1695, %v8357
    %v8432 = vadd.f32 %v1696, %v8360
    %v8433 = vadd.f32 %v1697, %v8365
    %v8434 = vadd.f32 %v1698, %v8368
    %vm8435 = vcmask 130048
    %8436 = vst.msk [vmem:[#allocation2] sm:$0xff] %vm8435, %v8371
    %8437 = vst.msk [vmem:[#allocation2 + $0x8] sm:$0xff] %vm8435, %v8372
    %8438 = vst.msk [vmem:[#allocation2 + $0x10] sm:$0xff] %vm8435, %v8373
    %8439 = vst.msk [vmem:[#allocation2 + $0x18] sm:$0xff] %vm8435, %v8374
    %8440 = vst.msk [vmem:[#allocation2 + $0x20] sm:$0xff] %vm8435, %v8375
    %8441 = vst.msk [vmem:[#allocation2 + $0x28] sm:$0xff] %vm8435, %v8376
    %8442 = vst.msk [vmem:[#allocation2 + $0x30] sm:$0xff] %vm8435, %v8377
    %8443 = vst.msk [vmem:[#allocation2 + $0x38] sm:$0xff] %vm8435, %v8378
    %8444 = vst.msk [vmem:[#allocation2 + $0x40] sm:$0xff] %vm8435, %v8379
    %8445 = vst.msk [vmem:[#allocation2 + $0x48] sm:$0xff] %vm8435, %v8380
    %8446 = vst.msk [vmem:[#allocation2 + $0x50] sm:$0xff] %vm8435, %v8381
    %8447 = vst.msk [vmem:[#allocation2 + $0x58] sm:$0xff] %vm8435, %v8382
    %8448 = vst.msk [vmem:[#allocation2 + $0x60] sm:$0xff] %vm8435, %v8383
    %8449 = vst.msk [vmem:[#allocation2 + $0x68] sm:$0xff] %vm8435, %v8384
    %8450 = vst.msk [vmem:[#allocation2 + $0x70] sm:$0xff] %vm8435, %v8385
    %8451 = vst.msk [vmem:[#allocation2 + $0x78] sm:$0xff] %vm8435, %v8386
    %8452 = vst.msk [vmem:[#allocation2 + $0x80] sm:$0xff] %vm8435, %v8387
    %8453 = vst.msk [vmem:[#allocation2 + $0x88] sm:$0xff] %vm8435, %v8388
    %8454 = vst.msk [vmem:[#allocation2 + $0x90] sm:$0xff] %vm8435, %v8389
    %8455 = vst.msk [vmem:[#allocation2 + $0x98] sm:$0xff] %vm8435, %v8390
    %8456 = vst.msk [vmem:[#allocation2 + $0xa0] sm:$0xff] %vm8435, %v8391
    %8457 = vst.msk [vmem:[#allocation2 + $0xa8] sm:$0xff] %vm8435, %v8392
    %8458 = vst.msk [vmem:[#allocation2 + $0xb0] sm:$0xff] %vm8435, %v8393
    %8459 = vst.msk [vmem:[#allocation2 + $0xb8] sm:$0xff] %vm8435, %v8394
    %8460 = vst.msk [vmem:[#allocation2 + $0xc0] sm:$0xff] %vm8435, %v8395
    %8461 = vst.msk [vmem:[#allocation2 + $0xc8] sm:$0xff] %vm8435, %v8396
    %8462 = vst.msk [vmem:[#allocation2 + $0xd0] sm:$0xff] %vm8435, %v8397
    %8463 = vst.msk [vmem:[#allocation2 + $0xd8] sm:$0xff] %vm8435, %v8398
    %8464 = vst.msk [vmem:[#allocation2 + $0xe0] sm:$0xff] %vm8435, %v8399
    %8465 = vst.msk [vmem:[#allocation2 + $0xe8] sm:$0xff] %vm8435, %v8400
    %8466 = vst.msk [vmem:[#allocation2 + $0xf0] sm:$0xff] %vm8435, %v8401
    %8467 = vst.msk [vmem:[#allocation2 + $0xf8] sm:$0xff] %vm8435, %v8402
    %8468 = vst.msk [vmem:[#allocation2 + $0x100] sm:$0xff] %vm8435, %v8403
    %8469 = vst.msk [vmem:[#allocation2 + $0x108] sm:$0xff] %vm8435, %v8404
    %8470 = vst.msk [vmem:[#allocation2 + $0x110] sm:$0xff] %vm8435, %v8405
    %8471 = vst.msk [vmem:[#allocation2 + $0x118] sm:$0xff] %vm8435, %v8406
    %8472 = vst.msk [vmem:[#allocation2 + $0x120] sm:$0xff] %vm8435, %v8407
    %8473 = vst.msk [vmem:[#allocation2 + $0x128] sm:$0xff] %vm8435, %v8408
    %8474 = vst.msk [vmem:[#allocation2 + $0x130] sm:$0xff] %vm8435, %v8409
    %8475 = vst.msk [vmem:[#allocation2 + $0x138] sm:$0xff] %vm8435, %v8410
    %8476 = vst.msk [vmem:[#allocation2 + $0x140] sm:$0xff] %vm8435, %v8411
    %8477 = vst.msk [vmem:[#allocation2 + $0x148] sm:$0xff] %vm8435, %v8412
    %8478 = vst.msk [vmem:[#allocation2 + $0x150] sm:$0xff] %vm8435, %v8413
    %8479 = vst.msk [vmem:[#allocation2 + $0x158] sm:$0xff] %vm8435, %v8414
    %8480 = vst.msk [vmem:[#allocation2 + $0x160] sm:$0xff] %vm8435, %v8415
    %8481 = vst.msk [vmem:[#allocation2 + $0x168] sm:$0xff] %vm8435, %v8416
    %8482 = vst.msk [vmem:[#allocation2 + $0x170] sm:$0xff] %vm8435, %v8417
    %8483 = vst.msk [vmem:[#allocation2 + $0x178] sm:$0xff] %vm8435, %v8418
    %8484 = vst.msk [vmem:[#allocation2 + $0x180] sm:$0xff] %vm8435, %v8419
    %8485 = vst.msk [vmem:[#allocation2 + $0x188] sm:$0xff] %vm8435, %v8420
    %8486 = vst.msk [vmem:[#allocation2 + $0x190] sm:$0xff] %vm8435, %v8421
    %8487 = vst.msk [vmem:[#allocation2 + $0x198] sm:$0xff] %vm8435, %v8422
    %8488 = vst.msk [vmem:[#allocation2 + $0x1a0] sm:$0xff] %vm8435, %v8423
    %8489 = vst.msk [vmem:[#allocation2 + $0x1a8] sm:$0xff] %vm8435, %v8424
    %8490 = vst.msk [vmem:[#allocation2 + $0x1b0] sm:$0xff] %vm8435, %v8425
    %8491 = vst.msk [vmem:[#allocation2 + $0x1b8] sm:$0xff] %vm8435, %v8426
    %8492 = vst.msk [vmem:[#allocation2 + $0x1c0] sm:$0xff] %vm8435, %v8427
    %8493 = vst.msk [vmem:[#allocation2 + $0x1c8] sm:$0xff] %vm8435, %v8428
    %8494 = vst.msk [vmem:[#allocation2 + $0x1d0] sm:$0xff] %vm8435, %v8429
    %8495 = vst.msk [vmem:[#allocation2 + $0x1d8] sm:$0xff] %vm8435, %v8430
    %8496 = vst.msk [vmem:[#allocation2 + $0x1e0] sm:$0xff] %vm8435, %v8431
    %8497 = vst.msk [vmem:[#allocation2 + $0x1e8] sm:$0xff] %vm8435, %v8432
    %8498 = vst.msk [vmem:[#allocation2 + $0x1f0] sm:$0xff] %vm8435, %v8433
    %8499 = vst.msk [vmem:[#allocation2 + $0x1f8] sm:$0xff] %vm8435, %v8434
    // Predicated region
    $region22: #{tpu_custom_call.1} parent=1 // pred_check
      %p8500 = pneg %p30
    $region23: #{tpu_custom_call.1} parent=1 // pred_check_branch
      %8502 = sbr.rel (%p8500) target = $region25
    $region24: #{tpu_custom_call.1} parent=1 // pred_region
      %v8503 = vld [vmem:[#allocation2] sm:$0xff]
      %v8504 = vld [vmem:[#allocation2 + $0x8] sm:$0xff]
      %v8505 = vld [vmem:[#allocation2 + $0x10] sm:$0xff]
      %v8506 = vld [vmem:[#allocation2 + $0x18] sm:$0xff]
      %v8507 = vld [vmem:[#allocation2 + $0x20] sm:$0xff]
      %v8508 = vld [vmem:[#allocation2 + $0x28] sm:$0xff]
      %v8509 = vld [vmem:[#allocation2 + $0x30] sm:$0xff]
      %v8510 = vld [vmem:[#allocation2 + $0x38] sm:$0xff]
      %v8511 = vld [vmem:[#allocation2 + $0x40] sm:$0xff]
      %v8512 = vld [vmem:[#allocation2 + $0x48] sm:$0xff]
      %v8513 = vld [vmem:[#allocation2 + $0x50] sm:$0xff]
      %v8514 = vld [vmem:[#allocation2 + $0x58] sm:$0xff]
      %v8515 = vld [vmem:[#allocation2 + $0x60] sm:$0xff]
      %v8516 = vld [vmem:[#allocation2 + $0x68] sm:$0xff]
      %v8517 = vld [vmem:[#allocation2 + $0x70] sm:$0xff]
      %v8518 = vld [vmem:[#allocation2 + $0x78] sm:$0xff]
      %v8519 = vld [vmem:[#allocation2 + $0x80] sm:$0xff]
      %v8520 = vld [vmem:[#allocation2 + $0x88] sm:$0xff]
      %v8521 = vld [vmem:[#allocation2 + $0x90] sm:$0xff]
      %v8522 = vld [vmem:[#allocation2 + $0x98] sm:$0xff]
      %v8523 = vld [vmem:[#allocation2 + $0xa0] sm:$0xff]
      %v8524 = vld [vmem:[#allocation2 + $0xa8] sm:$0xff]
      %v8525 = vld [vmem:[#allocation2 + $0xb0] sm:$0xff]
      %v8526 = vld [vmem:[#allocation2 + $0xb8] sm:$0xff]
      %v8527 = vld [vmem:[#allocation2 + $0xc0] sm:$0xff]
      %v8528 = vld [vmem:[#allocation2 + $0xc8] sm:$0xff]
      %v8529 = vld [vmem:[#allocation2 + $0xd0] sm:$0xff]
      %v8530 = vld [vmem:[#allocation2 + $0xd8] sm:$0xff]
      %v8531 = vld [vmem:[#allocation2 + $0xe0] sm:$0xff]
      %v8532 = vld [vmem:[#allocation2 + $0xe8] sm:$0xff]
      %v8533 = vld [vmem:[#allocation2 + $0xf0] sm:$0xff]
      %v8534 = vld [vmem:[#allocation2 + $0xf8] sm:$0xff]
      %v8535 = vld [vmem:[#allocation2 + $0x100] sm:$0xff]
      %v8536 = vld [vmem:[#allocation2 + $0x108] sm:$0xff]
      %v8537 = vld [vmem:[#allocation2 + $0x110] sm:$0xff]
      %v8538 = vld [vmem:[#allocation2 + $0x118] sm:$0xff]
      %v8539 = vld [vmem:[#allocation2 + $0x120] sm:$0xff]
      %v8540 = vld [vmem:[#allocation2 + $0x128] sm:$0xff]
      %v8541 = vld [vmem:[#allocation2 + $0x130] sm:$0xff]
      %v8542 = vld [vmem:[#allocation2 + $0x138] sm:$0xff]
      %v8543 = vld [vmem:[#allocation2 + $0x140] sm:$0xff]
      %v8544 = vld [vmem:[#allocation2 + $0x148] sm:$0xff]
      %v8545 = vld [vmem:[#allocation2 + $0x150] sm:$0xff]
      %v8546 = vld [vmem:[#allocation2 + $0x158] sm:$0xff]
      %v8547 = vld [vmem:[#allocation2 + $0x160] sm:$0xff]
      %v8548 = vld [vmem:[#allocation2 + $0x168] sm:$0xff]
      %v8549 = vld [vmem:[#allocation2 + $0x170] sm:$0xff]
      %v8550 = vld [vmem:[#allocation2 + $0x178] sm:$0xff]
      %v8551 = vld [vmem:[#allocation2 + $0x180] sm:$0xff]
      %v8552 = vld [vmem:[#allocation2 + $0x188] sm:$0xff]
      %v8553 = vld [vmem:[#allocation2 + $0x190] sm:$0xff]
      %v8554 = vld [vmem:[#allocation2 + $0x198] sm:$0xff]
      %v8555 = vld [vmem:[#allocation2 + $0x1a0] sm:$0xff]
      %v8556 = vld [vmem:[#allocation2 + $0x1a8] sm:$0xff]
      %v8557 = vld [vmem:[#allocation2 + $0x1b0] sm:$0xff]
      %v8558 = vld [vmem:[#allocation2 + $0x1b8] sm:$0xff]
      %v8559 = vld [vmem:[#allocation2 + $0x1c0] sm:$0xff]
      %v8560 = vld [vmem:[#allocation2 + $0x1c8] sm:$0xff]
      %v8561 = vld [vmem:[#allocation2 + $0x1d0] sm:$0xff]
      %v8562 = vld [vmem:[#allocation2 + $0x1d8] sm:$0xff]
      %v8563 = vld [vmem:[#allocation2 + $0x1e0] sm:$0xff]
      %v8564 = vld [vmem:[#allocation2 + $0x1e8] sm:$0xff]
      %v8565 = vld [vmem:[#allocation2 + $0x1f0] sm:$0xff]
      %v8566 = vld [vmem:[#allocation2 + $0x1f8] sm:$0xff]
      %v8567 = vmax.f32 %v8503, 1.0
      %v8568 = vmax.f32 %v8504, 1.0
      %v8569 = vmax.f32 %v8505, 1.0
      %v8570 = vmax.f32 %v8506, 1.0
      %v8571 = vmax.f32 %v8507, 1.0
      %v8572 = vmax.f32 %v8508, 1.0
      %v8573 = vmax.f32 %v8509, 1.0
      %v8574 = vmax.f32 %v8510, 1.0
      %v8575 = vmax.f32 %v8511, 1.0
      %v8576 = vmax.f32 %v8512, 1.0
      %v8577 = vmax.f32 %v8513, 1.0
      %v8578 = vmax.f32 %v8514, 1.0
      %v8579 = vmax.f32 %v8515, 1.0
      %v8580 = vmax.f32 %v8516, 1.0
      %v8581 = vmax.f32 %v8517, 1.0
      %v8582 = vmax.f32 %v8518, 1.0
      %v8583 = vmax.f32 %v8519, 1.0
      %v8584 = vmax.f32 %v8520, 1.0
      %v8585 = vmax.f32 %v8521, 1.0
      %v8586 = vmax.f32 %v8522, 1.0
      %v8587 = vmax.f32 %v8523, 1.0
      %v8588 = vmax.f32 %v8524, 1.0
      %v8589 = vmax.f32 %v8525, 1.0
      %v8590 = vmax.f32 %v8526, 1.0
      %v8591 = vmax.f32 %v8527, 1.0
      %v8592 = vmax.f32 %v8528, 1.0
      %v8593 = vmax.f32 %v8529, 1.0
      %v8594 = vmax.f32 %v8530, 1.0
      %v8595 = vmax.f32 %v8531, 1.0
      %v8596 = vmax.f32 %v8532, 1.0
      %v8597 = vmax.f32 %v8533, 1.0
      %v8598 = vmax.f32 %v8534, 1.0
      %v8599 = vmax.f32 %v8535, 1.0
      %v8600 = vmax.f32 %v8536, 1.0
      %v8601 = vmax.f32 %v8537, 1.0
      %v8602 = vmax.f32 %v8538, 1.0
      %v8603 = vmax.f32 %v8539, 1.0
      %v8604 = vmax.f32 %v8540, 1.0
      %v8605 = vmax.f32 %v8541, 1.0
      %v8606 = vmax.f32 %v8542, 1.0
      %v8607 = vmax.f32 %v8543, 1.0
      %v8608 = vmax.f32 %v8544, 1.0
      %v8609 = vmax.f32 %v8545, 1.0
      %v8610 = vmax.f32 %v8546, 1.0
      %v8611 = vmax.f32 %v8547, 1.0
      %v8612 = vmax.f32 %v8548, 1.0
      %v8613 = vmax.f32 %v8549, 1.0
      %v8614 = vmax.f32 %v8550, 1.0
      %v8615 = vmax.f32 %v8551, 1.0
      %v8616 = vmax.f32 %v8552, 1.0
      %v8617 = vmax.f32 %v8553, 1.0
      %v8618 = vmax.f32 %v8554, 1.0
      %v8619 = vmax.f32 %v8555, 1.0
      %v8620 = vmax.f32 %v8556, 1.0
      %v8621 = vmax.f32 %v8557, 1.0
      %v8622 = vmax.f32 %v8558, 1.0
      %v8623 = vmax.f32 %v8559, 1.0
      %v8624 = vmax.f32 %v8560, 1.0
      %v8625 = vmax.f32 %v8561, 1.0
      %v8626 = vmax.f32 %v8562, 1.0
      %v8627 = vmax.f32 %v8563, 1.0
      %v8628 = vmax.f32 %v8564, 1.0
      %v8629 = vmax.f32 %v8565, 1.0
      %v8630 = vmax.f32 %v8566, 1.0
      %v8631 = vrcp.pop %v8567
      %v8632 = vmul.f32 1.0, %v8631
      %v8633 = vrcp.pop %v8568
      %v8634 = vmul.f32 1.0, %v8633
      %v8635 = vrcp.pop %v8569
      %v8636 = vmul.f32 1.0, %v8635
      %v8637 = vrcp.pop %v8570
      %v8638 = vmul.f32 1.0, %v8637
      %v8639 = vrcp.pop %v8571
      %v8640 = vmul.f32 1.0, %v8639
      %v8641 = vrcp.pop %v8572
      %v8642 = vmul.f32 1.0, %v8641
      %v8643 = vrcp.pop %v8573
      %v8644 = vmul.f32 1.0, %v8643
      %v8645 = vrcp.pop %v8574
      %v8646 = vmul.f32 1.0, %v8645
      %v8647 = vrcp.pop %v8575
      %v8648 = vmul.f32 1.0, %v8647
      %v8649 = vrcp.pop %v8576
      %v8650 = vmul.f32 1.0, %v8649
      %v8651 = vrcp.pop %v8577
      %v8652 = vmul.f32 1.0, %v8651
      %v8653 = vrcp.pop %v8578
      %v8654 = vmul.f32 1.0, %v8653
      %v8655 = vrcp.pop %v8579
      %v8656 = vmul.f32 1.0, %v8655
      %v8657 = vrcp.pop %v8580
      %v8658 = vmul.f32 1.0, %v8657
      %v8659 = vrcp.pop %v8581
      %v8660 = vmul.f32 1.0, %v8659
      %v8661 = vrcp.pop %v8582
      %v8662 = vmul.f32 1.0, %v8661
      %v8663 = vrcp.pop %v8583
      %v8664 = vmul.f32 1.0, %v8663
      %v8665 = vrcp.pop %v8584
      %v8666 = vmul.f32 1.0, %v8665
      %v8667 = vrcp.pop %v8585
      %v8668 = vmul.f32 1.0, %v8667
      %v8669 = vrcp.pop %v8586
      %v8670 = vmul.f32 1.0, %v8669
      %v8671 = vrcp.pop %v8587
      %v8672 = vmul.f32 1.0, %v8671
      %v8673 = vrcp.pop %v8588
      %v8674 = vmul.f32 1.0, %v8673
      %v8675 = vrcp.pop %v8589
      %v8676 = vmul.f32 1.0, %v8675
      %v8677 = vrcp.pop %v8590
      %v8678 = vmul.f32 1.0, %v8677
      %v8679 = vrcp.pop %v8591
      %v8680 = vmul.f32 1.0, %v8679
      %v8681 = vrcp.pop %v8592
      %v8682 = vmul.f32 1.0, %v8681
      %v8683 = vrcp.pop %v8593
      %v8684 = vmul.f32 1.0, %v8683
      %v8685 = vrcp.pop %v8594
      %v8686 = vmul.f32 1.0, %v8685
      %v8687 = vrcp.pop %v8595
      %v8688 = vmul.f32 1.0, %v8687
      %v8689 = vrcp.pop %v8596
      %v8690 = vmul.f32 1.0, %v8689
      %v8691 = vrcp.pop %v8597
      %v8692 = vmul.f32 1.0, %v8691
      %v8693 = vrcp.pop %v8598
      %v8694 = vmul.f32 1.0, %v8693
      %v8695 = vrcp.pop %v8599
      %v8696 = vmul.f32 1.0, %v8695
      %v8697 = vrcp.pop %v8600
      %v8698 = vmul.f32 1.0, %v8697
      %v8699 = vrcp.pop %v8601
      %v8700 = vmul.f32 1.0, %v8699
      %v8701 = vrcp.pop %v8602
      %v8702 = vmul.f32 1.0, %v8701
      %v8703 = vrcp.pop %v8603
      %v8704 = vmul.f32 1.0, %v8703
      %v8705 = vrcp.pop %v8604
      %v8706 = vmul.f32 1.0, %v8705
      %v8707 = vrcp.pop %v8605
      %v8708 = vmul.f32 1.0, %v8707
      %v8709 = vrcp.pop %v8606
      %v8710 = vmul.f32 1.0, %v8709
      %v8711 = vrcp.pop %v8607
      %v8712 = vmul.f32 1.0, %v8711
      %v8713 = vrcp.pop %v8608
      %v8714 = vmul.f32 1.0, %v8713
      %v8715 = vrcp.pop %v8609
      %v8716 = vmul.f32 1.0, %v8715
      %v8717 = vrcp.pop %v8610
      %v8718 = vmul.f32 1.0, %v8717
      %v8719 = vrcp.pop %v8611
      %v8720 = vmul.f32 1.0, %v8719
      %v8721 = vrcp.pop %v8612
      %v8722 = vmul.f32 1.0, %v8721
      %v8723 = vrcp.pop %v8613
      %v8724 = vmul.f32 1.0, %v8723
      %v8725 = vrcp.pop %v8614
      %v8726 = vmul.f32 1.0, %v8725
      %v8727 = vrcp.pop %v8615
      %v8728 = vmul.f32 1.0, %v8727
      %v8729 = vrcp.pop %v8616
      %v8730 = vmul.f32 1.0, %v8729
      %v8731 = vrcp.pop %v8617
      %v8732 = vmul.f32 1.0, %v8731
      %v8733 = vrcp.pop %v8618
      %v8734 = vmul.f32 1.0, %v8733
      %v8735 = vrcp.pop %v8619
      %v8736 = vmul.f32 1.0, %v8735
      %v8737 = vrcp.pop %v8620
      %v8738 = vmul.f32 1.0, %v8737
      %v8739 = vrcp.pop %v8621
      %v8740 = vmul.f32 1.0, %v8739
      %v8741 = vrcp.pop %v8622
      %v8742 = vmul.f32 1.0, %v8741
      %v8743 = vrcp.pop %v8623
      %v8744 = vmul.f32 1.0, %v8743
      %v8745 = vrcp.pop %v8624
      %v8746 = vmul.f32 1.0, %v8745
      %v8747 = vrcp.pop %v8625
      %v8748 = vmul.f32 1.0, %v8747
      %v8749 = vrcp.pop %v8626
      %v8750 = vmul.f32 1.0, %v8749
      %v8751 = vrcp.pop %v8627
      %v8752 = vmul.f32 1.0, %v8751
      %v8753 = vrcp.pop %v8628
      %v8754 = vmul.f32 1.0, %v8753
      %v8755 = vrcp.pop %v8629
      %v8756 = vmul.f32 1.0, %v8755
      %v8757 = vrcp.pop %v8630
      %v8758 = vmul.f32 1.0, %v8757
      %8760 = vset.pattern.permute.xlu0 9
      %8761 = vperm.xlu0 %8760, %v8632
      %v8762 = vpop.permute.xlu0 %8761
      %8765 = vset.pattern.permute.xlu0 9
      %8766 = vperm.xlu0 %8765, %v8634
      %v8767 = vpop.permute.xlu0 %8766
      %8770 = vset.pattern.permute.xlu0 9
      %8771 = vperm.xlu0 %8770, %v8636
      %v8772 = vpop.permute.xlu0 %8771
      %8775 = vset.pattern.permute.xlu0 9
      %8776 = vperm.xlu0 %8775, %v8638
      %v8777 = vpop.permute.xlu0 %8776
      %8780 = vset.pattern.permute.xlu0 9
      %8781 = vperm.xlu0 %8780, %v8640
      %v8782 = vpop.permute.xlu0 %8781
      %8785 = vset.pattern.permute.xlu0 9
      %8786 = vperm.xlu0 %8785, %v8642
      %v8787 = vpop.permute.xlu0 %8786
      %8790 = vset.pattern.permute.xlu0 9
      %8791 = vperm.xlu0 %8790, %v8644
      %v8792 = vpop.permute.xlu0 %8791
      %8795 = vset.pattern.permute.xlu0 9
      %8796 = vperm.xlu0 %8795, %v8646
      %v8797 = vpop.permute.xlu0 %8796
      %8800 = vset.pattern.permute.xlu0 9
      %8801 = vperm.xlu0 %8800, %v8648
      %v8802 = vpop.permute.xlu0 %8801
      %8805 = vset.pattern.permute.xlu0 9
      %8806 = vperm.xlu0 %8805, %v8650
      %v8807 = vpop.permute.xlu0 %8806
      %8810 = vset.pattern.permute.xlu0 9
      %8811 = vperm.xlu0 %8810, %v8652
      %v8812 = vpop.permute.xlu0 %8811
      %8815 = vset.pattern.permute.xlu0 9
      %8816 = vperm.xlu0 %8815, %v8654
      %v8817 = vpop.permute.xlu0 %8816
      %8820 = vset.pattern.permute.xlu0 9
      %8821 = vperm.xlu0 %8820, %v8656
      %v8822 = vpop.permute.xlu0 %8821
      %8825 = vset.pattern.permute.xlu0 9
      %8826 = vperm.xlu0 %8825, %v8658
      %v8827 = vpop.permute.xlu0 %8826
      %8830 = vset.pattern.permute.xlu0 9
      %8831 = vperm.xlu0 %8830, %v8660
      %v8832 = vpop.permute.xlu0 %8831
      %8835 = vset.pattern.permute.xlu0 9
      %8836 = vperm.xlu0 %8835, %v8662
      %v8837 = vpop.permute.xlu0 %8836
      %8840 = vset.pattern.permute.xlu0 9
      %8841 = vperm.xlu0 %8840, %v8664
      %v8842 = vpop.permute.xlu0 %8841
      %8845 = vset.pattern.permute.xlu0 9
      %8846 = vperm.xlu0 %8845, %v8666
      %v8847 = vpop.permute.xlu0 %8846
      %8850 = vset.pattern.permute.xlu0 9
      %8851 = vperm.xlu0 %8850, %v8668
      %v8852 = vpop.permute.xlu0 %8851
      %8855 = vset.pattern.permute.xlu0 9
      %8856 = vperm.xlu0 %8855, %v8670
      %v8857 = vpop.permute.xlu0 %8856
      %8860 = vset.pattern.permute.xlu0 9
      %8861 = vperm.xlu0 %8860, %v8672
      %v8862 = vpop.permute.xlu0 %8861
      %8865 = vset.pattern.permute.xlu0 9
      %8866 = vperm.xlu0 %8865, %v8674
      %v8867 = vpop.permute.xlu0 %8866
      %8870 = vset.pattern.permute.xlu0 9
      %8871 = vperm.xlu0 %8870, %v8676
      %v8872 = vpop.permute.xlu0 %8871
      %8875 = vset.pattern.permute.xlu0 9
      %8876 = vperm.xlu0 %8875, %v8678
      %v8877 = vpop.permute.xlu0 %8876
      %8880 = vset.pattern.permute.xlu0 9
      %8881 = vperm.xlu0 %8880, %v8680
      %v8882 = vpop.permute.xlu0 %8881
      %8885 = vset.pattern.permute.xlu0 9
      %8886 = vperm.xlu0 %8885, %v8682
      %v8887 = vpop.permute.xlu0 %8886
      %8890 = vset.pattern.permute.xlu0 9
      %8891 = vperm.xlu0 %8890, %v8684
      %v8892 = vpop.permute.xlu0 %8891
      %8895 = vset.pattern.permute.xlu0 9
      %8896 = vperm.xlu0 %8895, %v8686
      %v8897 = vpop.permute.xlu0 %8896
      %8900 = vset.pattern.permute.xlu0 9
      %8901 = vperm.xlu0 %8900, %v8688
      %v8902 = vpop.permute.xlu0 %8901
      %8905 = vset.pattern.permute.xlu0 9
      %8906 = vperm.xlu0 %8905, %v8690
      %v8907 = vpop.permute.xlu0 %8906
      %8910 = vset.pattern.permute.xlu0 9
      %8911 = vperm.xlu0 %8910, %v8692
      %v8912 = vpop.permute.xlu0 %8911
      %8915 = vset.pattern.permute.xlu0 9
      %8916 = vperm.xlu0 %8915, %v8694
      %v8917 = vpop.permute.xlu0 %8916
      %8920 = vset.pattern.permute.xlu0 9
      %8921 = vperm.xlu0 %8920, %v8696
      %v8922 = vpop.permute.xlu0 %8921
      %8925 = vset.pattern.permute.xlu0 9
      %8926 = vperm.xlu0 %8925, %v8698
      %v8927 = vpop.permute.xlu0 %8926
      %8930 = vset.pattern.permute.xlu0 9
      %8931 = vperm.xlu0 %8930, %v8700
      %v8932 = vpop.permute.xlu0 %8931
      %8935 = vset.pattern.permute.xlu0 9
      %8936 = vperm.xlu0 %8935, %v8702
      %v8937 = vpop.permute.xlu0 %8936
      %8940 = vset.pattern.permute.xlu0 9
      %8941 = vperm.xlu0 %8940, %v8704
      %v8942 = vpop.permute.xlu0 %8941
      %8945 = vset.pattern.permute.xlu0 9
      %8946 = vperm.xlu0 %8945, %v8706
      %v8947 = vpop.permute.xlu0 %8946
      %8950 = vset.pattern.permute.xlu0 9
      %8951 = vperm.xlu0 %8950, %v8708
      %v8952 = vpop.permute.xlu0 %8951
      %8955 = vset.pattern.permute.xlu0 9
      %8956 = vperm.xlu0 %8955, %v8710
      %v8957 = vpop.permute.xlu0 %8956
      %8960 = vset.pattern.permute.xlu0 9
      %8961 = vperm.xlu0 %8960, %v8712
      %v8962 = vpop.permute.xlu0 %8961
      %8965 = vset.pattern.permute.xlu0 9
      %8966 = vperm.xlu0 %8965, %v8714
      %v8967 = vpop.permute.xlu0 %8966
      %8970 = vset.pattern.permute.xlu0 9
      %8971 = vperm.xlu0 %8970, %v8716
      %v8972 = vpop.permute.xlu0 %8971
      %8975 = vset.pattern.permute.xlu0 9
      %8976 = vperm.xlu0 %8975, %v8718
      %v8977 = vpop.permute.xlu0 %8976
      %8980 = vset.pattern.permute.xlu0 9
      %8981 = vperm.xlu0 %8980, %v8720
      %v8982 = vpop.permute.xlu0 %8981
      %8985 = vset.pattern.permute.xlu0 9
      %8986 = vperm.xlu0 %8985, %v8722
      %v8987 = vpop.permute.xlu0 %8986
      %8990 = vset.pattern.permute.xlu0 9
      %8991 = vperm.xlu0 %8990, %v8724
      %v8992 = vpop.permute.xlu0 %8991
      %8995 = vset.pattern.permute.xlu0 9
      %8996 = vperm.xlu0 %8995, %v8726
      %v8997 = vpop.permute.xlu0 %8996
      %9000 = vset.pattern.permute.xlu0 9
      %9001 = vperm.xlu0 %9000, %v8728
      %v9002 = vpop.permute.xlu0 %9001
      %9005 = vset.pattern.permute.xlu0 9
      %9006 = vperm.xlu0 %9005, %v8730
      %v9007 = vpop.permute.xlu0 %9006
      %9010 = vset.pattern.permute.xlu0 9
      %9011 = vperm.xlu0 %9010, %v8732
      %v9012 = vpop.permute.xlu0 %9011
      %9015 = vset.pattern.permute.xlu0 9
      %9016 = vperm.xlu0 %9015, %v8734
      %v9017 = vpop.permute.xlu0 %9016
      %9020 = vset.pattern.permute.xlu0 9
      %9021 = vperm.xlu0 %9020, %v8736
      %v9022 = vpop.permute.xlu0 %9021
      %9025 = vset.pattern.permute.xlu0 9
      %9026 = vperm.xlu0 %9025, %v8738
      %v9027 = vpop.permute.xlu0 %9026
      %9030 = vset.pattern.permute.xlu0 9
      %9031 = vperm.xlu0 %9030, %v8740
      %v9032 = vpop.permute.xlu0 %9031
      %9035 = vset.pattern.permute.xlu0 9
      %9036 = vperm.xlu0 %9035, %v8742
      %v9037 = vpop.permute.xlu0 %9036
      %9040 = vset.pattern.permute.xlu0 9
      %9041 = vperm.xlu0 %9040, %v8744
      %v9042 = vpop.permute.xlu0 %9041
      %9045 = vset.pattern.permute.xlu0 9
      %9046 = vperm.xlu0 %9045, %v8746
      %v9047 = vpop.permute.xlu0 %9046
      %9050 = vset.pattern.permute.xlu0 9
      %9051 = vperm.xlu0 %9050, %v8748
      %v9052 = vpop.permute.xlu0 %9051
      %9055 = vset.pattern.permute.xlu0 9
      %9056 = vperm.xlu0 %9055, %v8750
      %v9057 = vpop.permute.xlu0 %9056
      %9060 = vset.pattern.permute.xlu0 9
      %9061 = vperm.xlu0 %9060, %v8752
      %v9062 = vpop.permute.xlu0 %9061
      %9065 = vset.pattern.permute.xlu0 9
      %9066 = vperm.xlu0 %9065, %v8754
      %v9067 = vpop.permute.xlu0 %9066
      %9070 = vset.pattern.permute.xlu0 9
      %9071 = vperm.xlu0 %9070, %v8756
      %v9072 = vpop.permute.xlu0 %9071
      %9075 = vset.pattern.permute.xlu0 9
      %9076 = vperm.xlu0 %9075, %v8758
      %v9077 = vpop.permute.xlu0 %9076
      %v9079 = vmul.f32 %v8503, %v8762
      %v9080 = vmul.f32 %v8504, %v8767
      %v9081 = vmul.f32 %v8505, %v8772
      %v9082 = vmul.f32 %v8506, %v8777
      %v9083 = vmul.f32 %v8507, %v8782
      %v9084 = vmul.f32 %v8508, %v8787
      %v9085 = vmul.f32 %v8509, %v8792
      %v9086 = vmul.f32 %v8510, %v8797
      %v9087 = vmul.f32 %v8511, %v8802
      %v9088 = vmul.f32 %v8512, %v8807
      %v9089 = vmul.f32 %v8513, %v8812
      %v9090 = vmul.f32 %v8514, %v8817
      %v9091 = vmul.f32 %v8515, %v8822
      %v9092 = vmul.f32 %v8516, %v8827
      %v9093 = vmul.f32 %v8517, %v8832
      %v9094 = vmul.f32 %v8518, %v8837
      %v9095 = vmul.f32 %v8519, %v8842
      %v9096 = vmul.f32 %v8520, %v8847
      %v9097 = vmul.f32 %v8521, %v8852
      %v9098 = vmul.f32 %v8522, %v8857
      %v9099 = vmul.f32 %v8523, %v8862
      %v9100 = vmul.f32 %v8524, %v8867
      %v9101 = vmul.f32 %v8525, %v8872
      %v9102 = vmul.f32 %v8526, %v8877
      %v9103 = vmul.f32 %v8527, %v8882
      %v9104 = vmul.f32 %v8528, %v8887
      %v9105 = vmul.f32 %v8529, %v8892
      %v9106 = vmul.f32 %v8530, %v8897
      %v9107 = vmul.f32 %v8531, %v8902
      %v9108 = vmul.f32 %v8532, %v8907
      %v9109 = vmul.f32 %v8533, %v8912
      %v9110 = vmul.f32 %v8534, %v8917
      %v9111 = vmul.f32 %v8535, %v8922
      %v9112 = vmul.f32 %v8536, %v8927
      %v9113 = vmul.f32 %v8537, %v8932
      %v9114 = vmul.f32 %v8538, %v8937
      %v9115 = vmul.f32 %v8539, %v8942
      %v9116 = vmul.f32 %v8540, %v8947
      %v9117 = vmul.f32 %v8541, %v8952
      %v9118 = vmul.f32 %v8542, %v8957
      %v9119 = vmul.f32 %v8543, %v8962
      %v9120 = vmul.f32 %v8544, %v8967
      %v9121 = vmul.f32 %v8545, %v8972
      %v9122 = vmul.f32 %v8546, %v8977
      %v9123 = vmul.f32 %v8547, %v8982
      %v9124 = vmul.f32 %v8548, %v8987
      %v9125 = vmul.f32 %v8549, %v8992
      %v9126 = vmul.f32 %v8550, %v8997
      %v9127 = vmul.f32 %v8551, %v9002
      %v9128 = vmul.f32 %v8552, %v9007
      %v9129 = vmul.f32 %v8553, %v9012
      %v9130 = vmul.f32 %v8554, %v9017
      %v9131 = vmul.f32 %v8555, %v9022
      %v9132 = vmul.f32 %v8556, %v9027
      %v9133 = vmul.f32 %v8557, %v9032
      %v9134 = vmul.f32 %v8558, %v9037
      %v9135 = vmul.f32 %v8559, %v9042
      %v9136 = vmul.f32 %v8560, %v9047
      %v9137 = vmul.f32 %v8561, %v9052
      %v9138 = vmul.f32 %v8562, %v9057
      %v9139 = vmul.f32 %v8563, %v9062
      %v9140 = vmul.f32 %v8564, %v9067
      %v9141 = vmul.f32 %v8565, %v9072
      %v9142 = vmul.f32 %v8566, %v9077
      %v9143 = vmul.f32 %v9079, %v9079
      %v9144 = vmul.f32 %v9080, %v9080
      %v9145 = vmul.f32 %v9081, %v9081
      %v9146 = vmul.f32 %v9082, %v9082
      %v9147 = vmul.f32 %v9083, %v9083
      %v9148 = vmul.f32 %v9084, %v9084
      %v9149 = vmul.f32 %v9085, %v9085
      %v9150 = vmul.f32 %v9086, %v9086
      %v9151 = vmul.f32 %v9087, %v9087
      %v9152 = vmul.f32 %v9088, %v9088
      %v9153 = vmul.f32 %v9089, %v9089
      %v9154 = vmul.f32 %v9090, %v9090
      %v9155 = vmul.f32 %v9091, %v9091
      %v9156 = vmul.f32 %v9092, %v9092
      %v9157 = vmul.f32 %v9093, %v9093
      %v9158 = vmul.f32 %v9094, %v9094
      %v9159 = vmul.f32 %v9095, %v9095
      %v9160 = vmul.f32 %v9096, %v9096
      %v9161 = vmul.f32 %v9097, %v9097
      %v9162 = vmul.f32 %v9098, %v9098
      %v9163 = vmul.f32 %v9099, %v9099
      %v9164 = vmul.f32 %v9100, %v9100
      %v9165 = vmul.f32 %v9101, %v9101
      %v9166 = vmul.f32 %v9102, %v9102
      %v9167 = vmul.f32 %v9103, %v9103
      %v9168 = vmul.f32 %v9104, %v9104
      %v9169 = vmul.f32 %v9105, %v9105
      %v9170 = vmul.f32 %v9106, %v9106
      %v9171 = vmul.f32 %v9107, %v9107
      %v9172 = vmul.f32 %v9108, %v9108
      %v9173 = vmul.f32 %v9109, %v9109
      %v9174 = vmul.f32 %v9110, %v9110
      %v9175 = vmul.f32 %v9111, %v9111
      %v9176 = vmul.f32 %v9112, %v9112
      %v9177 = vmul.f32 %v9113, %v9113
      %v9178 = vmul.f32 %v9114, %v9114
      %v9179 = vmul.f32 %v9115, %v9115
      %v9180 = vmul.f32 %v9116, %v9116
      %v9181 = vmul.f32 %v9117, %v9117
      %v9182 = vmul.f32 %v9118, %v9118
      %v9183 = vmul.f32 %v9119, %v9119
      %v9184 = vmul.f32 %v9120, %v9120
      %v9185 = vmul.f32 %v9121, %v9121
      %v9186 = vmul.f32 %v9122, %v9122
      %v9187 = vmul.f32 %v9123, %v9123
      %v9188 = vmul.f32 %v9124, %v9124
      %v9189 = vmul.f32 %v9125, %v9125
      %v9190 = vmul.f32 %v9126, %v9126
      %v9191 = vmul.f32 %v9127, %v9127
      %v9192 = vmul.f32 %v9128, %v9128
      %v9193 = vmul.f32 %v9129, %v9129
      %v9194 = vmul.f32 %v9130, %v9130
      %v9195 = vmul.f32 %v9131, %v9131
      %v9196 = vmul.f32 %v9132, %v9132
      %v9197 = vmul.f32 %v9133, %v9133
      %v9198 = vmul.f32 %v9134, %v9134
      %v9199 = vmul.f32 %v9135, %v9135
      %v9200 = vmul.f32 %v9136, %v9136
      %v9201 = vmul.f32 %v9137, %v9137
      %v9202 = vmul.f32 %v9138, %v9138
      %v9203 = vmul.f32 %v9139, %v9139
      %v9204 = vmul.f32 %v9140, %v9140
      %v9205 = vmul.f32 %v9141, %v9141
      %v9206 = vmul.f32 %v9142, %v9142
      %9271 = vrot.lane.b32.xlu0 %v9143, 125
      %v9272 = vpop.permute.xlu0 %9271
      %9273 = vrot.lane.b32.xlu0 %v9144, 125
      %v9274 = vpop.permute.xlu0 %9273
      %9275 = vrot.lane.b32.xlu0 %v9145, 125
      %v9276 = vpop.permute.xlu0 %9275
      %9277 = vrot.lane.b32.xlu0 %v9146, 125
      %v9278 = vpop.permute.xlu0 %9277
      %9279 = vrot.lane.b32.xlu0 %v9147, 125
      %v9280 = vpop.permute.xlu0 %9279
      %9281 = vrot.lane.b32.xlu0 %v9148, 125
      %v9282 = vpop.permute.xlu0 %9281
      %9283 = vrot.lane.b32.xlu0 %v9149, 125
      %v9284 = vpop.permute.xlu0 %9283
      %9285 = vrot.lane.b32.xlu0 %v9150, 125
      %v9286 = vpop.permute.xlu0 %9285
      %9287 = vrot.lane.b32.xlu0 %v9151, 125
      %v9288 = vpop.permute.xlu0 %9287
      %9289 = vrot.lane.b32.xlu0 %v9152, 125
      %v9290 = vpop.permute.xlu0 %9289
      %9291 = vrot.lane.b32.xlu0 %v9153, 125
      %v9292 = vpop.permute.xlu0 %9291
      %9293 = vrot.lane.b32.xlu0 %v9154, 125
      %v9294 = vpop.permute.xlu0 %9293
      %9295 = vrot.lane.b32.xlu0 %v9155, 125
      %v9296 = vpop.permute.xlu0 %9295
      %9297 = vrot.lane.b32.xlu0 %v9156, 125
      %v9298 = vpop.permute.xlu0 %9297
      %9299 = vrot.lane.b32.xlu0 %v9157, 125
      %v9300 = vpop.permute.xlu0 %9299
      %9301 = vrot.lane.b32.xlu0 %v9158, 125
      %v9302 = vpop.permute.xlu0 %9301
      %9303 = vrot.lane.b32.xlu0 %v9159, 125
      %v9304 = vpop.permute.xlu0 %9303
      %9305 = vrot.lane.b32.xlu0 %v9160, 125
      %v9306 = vpop.permute.xlu0 %9305
      %9307 = vrot.lane.b32.xlu0 %v9161, 125
      %v9308 = vpop.permute.xlu0 %9307
      %9309 = vrot.lane.b32.xlu0 %v9162, 125
      %v9310 = vpop.permute.xlu0 %9309
      %9311 = vrot.lane.b32.xlu0 %v9163, 125
      %v9312 = vpop.permute.xlu0 %9311
      %9313 = vrot.lane.b32.xlu0 %v9164, 125
      %v9314 = vpop.permute.xlu0 %9313
      %9315 = vrot.lane.b32.xlu0 %v9165, 125
      %v9316 = vpop.permute.xlu0 %9315
      %9317 = vrot.lane.b32.xlu0 %v9166, 125
      %v9318 = vpop.permute.xlu0 %9317
      %9319 = vrot.lane.b32.xlu0 %v9167, 125
      %v9320 = vpop.permute.xlu0 %9319
      %9321 = vrot.lane.b32.xlu0 %v9168, 125
      %v9322 = vpop.permute.xlu0 %9321
      %9323 = vrot.lane.b32.xlu0 %v9169, 125
      %v9324 = vpop.permute.xlu0 %9323
      %9325 = vrot.lane.b32.xlu0 %v9170, 125
      %v9326 = vpop.permute.xlu0 %9325
      %9327 = vrot.lane.b32.xlu0 %v9171, 125
      %v9328 = vpop.permute.xlu0 %9327
      %9329 = vrot.lane.b32.xlu0 %v9172, 125
      %v9330 = vpop.permute.xlu0 %9329
      %9331 = vrot.lane.b32.xlu0 %v9173, 125
      %v9332 = vpop.permute.xlu0 %9331
      %9333 = vrot.lane.b32.xlu0 %v9174, 125
      %v9334 = vpop.permute.xlu0 %9333
      %9335 = vrot.lane.b32.xlu0 %v9175, 125
      %v9336 = vpop.permute.xlu0 %9335
      %9337 = vrot.lane.b32.xlu0 %v9176, 125
      %v9338 = vpop.permute.xlu0 %9337
      %9339 = vrot.lane.b32.xlu0 %v9177, 125
      %v9340 = vpop.permute.xlu0 %9339
      %9341 = vrot.lane.b32.xlu0 %v9178, 125
      %v9342 = vpop.permute.xlu0 %9341
      %9343 = vrot.lane.b32.xlu0 %v9179, 125
      %v9344 = vpop.permute.xlu0 %9343
      %9345 = vrot.lane.b32.xlu0 %v9180, 125
      %v9346 = vpop.permute.xlu0 %9345
      %9347 = vrot.lane.b32.xlu0 %v9181, 125
      %v9348 = vpop.permute.xlu0 %9347
      %9349 = vrot.lane.b32.xlu0 %v9182, 125
      %v9350 = vpop.permute.xlu0 %9349
      %9351 = vrot.lane.b32.xlu0 %v9183, 125
      %v9352 = vpop.permute.xlu0 %9351
      %9353 = vrot.lane.b32.xlu0 %v9184, 125
      %v9354 = vpop.permute.xlu0 %9353
      %9355 = vrot.lane.b32.xlu0 %v9185, 125
      %v9356 = vpop.permute.xlu0 %9355
      %9357 = vrot.lane.b32.xlu0 %v9186, 125
      %v9358 = vpop.permute.xlu0 %9357
      %9359 = vrot.lane.b32.xlu0 %v9187, 125
      %v9360 = vpop.permute.xlu0 %9359
      %9361 = vrot.lane.b32.xlu0 %v9188, 125
      %v9362 = vpop.permute.xlu0 %9361
      %9363 = vrot.lane.b32.xlu0 %v9189, 125
      %v9364 = vpop.permute.xlu0 %9363
      %9365 = vrot.lane.b32.xlu0 %v9190, 125
      %v9366 = vpop.permute.xlu0 %9365
      %9367 = vrot.lane.b32.xlu0 %v9191, 125
      %v9368 = vpop.permute.xlu0 %9367
      %9369 = vrot.lane.b32.xlu0 %v9192, 125
      %v9370 = vpop.permute.xlu0 %9369
      %9371 = vrot.lane.b32.xlu0 %v9193, 125
      %v9372 = vpop.permute.xlu0 %9371
      %9373 = vrot.lane.b32.xlu0 %v9194, 125
      %v9374 = vpop.permute.xlu0 %9373
      %9375 = vrot.lane.b32.xlu0 %v9195, 125
      %v9376 = vpop.permute.xlu0 %9375
      %9377 = vrot.lane.b32.xlu0 %v9196, 125
      %v9378 = vpop.permute.xlu0 %9377
      %9379 = vrot.lane.b32.xlu0 %v9197, 125
      %v9380 = vpop.permute.xlu0 %9379
      %9381 = vrot.lane.b32.xlu0 %v9198, 125
      %v9382 = vpop.permute.xlu0 %9381
      %9383 = vrot.lane.b32.xlu0 %v9199, 125
      %v9384 = vpop.permute.xlu0 %9383
      %9385 = vrot.lane.b32.xlu0 %v9200, 125
      %v9386 = vpop.permute.xlu0 %9385
      %9387 = vrot.lane.b32.xlu0 %v9201, 125
      %v9388 = vpop.permute.xlu0 %9387
      %9389 = vrot.lane.b32.xlu0 %v9202, 125
      %v9390 = vpop.permute.xlu0 %9389
      %9391 = vrot.lane.b32.xlu0 %v9203, 125
      %v9392 = vpop.permute.xlu0 %9391
      %9393 = vrot.lane.b32.xlu0 %v9204, 125
      %v9394 = vpop.permute.xlu0 %9393
      %9395 = vrot.lane.b32.xlu0 %v9205, 125
      %v9396 = vpop.permute.xlu0 %9395
      %9397 = vrot.lane.b32.xlu0 %v9206, 125
      %v9398 = vpop.permute.xlu0 %9397
      %v9463 = vsub.f32 %v9079, %v9272
      %v9464 = vsub.f32 %v9080, %v9274
      %v9465 = vsub.f32 %v9081, %v9276
      %v9466 = vsub.f32 %v9082, %v9278
      %v9467 = vsub.f32 %v9083, %v9280
      %v9468 = vsub.f32 %v9084, %v9282
      %v9469 = vsub.f32 %v9085, %v9284
      %v9470 = vsub.f32 %v9086, %v9286
      %v9471 = vsub.f32 %v9087, %v9288
      %v9472 = vsub.f32 %v9088, %v9290
      %v9473 = vsub.f32 %v9089, %v9292
      %v9474 = vsub.f32 %v9090, %v9294
      %v9475 = vsub.f32 %v9091, %v9296
      %v9476 = vsub.f32 %v9092, %v9298
      %v9477 = vsub.f32 %v9093, %v9300
      %v9478 = vsub.f32 %v9094, %v9302
      %v9479 = vsub.f32 %v9095, %v9304
      %v9480 = vsub.f32 %v9096, %v9306
      %v9481 = vsub.f32 %v9097, %v9308
      %v9482 = vsub.f32 %v9098, %v9310
      %v9483 = vsub.f32 %v9099, %v9312
      %v9484 = vsub.f32 %v9100, %v9314
      %v9485 = vsub.f32 %v9101, %v9316
      %v9486 = vsub.f32 %v9102, %v9318
      %v9487 = vsub.f32 %v9103, %v9320
      %v9488 = vsub.f32 %v9104, %v9322
      %v9489 = vsub.f32 %v9105, %v9324
      %v9490 = vsub.f32 %v9106, %v9326
      %v9491 = vsub.f32 %v9107, %v9328
      %v9492 = vsub.f32 %v9108, %v9330
      %v9493 = vsub.f32 %v9109, %v9332
      %v9494 = vsub.f32 %v9110, %v9334
      %v9495 = vsub.f32 %v9111, %v9336
      %v9496 = vsub.f32 %v9112, %v9338
      %v9497 = vsub.f32 %v9113, %v9340
      %v9498 = vsub.f32 %v9114, %v9342
      %v9499 = vsub.f32 %v9115, %v9344
      %v9500 = vsub.f32 %v9116, %v9346
      %v9501 = vsub.f32 %v9117, %v9348
      %v9502 = vsub.f32 %v9118, %v9350
      %v9503 = vsub.f32 %v9119, %v9352
      %v9504 = vsub.f32 %v9120, %v9354
      %v9505 = vsub.f32 %v9121, %v9356
      %v9506 = vsub.f32 %v9122, %v9358
      %v9507 = vsub.f32 %v9123, %v9360
      %v9508 = vsub.f32 %v9124, %v9362
      %v9509 = vsub.f32 %v9125, %v9364
      %v9510 = vsub.f32 %v9126, %v9366
      %v9511 = vsub.f32 %v9127, %v9368
      %v9512 = vsub.f32 %v9128, %v9370
      %v9513 = vsub.f32 %v9129, %v9372
      %v9514 = vsub.f32 %v9130, %v9374
      %v9515 = vsub.f32 %v9131, %v9376
      %v9516 = vsub.f32 %v9132, %v9378
      %v9517 = vsub.f32 %v9133, %v9380
      %v9518 = vsub.f32 %v9134, %v9382
      %v9519 = vsub.f32 %v9135, %v9384
      %v9520 = vsub.f32 %v9136, %v9386
      %v9521 = vsub.f32 %v9137, %v9388
      %v9522 = vsub.f32 %v9138, %v9390
      %v9523 = vsub.f32 %v9139, %v9392
      %v9524 = vsub.f32 %v9140, %v9394
      %v9525 = vsub.f32 %v9141, %v9396
      %v9526 = vsub.f32 %v9142, %v9398
      %v9527 = vmax.f32 %v9463, 0.0
      %v9528 = vmax.f32 %v9464, 0.0
      %v9529 = vmax.f32 %v9465, 0.0
      %v9530 = vmax.f32 %v9466, 0.0
      %v9531 = vmax.f32 %v9467, 0.0
      %v9532 = vmax.f32 %v9468, 0.0
      %v9533 = vmax.f32 %v9469, 0.0
      %v9534 = vmax.f32 %v9470, 0.0
      %v9535 = vmax.f32 %v9471, 0.0
      %v9536 = vmax.f32 %v9472, 0.0
      %v9537 = vmax.f32 %v9473, 0.0
      %v9538 = vmax.f32 %v9474, 0.0
      %v9539 = vmax.f32 %v9475, 0.0
      %v9540 = vmax.f32 %v9476, 0.0
      %v9541 = vmax.f32 %v9477, 0.0
      %v9542 = vmax.f32 %v9478, 0.0
      %v9543 = vmax.f32 %v9479, 0.0
      %v9544 = vmax.f32 %v9480, 0.0
      %v9545 = vmax.f32 %v9481, 0.0
      %v9546 = vmax.f32 %v9482, 0.0
      %v9547 = vmax.f32 %v9483, 0.0
      %v9548 = vmax.f32 %v9484, 0.0
      %v9549 = vmax.f32 %v9485, 0.0
      %v9550 = vmax.f32 %v9486, 0.0
      %v9551 = vmax.f32 %v9487, 0.0
      %v9552 = vmax.f32 %v9488, 0.0
      %v9553 = vmax.f32 %v9489, 0.0
      %v9554 = vmax.f32 %v9490, 0.0
      %v9555 = vmax.f32 %v9491, 0.0
      %v9556 = vmax.f32 %v9492, 0.0
      %v9557 = vmax.f32 %v9493, 0.0
      %v9558 = vmax.f32 %v9494, 0.0
      %v9559 = vmax.f32 %v9495, 0.0
      %v9560 = vmax.f32 %v9496, 0.0
      %v9561 = vmax.f32 %v9497, 0.0
      %v9562 = vmax.f32 %v9498, 0.0
      %v9563 = vmax.f32 %v9499, 0.0
      %v9564 = vmax.f32 %v9500, 0.0
      %v9565 = vmax.f32 %v9501, 0.0
      %v9566 = vmax.f32 %v9502, 0.0
      %v9567 = vmax.f32 %v9503, 0.0
      %v9568 = vmax.f32 %v9504, 0.0
      %v9569 = vmax.f32 %v9505, 0.0
      %v9570 = vmax.f32 %v9506, 0.0
      %v9571 = vmax.f32 %v9507, 0.0
      %v9572 = vmax.f32 %v9508, 0.0
      %v9573 = vmax.f32 %v9509, 0.0
      %v9574 = vmax.f32 %v9510, 0.0
      %v9575 = vmax.f32 %v9511, 0.0
      %v9576 = vmax.f32 %v9512, 0.0
      %v9577 = vmax.f32 %v9513, 0.0
      %v9578 = vmax.f32 %v9514, 0.0
      %v9579 = vmax.f32 %v9515, 0.0
      %v9580 = vmax.f32 %v9516, 0.0
      %v9581 = vmax.f32 %v9517, 0.0
      %v9582 = vmax.f32 %v9518, 0.0
      %v9583 = vmax.f32 %v9519, 0.0
      %v9584 = vmax.f32 %v9520, 0.0
      %v9585 = vmax.f32 %v9521, 0.0
      %v9586 = vmax.f32 %v9522, 0.0
      %v9587 = vmax.f32 %v9523, 0.0
      %v9588 = vmax.f32 %v9524, 0.0
      %v9589 = vmax.f32 %v9525, 0.0
      %v9590 = vmax.f32 %v9526, 0.0
      %vm9591 = vcmask 72704
      %9592 = vst.msk [vmem:[#allocation6] sm:$0xff] %vm9591, %v8503
      %9593 = vst.msk [vmem:[#allocation6 + $0x8] sm:$0xff] %vm9591, %v8504
      %9594 = vst.msk [vmem:[#allocation6 + $0x10] sm:$0xff] %vm9591, %v8505
      %9595 = vst.msk [vmem:[#allocation6 + $0x18] sm:$0xff] %vm9591, %v8506
      %9596 = vst.msk [vmem:[#allocation6 + $0x20] sm:$0xff] %vm9591, %v8507
      %9597 = vst.msk [vmem:[#allocation6 + $0x28] sm:$0xff] %vm9591, %v8508
      %9598 = vst.msk [vmem:[#allocation6 + $0x30] sm:$0xff] %vm9591, %v8509
      %9599 = vst.msk [vmem:[#allocation6 + $0x38] sm:$0xff] %vm9591, %v8510
      %9600 = vst.msk [vmem:[#allocation6 + $0x40] sm:$0xff] %vm9591, %v8511
      %9601 = vst.msk [vmem:[#allocation6 + $0x48] sm:$0xff] %vm9591, %v8512
      %9602 = vst.msk [vmem:[#allocation6 + $0x50] sm:$0xff] %vm9591, %v8513
      %9603 = vst.msk [vmem:[#allocation6 + $0x58] sm:$0xff] %vm9591, %v8514
      %9604 = vst.msk [vmem:[#allocation6 + $0x60] sm:$0xff] %vm9591, %v8515
      %9605 = vst.msk [vmem:[#allocation6 + $0x68] sm:$0xff] %vm9591, %v8516
      %9606 = vst.msk [vmem:[#allocation6 + $0x70] sm:$0xff] %vm9591, %v8517
      %9607 = vst.msk [vmem:[#allocation6 + $0x78] sm:$0xff] %vm9591, %v8518
      %9608 = vst.msk [vmem:[#allocation6 + $0x80] sm:$0xff] %vm9591, %v8519
      %9609 = vst.msk [vmem:[#allocation6 + $0x88] sm:$0xff] %vm9591, %v8520
      %9610 = vst.msk [vmem:[#allocation6 + $0x90] sm:$0xff] %vm9591, %v8521
      %9611 = vst.msk [vmem:[#allocation6 + $0x98] sm:$0xff] %vm9591, %v8522
      %9612 = vst.msk [vmem:[#allocation6 + $0xa0] sm:$0xff] %vm9591, %v8523
      %9613 = vst.msk [vmem:[#allocation6 + $0xa8] sm:$0xff] %vm9591, %v8524
      %9614 = vst.msk [vmem:[#allocation6 + $0xb0] sm:$0xff] %vm9591, %v8525
      %9615 = vst.msk [vmem:[#allocation6 + $0xb8] sm:$0xff] %vm9591, %v8526
      %9616 = vst.msk [vmem:[#allocation6 + $0xc0] sm:$0xff] %vm9591, %v8527
      %9617 = vst.msk [vmem:[#allocation6 + $0xc8] sm:$0xff] %vm9591, %v8528
      %9618 = vst.msk [vmem:[#allocation6 + $0xd0] sm:$0xff] %vm9591, %v8529
      %9619 = vst.msk [vmem:[#allocation6 + $0xd8] sm:$0xff] %vm9591, %v8530
      %9620 = vst.msk [vmem:[#allocation6 + $0xe0] sm:$0xff] %vm9591, %v8531
      %9621 = vst.msk [vmem:[#allocation6 + $0xe8] sm:$0xff] %vm9591, %v8532
      %9622 = vst.msk [vmem:[#allocation6 + $0xf0] sm:$0xff] %vm9591, %v8533
      %9623 = vst.msk [vmem:[#allocation6 + $0xf8] sm:$0xff] %vm9591, %v8534
      %9624 = vst.msk [vmem:[#allocation6 + $0x100] sm:$0xff] %vm9591, %v8535
      %9625 = vst.msk [vmem:[#allocation6 + $0x108] sm:$0xff] %vm9591, %v8536
      %9626 = vst.msk [vmem:[#allocation6 + $0x110] sm:$0xff] %vm9591, %v8537
      %9627 = vst.msk [vmem:[#allocation6 + $0x118] sm:$0xff] %vm9591, %v8538
      %9628 = vst.msk [vmem:[#allocation6 + $0x120] sm:$0xff] %vm9591, %v8539
      %9629 = vst.msk [vmem:[#allocation6 + $0x128] sm:$0xff] %vm9591, %v8540
      %9630 = vst.msk [vmem:[#allocation6 + $0x130] sm:$0xff] %vm9591, %v8541
      %9631 = vst.msk [vmem:[#allocation6 + $0x138] sm:$0xff] %vm9591, %v8542
      %9632 = vst.msk [vmem:[#allocation6 + $0x140] sm:$0xff] %vm9591, %v8543
      %9633 = vst.msk [vmem:[#allocation6 + $0x148] sm:$0xff] %vm9591, %v8544
      %9634 = vst.msk [vmem:[#allocation6 + $0x150] sm:$0xff] %vm9591, %v8545
      %9635 = vst.msk [vmem:[#allocation6 + $0x158] sm:$0xff] %vm9591, %v8546
      %9636 = vst.msk [vmem:[#allocation6 + $0x160] sm:$0xff] %vm9591, %v8547
      %9637 = vst.msk [vmem:[#allocation6 + $0x168] sm:$0xff] %vm9591, %v8548
      %9638 = vst.msk [vmem:[#allocation6 + $0x170] sm:$0xff] %vm9591, %v8549
      %9639 = vst.msk [vmem:[#allocation6 + $0x178] sm:$0xff] %vm9591, %v8550
      %9640 = vst.msk [vmem:[#allocation6 + $0x180] sm:$0xff] %vm9591, %v8551
      %9641 = vst.msk [vmem:[#allocation6 + $0x188] sm:$0xff] %vm9591, %v8552
      %9642 = vst.msk [vmem:[#allocation6 + $0x190] sm:$0xff] %vm9591, %v8553
      %9643 = vst.msk [vmem:[#allocation6 + $0x198] sm:$0xff] %vm9591, %v8554
      %9644 = vst.msk [vmem:[#allocation6 + $0x1a0] sm:$0xff] %vm9591, %v8555
      %9645 = vst.msk [vmem:[#allocation6 + $0x1a8] sm:$0xff] %vm9591, %v8556
      %9646 = vst.msk [vmem:[#allocation6 + $0x1b0] sm:$0xff] %vm9591, %v8557
      %9647 = vst.msk [vmem:[#allocation6 + $0x1b8] sm:$0xff] %vm9591, %v8558
      %9648 = vst.msk [vmem:[#allocation6 + $0x1c0] sm:$0xff] %vm9591, %v8559
      %9649 = vst.msk [vmem:[#allocation6 + $0x1c8] sm:$0xff] %vm9591, %v8560
      %9650 = vst.msk [vmem:[#allocation6 + $0x1d0] sm:$0xff] %vm9591, %v8561
      %9651 = vst.msk [vmem:[#allocation6 + $0x1d8] sm:$0xff] %vm9591, %v8562
      %9652 = vst.msk [vmem:[#allocation6 + $0x1e0] sm:$0xff] %vm9591, %v8563
      %9653 = vst.msk [vmem:[#allocation6 + $0x1e8] sm:$0xff] %vm9591, %v8564
      %9654 = vst.msk [vmem:[#allocation6 + $0x1f0] sm:$0xff] %vm9591, %v8565
      %9655 = vst.msk [vmem:[#allocation6 + $0x1f8] sm:$0xff] %vm9591, %v8566
      %v9656 = vld [vmem:[%s2] sm:$0xff]
      %v9657 = vld [vmem:[%s2 + $0x8] sm:$0xff]
      %v9658 = vld [vmem:[%s2 + $0x10] sm:$0xff]
      %v9659 = vld [vmem:[%s2 + $0x18] sm:$0xff]
      %v9660 = vld [vmem:[%s2 + $0x20] sm:$0xff]
      %v9661 = vld [vmem:[%s2 + $0x28] sm:$0xff]
      %v9662 = vld [vmem:[%s2 + $0x30] sm:$0xff]
      %v9663 = vld [vmem:[%s2 + $0x38] sm:$0xff]
      %v9664 = vld [vmem:[%s2 + $0x40] sm:$0xff]
      %v9665 = vld [vmem:[%s2 + $0x48] sm:$0xff]
      %v9666 = vld [vmem:[%s2 + $0x50] sm:$0xff]
      %v9667 = vld [vmem:[%s2 + $0x58] sm:$0xff]
      %v9668 = vld [vmem:[%s2 + $0x60] sm:$0xff]
      %v9669 = vld [vmem:[%s2 + $0x68] sm:$0xff]
      %v9670 = vld [vmem:[%s2 + $0x70] sm:$0xff]
      %v9671 = vld [vmem:[%s2 + $0x78] sm:$0xff]
      %v9672 = vld [vmem:[%s2 + $0x80] sm:$0xff]
      %v9673 = vld [vmem:[%s2 + $0x88] sm:$0xff]
      %v9674 = vld [vmem:[%s2 + $0x90] sm:$0xff]
      %v9675 = vld [vmem:[%s2 + $0x98] sm:$0xff]
      %v9676 = vld [vmem:[%s2 + $0xa0] sm:$0xff]
      %v9677 = vld [vmem:[%s2 + $0xa8] sm:$0xff]
      %v9678 = vld [vmem:[%s2 + $0xb0] sm:$0xff]
      %v9679 = vld [vmem:[%s2 + $0xb8] sm:$0xff]
      %v9680 = vld [vmem:[%s2 + $0xc0] sm:$0xff]
      %v9681 = vld [vmem:[%s2 + $0xc8] sm:$0xff]
      %v9682 = vld [vmem:[%s2 + $0xd0] sm:$0xff]
      %v9683 = vld [vmem:[%s2 + $0xd8] sm:$0xff]
      %v9684 = vld [vmem:[%s2 + $0xe0] sm:$0xff]
      %v9685 = vld [vmem:[%s2 + $0xe8] sm:$0xff]
      %v9686 = vld [vmem:[%s2 + $0xf0] sm:$0xff]
      %v9687 = vld [vmem:[%s2 + $0xf8] sm:$0xff]
      %v9688 = vld [vmem:[%s2 + $0x100] sm:$0xff]
      %v9689 = vld [vmem:[%s2 + $0x108] sm:$0xff]
      %v9690 = vld [vmem:[%s2 + $0x110] sm:$0xff]
      %v9691 = vld [vmem:[%s2 + $0x118] sm:$0xff]
      %v9692 = vld [vmem:[%s2 + $0x120] sm:$0xff]
      %v9693 = vld [vmem:[%s2 + $0x128] sm:$0xff]
      %v9694 = vld [vmem:[%s2 + $0x130] sm:$0xff]
      %v9695 = vld [vmem:[%s2 + $0x138] sm:$0xff]
      %v9696 = vld [vmem:[%s2 + $0x140] sm:$0xff]
      %v9697 = vld [vmem:[%s2 + $0x148] sm:$0xff]
      %v9698 = vld [vmem:[%s2 + $0x150] sm:$0xff]
      %v9699 = vld [vmem:[%s2 + $0x158] sm:$0xff]
      %v9700 = vld [vmem:[%s2 + $0x160] sm:$0xff]
      %v9701 = vld [vmem:[%s2 + $0x168] sm:$0xff]
      %v9702 = vld [vmem:[%s2 + $0x170] sm:$0xff]
      %v9703 = vld [vmem:[%s2 + $0x178] sm:$0xff]
      %v9704 = vld [vmem:[%s2 + $0x180] sm:$0xff]
      %v9705 = vld [vmem:[%s2 + $0x188] sm:$0xff]
      %v9706 = vld [vmem:[%s2 + $0x190] sm:$0xff]
      %v9707 = vld [vmem:[%s2 + $0x198] sm:$0xff]
      %v9708 = vld [vmem:[%s2 + $0x1a0] sm:$0xff]
      %v9709 = vld [vmem:[%s2 + $0x1a8] sm:$0xff]
      %v9710 = vld [vmem:[%s2 + $0x1b0] sm:$0xff]
      %v9711 = vld [vmem:[%s2 + $0x1b8] sm:$0xff]
      %v9712 = vld [vmem:[%s2 + $0x1c0] sm:$0xff]
      %v9713 = vld [vmem:[%s2 + $0x1c8] sm:$0xff]
      %v9714 = vld [vmem:[%s2 + $0x1d0] sm:$0xff]
      %v9715 = vld [vmem:[%s2 + $0x1d8] sm:$0xff]
      %v9716 = vld [vmem:[%s2 + $0x1e0] sm:$0xff]
      %v9717 = vld [vmem:[%s2 + $0x1e8] sm:$0xff]
      %v9718 = vld [vmem:[%s2 + $0x1f0] sm:$0xff]
      %v9719 = vld [vmem:[%s2 + $0x1f8] sm:$0xff]
      %9784 = vrot.lane.b32.xlu0 %v9656, 9
      %v9785 = vpop.permute.xlu0 %9784
      %9786 = vrot.lane.b32.xlu0 %v9657, 9
      %v9787 = vpop.permute.xlu0 %9786
      %9788 = vrot.lane.b32.xlu0 %v9658, 9
      %v9789 = vpop.permute.xlu0 %9788
      %9790 = vrot.lane.b32.xlu0 %v9659, 9
      %v9791 = vpop.permute.xlu0 %9790
      %9792 = vrot.lane.b32.xlu0 %v9660, 9
      %v9793 = vpop.permute.xlu0 %9792
      %9794 = vrot.lane.b32.xlu0 %v9661, 9
      %v9795 = vpop.permute.xlu0 %9794
      %9796 = vrot.lane.b32.xlu0 %v9662, 9
      %v9797 = vpop.permute.xlu0 %9796
      %9798 = vrot.lane.b32.xlu0 %v9663, 9
      %v9799 = vpop.permute.xlu0 %9798
      %9800 = vrot.lane.b32.xlu0 %v9664, 9
      %v9801 = vpop.permute.xlu0 %9800
      %9802 = vrot.lane.b32.xlu0 %v9665, 9
      %v9803 = vpop.permute.xlu0 %9802
      %9804 = vrot.lane.b32.xlu0 %v9666, 9
      %v9805 = vpop.permute.xlu0 %9804
      %9806 = vrot.lane.b32.xlu0 %v9667, 9
      %v9807 = vpop.permute.xlu0 %9806
      %9808 = vrot.lane.b32.xlu0 %v9668, 9
      %v9809 = vpop.permute.xlu0 %9808
      %9810 = vrot.lane.b32.xlu0 %v9669, 9
      %v9811 = vpop.permute.xlu0 %9810
      %9812 = vrot.lane.b32.xlu0 %v9670, 9
      %v9813 = vpop.permute.xlu0 %9812
      %9814 = vrot.lane.b32.xlu0 %v9671, 9
      %v9815 = vpop.permute.xlu0 %9814
      %9816 = vrot.lane.b32.xlu0 %v9672, 9
      %v9817 = vpop.permute.xlu0 %9816
      %9818 = vrot.lane.b32.xlu0 %v9673, 9
      %v9819 = vpop.permute.xlu0 %9818
      %9820 = vrot.lane.b32.xlu0 %v9674, 9
      %v9821 = vpop.permute.xlu0 %9820
      %9822 = vrot.lane.b32.xlu0 %v9675, 9
      %v9823 = vpop.permute.xlu0 %9822
      %9824 = vrot.lane.b32.xlu0 %v9676, 9
      %v9825 = vpop.permute.xlu0 %9824
      %9826 = vrot.lane.b32.xlu0 %v9677, 9
      %v9827 = vpop.permute.xlu0 %9826
      %9828 = vrot.lane.b32.xlu0 %v9678, 9
      %v9829 = vpop.permute.xlu0 %9828
      %9830 = vrot.lane.b32.xlu0 %v9679, 9
      %v9831 = vpop.permute.xlu0 %9830
      %9832 = vrot.lane.b32.xlu0 %v9680, 9
      %v9833 = vpop.permute.xlu0 %9832
      %9834 = vrot.lane.b32.xlu0 %v9681, 9
      %v9835 = vpop.permute.xlu0 %9834
      %9836 = vrot.lane.b32.xlu0 %v9682, 9
      %v9837 = vpop.permute.xlu0 %9836
      %9838 = vrot.lane.b32.xlu0 %v9683, 9
      %v9839 = vpop.permute.xlu0 %9838
      %9840 = vrot.lane.b32.xlu0 %v9684, 9
      %v9841 = vpop.permute.xlu0 %9840
      %9842 = vrot.lane.b32.xlu0 %v9685, 9
      %v9843 = vpop.permute.xlu0 %9842
      %9844 = vrot.lane.b32.xlu0 %v9686, 9
      %v9845 = vpop.permute.xlu0 %9844
      %9846 = vrot.lane.b32.xlu0 %v9687, 9
      %v9847 = vpop.permute.xlu0 %9846
      %9848 = vrot.lane.b32.xlu0 %v9688, 9
      %v9849 = vpop.permute.xlu0 %9848
      %9850 = vrot.lane.b32.xlu0 %v9689, 9
      %v9851 = vpop.permute.xlu0 %9850
      %9852 = vrot.lane.b32.xlu0 %v9690, 9
      %v9853 = vpop.permute.xlu0 %9852
      %9854 = vrot.lane.b32.xlu0 %v9691, 9
      %v9855 = vpop.permute.xlu0 %9854
      %9856 = vrot.lane.b32.xlu0 %v9692, 9
      %v9857 = vpop.permute.xlu0 %9856
      %9858 = vrot.lane.b32.xlu0 %v9693, 9
      %v9859 = vpop.permute.xlu0 %9858
      %9860 = vrot.lane.b32.xlu0 %v9694, 9
      %v9861 = vpop.permute.xlu0 %9860
      %9862 = vrot.lane.b32.xlu0 %v9695, 9
      %v9863 = vpop.permute.xlu0 %9862
      %9864 = vrot.lane.b32.xlu0 %v9696, 9
      %v9865 = vpop.permute.xlu0 %9864
      %9866 = vrot.lane.b32.xlu0 %v9697, 9
      %v9867 = vpop.permute.xlu0 %9866
      %9868 = vrot.lane.b32.xlu0 %v9698, 9
      %v9869 = vpop.permute.xlu0 %9868
      %9870 = vrot.lane.b32.xlu0 %v9699, 9
      %v9871 = vpop.permute.xlu0 %9870
      %9872 = vrot.lane.b32.xlu0 %v9700, 9
      %v9873 = vpop.permute.xlu0 %9872
      %9874 = vrot.lane.b32.xlu0 %v9701, 9
      %v9875 = vpop.permute.xlu0 %9874
      %9876 = vrot.lane.b32.xlu0 %v9702, 9
      %v9877 = vpop.permute.xlu0 %9876
      %9878 = vrot.lane.b32.xlu0 %v9703, 9
      %v9879 = vpop.permute.xlu0 %9878
      %9880 = vrot.lane.b32.xlu0 %v9704, 9
      %v9881 = vpop.permute.xlu0 %9880
      %9882 = vrot.lane.b32.xlu0 %v9705, 9
      %v9883 = vpop.permute.xlu0 %9882
      %9884 = vrot.lane.b32.xlu0 %v9706, 9
      %v9885 = vpop.permute.xlu0 %9884
      %9886 = vrot.lane.b32.xlu0 %v9707, 9
      %v9887 = vpop.permute.xlu0 %9886
      %9888 = vrot.lane.b32.xlu0 %v9708, 9
      %v9889 = vpop.permute.xlu0 %9888
      %9890 = vrot.lane.b32.xlu0 %v9709, 9
      %v9891 = vpop.permute.xlu0 %9890
      %9892 = vrot.lane.b32.xlu0 %v9710, 9
      %v9893 = vpop.permute.xlu0 %9892
      %9894 = vrot.lane.b32.xlu0 %v9711, 9
      %v9895 = vpop.permute.xlu0 %9894
      %9896 = vrot.lane.b32.xlu0 %v9712, 9
      %v9897 = vpop.permute.xlu0 %9896
      %9898 = vrot.lane.b32.xlu0 %v9713, 9
      %v9899 = vpop.permute.xlu0 %9898
      %9900 = vrot.lane.b32.xlu0 %v9714, 9
      %v9901 = vpop.permute.xlu0 %9900
      %9902 = vrot.lane.b32.xlu0 %v9715, 9
      %v9903 = vpop.permute.xlu0 %9902
      %9904 = vrot.lane.b32.xlu0 %v9716, 9
      %v9905 = vpop.permute.xlu0 %9904
      %9906 = vrot.lane.b32.xlu0 %v9717, 9
      %v9907 = vpop.permute.xlu0 %9906
      %9908 = vrot.lane.b32.xlu0 %v9718, 9
      %v9909 = vpop.permute.xlu0 %9908
      %9910 = vrot.lane.b32.xlu0 %v9719, 9
      %v9911 = vpop.permute.xlu0 %9910
      %v9976 = vmul.f32 %v8503, %v9785
      %v9977 = vmul.f32 %v8504, %v9787
      %v9978 = vmul.f32 %v8505, %v9789
      %v9979 = vmul.f32 %v8506, %v9791
      %v9980 = vmul.f32 %v8507, %v9793
      %v9981 = vmul.f32 %v8508, %v9795
      %v9982 = vmul.f32 %v8509, %v9797
      %v9983 = vmul.f32 %v8510, %v9799
      %v9984 = vmul.f32 %v8511, %v9801
      %v9985 = vmul.f32 %v8512, %v9803
      %v9986 = vmul.f32 %v8513, %v9805
      %v9987 = vmul.f32 %v8514, %v9807
      %v9988 = vmul.f32 %v8515, %v9809
      %v9989 = vmul.f32 %v8516, %v9811
      %v9990 = vmul.f32 %v8517, %v9813
      %v9991 = vmul.f32 %v8518, %v9815
      %v9992 = vmul.f32 %v8519, %v9817
      %v9993 = vmul.f32 %v8520, %v9819
      %v9994 = vmul.f32 %v8521, %v9821
      %v9995 = vmul.f32 %v8522, %v9823
      %v9996 = vmul.f32 %v8523, %v9825
      %v9997 = vmul.f32 %v8524, %v9827
      %v9998 = vmul.f32 %v8525, %v9829
      %v9999 = vmul.f32 %v8526, %v9831
      %v10000 = vmul.f32 %v8527, %v9833
      %v10001 = vmul.f32 %v8528, %v9835
      %v10002 = vmul.f32 %v8529, %v9837
      %v10003 = vmul.f32 %v8530, %v9839
      %v10004 = vmul.f32 %v8531, %v9841
      %v10005 = vmul.f32 %v8532, %v9843
      %v10006 = vmul.f32 %v8533, %v9845
      %v10007 = vmul.f32 %v8534, %v9847
      %v10008 = vmul.f32 %v8535, %v9849
      %v10009 = vmul.f32 %v8536, %v9851
      %v10010 = vmul.f32 %v8537, %v9853
      %v10011 = vmul.f32 %v8538, %v9855
      %v10012 = vmul.f32 %v8539, %v9857
      %v10013 = vmul.f32 %v8540, %v9859
      %v10014 = vmul.f32 %v8541, %v9861
      %v10015 = vmul.f32 %v8542, %v9863
      %v10016 = vmul.f32 %v8543, %v9865
      %v10017 = vmul.f32 %v8544, %v9867
      %v10018 = vmul.f32 %v8545, %v9869
      %v10019 = vmul.f32 %v8546, %v9871
      %v10020 = vmul.f32 %v8547, %v9873
      %v10021 = vmul.f32 %v8548, %v9875
      %v10022 = vmul.f32 %v8549, %v9877
      %v10023 = vmul.f32 %v8550, %v9879
      %v10024 = vmul.f32 %v8551, %v9881
      %v10025 = vmul.f32 %v8552, %v9883
      %v10026 = vmul.f32 %v8553, %v9885
      %v10027 = vmul.f32 %v8554, %v9887
      %v10028 = vmul.f32 %v8555, %v9889
      %v10029 = vmul.f32 %v8556, %v9891
      %v10030 = vmul.f32 %v8557, %v9893
      %v10031 = vmul.f32 %v8558, %v9895
      %v10032 = vmul.f32 %v8559, %v9897
      %v10033 = vmul.f32 %v8560, %v9899
      %v10034 = vmul.f32 %v8561, %v9901
      %v10035 = vmul.f32 %v8562, %v9903
      %v10036 = vmul.f32 %v8563, %v9905
      %v10037 = vmul.f32 %v8564, %v9907
      %v10038 = vmul.f32 %v8565, %v9909
      %v10039 = vmul.f32 %v8566, %v9911
      %vm10040 = vcmask 80968
      %10041 = vst.msk [vmem:[#allocation6] sm:$0xff] %vm10040, %v9976
      %10042 = vst.msk [vmem:[#allocation6 + $0x8] sm:$0xff] %vm10040, %v9977
      %10043 = vst.msk [vmem:[#allocation6 + $0x10] sm:$0xff] %vm10040, %v9978
      %10044 = vst.msk [vmem:[#allocation6 + $0x18] sm:$0xff] %vm10040, %v9979
      %10045 = vst.msk [vmem:[#allocation6 + $0x20] sm:$0xff] %vm10040, %v9980
      %10046 = vst.msk [vmem:[#allocation6 + $0x28] sm:$0xff] %vm10040, %v9981
      %10047 = vst.msk [vmem:[#allocation6 + $0x30] sm:$0xff] %vm10040, %v9982
      %10048 = vst.msk [vmem:[#allocation6 + $0x38] sm:$0xff] %vm10040, %v9983
      %10049 = vst.msk [vmem:[#allocation6 + $0x40] sm:$0xff] %vm10040, %v9984
      %10050 = vst.msk [vmem:[#allocation6 + $0x48] sm:$0xff] %vm10040, %v9985
      %10051 = vst.msk [vmem:[#allocation6 + $0x50] sm:$0xff] %vm10040, %v9986
      %10052 = vst.msk [vmem:[#allocation6 + $0x58] sm:$0xff] %vm10040, %v9987
      %10053 = vst.msk [vmem:[#allocation6 + $0x60] sm:$0xff] %vm10040, %v9988
      %10054 = vst.msk [vmem:[#allocation6 + $0x68] sm:$0xff] %vm10040, %v9989
      %10055 = vst.msk [vmem:[#allocation6 + $0x70] sm:$0xff] %vm10040, %v9990
      %10056 = vst.msk [vmem:[#allocation6 + $0x78] sm:$0xff] %vm10040, %v9991
      %10057 = vst.msk [vmem:[#allocation6 + $0x80] sm:$0xff] %vm10040, %v9992
      %10058 = vst.msk [vmem:[#allocation6 + $0x88] sm:$0xff] %vm10040, %v9993
      %10059 = vst.msk [vmem:[#allocation6 + $0x90] sm:$0xff] %vm10040, %v9994
      %10060 = vst.msk [vmem:[#allocation6 + $0x98] sm:$0xff] %vm10040, %v9995
      %10061 = vst.msk [vmem:[#allocation6 + $0xa0] sm:$0xff] %vm10040, %v9996
      %10062 = vst.msk [vmem:[#allocation6 + $0xa8] sm:$0xff] %vm10040, %v9997
      %10063 = vst.msk [vmem:[#allocation6 + $0xb0] sm:$0xff] %vm10040, %v9998
      %10064 = vst.msk [vmem:[#allocation6 + $0xb8] sm:$0xff] %vm10040, %v9999
      %10065 = vst.msk [vmem:[#allocation6 + $0xc0] sm:$0xff] %vm10040, %v10000
      %10066 = vst.msk [vmem:[#allocation6 + $0xc8] sm:$0xff] %vm10040, %v10001
      %10067 = vst.msk [vmem:[#allocation6 + $0xd0] sm:$0xff] %vm10040, %v10002
      %10068 = vst.msk [vmem:[#allocation6 + $0xd8] sm:$0xff] %vm10040, %v10003
      %10069 = vst.msk [vmem:[#allocation6 + $0xe0] sm:$0xff] %vm10040, %v10004
      %10070 = vst.msk [vmem:[#allocation6 + $0xe8] sm:$0xff] %vm10040, %v10005
      %10071 = vst.msk [vmem:[#allocation6 + $0xf0] sm:$0xff] %vm10040, %v10006
      %10072 = vst.msk [vmem:[#allocation6 + $0xf8] sm:$0xff] %vm10040, %v10007
      %10073 = vst.msk [vmem:[#allocation6 + $0x100] sm:$0xff] %vm10040, %v10008
      %10074 = vst.msk [vmem:[#allocation6 + $0x108] sm:$0xff] %vm10040, %v10009
      %10075 = vst.msk [vmem:[#allocation6 + $0x110] sm:$0xff] %vm10040, %v10010
      %10076 = vst.msk [vmem:[#allocation6 + $0x118] sm:$0xff] %vm10040, %v10011
      %10077 = vst.msk [vmem:[#allocation6 + $0x120] sm:$0xff] %vm10040, %v10012
      %10078 = vst.msk [vmem:[#allocation6 + $0x128] sm:$0xff] %vm10040, %v10013
      %10079 = vst.msk [vmem:[#allocation6 + $0x130] sm:$0xff] %vm10040, %v10014
      %10080 = vst.msk [vmem:[#allocation6 + $0x138] sm:$0xff] %vm10040, %v10015
      %10081 = vst.msk [vmem:[#allocation6 + $0x140] sm:$0xff] %vm10040, %v10016
      %10082 = vst.msk [vmem:[#allocation6 + $0x148] sm:$0xff] %vm10040, %v10017
      %10083 = vst.msk [vmem:[#allocation6 + $0x150] sm:$0xff] %vm10040, %v10018
      %10084 = vst.msk [vmem:[#allocation6 + $0x158] sm:$0xff] %vm10040, %v10019
      %10085 = vst.msk [vmem:[#allocation6 + $0x160] sm:$0xff] %vm10040, %v10020
      %10086 = vst.msk [vmem:[#allocation6 + $0x168] sm:$0xff] %vm10040, %v10021
      %10087 = vst.msk [vmem:[#allocation6 + $0x170] sm:$0xff] %vm10040, %v10022
      %10088 = vst.msk [vmem:[#allocation6 + $0x178] sm:$0xff] %vm10040, %v10023
      %10089 = vst.msk [vmem:[#allocation6 + $0x180] sm:$0xff] %vm10040, %v10024
      %10090 = vst.msk [vmem:[#allocation6 + $0x188] sm:$0xff] %vm10040, %v10025
      %10091 = vst.msk [vmem:[#allocation6 + $0x190] sm:$0xff] %vm10040, %v10026
      %10092 = vst.msk [vmem:[#allocation6 + $0x198] sm:$0xff] %vm10040, %v10027
      %10093 = vst.msk [vmem:[#allocation6 + $0x1a0] sm:$0xff] %vm10040, %v10028
      %10094 = vst.msk [vmem:[#allocation6 + $0x1a8] sm:$0xff] %vm10040, %v10029
      %10095 = vst.msk [vmem:[#allocation6 + $0x1b0] sm:$0xff] %vm10040, %v10030
      %10096 = vst.msk [vmem:[#allocation6 + $0x1b8] sm:$0xff] %vm10040, %v10031
      %10097 = vst.msk [vmem:[#allocation6 + $0x1c0] sm:$0xff] %vm10040, %v10032
      %10098 = vst.msk [vmem:[#allocation6 + $0x1c8] sm:$0xff] %vm10040, %v10033
      %10099 = vst.msk [vmem:[#allocation6 + $0x1d0] sm:$0xff] %vm10040, %v10034
      %10100 = vst.msk [vmem:[#allocation6 + $0x1d8] sm:$0xff] %vm10040, %v10035
      %10101 = vst.msk [vmem:[#allocation6 + $0x1e0] sm:$0xff] %vm10040, %v10036
      %10102 = vst.msk [vmem:[#allocation6 + $0x1e8] sm:$0xff] %vm10040, %v10037
      %10103 = vst.msk [vmem:[#allocation6 + $0x1f0] sm:$0xff] %vm10040, %v10038
      %10104 = vst.msk [vmem:[#allocation6 + $0x1f8] sm:$0xff] %vm10040, %v10039
      %vm10105 = vcmask 105552
      %10106 = vst.msk [vmem:[#allocation6] sm:$0xff] %vm10105, %v9527
      %10107 = vst.msk [vmem:[#allocation6 + $0x8] sm:$0xff] %vm10105, %v9528
      %10108 = vst.msk [vmem:[#allocation6 + $0x10] sm:$0xff] %vm10105, %v9529
      %10109 = vst.msk [vmem:[#allocation6 + $0x18] sm:$0xff] %vm10105, %v9530
      %10110 = vst.msk [vmem:[#allocation6 + $0x20] sm:$0xff] %vm10105, %v9531
      %10111 = vst.msk [vmem:[#allocation6 + $0x28] sm:$0xff] %vm10105, %v9532
      %10112 = vst.msk [vmem:[#allocation6 + $0x30] sm:$0xff] %vm10105, %v9533
      %10113 = vst.msk [vmem:[#allocation6 + $0x38] sm:$0xff] %vm10105, %v9534
      %10114 = vst.msk [vmem:[#allocation6 + $0x40] sm:$0xff] %vm10105, %v9535
      %10115 = vst.msk [vmem:[#allocation6 + $0x48] sm:$0xff] %vm10105, %v9536
      %10116 = vst.msk [vmem:[#allocation6 + $0x50] sm:$0xff] %vm10105, %v9537
      %10117 = vst.msk [vmem:[#allocation6 + $0x58] sm:$0xff] %vm10105, %v9538
      %10118 = vst.msk [vmem:[#allocation6 + $0x60] sm:$0xff] %vm10105, %v9539
      %10119 = vst.msk [vmem:[#allocation6 + $0x68] sm:$0xff] %vm10105, %v9540
      %10120 = vst.msk [vmem:[#allocation6 + $0x70] sm:$0xff] %vm10105, %v9541
      %10121 = vst.msk [vmem:[#allocation6 + $0x78] sm:$0xff] %vm10105, %v9542
      %10122 = vst.msk [vmem:[#allocation6 + $0x80] sm:$0xff] %vm10105, %v9543
      %10123 = vst.msk [vmem:[#allocation6 + $0x88] sm:$0xff] %vm10105, %v9544
      %10124 = vst.msk [vmem:[#allocation6 + $0x90] sm:$0xff] %vm10105, %v9545
      %10125 = vst.msk [vmem:[#allocation6 + $0x98] sm:$0xff] %vm10105, %v9546
      %10126 = vst.msk [vmem:[#allocation6 + $0xa0] sm:$0xff] %vm10105, %v9547
      %10127 = vst.msk [vmem:[#allocation6 + $0xa8] sm:$0xff] %vm10105, %v9548
      %10128 = vst.msk [vmem:[#allocation6 + $0xb0] sm:$0xff] %vm10105, %v9549
      %10129 = vst.msk [vmem:[#allocation6 + $0xb8] sm:$0xff] %vm10105, %v9550
      %10130 = vst.msk [vmem:[#allocation6 + $0xc0] sm:$0xff] %vm10105, %v9551
      %10131 = vst.msk [vmem:[#allocation6 + $0xc8] sm:$0xff] %vm10105, %v9552
      %10132 = vst.msk [vmem:[#allocation6 + $0xd0] sm:$0xff] %vm10105, %v9553
      %10133 = vst.msk [vmem:[#allocation6 + $0xd8] sm:$0xff] %vm10105, %v9554
      %10134 = vst.msk [vmem:[#allocation6 + $0xe0] sm:$0xff] %vm10105, %v9555
      %10135 = vst.msk [vmem:[#allocation6 + $0xe8] sm:$0xff] %vm10105, %v9556
      %10136 = vst.msk [vmem:[#allocation6 + $0xf0] sm:$0xff] %vm10105, %v9557
      %10137 = vst.msk [vmem:[#allocation6 + $0xf8] sm:$0xff] %vm10105, %v9558
      %10138 = vst.msk [vmem:[#allocation6 + $0x100] sm:$0xff] %vm10105, %v9559
      %10139 = vst.msk [vmem:[#allocation6 + $0x108] sm:$0xff] %vm10105, %v9560
      %10140 = vst.msk [vmem:[#allocation6 + $0x110] sm:$0xff] %vm10105, %v9561
      %10141 = vst.msk [vmem:[#allocation6 + $0x118] sm:$0xff] %vm10105, %v9562
      %10142 = vst.msk [vmem:[#allocation6 + $0x120] sm:$0xff] %vm10105, %v9563
      %10143 = vst.msk [vmem:[#allocation6 + $0x128] sm:$0xff] %vm10105, %v9564
      %10144 = vst.msk [vmem:[#allocation6 + $0x130] sm:$0xff] %vm10105, %v9565
      %10145 = vst.msk [vmem:[#allocation6 + $0x138] sm:$0xff] %vm10105, %v9566
      %10146 = vst.msk [vmem:[#allocation6 + $0x140] sm:$0xff] %vm10105, %v9567
      %10147 = vst.msk [vmem:[#allocation6 + $0x148] sm:$0xff] %vm10105, %v9568
      %10148 = vst.msk [vmem:[#allocation6 + $0x150] sm:$0xff] %vm10105, %v9569
      %10149 = vst.msk [vmem:[#allocation6 + $0x158] sm:$0xff] %vm10105, %v9570
      %10150 = vst.msk [vmem:[#allocation6 + $0x160] sm:$0xff] %vm10105, %v9571
      %10151 = vst.msk [vmem:[#allocation6 + $0x168] sm:$0xff] %vm10105, %v9572
      %10152 = vst.msk [vmem:[#allocation6 + $0x170] sm:$0xff] %vm10105, %v9573
      %10153 = vst.msk [vmem:[#allocation6 + $0x178] sm:$0xff] %vm10105, %v9574
      %10154 = vst.msk [vmem:[#allocation6 + $0x180] sm:$0xff] %vm10105, %v9575
      %10155 = vst.msk [vmem:[#allocation6 + $0x188] sm:$0xff] %vm10105, %v9576
      %10156 = vst.msk [vmem:[#allocation6 + $0x190] sm:$0xff] %vm10105, %v9577
      %10157 = vst.msk [vmem:[#allocation6 + $0x198] sm:$0xff] %vm10105, %v9578
      %10158 = vst.msk [vmem:[#allocation6 + $0x1a0] sm:$0xff] %vm10105, %v9579
      %10159 = vst.msk [vmem:[#allocation6 + $0x1a8] sm:$0xff] %vm10105, %v9580
      %10160 = vst.msk [vmem:[#allocation6 + $0x1b0] sm:$0xff] %vm10105, %v9581
      %10161 = vst.msk [vmem:[#allocation6 + $0x1b8] sm:$0xff] %vm10105, %v9582
      %10162 = vst.msk [vmem:[#allocation6 + $0x1c0] sm:$0xff] %vm10105, %v9583
      %10163 = vst.msk [vmem:[#allocation6 + $0x1c8] sm:$0xff] %vm10105, %v9584
      %10164 = vst.msk [vmem:[#allocation6 + $0x1d0] sm:$0xff] %vm10105, %v9585
      %10165 = vst.msk [vmem:[#allocation6 + $0x1d8] sm:$0xff] %vm10105, %v9586
      %10166 = vst.msk [vmem:[#allocation6 + $0x1e0] sm:$0xff] %vm10105, %v9587
      %10167 = vst.msk [vmem:[#allocation6 + $0x1e8] sm:$0xff] %vm10105, %v9588
      %10168 = vst.msk [vmem:[#allocation6 + $0x1f0] sm:$0xff] %vm10105, %v9589
      %10169 = vst.msk [vmem:[#allocation6 + $0x1f8] sm:$0xff] %vm10105, %v9590
      %vm10170 = vcmask 130152
      %10171 = vst.msk [vmem:[#allocation6] sm:$0xff] %vm10170, %v9079
      %10172 = vst.msk [vmem:[#allocation6 + $0x8] sm:$0xff] %vm10170, %v9080
      %10173 = vst.msk [vmem:[#allocation6 + $0x10] sm:$0xff] %vm10170, %v9081
      %10174 = vst.msk [vmem:[#allocation6 + $0x18] sm:$0xff] %vm10170, %v9082
      %10175 = vst.msk [vmem:[#allocation6 + $0x20] sm:$0xff] %vm10170, %v9083
      %10176 = vst.msk [vmem:[#allocation6 + $0x28] sm:$0xff] %vm10170, %v9084
      %10177 = vst.msk [vmem:[#allocation6 + $0x30] sm:$0xff] %vm10170, %v9085
      %10178 = vst.msk [vmem:[#allocation6 + $0x38] sm:$0xff] %vm10170, %v9086
      %10179 = vst.msk [vmem:[#allocation6 + $0x40] sm:$0xff] %vm10170, %v9087
      %10180 = vst.msk [vmem:[#allocation6 + $0x48] sm:$0xff] %vm10170, %v9088
      %10181 = vst.msk [vmem:[#allocation6 + $0x50] sm:$0xff] %vm10170, %v9089
      %10182 = vst.msk [vmem:[#allocation6 + $0x58] sm:$0xff] %vm10170, %v9090
      %10183 = vst.msk [vmem:[#allocation6 + $0x60] sm:$0xff] %vm10170, %v9091
      %10184 = vst.msk [vmem:[#allocation6 + $0x68] sm:$0xff] %vm10170, %v9092
      %10185 = vst.msk [vmem:[#allocation6 + $0x70] sm:$0xff] %vm10170, %v9093
      %10186 = vst.msk [vmem:[#allocation6 + $0x78] sm:$0xff] %vm10170, %v9094
      %10187 = vst.msk [vmem:[#allocation6 + $0x80] sm:$0xff] %vm10170, %v9095
      %10188 = vst.msk [vmem:[#allocation6 + $0x88] sm:$0xff] %vm10170, %v9096
      %10189 = vst.msk [vmem:[#allocation6 + $0x90] sm:$0xff] %vm10170, %v9097
      %10190 = vst.msk [vmem:[#allocation6 + $0x98] sm:$0xff] %vm10170, %v9098
      %10191 = vst.msk [vmem:[#allocation6 + $0xa0] sm:$0xff] %vm10170, %v9099
      %10192 = vst.msk [vmem:[#allocation6 + $0xa8] sm:$0xff] %vm10170, %v9100
      %10193 = vst.msk [vmem:[#allocation6 + $0xb0] sm:$0xff] %vm10170, %v9101
      %10194 = vst.msk [vmem:[#allocation6 + $0xb8] sm:$0xff] %vm10170, %v9102
      %10195 = vst.msk [vmem:[#allocation6 + $0xc0] sm:$0xff] %vm10170, %v9103
      %10196 = vst.msk [vmem:[#allocation6 + $0xc8] sm:$0xff] %vm10170, %v9104
      %10197 = vst.msk [vmem:[#allocation6 + $0xd0] sm:$0xff] %vm10170, %v9105
      %10198 = vst.msk [vmem:[#allocation6 + $0xd8] sm:$0xff] %vm10170, %v9106
      %10199 = vst.msk [vmem:[#allocation6 + $0xe0] sm:$0xff] %vm10170, %v9107
      %10200 = vst.msk [vmem:[#allocation6 + $0xe8] sm:$0xff] %vm10170, %v9108
      %10201 = vst.msk [vmem:[#allocation6 + $0xf0] sm:$0xff] %vm10170, %v9109
      %10202 = vst.msk [vmem:[#allocation6 + $0xf8] sm:$0xff] %vm10170, %v9110
      %10203 = vst.msk [vmem:[#allocation6 + $0x100] sm:$0xff] %vm10170, %v9111
      %10204 = vst.msk [vmem:[#allocation6 + $0x108] sm:$0xff] %vm10170, %v9112
      %10205 = vst.msk [vmem:[#allocation6 + $0x110] sm:$0xff] %vm10170, %v9113
      %10206 = vst.msk [vmem:[#allocation6 + $0x118] sm:$0xff] %vm10170, %v9114
      %10207 = vst.msk [vmem:[#allocation6 + $0x120] sm:$0xff] %vm10170, %v9115
      %10208 = vst.msk [vmem:[#allocation6 + $0x128] sm:$0xff] %vm10170, %v9116
      %10209 = vst.msk [vmem:[#allocation6 + $0x130] sm:$0xff] %vm10170, %v9117
      %10210 = vst.msk [vmem:[#allocation6 + $0x138] sm:$0xff] %vm10170, %v9118
      %10211 = vst.msk [vmem:[#allocation6 + $0x140] sm:$0xff] %vm10170, %v9119
      %10212 = vst.msk [vmem:[#allocation6 + $0x148] sm:$0xff] %vm10170, %v9120
      %10213 = vst.msk [vmem:[#allocation6 + $0x150] sm:$0xff] %vm10170, %v9121
      %10214 = vst.msk [vmem:[#allocation6 + $0x158] sm:$0xff] %vm10170, %v9122
      %10215 = vst.msk [vmem:[#allocation6 + $0x160] sm:$0xff] %vm10170, %v9123
      %10216 = vst.msk [vmem:[#allocation6 + $0x168] sm:$0xff] %vm10170, %v9124
      %10217 = vst.msk [vmem:[#allocation6 + $0x170] sm:$0xff] %vm10170, %v9125
      %10218 = vst.msk [vmem:[#allocation6 + $0x178] sm:$0xff] %vm10170, %v9126
      %10219 = vst.msk [vmem:[#allocation6 + $0x180] sm:$0xff] %vm10170, %v9127
      %10220 = vst.msk [vmem:[#allocation6 + $0x188] sm:$0xff] %vm10170, %v9128
      %10221 = vst.msk [vmem:[#allocation6 + $0x190] sm:$0xff] %vm10170, %v9129
      %10222 = vst.msk [vmem:[#allocation6 + $0x198] sm:$0xff] %vm10170, %v9130
      %10223 = vst.msk [vmem:[#allocation6 + $0x1a0] sm:$0xff] %vm10170, %v9131
      %10224 = vst.msk [vmem:[#allocation6 + $0x1a8] sm:$0xff] %vm10170, %v9132
      %10225 = vst.msk [vmem:[#allocation6 + $0x1b0] sm:$0xff] %vm10170, %v9133
      %10226 = vst.msk [vmem:[#allocation6 + $0x1b8] sm:$0xff] %vm10170, %v9134
      %10227 = vst.msk [vmem:[#allocation6 + $0x1c0] sm:$0xff] %vm10170, %v9135
      %10228 = vst.msk [vmem:[#allocation6 + $0x1c8] sm:$0xff] %vm10170, %v9136
      %10229 = vst.msk [vmem:[#allocation6 + $0x1d0] sm:$0xff] %vm10170, %v9137
      %10230 = vst.msk [vmem:[#allocation6 + $0x1d8] sm:$0xff] %vm10170, %v9138
      %10231 = vst.msk [vmem:[#allocation6 + $0x1e0] sm:$0xff] %vm10170, %v9139
      %10232 = vst.msk [vmem:[#allocation6 + $0x1e8] sm:$0xff] %vm10170, %v9140
      %10233 = vst.msk [vmem:[#allocation6 + $0x1f0] sm:$0xff] %vm10170, %v9141
      %10234 = vst.msk [vmem:[#allocation6 + $0x1f8] sm:$0xff] %vm10170, %v9142
      %vm10235 = vcmask 1047680
      %10236 = vst.msk [vmem:[#allocation6] sm:$0xff] %vm10235, 0.0
      %10237 = vst.msk [vmem:[#allocation6 + $0x8] sm:$0xff] %vm10235, 0.0
      %10238 = vst.msk [vmem:[#allocation6 + $0x10] sm:$0xff] %vm10235, 0.0
      %10239 = vst.msk [vmem:[#allocation6 + $0x18] sm:$0xff] %vm10235, 0.0
      %10240 = vst.msk [vmem:[#allocation6 + $0x20] sm:$0xff] %vm10235, 0.0
      %10241 = vst.msk [vmem:[#allocation6 + $0x28] sm:$0xff] %vm10235, 0.0
      %10242 = vst.msk [vmem:[#allocation6 + $0x30] sm:$0xff] %vm10235, 0.0
      %10243 = vst.msk [vmem:[#allocation6 + $0x38] sm:$0xff] %vm10235, 0.0
      %10244 = vst.msk [vmem:[#allocation6 + $0x40] sm:$0xff] %vm10235, 0.0
      %10245 = vst.msk [vmem:[#allocation6 + $0x48] sm:$0xff] %vm10235, 0.0
      %10246 = vst.msk [vmem:[#allocation6 + $0x50] sm:$0xff] %vm10235, 0.0
      %10247 = vst.msk [vmem:[#allocation6 + $0x58] sm:$0xff] %vm10235, 0.0
      %10248 = vst.msk [vmem:[#allocation6 + $0x60] sm:$0xff] %vm10235, 0.0
      %10249 = vst.msk [vmem:[#allocation6 + $0x68] sm:$0xff] %vm10235, 0.0
      %10250 = vst.msk [vmem:[#allocation6 + $0x70] sm:$0xff] %vm10235, 0.0
      %10251 = vst.msk [vmem:[#allocation6 + $0x78] sm:$0xff] %vm10235, 0.0
      %10252 = vst.msk [vmem:[#allocation6 + $0x80] sm:$0xff] %vm10235, 0.0
      %10253 = vst.msk [vmem:[#allocation6 + $0x88] sm:$0xff] %vm10235, 0.0
      %10254 = vst.msk [vmem:[#allocation6 + $0x90] sm:$0xff] %vm10235, 0.0
      %10255 = vst.msk [vmem:[#allocation6 + $0x98] sm:$0xff] %vm10235, 0.0
      %10256 = vst.msk [vmem:[#allocation6 + $0xa0] sm:$0xff] %vm10235, 0.0
      %10257 = vst.msk [vmem:[#allocation6 + $0xa8] sm:$0xff] %vm10235, 0.0
      %10258 = vst.msk [vmem:[#allocation6 + $0xb0] sm:$0xff] %vm10235, 0.0
      %10259 = vst.msk [vmem:[#allocation6 + $0xb8] sm:$0xff] %vm10235, 0.0
      %10260 = vst.msk [vmem:[#allocation6 + $0xc0] sm:$0xff] %vm10235, 0.0
      %10261 = vst.msk [vmem:[#allocation6 + $0xc8] sm:$0xff] %vm10235, 0.0
      %10262 = vst.msk [vmem:[#allocation6 + $0xd0] sm:$0xff] %vm10235, 0.0
      %10263 = vst.msk [vmem:[#allocation6 + $0xd8] sm:$0xff] %vm10235, 0.0
      %10264 = vst.msk [vmem:[#allocation6 + $0xe0] sm:$0xff] %vm10235, 0.0
      %10265 = vst.msk [vmem:[#allocation6 + $0xe8] sm:$0xff] %vm10235, 0.0
      %10266 = vst.msk [vmem:[#allocation6 + $0xf0] sm:$0xff] %vm10235, 0.0
      %10267 = vst.msk [vmem:[#allocation6 + $0xf8] sm:$0xff] %vm10235, 0.0
      %10268 = vst.msk [vmem:[#allocation6 + $0x100] sm:$0xff] %vm10235, 0.0
      %10269 = vst.msk [vmem:[#allocation6 + $0x108] sm:$0xff] %vm10235, 0.0
      %10270 = vst.msk [vmem:[#allocation6 + $0x110] sm:$0xff] %vm10235, 0.0
      %10271 = vst.msk [vmem:[#allocation6 + $0x118] sm:$0xff] %vm10235, 0.0
      %10272 = vst.msk [vmem:[#allocation6 + $0x120] sm:$0xff] %vm10235, 0.0
      %10273 = vst.msk [vmem:[#allocation6 + $0x128] sm:$0xff] %vm10235, 0.0
      %10274 = vst.msk [vmem:[#allocation6 + $0x130] sm:$0xff] %vm10235, 0.0
      %10275 = vst.msk [vmem:[#allocation6 + $0x138] sm:$0xff] %vm10235, 0.0
      %10276 = vst.msk [vmem:[#allocation6 + $0x140] sm:$0xff] %vm10235, 0.0
      %10277 = vst.msk [vmem:[#allocation6 + $0x148] sm:$0xff] %vm10235, 0.0
      %10278 = vst.msk [vmem:[#allocation6 + $0x150] sm:$0xff] %vm10235, 0.0
      %10279 = vst.msk [vmem:[#allocation6 + $0x158] sm:$0xff] %vm10235, 0.0
      %10280 = vst.msk [vmem:[#allocation6 + $0x160] sm:$0xff] %vm10235, 0.0
      %10281 = vst.msk [vmem:[#allocation6 + $0x168] sm:$0xff] %vm10235, 0.0
      %10282 = vst.msk [vmem:[#allocation6 + $0x170] sm:$0xff] %vm10235, 0.0
      %10283 = vst.msk [vmem:[#allocation6 + $0x178] sm:$0xff] %vm10235, 0.0
      %10284 = vst.msk [vmem:[#allocation6 + $0x180] sm:$0xff] %vm10235, 0.0
      %10285 = vst.msk [vmem:[#allocation6 + $0x188] sm:$0xff] %vm10235, 0.0
      %10286 = vst.msk [vmem:[#allocation6 + $0x190] sm:$0xff] %vm10235, 0.0
      %10287 = vst.msk [vmem:[#allocation6 + $0x198] sm:$0xff] %vm10235, 0.0
      %10288 = vst.msk [vmem:[#allocation6 + $0x1a0] sm:$0xff] %vm10235, 0.0
      %10289 = vst.msk [vmem:[#allocation6 + $0x1a8] sm:$0xff] %vm10235, 0.0
      %10290 = vst.msk [vmem:[#allocation6 + $0x1b0] sm:$0xff] %vm10235, 0.0
      %10291 = vst.msk [vmem:[#allocation6 + $0x1b8] sm:$0xff] %vm10235, 0.0
      %10292 = vst.msk [vmem:[#allocation6 + $0x1c0] sm:$0xff] %vm10235, 0.0
      %10293 = vst.msk [vmem:[#allocation6 + $0x1c8] sm:$0xff] %vm10235, 0.0
      %10294 = vst.msk [vmem:[#allocation6 + $0x1d0] sm:$0xff] %vm10235, 0.0
      %10295 = vst.msk [vmem:[#allocation6 + $0x1d8] sm:$0xff] %vm10235, 0.0
      %10296 = vst.msk [vmem:[#allocation6 + $0x1e0] sm:$0xff] %vm10235, 0.0
      %10297 = vst.msk [vmem:[#allocation6 + $0x1e8] sm:$0xff] %vm10235, 0.0
      %10298 = vst.msk [vmem:[#allocation6 + $0x1f0] sm:$0xff] %vm10235, 0.0
      %10299 = vst.msk [vmem:[#allocation6 + $0x1f8] sm:$0xff] %vm10235, 0.0
    $region25: #{tpu_custom_call.1} parent=1 // pred_fallthru
      _
    // Predicated region
    $region26: #{tpu_custom_call.1} parent=1 // pred_check
      _
    $region27: #{tpu_custom_call.1} parent=1 // pred_check_branch
      %10301 = sbr.rel (0) target = $region29
    $region28: #{tpu_custom_call.1} parent=1 // pred_region
      %s10303 = ssub.s32 8192, 8192
      %10304 = vsyncadd [#allocation5], %s10303
      %s10305 = sshll.u32 [#allocation6], 4
      %s10306 = int_to_ptr.vmem [resolvable:$true] %s10305
      %10311 = dma.vmem_to_hbm [thread:$0]  %s10306, 8192, %s3, [#allocation5], 128, 128, 8
    $region29: #{tpu_custom_call.1} parent=1 // pred_fallthru
      _
    // Predicated region
    $region30: #{tpu_custom_call.1} parent=1 // pred_check
      _
    $region31: #{tpu_custom_call.1} parent=1 // pred_check_branch
      %10313 = sbr.rel (0) target = $region33
    $region32: #{tpu_custom_call.1} parent=1 // pred_region
      %10314 = dma.done [#allocation5], 8192
    $region33: #{tpu_custom_call.1} parent=1 // pred_fallthru
      _
    %10315 = vsyncpa [#allocation4], 1
    %10316 = vsyncpa [#allocation5], 1

</llo_original>
